<compile_context>
chip_gen: v6e
topology: v6e:2x2x1
jax: 0.10.0
libtpu: 0.0.40
codegen_flags: <defaults>
</compile_context>

<pallas_src>
import functools

import jax
import jax.numpy as jnp
from jax import lax
from jax.experimental import pallas as pl
from jax.experimental.pallas import tpu as pltpu


# ----------------------------- in-kernel math -------------------------------

def _erf_approx(x):
    # Abramowitz & Stegun 7.1.26 rational approximation, |err| < 1.5e-7.
    a1, a2, a3, a4, a5 = (0.254829592, -0.284496736, 1.421413741,
                          -1.453152027, 1.061405429)
    p = 0.3275911
    s = jnp.where(x >= 0.0, 1.0, -1.0)
    z = jnp.abs(x)
    t = 1.0 / (1.0 + p * z)
    poly = t * (a1 + t * (a2 + t * (a3 + t * (a4 + t * a5))))
    return s * (1.0 - poly * jnp.exp(-z * z))


def _gelu_exact(x):
    return 0.5 * x * (1.0 + _erf_approx(x * 0.7071067811865476))


def _layernorm(x, gamma, beta, eps):
    mu = jnp.mean(x, axis=-1, keepdims=True)
    xc = x - mu
    var = jnp.mean(xc * xc, axis=-1, keepdims=True)
    inv = lax.rsqrt(var + eps)
    return xc * inv * gamma + beta


# ----------------------------- tiling helpers --------------------------------

def _row_tiling(n, cap=512):
    """Largest row tile t (multiple of 8, t <= cap) with n % t == 0,
    preferring >= 2 grid steps (v7x megacore).  Falls back to the full dim
    (single block, always BlockSpec-legal)."""
    cap = min(cap, n)
    cands = [t for t in range(8, cap + 1, 8) if n % t == 0]
    if not cands:
        return n
    multi = [t for t in cands if n // t >= 2]
    return max(multi) if multi else max(cands)


def _post_row_cap(c, hid, budget=8 << 20):
    # rough per-row live bytes: f32 GELU intermediate + bf16 h + concat input
    # + double-buffered row blocks -> keeps the post block inside v7x's VMEM.
    per_row = 6 * hid + 32 * c
    cap = (budget // per_row) // 8 * 8
    return int(max(64, min(512, cap)))


def _largest_divisor(n, cap):
    cap = max(1, min(n, cap))
    for d in range(cap, 0, -1):
        if n % d == 0:
            return d
    return 1


# ------------------------------- kernels -------------------------------------

def _win_attn_body(x0_ref, x1_ref, wq_ref, wkv_ref, m_ref, o_ref, c):
    """Fused QKV projection + per-window softmax attention.

    x0_ref / x1_ref: (g, wh, ww, C) image-window blocks or (g, L, C) flattened
    windows.  wq is pre-scaled by 1/sqrt(C); wkv = [wk | wv]."""
    shp = x0_ref.shape
    g = shp[0]
    L = 1
    for d in shp[1:-1]:
        L *= d
    x0 = x0_ref[...].reshape(g * L, c).astype(jnp.bfloat16)
    x1 = x1_ref[...].reshape(g * L, c).astype(jnp.bfloat16)
    # Projections on the MXU, f32 accumulation.
    q = jnp.dot(x0, wq_ref[...], preferred_element_type=jnp.float32)
    kv = jnp.dot(x1, wkv_ref[...], preferred_element_type=jnp.float32)
    q = q.astype(jnp.bfloat16).reshape(g, L, c)
    k = kv[:, :c].astype(jnp.bfloat16).reshape(g, L, c)
    v = kv[:, c:].astype(jnp.bfloat16).reshape(g, L, c)

    s = jnp.einsum("glc,gmc->glm", q, k, preferred_element_type=jnp.float32)
    if m_ref is not None:
        m = m_ref[...]
        nm = m.shape[0]
        if nm == 1:
            s = s + m                                   # one window per step
        else:
            s = (s.reshape(g // nm, nm, L, L) + m[None]).reshape(g, L, L)
    s = s - jnp.max(s, axis=-1, keepdims=True)
    p = jnp.exp(s)
    # EUP reciprocal: rows sum to ~1 (approx) — intentional trade-off.
    p = p * pl.reciprocal(jnp.sum(p, axis=-1, keepdims=True), approx=True)
    o = jnp.einsum("glm,gmc->glc", p.astype(jnp.bfloat16), v,
                   preferred_element_type=jnp.float32)
    o_ref[...] = o.reshape(o_ref.shape).astype(o_ref.dtype)


def win_attn_kernel_mask(x0_ref, x1_ref, wq_ref, wkv_ref, m_ref, o_ref, *, c):
    _win_attn_body(x0_ref, x1_ref, wq_ref, wkv_ref, m_ref, o_ref, c)


def win_attn_kernel_nomask(x0_ref, x1_ref, wq_ref, wkv_ref, o_ref, *, c):
    _win_attn_body(x0_ref, x1_ref, wq_ref, wkv_ref, None, o_ref, c)


def post_kernel(f0_ref, attn_ref, wfc_ref, ln_ref, w1_ref, w2_ref, o_ref, *, eps):
    f0 = f0_ref[...]                                             # (TM, C) f32
    x = jnp.dot(attn_ref[...].astype(jnp.bfloat16), wfc_ref[...],
                preferred_element_type=jnp.float32)              # fc
    x = _layernorm(x, ln_ref[0:1, :], ln_ref[1:2, :], eps)       # norm (f32)
    # cat([feat0, x], -1) @ W1 as one K=2C contraction (full MXU depth).
    h_in = jnp.concatenate([f0.astype(jnp.bfloat16),
                            x.astype(jnp.bfloat16)], axis=-1)
    h = jnp.dot(h_in, w1_ref[...], preferred_element_type=jnp.float32)
    h = _gelu_exact(h)                                           # GELU (f32)
    y = jnp.dot(h.astype(jnp.bfloat16), w2_ref[...],
                preferred_element_type=jnp.float32)
    y = _layernorm(y, ln_ref[2:3, :], ln_ref[3:4, :], eps)       # ffn_norm
    o_ref[...] = f0 + y                                          # residual


# ------------------------------ wrappers --------------------------------------

def window_attention_fused(x0, x1, wq_bf, wkv_bf, mask, n_window,
                           out_dtype=jnp.bfloat16):
    """Windowed attention with window partition/merge fused into the BlockSpec
    index_maps.  x0/x1: (B, H, W, C); output (B, H, W, C)."""
    b, h, w, c = x0.shape
    wh, ww = h // n_window, w // n_window
    L = wh * ww
    # windows-per-step group along the batch dim (same window id -> same mask)
    per_win = 24 * L * c + 8 * L * L
    cap = max(1, int((4 << 20) // per_win))
    if n_window == 1 and b > 1:
        cap = max(1, min(cap, b // 2))        # keep >= 2 grid steps (v7x)
    gb = _largest_divisor(b, cap)

    grid = (b // gb, n_window, n_window)
    blk = pl.BlockSpec((gb, wh, ww, c), lambda bi, wy, wx: (bi, wy, wx, 0))
    wq_spec = pl.BlockSpec((c, c), lambda bi, wy, wx: (0, 0))
    wkv_spec = pl.BlockSpec((c, 2 * c), lambda bi, wy, wx: (0, 0))
    cparams = pltpu.CompilerParams(
        dimension_semantics=("parallel", "parallel", "parallel"))
    out_shape = jax.ShapeDtypeStruct((b, h, w, c), out_dtype)

    if mask is not None:
        m_spec = pl.BlockSpec(
            (1, L, L), lambda bi, wy, wx: (wy * n_window + wx, 0, 0))
        return pl.pallas_call(
            functools.partial(win_attn_kernel_mask, c=c),
            out_shape=out_shape, grid=grid,
            in_specs=[blk, blk, wq_spec, wkv_spec, m_spec],
            out_specs=blk, compiler_params=cparams,
        )(x0, x1, wq_bf, wkv_bf, mask)
    return pl.pallas_call(
        functools.partial(win_attn_kernel_nomask, c=c),
        out_shape=out_shape, grid=grid,
        in_specs=[blk, blk, wq_spec, wkv_spec],
        out_specs=blk, compiler_params=cparams,
    )(x0, x1, wq_bf, wkv_bf)


def window_attention_flat(x0w, x1w, wq_bf, wkv_bf, mask, nw2,
                          out_dtype=jnp.bfloat16):
    """Fallback for window widths that violate the (8,128) block constraint:
    windows are pre-flattened to (B*nw^2, L, C) in JAX."""
    bw, L, c = x0w.shape
    nb = bw // nw2
    per_grp = nw2 * (24 * L * c + 8 * L * L)
    cap = max(1, int((4 << 20) // per_grp))
    if nb > 1:
        cap = max(1, min(cap, nb // 2))       # keep >= 2 grid steps (v7x)
    gb = _largest_divisor(nb, cap)
    G = gb * nw2

    grid = (bw // G,)
    tok = pl.BlockSpec((G, L, c), lambda i: (i, 0, 0))
    full = lambda shp: pl.BlockSpec(shp, lambda i: (0, 0))
    cparams = pltpu.CompilerParams(dimension_semantics=("parallel",))
    out_shape = jax.ShapeDtypeStruct((bw, L, c), out_dtype)

    if mask is not None:
        return pl.pallas_call(
            functools.partial(win_attn_kernel_mask, c=c),
            out_shape=out_shape, grid=grid,
            in_specs=[tok, tok, full((c, c)), full((c, 2 * c)),
                      pl.BlockSpec((nw2, L, L), lambda i: (0, 0, 0))],
            out_specs=tok, compiler_params=cparams,
        )(x0w, x1w, wq_bf, wkv_bf, mask)
    return pl.pallas_call(
        functools.partial(win_attn_kernel_nomask, c=c),
        out_shape=out_shape, grid=grid,
        in_specs=[tok, tok, full((c, c)), full((c, 2 * c))],
        out_specs=tok, compiler_params=cparams,
    )(x0w, x1w, wq_bf, wkv_bf)


def post_block_pallas(feat0, attn, wfc_bf, ln_params, w1_bf, w2_bf, eps=1e-5):
    n, c = feat0.shape
    hid = w1_bf.shape[1]
    tm = _row_tiling(n, cap=_post_row_cap(c, hid))
    row = pl.BlockSpec((tm, c), lambda i: (i, 0))
    full = lambda shp: pl.BlockSpec(shp, lambda i: (0, 0))
    return pl.pallas_call(
        functools.partial(post_kernel, eps=eps),
        out_shape=jax.ShapeDtypeStruct((n, c), jnp.float32),
        grid=(n // tm,),
        in_specs=[row, row,
                  full((c, c)), full((4, c)),
                  full((2 * c, hid)), full((hid, c))],
        out_specs=row,
        compiler_params=pltpu.CompilerParams(
            dimension_semantics=("parallel",),
            vmem_limit_bytes=32 * 1024 * 1024),
    )(feat0, attn, wfc_bf, ln_params, w1_bf, w2_bf)


# ------------------------------ JAX glue --------------------------------------

def window_partition(x, n_window):
    b, h, w, c = x.shape
    x = x.reshape(b, n_window, h // n_window, n_window, w // n_window, c)
    x = jnp.transpose(x, (0, 1, 3, 2, 4, 5))
    return x.reshape(b * n_window * n_window, h // n_window, w // n_window, c)


def window_merge(x, n_window):
    b, h, w, c = x.shape
    b_ = b // (n_window * n_window)
    x = x.reshape(b_, n_window, n_window, h, w, c)
    x = jnp.transpose(x, (0, 1, 3, 2, 4, 5))
    return x.reshape(b_, n_window * h, n_window * w, c)


def transformer_forward(params, feat0, feat1, width, height, mask_attn,
                        n_window, is_shift=True):
    b, seq, c = feat0.shape
    assert seq == width * height
    n = b * seq

    # Pre-cast weights to bf16 once; 1/sqrt(C) folded into wq; k|v fused.
    scale = 1.0 / float(c) ** 0.5
    wq_bf = (params["wq"] * scale).astype(jnp.bfloat16)
    wkv_bf = jnp.concatenate([params["wk"], params["wv"]],
                             axis=1).astype(jnp.bfloat16)
    wfc_bf = params["wfc"].astype(jnp.bfloat16)
    w1_bf = params["w1"].astype(jnp.bfloat16)
    w2_bf = params["w2"].astype(jnp.bfloat16)
    ln_params = jnp.concatenate([params["g1"], params["b1"],
                                 params["g2"], params["b2"]], axis=0)  # (4, C)

    wh, ww = height // n_window, width // n_window
    L = wh * ww
    nw2 = n_window * n_window
    sh, sw = wh // 2, ww // 2

    x0_img = feat0.reshape(b, height, width, c)
    x1_img = feat1.reshape(b, height, width, c)
    mask = mask_attn.astype(jnp.float32) if is_shift else None

    fused_ok = (ww % 8 == 0) or (n_window == 1)   # (8,128) block constraint
    if fused_ok:
        if is_shift:
            # roll fused with the bf16 cast: one narrow HBM pass per tensor
            x0a = jnp.roll(x0_img.astype(jnp.bfloat16), (-sh, -sw), axis=(1, 2))
            x1a = jnp.roll(x1_img.astype(jnp.bfloat16), (-sh, -sw), axis=(1, 2))
        else:
            x0a, x1a = x0_img, x1_img             # kernel casts in-VMEM
        o_img = window_attention_fused(x0a, x1a, wq_bf, wkv_bf, mask, n_window)
        if is_shift:
            o_img = jnp.roll(o_img, (sh, sw), axis=(1, 2))
        attn_feat = o_img.reshape(n, c)
    else:
        # Fallback: window width not a multiple of 8 -> partition/merge in JAX.
        def prep(img):
            if is_shift:
                img = jnp.roll(img.astype(jnp.bfloat16), (-sh, -sw), axis=(1, 2))
            return window_partition(img, n_window).reshape(b * nw2, L, c)
        x0w, x1w = prep(x0_img), prep(x1_img)
        ow = window_attention_flat(x0w, x1w, wq_bf, wkv_bf, mask, nw2)
        o = window_merge(ow.reshape(b * nw2, wh, ww, c), n_window)
        if is_shift:
            o = jnp.roll(o, (sh, sw), axis=(1, 2))
        attn_feat = o.reshape(n, c)

    out = post_block_pallas(feat0.reshape(n, c), attn_feat, wfc_bf,
                            ln_params, w1_bf, w2_bf)
    return out.reshape(b, seq, c)


# ------------------------------ pure-JAX reference ----------------------------

def reference_forward(params, feat0, feat1, width, height, mask_attn,
                      n_window, is_shift=True, eps=1e-5):
    b, seq, c = feat0.shape
    q = feat0 @ params["wq"]
    k = feat1 @ params["wk"]
    v = feat1 @ params["wv"]
    wh, ww = height // n_window, width // n_window
    L = wh * ww
    b_ = b * n_window * n_window
    sh, sw = wh // 2, ww // 2

    def to_windows(t):
        t = t.reshape(b, height, width, c)
        if is_shift:
            t = jnp.roll(t, shift=(-sh, -sw), axis=(1, 2))
        return window_partition(t, n_window).reshape(b_, L, c)

    qw, kw, vw = to_windows(q), to_windows(k), to_windows(v)
    scores = jnp.einsum("bic,bjc->bij", qw, kw) / float(c) ** 0.5
    if is_shift:
        scores = scores + jnp.tile(mask_attn, (b, 1, 1))
    p = jax.nn.softmax(scores, axis=-1)
    ow = jnp.einsum("bij,bjc->bic", p, vw)
    o = window_merge(ow.reshape(b_, wh, ww, c), n_window)
    if is_shift:
        o = jnp.roll(o, shift=(sh, sw), axis=(1, 2))
    attn = o.reshape(b, seq, c)

    def ln(x, g, bb):
        mu = jnp.mean(x, -1, keepdims=True)
        var = jnp.mean((x - mu) ** 2, -1, keepdims=True)
        return (x - mu) / jnp.sqrt(var + eps) * g + bb

    x = ln(attn @ params["wfc"], params["g1"], params["b1"])
    h = jnp.concatenate([feat0, x], axis=-1) @ params["w1"]
    h = jax.nn.gelu(h, approximate=False)
    y = ln(h @ params["w2"], params["g2"], params["b2"])
    return feat0 + y


# ------------------------------ main ------------------------------------------

def make_swin_mask(height, width, n_window):
    wh, ww = height // n_window, width // n_window
    sh, sw = wh // 2, ww // 2
    img = jnp.zeros((1, height, width, 1), jnp.float32)
    cnt = 0
    h_slices = (slice(0, -wh), slice(-wh, -sh), slice(-sh, None))
    w_slices = (slice(0, -ww), slice(-ww, -sw), slice(-sw, None))
    for hs in h_slices:
        for ws in w_slices:
            img = img.at[:, hs, ws, :].set(float(cnt))
            cnt += 1
    mw = window_partition(img, n_window).reshape(n_window * n_window, wh * ww)
    mask = jnp.where(mw[:, :, None] != mw[:, None, :], -100.0, 0.0)
    return mask.astype(jnp.float32)


if __name__ == "__main__":
    B, C, Hs, Ws, NW, FFN = 2, 128, 16, 16, 2, 2
    HID = 2 * C * FFN

    key = jax.random.PRNGKey(0)
    ks = jax.random.split(key, 8)
    init = lambda k, shp: 0.05 * jax.random.normal(k, shp, jnp.float32)

    # weights stored (in, out): y = x @ W  (== torch Linear with weight = W.T)
    params = dict(
        wq=init(ks[0], (C, C)),
        wk=init(ks[1], (C, C)),
        wv=init(ks[2], (C, C)),
        wfc=init(ks[3], (C, C)),
        g1=jnp.ones((1, C), jnp.float32),   # LayerNorm default init
        b1=jnp.zeros((1, C), jnp.float32),
        g2=jnp.ones((1, C), jnp.float32),
        b2=jnp.zeros((1, C), jnp.float32),
        w1=init(ks[4], (2 * C, HID)),
        w2=init(ks[5], (HID, C)),
    )

    feat0 = jax.random.normal(ks[6], (B, Hs * Ws, C), jnp.float32)
    feat1 = jax.random.normal(ks[7], (B, Hs * Ws, C), jnp.float32)
    mask_attn = make_swin_mask(Hs, Ws, NW)          # (n_window^2, L, L)

    fwd = jax.jit(transformer_forward,
                  static_argnames=("width", "height", "n_window", "is_shift"))

    # shifted (masked) path
    out_s = jax.block_until_ready(
        fwd(params, feat0, feat1, width=Ws, height=Hs,
            mask_attn=mask_attn, n_window=NW, is_shift=True))
    ref_s = jax.block_until_ready(
        reference_forward(params, feat0, feat1, Ws, Hs, mask_attn, NW,
                          is_shift=True))
    assert out_s.shape == (B, Hs * Ws, C)
    err_s = float(jnp.max(jnp.abs(out_s - ref_s)))
    assert err_s < 8e-2, f"shift-path mismatch: max abs err {err_s}"

    # non-shifted (unmasked) path
    out_n = jax.block_until_ready(
        fwd(params, feat0, feat1, width=Ws, height=Hs,
            mask_attn=mask_attn, n_window=NW, is_shift=False))
    ref_n = jax.block_until_ready(
        reference_forward(params, feat0, feat1, Ws, Hs, mask_attn, NW,
                          is_shift=False))
    err_n = float(jnp.max(jnp.abs(out_n - ref_n)))
    assert err_n < 8e-2, f"no-shift-path mismatch: max abs err {err_n}"

    print("KERNEL_OK")
</pallas_src>

<mosaic_0001>
module attributes {stable_mosaic.version = 11 : i64} {
  func.func @win_attn_kernel_mask(%arg0: i32, %arg1: i32, %arg2: i32, %arg3: memref<2x8x8x128xbf16, #tpu.memory_space<vmem>>, %arg4: memref<2x8x8x128xbf16, #tpu.memory_space<vmem>>, %arg5: memref<128x128xbf16, #tpu.memory_space<vmem>>, %arg6: memref<128x256xbf16, #tpu.memory_space<vmem>>, %arg7: memref<1x64x64xf32, #tpu.memory_space<vmem>>, %arg8: memref<2x8x8x128xbf16, #tpu.memory_space<vmem>>) attributes {dimension_semantics = [#tpu.dimension_semantics<parallel>, #tpu.dimension_semantics<parallel>, #tpu.dimension_semantics<parallel>], iteration_bounds = array<i64: 1, 2, 2>, scalar_prefetch = 0 : i64, scratch_operands = 0 : i64, tpu.core_type = #tpu.core_type<tc>, window_params = [{transform_indices = @transform_0, window_bounds = array<i64: 2, 8, 8, 128>}, {transform_indices = @transform_1, window_bounds = array<i64: 2, 8, 8, 128>}, {pipeline_mode = #tpu.pipeline_mode<synchronous>, transform_indices = @transform_2, window_bounds = array<i64: 128, 128>}, {pipeline_mode = #tpu.pipeline_mode<synchronous>, transform_indices = @transform_3, window_bounds = array<i64: 128, 256>}, {transform_indices = @transform_4, window_bounds = array<i64: 1, 64, 64>}, {transform_indices = @transform_5, window_bounds = array<i64: 2, 8, 8, 128>}]} {
    %c0 = arith.constant 0 : index
    %c0_0 = arith.constant 0 : index
    %c0_1 = arith.constant 0 : index
    %c0_2 = arith.constant 0 : index
    %0 = vector.load %arg3[%c0, %c0_0, %c0_1, %c0_2] : memref<2x8x8x128xbf16, #tpu.memory_space<vmem>>, vector<2x8x8x128xbf16>
    %1 = vector.shape_cast %0 : vector<2x8x8x128xbf16> to vector<128x128xbf16>
    %c0_3 = arith.constant 0 : index
    %c0_4 = arith.constant 0 : index
    %c0_5 = arith.constant 0 : index
    %c0_6 = arith.constant 0 : index
    %2 = vector.load %arg4[%c0_3, %c0_4, %c0_5, %c0_6] : memref<2x8x8x128xbf16, #tpu.memory_space<vmem>>, vector<2x8x8x128xbf16>
    %3 = vector.shape_cast %2 : vector<2x8x8x128xbf16> to vector<128x128xbf16>
    %c0_7 = arith.constant 0 : index
    %c0_8 = arith.constant 0 : index
    %4 = vector.load %arg5[%c0_7, %c0_8] : memref<128x128xbf16, #tpu.memory_space<vmem>>, vector<128x128xbf16>
    %cst = arith.constant dense<0.000000e+00> : vector<128x128xf32>
    %5 = tpu.matmul %1, %4, %cst {dimension_numbers = #tpu.dot_dimension_numbers<[1], [0], [0], [1], [0, 0, 1, 1], [], []>} : vector<128x128xbf16>, vector<128x128xbf16>, vector<128x128xf32> -> vector<128x128xf32>
    %c0_9 = arith.constant 0 : index
    %c0_10 = arith.constant 0 : index
    %6 = vector.load %arg6[%c0_9, %c0_10] : memref<128x256xbf16, #tpu.memory_space<vmem>>, vector<128x256xbf16>
    %cst_11 = arith.constant dense<0.000000e+00> : vector<128x256xf32>
    %7 = tpu.matmul %3, %6, %cst_11 {dimension_numbers = #tpu.dot_dimension_numbers<[1], [0], [0], [1], [0, 0, 1, 1], [], []>} : vector<128x128xbf16>, vector<128x256xbf16>, vector<128x256xf32> -> vector<128x256xf32>
    %8 = arith.truncf %5 : vector<128x128xf32> to vector<128x128xbf16>
    %9 = vector.shape_cast %8 : vector<128x128xbf16> to vector<2x64x128xbf16>
    %10 = vector.extract_strided_slice %7 {offsets = [0, 0], sizes = [128, 128], strides = [1, 1]} : vector<128x256xf32> to vector<128x128xf32>
    %11 = arith.truncf %10 : vector<128x128xf32> to vector<128x128xbf16>
    %12 = vector.shape_cast %11 : vector<128x128xbf16> to vector<2x64x128xbf16>
    %13 = vector.extract_strided_slice %7 {offsets = [0, 128], sizes = [128, 128], strides = [1, 1]} : vector<128x256xf32> to vector<128x128xf32>
    %14 = arith.truncf %13 : vector<128x128xf32> to vector<128x128xbf16>
    %15 = vector.shape_cast %14 : vector<128x128xbf16> to vector<2x64x128xbf16>
    "tpu.trace_start"() <{level = 10 : i32, message = "glc,gmc->glm"}> : () -> ()
    %cst_12 = arith.constant dense<0.000000e+00> : vector<2x64x64xf32>
    %16 = tpu.matmul %9, %12, %cst_12 {dimension_numbers = #tpu.dot_dimension_numbers<[2], [2], [1], [1], [0, 0, 0, 1, 1, 1], [0], [0]>} : vector<2x64x128xbf16>, vector<2x64x128xbf16>, vector<2x64x64xf32> -> vector<2x64x64xf32>
    "tpu.trace_stop"() : () -> ()
    %c0_13 = arith.constant 0 : index
    %c0_14 = arith.constant 0 : index
    %c0_15 = arith.constant 0 : index
    %17 = vector.load %arg7[%c0_13, %c0_14, %c0_15] : memref<1x64x64xf32, #tpu.memory_space<vmem>>, vector<1x64x64xf32>
    %18 = vector.broadcast %17 : vector<1x64x64xf32> to vector<2x64x64xf32>
    %19 = arith.addf %16, %18 : vector<2x64x64xf32>
    %cst_16 = arith.constant dense<0xFF800000> : vector<2x64xf32>
    %20 = vector.multi_reduction <maximumf>, %19, %cst_16 [2] : vector<2x64x64xf32> to vector<2x64xf32>
    %21 = vector.shape_cast %20 : vector<2x64xf32> to vector<2x64x1xf32>
    %22 = vector.broadcast %21 : vector<2x64x1xf32> to vector<2x64x64xf32>
    %23 = arith.subf %19, %22 : vector<2x64x64xf32>
    %24 = math.exp %23 : vector<2x64x64xf32>
    %cst_17 = arith.constant dense<0.000000e+00> : vector<2x64xf32>
    %25 = vector.multi_reduction <add>, %24, %cst_17 [2] : vector<2x64x64xf32> to vector<2x64xf32>
    %26 = vector.shape_cast %25 : vector<2x64xf32> to vector<2x64x1xf32>
    %27 = tpu.reciprocal %26 {approx = true} : vector<2x64x1xf32> -> vector<2x64x1xf32>
    %28 = vector.broadcast %27 : vector<2x64x1xf32> to vector<2x64x64xf32>
    %29 = arith.mulf %24, %28 : vector<2x64x64xf32>
    %30 = arith.truncf %29 : vector<2x64x64xf32> to vector<2x64x64xbf16>
    "tpu.trace_start"() <{level = 10 : i32, message = "glm,gmc->glc"}> : () -> ()
    %cst_18 = arith.constant dense<0.000000e+00> : vector<2x64x128xf32>
    %31 = tpu.matmul %30, %15, %cst_18 {dimension_numbers = #tpu.dot_dimension_numbers<[2], [1], [1], [2], [0, 0, 0, 1, 1, 2], [0], [0]>} : vector<2x64x64xbf16>, vector<2x64x128xbf16>, vector<2x64x128xf32> -> vector<2x64x128xf32>
    "tpu.trace_stop"() : () -> ()
    %32 = vector.shape_cast %31 : vector<2x64x128xf32> to vector<2x8x8x128xf32>
    %33 = arith.truncf %32 : vector<2x8x8x128xf32> to vector<2x8x8x128xbf16>
    %c0_19 = arith.constant 0 : index
    %c0_20 = arith.constant 0 : index
    %c0_21 = arith.constant 0 : index
    %c0_22 = arith.constant 0 : index
    %34 = vector.load %arg8[%c0_19, %c0_20, %c0_21, %c0_22] : memref<2x8x8x128xbf16, #tpu.memory_space<vmem>>, vector<2x8x8x128xbf16>
    tpu.vector_store %arg8[%c0_19, %c0_20, %c0_21, %c0_22], %33 {strides = array<i32>} : memref<2x8x8x128xbf16, #tpu.memory_space<vmem>>, vector<2x8x8x128xbf16>,
    return
  }
  func.func @transform_0(%arg0: i32, %arg1: i32, %arg2: i32) -> (i32, i32, i32, i32) {
    %c0_i32 = arith.constant 0 : i32
    %c0_i32_0 = arith.constant 0 : i32
    return %arg0, %arg1, %arg2, %c0_i32 : i32, i32, i32, i32
  }
  func.func @transform_1(%arg0: i32, %arg1: i32, %arg2: i32) -> (i32, i32, i32, i32) {
    %c0_i32 = arith.constant 0 : i32
    %c0_i32_0 = arith.constant 0 : i32
    return %arg0, %arg1, %arg2, %c0_i32 : i32, i32, i32, i32
  }
  func.func @transform_2(%arg0: i32, %arg1: i32, %arg2: i32) -> (i32, i32) {
    %c0_i32 = arith.constant 0 : i32
    %c0_i32_0 = arith.constant 0 : i32
    %c0_i32_1 = arith.constant 0 : i32
    return %c0_i32, %c0_i32_0 : i32, i32
  }
  func.func @transform_3(%arg0: i32, %arg1: i32, %arg2: i32) -> (i32, i32) {
    %c0_i32 = arith.constant 0 : i32
    %c0_i32_0 = arith.constant 0 : i32
    %c0_i32_1 = arith.constant 0 : i32
    return %c0_i32, %c0_i32_0 : i32, i32
  }
  func.func @transform_4(%arg0: i32, %arg1: i32, %arg2: i32) -> (i32, i32, i32) {
    %c2_i32 = arith.constant 2 : i32
    %0 = arith.muli %arg1, %c2_i32 : i32
    %1 = arith.addi %0, %arg2 : i32
    %c0_i32 = arith.constant 0 : i32
    %c0_i32_0 = arith.constant 0 : i32
    %c0_i32_1 = arith.constant 0 : i32
    return %1, %c0_i32, %c0_i32_0 : i32, i32, i32
  }
  func.func @transform_5(%arg0: i32, %arg1: i32, %arg2: i32) -> (i32, i32, i32, i32) {
    %c0_i32 = arith.constant 0 : i32
    %c0_i32_0 = arith.constant 0 : i32
    return %arg0, %arg1, %arg2, %c0_i32 : i32, i32, i32, i32
  }
}

module attributes {stable_mosaic.version = 11 : i64} {
  func.func @post_kernel(%arg0: i32, %arg1: memref<256x128xf32, #tpu.memory_space<vmem>>, %arg2: memref<256x128xbf16, #tpu.memory_space<vmem>>, %arg3: memref<128x128xbf16, #tpu.memory_space<vmem>>, %arg4: memref<4x128xf32, #tpu.memory_space<vmem>>, %arg5: memref<256x512xbf16, #tpu.memory_space<vmem>>, %arg6: memref<512x128xbf16, #tpu.memory_space<vmem>>, %arg7: memref<256x128xf32, #tpu.memory_space<vmem>>) attributes {dimension_semantics = [#tpu.dimension_semantics<parallel>], iteration_bounds = array<i64: 2>, scalar_prefetch = 0 : i64, scratch_operands = 0 : i64, tpu.core_type = #tpu.core_type<tc>, window_params = [{transform_indices = @transform_0, window_bounds = array<i64: 256, 128>}, {transform_indices = @transform_1, window_bounds = array<i64: 256, 128>}, {pipeline_mode = #tpu.pipeline_mode<synchronous>, transform_indices = @transform_2, window_bounds = array<i64: 128, 128>}, {pipeline_mode = #tpu.pipeline_mode<synchronous>, transform_indices = @transform_3, window_bounds = array<i64: 4, 128>}, {pipeline_mode = #tpu.pipeline_mode<synchronous>, transform_indices = @transform_4, window_bounds = array<i64: 256, 512>}, {pipeline_mode = #tpu.pipeline_mode<synchronous>, transform_indices = @transform_5, window_bounds = array<i64: 512, 128>}, {transform_indices = @transform_6, window_bounds = array<i64: 256, 128>}]} {
    %c0 = arith.constant 0 : index
    %c0_0 = arith.constant 0 : index
    %0 = vector.load %arg1[%c0, %c0_0] : memref<256x128xf32, #tpu.memory_space<vmem>>, vector<256x128xf32>
    %c0_1 = arith.constant 0 : index
    %c0_2 = arith.constant 0 : index
    %1 = vector.load %arg2[%c0_1, %c0_2] : memref<256x128xbf16, #tpu.memory_space<vmem>>, vector<256x128xbf16>
    %c0_3 = arith.constant 0 : index
    %c0_4 = arith.constant 0 : index
    %2 = vector.load %arg3[%c0_3, %c0_4] : memref<128x128xbf16, #tpu.memory_space<vmem>>, vector<128x128xbf16>
    %cst = arith.constant dense<0.000000e+00> : vector<256x128xf32>
    %3 = tpu.matmul %1, %2, %cst {dimension_numbers = #tpu.dot_dimension_numbers<[1], [0], [0], [1], [0, 0, 1, 1], [], []>} : vector<256x128xbf16>, vector<128x128xbf16>, vector<256x128xf32> -> vector<256x128xf32>
    %c0_5 = arith.constant 0 : index
    %c0_6 = arith.constant 0 : index
    %4 = vector.load %arg4[%c0_5, %c0_6] : memref<4x128xf32, #tpu.memory_space<vmem>>, vector<1x128xf32>
    %c1 = arith.constant 1 : index
    %c0_7 = arith.constant 0 : index
    %5 = vector.load %arg4[%c1, %c0_7] : memref<4x128xf32, #tpu.memory_space<vmem>>, vector<1x128xf32>
    %cst_8 = arith.constant dense<0.000000e+00> : vector<256xf32>
    %6 = vector.multi_reduction <add>, %3, %cst_8 [1] : vector<256x128xf32> to vector<256xf32>
    %7 = vector.shape_cast %6 : vector<256xf32> to vector<256x1xf32>
    %cst_9 = arith.constant 1.280000e+02 : f32
    %8 = vector.broadcast %cst_9 : f32 to vector<256x1xf32>
    %9 = arith.divf %7, %8 : vector<256x1xf32>
    %10 = vector.broadcast %9 : vector<256x1xf32> to vector<256x128xf32>
    %11 = arith.subf %3, %10 : vector<256x128xf32>
    %12 = arith.mulf %11, %11 : vector<256x128xf32>
    %cst_10 = arith.constant dense<0.000000e+00> : vector<256xf32>
    %13 = vector.multi_reduction <add>, %12, %cst_10 [1] : vector<256x128xf32> to vector<256xf32>
    %14 = vector.shape_cast %13 : vector<256xf32> to vector<256x1xf32>
    %cst_11 = arith.constant 1.280000e+02 : f32
    %15 = vector.broadcast %cst_11 : f32 to vector<256x1xf32>
    %16 = arith.divf %14, %15 : vector<256x1xf32>
    %cst_12 = arith.constant 9.99999974E-6 : f32
    %17 = vector.broadcast %cst_12 : f32 to vector<256x1xf32>
    %18 = arith.addf %16, %17 : vector<256x1xf32>
    %19 = math.rsqrt %18 : vector<256x1xf32>
    %20 = vector.broadcast %19 : vector<256x1xf32> to vector<256x128xf32>
    %21 = arith.mulf %11, %20 : vector<256x128xf32>
    %22 = vector.broadcast %4 : vector<1x128xf32> to vector<256x128xf32>
    %23 = arith.mulf %21, %22 : vector<256x128xf32>
    %24 = vector.broadcast %5 : vector<1x128xf32> to vector<256x128xf32>
    %25 = arith.addf %23, %24 : vector<256x128xf32>
    %26 = arith.truncf %0 : vector<256x128xf32> to vector<256x128xbf16>
    %27 = arith.truncf %25 : vector<256x128xf32> to vector<256x128xbf16>
    %28 = tpu.concatenate %26, %27 in 1 : vector<256x128xbf16>, vector<256x128xbf16> -> vector<256x256xbf16>
    %c0_13 = arith.constant 0 : index
    %c0_14 = arith.constant 0 : index
    %29 = vector.load %arg5[%c0_13, %c0_14] : memref<256x512xbf16, #tpu.memory_space<vmem>>, vector<256x512xbf16>
    %cst_15 = arith.constant dense<0.000000e+00> : vector<256x512xf32>
    %30 = tpu.matmul %28, %29, %cst_15 {dimension_numbers = #tpu.dot_dimension_numbers<[1], [0], [0], [1], [0, 0, 1, 1], [], []>} : vector<256x256xbf16>, vector<256x512xbf16>, vector<256x512xf32> -> vector<256x512xf32>
    %cst_16 = arith.constant 5.000000e-01 : f32
    %31 = vector.broadcast %cst_16 : f32 to vector<256x512xf32>
    %32 = arith.mulf %31, %30 : vector<256x512xf32>
    %cst_17 = arith.constant 0.707106769 : f32
    %33 = vector.broadcast %cst_17 : f32 to vector<256x512xf32>
    %34 = arith.mulf %30, %33 : vector<256x512xf32>
    %cst_18 = arith.constant 0.000000e+00 : f32
    %35 = vector.broadcast %cst_18 : f32 to vector<256x512xf32>
    %36 = arith.cmpf oge, %34, %35 : vector<256x512xf32>
    %cst_19 = arith.constant 1.000000e+00 : f32
    %cst_20 = arith.constant -1.000000e+00 : f32
    %37 = vector.broadcast %cst_19 : f32 to vector<256x512xf32>
    %38 = vector.broadcast %cst_20 : f32 to vector<256x512xf32>
    %39 = arith.select %36, %37, %38 : vector<256x512xi1>, vector<256x512xf32>
    %40 = math.absf %34 : vector<256x512xf32>
    %cst_21 = arith.constant 0.327591091 : f32
    %41 = vector.broadcast %cst_21 : f32 to vector<256x512xf32>
    %42 = arith.mulf %41, %40 : vector<256x512xf32>
    %cst_22 = arith.constant 1.000000e+00 : f32
    %43 = vector.broadcast %cst_22 : f32 to vector<256x512xf32>
    %44 = arith.addf %43, %42 : vector<256x512xf32>
    %cst_23 = arith.constant 1.000000e+00 : f32
    %45 = vector.broadcast %cst_23 : f32 to vector<256x512xf32>
    %46 = arith.divf %45, %44 : vector<256x512xf32>
    %cst_24 = arith.constant 1.06140542 : f32
    %47 = vector.broadcast %cst_24 : f32 to vector<256x512xf32>
    %48 = arith.mulf %46, %47 : vector<256x512xf32>
    %cst_25 = arith.constant -1.45315206 : f32
    %49 = vector.broadcast %cst_25 : f32 to vector<256x512xf32>
    %50 = arith.addf %49, %48 : vector<256x512xf32>
    %51 = arith.mulf %46, %50 : vector<256x512xf32>
    %cst_26 = arith.constant 1.42141378 : f32
    %52 = vector.broadcast %cst_26 : f32 to vector<256x512xf32>
    %53 = arith.addf %52, %51 : vector<256x512xf32>
    %54 = arith.mulf %46, %53 : vector<256x512xf32>
    %cst_27 = arith.constant -0.284496725 : f32
    %55 = vector.broadcast %cst_27 : f32 to vector<256x512xf32>
    %56 = arith.addf %55, %54 : vector<256x512xf32>
    %57 = arith.mulf %46, %56 : vector<256x512xf32>
    %cst_28 = arith.constant 0.254829586 : f32
    %58 = vector.broadcast %cst_28 : f32 to vector<256x512xf32>
    %59 = arith.addf %58, %57 : vector<256x512xf32>
    %60 = arith.mulf %46, %59 : vector<256x512xf32>
    %cst_29 = arith.constant 0.000000e+00 : f32
    %61 = vector.broadcast %cst_29 : f32 to vector<256x512xf32>
    %62 = arith.subf %61, %40 : vector<256x512xf32>
    %63 = arith.mulf %62, %40 : vector<256x512xf32>
    %64 = math.exp %63 : vector<256x512xf32>
    %65 = arith.mulf %60, %64 : vector<256x512xf32>
    %cst_30 = arith.constant 1.000000e+00 : f32
    %66 = vector.broadcast %cst_30 : f32 to vector<256x512xf32>
    %67 = arith.subf %66, %65 : vector<256x512xf32>
    %68 = arith.mulf %39, %67 : vector<256x512xf32>
    %cst_31 = arith.constant 1.000000e+00 : f32
    %69 = vector.broadcast %cst_31 : f32 to vector<256x512xf32>
    %70 = arith.addf %69, %68 : vector<256x512xf32>
    %71 = arith.mulf %32, %70 : vector<256x512xf32>
    %72 = arith.truncf %71 : vector<256x512xf32> to vector<256x512xbf16>
    %c0_32 = arith.constant 0 : index
    %c0_33 = arith.constant 0 : index
    %73 = vector.load %arg6[%c0_32, %c0_33] : memref<512x128xbf16, #tpu.memory_space<vmem>>, vector<512x128xbf16>
    %cst_34 = arith.constant dense<0.000000e+00> : vector<256x128xf32>
    %74 = tpu.matmul %72, %73, %cst_34 {dimension_numbers = #tpu.dot_dimension_numbers<[1], [0], [0], [1], [0, 0, 1, 1], [], []>} : vector<256x512xbf16>, vector<512x128xbf16>, vector<256x128xf32> -> vector<256x128xf32>
    %c2 = arith.constant 2 : index
    %c0_35 = arith.constant 0 : index
    %75 = vector.load %arg4[%c2, %c0_35] : memref<4x128xf32, #tpu.memory_space<vmem>>, vector<1x128xf32>
    %c3 = arith.constant 3 : index
    %c0_36 = arith.constant 0 : index
    %76 = vector.load %arg4[%c3, %c0_36] : memref<4x128xf32, #tpu.memory_space<vmem>>, vector<1x128xf32>
    %cst_37 = arith.constant dense<0.000000e+00> : vector<256xf32>
    %77 = vector.multi_reduction <add>, %74, %cst_37 [1] : vector<256x128xf32> to vector<256xf32>
    %78 = vector.shape_cast %77 : vector<256xf32> to vector<256x1xf32>
    %cst_38 = arith.constant 1.280000e+02 : f32
    %79 = vector.broadcast %cst_38 : f32 to vector<256x1xf32>
    %80 = arith.divf %78, %79 : vector<256x1xf32>
    %81 = vector.broadcast %80 : vector<256x1xf32> to vector<256x128xf32>
    %82 = arith.subf %74, %81 : vector<256x128xf32>
    %83 = arith.mulf %82, %82 : vector<256x128xf32>
    %cst_39 = arith.constant dense<0.000000e+00> : vector<256xf32>
    %84 = vector.multi_reduction <add>, %83, %cst_39 [1] : vector<256x128xf32> to vector<256xf32>
    %85 = vector.shape_cast %84 : vector<256xf32> to vector<256x1xf32>
    %cst_40 = arith.constant 1.280000e+02 : f32
    %86 = vector.broadcast %cst_40 : f32 to vector<256x1xf32>
    %87 = arith.divf %85, %86 : vector<256x1xf32>
    %cst_41 = arith.constant 9.99999974E-6 : f32
    %88 = vector.broadcast %cst_41 : f32 to vector<256x1xf32>
    %89 = arith.addf %87, %88 : vector<256x1xf32>
    %90 = math.rsqrt %89 : vector<256x1xf32>
    %91 = vector.broadcast %90 : vector<256x1xf32> to vector<256x128xf32>
    %92 = arith.mulf %82, %91 : vector<256x128xf32>
    %93 = vector.broadcast %75 : vector<1x128xf32> to vector<256x128xf32>
    %94 = arith.mulf %92, %93 : vector<256x128xf32>
    %95 = vector.broadcast %76 : vector<1x128xf32> to vector<256x128xf32>
    %96 = arith.addf %94, %95 : vector<256x128xf32>
    %97 = arith.addf %0, %96 : vector<256x128xf32>
    %c0_42 = arith.constant 0 : index
    %c0_43 = arith.constant 0 : index
    %98 = vector.load %arg7[%c0_42, %c0_43] : memref<256x128xf32, #tpu.memory_space<vmem>>, vector<256x128xf32>
    tpu.vector_store %arg7[%c0_42, %c0_43], %97 {strides = array<i32>} : memref<256x128xf32, #tpu.memory_space<vmem>>, vector<256x128xf32>,
    return
  }
  func.func @transform_0(%arg0: i32) -> (i32, i32) {
    %c0_i32 = arith.constant 0 : i32
    %c0_i32_0 = arith.constant 0 : i32
    return %arg0, %c0_i32 : i32, i32
  }
  func.func @transform_1(%arg0: i32) -> (i32, i32) {
    %c0_i32 = arith.constant 0 : i32
    %c0_i32_0 = arith.constant 0 : i32
    return %arg0, %c0_i32 : i32, i32
  }
  func.func @transform_2(%arg0: i32) -> (i32, i32) {
    %c0_i32 = arith.constant 0 : i32
    %c0_i32_0 = arith.constant 0 : i32
    %c0_i32_1 = arith.constant 0 : i32
    return %c0_i32, %c0_i32_0 : i32, i32
  }
  func.func @transform_3(%arg0: i32) -> (i32, i32) {
    %c0_i32 = arith.constant 0 : i32
    %c0_i32_0 = arith.constant 0 : i32
    %c0_i32_1 = arith.constant 0 : i32
    return %c0_i32, %c0_i32_0 : i32, i32
  }
  func.func @transform_4(%arg0: i32) -> (i32, i32) {
    %c0_i32 = arith.constant 0 : i32
    %c0_i32_0 = arith.constant 0 : i32
    %c0_i32_1 = arith.constant 0 : i32
    return %c0_i32, %c0_i32_0 : i32, i32
  }
  func.func @transform_5(%arg0: i32) -> (i32, i32) {
    %c0_i32 = arith.constant 0 : i32
    %c0_i32_0 = arith.constant 0 : i32
    %c0_i32_1 = arith.constant 0 : i32
    return %c0_i32, %c0_i32_0 : i32, i32
  }
  func.func @transform_6(%arg0: i32) -> (i32, i32) {
    %c0_i32 = arith.constant 0 : i32
    %c0_i32_0 = arith.constant 0 : i32
    return %arg0, %c0_i32 : i32, i32
  }
}

</mosaic_0001>

<llo_original>
// kernel: transformer_forward.2
$region0: #{transformer_forward.2}
  #allocation0 [shape = 'u32[]', space=smem, size = 0x4, offset = 0x4, fixed_abs, tag = 'smem constant byte address 0x4 - core index']
  #allocation1 [shape = 'u32[144,128]{1,0:T(1,128)}', space=vmem, size = 0x12000, scoped, tag = 'internal scratch']
  %s0 = inlined_call_operand.vmem [shape: bf16[2,16,16,128], index: 0, kind: input, shape index: {}]
  %s1 = inlined_call_operand.vmem [shape: bf16[2,16,16,128], index: 1, kind: input, shape index: {}]
  %s2 = inlined_call_operand.vmem [shape: bf16[128,128], index: 2, kind: input, shape index: {}]
  %s3 = inlined_call_operand.vmem [shape: bf16[128,256], index: 3, kind: input, shape index: {}]
  %s4 = inlined_call_operand.vmem [shape: f32[4,64,64], index: 4, kind: input, shape index: {}]
  %s5 = inlined_call_operand.vmem [shape: bf16[2,16,16,128], index: 5, kind: output, shape index: {}]
  %s6 = sld [smem:[#allocation0]]
  $region172: #{transformer_forward.2} parent=0
    _
  %s8 = ssub.s32 1, %s6
  %s9 = scalar_select 0, %s8, %s6
  $region1: #{transformer_forward.2} parent=0
    #allocation2 [shape = 'u8[65536]{0}', space=vmem, size = 0x10000, scoped, tag = 'input window, operand 0']
    #allocation3 [shape = 'u8[65536]{0}', space=vmem, size = 0x10000, scoped, tag = 'input window, operand 1']
    #allocation4 [shape = 'u8[65536]{0}', space=vmem, size = 0x10000, scoped, tag = 'output window, operand 0']
    loop: start=0, step=1, limit=6
    $region2: #{transformer_forward.2} parent=1 // loop_pre_header
      _
    $region3: #{transformer_forward.2} parent=1 // loop_header
      %s11 = sphi 0, %s15
      %p12 = scmp.ge.s32.totalorder %s11, 6
      %s18 = sphi 0, %s37
      %s19 = sphi 0, %s33
      %s20 = sphi 0, %s29
      %s21 = sphi 0, %s18
      %s22 = sphi 0, %s19
      %s23 = sphi 0, %s20
      %s24 = sphi 0, %s21
      %s25 = sphi 0, %s22
      %s26 = sphi 0, %s23
      %s44 = sphi 0, %s46
      %s47 = sphi 0, %s44
      %s48 = sphi 0, %s47
      %s64 = sphi 0, %s48
      %s74 = sphi 0, %s76
      %s77 = sphi 0, %s74
      %s78 = sphi 0, %s77
      %s94 = sphi 0, %s78
      %s98 = sphi 0, %s98
      %s100 = sphi 0, %s98
      %s101 = sphi 0, %s100
      %s115 = sphi 0, %s101
      %s119 = sphi 0, %s119
      %s121 = sphi 0, %s119
      %s122 = sphi 0, %s121
      %s136 = sphi 0, %s122
      %s146 = sphi 0, %s148
      %s149 = sphi 0, %s146
      %s150 = sphi 0, %s149
      %s166 = sphi 0, %s150
      %s176 = sphi 0, %s178
      %s179 = sphi 0, %s176
      %s180 = sphi 0, %s179
      %s196 = sphi 0, %s180
    $region4: #{transformer_forward.2} parent=1 // loop_header_branch
      %14 = sbr.rel (%p12) target = $region8
    $region5: #{transformer_forward.2} parent=1 // loop_body
      %s16 = ssub.s32 %s11, 1
      %s17 = ssub.s32 %s11, 2
      %s27 = sadd.s32 1, %s20
      %p28 = scmp.ge.s32.totalorder %s27, 2
      %s29 = scalar_select %p28, 0, %s27
      %s30 = sadd.s32 1, %s19
      %s31 = scalar_select %p28, %s30, %s19
      %p32 = scmp.ge.s32.totalorder %s31, 2
      %s33 = scalar_select %p32, 0, %s31
      %s34 = sadd.s32 1, %s18
      %s35 = scalar_select %p32, %s34, %s18
      %p36 = scmp.ge.s32.totalorder %s35, 1
      %s37 = scalar_select %p36, 0, %s35
      %s38 = ssub.s32 %s18, %s37
      %s39 = ssub.s32 %s19, %s33
      %s40 = sor.u32 %s38, %s39
      %s41 = ssub.s32 %s20, %s29
      %s42 = sor.u32 %s40, %s41
      %p43 = scmp.eq.s32.totalorder %s42, 0
      %s45 = sadd.s32 %s44, 1
      %s46 = scalar_select %p43, %s44, %s45
      %p49 = pneg %p43
      %p50 = scmp.eq.s32.totalorder %s11, 3
      %p51 = por %p49, %p50
      %p52 = scmp.ne.s32.totalorder %s44, %s47
      %p53 = scmp.eq.s32.totalorder %s11, 0
      %p54 = por %p52, %p53
      %p55 = scmp.ne.s32.totalorder %s44, %s47
      %p56 = scmp.eq.s32.totalorder %s16, 3
      %p57 = por %p55, %p56
      %p58 = scmp.ne.s32.totalorder %s47, %s48
      %p59 = scmp.eq.s32.totalorder %s16, 0
      %p60 = por %p58, %p59
      %p61 = scmp.ne.s32.totalorder %s47, %s48
      %p62 = scmp.eq.s32.totalorder %s17, 3
      %p63 = por %p61, %p62
      %p65 = scmp.ne.s32.totalorder %s48, %s64
      %p66 = scmp.eq.s32.totalorder %s17, 0
      %p67 = por %p65, %p66
      %s68 = ssub.s32 %s18, %s37
      %s69 = ssub.s32 %s19, %s33
      %s70 = sor.u32 %s68, %s69
      %s71 = ssub.s32 %s20, %s29
      %s72 = sor.u32 %s70, %s71
      %p73 = scmp.eq.s32.totalorder %s72, 0
      %s75 = sadd.s32 %s74, 1
      %s76 = scalar_select %p73, %s74, %s75
      %p79 = pneg %p73
      %p80 = scmp.eq.s32.totalorder %s11, 3
      %p81 = por %p79, %p80
      %p82 = scmp.ne.s32.totalorder %s74, %s77
      %p83 = scmp.eq.s32.totalorder %s11, 0
      %p84 = por %p82, %p83
      %p85 = scmp.ne.s32.totalorder %s74, %s77
      %p86 = scmp.eq.s32.totalorder %s16, 3
      %p87 = por %p85, %p86
      %p88 = scmp.ne.s32.totalorder %s77, %s78
      %p89 = scmp.eq.s32.totalorder %s16, 0
      %p90 = por %p88, %p89
      %p91 = scmp.ne.s32.totalorder %s77, %s78
      %p92 = scmp.eq.s32.totalorder %s17, 3
      %p93 = por %p91, %p92
      %p95 = scmp.ne.s32.totalorder %s78, %s94
      %p96 = scmp.eq.s32.totalorder %s17, 0
      %p97 = por %p95, %p96
      %s99 = sadd.s32 %s98, 1
      %p102 = scmp.eq.s32.totalorder %s11, 3
      %p103 = scmp.ne.s32.totalorder %s98, %s100
      %p104 = scmp.eq.s32.totalorder %s11, 0
      %p105 = por %p103, %p104
      %p106 = scmp.ne.s32.totalorder %s98, %s100
      %p107 = scmp.eq.s32.totalorder %s16, 3
      %p108 = por %p106, %p107
      %p109 = scmp.ne.s32.totalorder %s100, %s101
      %p110 = scmp.eq.s32.totalorder %s16, 0
      %p111 = por %p109, %p110
      %p112 = scmp.ne.s32.totalorder %s100, %s101
      %p113 = scmp.eq.s32.totalorder %s17, 3
      %p114 = por %p112, %p113
      %p116 = scmp.ne.s32.totalorder %s101, %s115
      %p117 = scmp.eq.s32.totalorder %s17, 0
      %p118 = por %p116, %p117
      %s120 = sadd.s32 %s119, 1
      %p123 = scmp.eq.s32.totalorder %s11, 3
      %p124 = scmp.ne.s32.totalorder %s119, %s121
      %p125 = scmp.eq.s32.totalorder %s11, 0
      %p126 = por %p124, %p125
      %p127 = scmp.ne.s32.totalorder %s119, %s121
      %p128 = scmp.eq.s32.totalorder %s16, 3
      %p129 = por %p127, %p128
      %p130 = scmp.ne.s32.totalorder %s121, %s122
      %p131 = scmp.eq.s32.totalorder %s16, 0
      %p132 = por %p130, %p131
      %p133 = scmp.ne.s32.totalorder %s121, %s122
      %p134 = scmp.eq.s32.totalorder %s17, 3
      %p135 = por %p133, %p134
      %p137 = scmp.ne.s32.totalorder %s122, %s136
      %p138 = scmp.eq.s32.totalorder %s17, 0
      %p139 = por %p137, %p138
      %s140 = smul.u32 %s19, 2
      %s141 = sadd.s32 %s140, %s20
      %s142 = smul.u32 %s33, 2
      %s143 = sadd.s32 %s142, %s29
      %s144 = ssub.s32 %s141, %s143
      %p145 = scmp.eq.s32.totalorder %s144, 0
      %s147 = sadd.s32 %s146, 1
      %s148 = scalar_select %p145, %s146, %s147
      %p151 = pneg %p145
      %p152 = scmp.eq.s32.totalorder %s11, 3
      %p153 = por %p151, %p152
      %p154 = scmp.ne.s32.totalorder %s146, %s149
      %p155 = scmp.eq.s32.totalorder %s11, 0
      %p156 = por %p154, %p155
      %p157 = scmp.ne.s32.totalorder %s146, %s149
      %p158 = scmp.eq.s32.totalorder %s16, 3
      %p159 = por %p157, %p158
      %p160 = scmp.ne.s32.totalorder %s149, %s150
      %p161 = scmp.eq.s32.totalorder %s16, 0
      %p162 = por %p160, %p161
      %p163 = scmp.ne.s32.totalorder %s149, %s150
      %p164 = scmp.eq.s32.totalorder %s17, 3
      %p165 = por %p163, %p164
      %p167 = scmp.ne.s32.totalorder %s150, %s166
      %p168 = scmp.eq.s32.totalorder %s17, 0
      %p169 = por %p167, %p168
      %s170 = ssub.s32 %s18, %s37
      %s171 = ssub.s32 %s19, %s33
      %s172 = sor.u32 %s170, %s171
      %s173 = ssub.s32 %s20, %s29
      %s174 = sor.u32 %s172, %s173
      %p175 = scmp.eq.s32.totalorder %s174, 0
      %s177 = sadd.s32 %s176, 1
      %s178 = scalar_select %p175, %s176, %s177
      %p181 = pneg %p175
      %p182 = scmp.eq.s32.totalorder %s11, 3
      %p183 = por %p181, %p182
      %p184 = scmp.ne.s32.totalorder %s176, %s179
      %p185 = scmp.eq.s32.totalorder %s11, 0
      %p186 = por %p184, %p185
      %p187 = scmp.ne.s32.totalorder %s176, %s179
      %p188 = scmp.eq.s32.totalorder %s16, 3
      %p189 = por %p187, %p188
      %p190 = scmp.ne.s32.totalorder %s179, %s180
      %p191 = scmp.eq.s32.totalorder %s16, 0
      %p192 = por %p190, %p191
      %p193 = scmp.ne.s32.totalorder %s179, %s180
      %p194 = scmp.eq.s32.totalorder %s17, 3
      %p195 = por %p193, %p194
      %p197 = scmp.ne.s32.totalorder %s180, %s196
      %p198 = scmp.eq.s32.totalorder %s17, 0
      %p199 = por %p197, %p198
      %p200 = scmp.le.s32.totalorder 1, %s11
      %p201 = scmp.lt.s32.totalorder %s11, 5
      %p202 = pnand %p200, %p201
      %p203 = pneg %p202
      // Predicated region
      $region9: #{transformer_forward.2} parent=5 // pred_check
        _
      $region10: #{transformer_forward.2} parent=5 // pred_check_branch
        %205 = sbr.rel (%p202) target = $region12
      $region11: #{transformer_forward.2} parent=5 // pred_region
        %s206 = ssub.s32 %s11, 1
        // Predicated region
        $region13: #{transformer_forward.2} parent=11 // pred_check
          %p207 = pneg %p111
        $region14: #{transformer_forward.2} parent=11 // pred_check_branch
          %209 = sbr.rel (%p207) target = $region16
        $region15: #{transformer_forward.2} parent=11 // pred_region
          _
        $region16: #{transformer_forward.2} parent=11 // pred_fallthru
          _
        // Predicated region
        $region17: #{transformer_forward.2} parent=11 // pred_check
          %p210 = pneg %p132
        $region18: #{transformer_forward.2} parent=11 // pred_check_branch
          %212 = sbr.rel (%p210) target = $region20
        $region19: #{transformer_forward.2} parent=11 // pred_region
          _
        $region20: #{transformer_forward.2} parent=11 // pred_fallthru
          _
      $region12: #{transformer_forward.2} parent=5 // pred_fallthru
        _
      %p213 = scmp.lt.s32.totalorder %s11, 4
      // Predicated region
      $region21: #{transformer_forward.2} parent=5 // pred_check
        %p214 = pneg %p213
      $region22: #{transformer_forward.2} parent=5 // pred_check_branch
        %216 = sbr.rel (%p214) target = $region24
      $region23: #{transformer_forward.2} parent=5 // pred_region
        // Predicated region
        $region25: #{transformer_forward.2} parent=23 // pred_check
          %p217 = pneg %p54
        $region26: #{transformer_forward.2} parent=23 // pred_check_branch
          %219 = sbr.rel (%p217) target = $region28
        $region27: #{transformer_forward.2} parent=23 // pred_region
          %s220 = sand.u32 %s44, 1
          %s221 = sand.u32 %s44, 1
          %s222 = smul.addr %s221, 64
          %s223 = scalar_lea.vmem [#allocation2], %s222
          %s224 = smul.u32 2, %s18
          %s225 = smul.u32 8, %s19
          %s226 = smul.addr %s225, 2
          %s227 = sadd.s32 %s20, %s226
          %s228 = smul.addr %s224, 32
          %s229 = sadd.s32 %s227, %s228
          %s230 = smul.addr %s229, 4
          %s231 = scalar_lea.vmem %s0, %s230
          // Predicated region
          $region29: #{transformer_forward.2} parent=27 // pred_check
            _
          $region30: #{transformer_forward.2} parent=27 // pred_check_branch
            %233 = sbr.rel (0) target = $region32
          $region31: #{transformer_forward.2} parent=27 // pred_region
            // Predicated region
            $region33: #{transformer_forward.2} parent=31 // pred_check
              _
            $region34: #{transformer_forward.2} parent=31 // pred_check_branch
              %235 = sbr.rel target = $region36
            $region35: #{transformer_forward.2} parent=31 // pred_region
              // Predicated region
              $region48: #{transformer_forward.2} parent=35 // pred_check
                _
              $region49: #{transformer_forward.2} parent=35 // pred_check_branch
                %281 = sbr.rel (0) target = $region51
              $region50: #{transformer_forward.2} parent=35 // pred_region
                loop: start=0, step=1, limit=1
                $region52: #{transformer_forward.2} parent=50 // loop_pre_header
                  _
                $region53: #{transformer_forward.2} parent=50 // loop_header
                  %s283 = sphi 0, %s287
                  %p284 = scmp.ge.s32.totalorder %s283, 1
                  %s288 = sphi %s231, %s231
                  %s289 = sphi %s223, %s223
                $region54: #{transformer_forward.2} parent=50 // loop_header_branch
                  %286 = sbr.rel (%p284) target = $region58
                $region55: #{transformer_forward.2} parent=50 // loop_body
                  _
                $region56: #{transformer_forward.2} parent=50 // loop_footer
                  %s287 = sadd.s32 1, %s283
                $region57: #{transformer_forward.2} parent=50 // loop_footer_branch
                  %282 = sbr.rel target = $region53
                $region58: #{transformer_forward.2} parent=50 // loop_exit
                  _
                %s291 = ssub.s32 16, 1
                loop: start=0, step=1, limit=1
                $region59: #{transformer_forward.2} parent=50 // loop_pre_header
                  _
                $region60: #{transformer_forward.2} parent=50 // loop_header
                  %s293 = sphi 0, %s297
                  %p294 = scmp.ge.s32.totalorder %s293, 1
                  %s298 = sphi %s231, %s231
                  %s299 = sphi %s223, %s223
                $region61: #{transformer_forward.2} parent=50 // loop_header_branch
                  %296 = sbr.rel (%p294) target = $region65
                $region62: #{transformer_forward.2} parent=50 // loop_body
                  %v300 = vld [vmem:[%s298] sm:%s291]
                  %301 = vst [vmem:[%s299] sm:%s291] %v300
                  %v302 = vld [vmem:[%s298 + $0x8] sm:%s291]
                  %303 = vst [vmem:[%s299 + $0x4] sm:%s291] %v302
                  %v304 = vld [vmem:[%s298 + $0x10] sm:%s291]
                  %305 = vst [vmem:[%s299 + $0x8] sm:%s291] %v304
                  %v306 = vld [vmem:[%s298 + $0x18] sm:%s291]
                  %307 = vst [vmem:[%s299 + $0xc] sm:%s291] %v306
                  %v308 = vld [vmem:[%s298 + $0x20] sm:%s291]
                  %309 = vst [vmem:[%s299 + $0x10] sm:%s291] %v308
                  %v310 = vld [vmem:[%s298 + $0x28] sm:%s291]
                  %311 = vst [vmem:[%s299 + $0x14] sm:%s291] %v310
                  %v312 = vld [vmem:[%s298 + $0x30] sm:%s291]
                  %313 = vst [vmem:[%s299 + $0x18] sm:%s291] %v312
                  %v314 = vld [vmem:[%s298 + $0x38] sm:%s291]
                  %315 = vst [vmem:[%s299 + $0x1c] sm:%s291] %v314
                  %v316 = vld [vmem:[%s298 + $0x80] sm:%s291]
                  %317 = vst [vmem:[%s299 + $0x20] sm:%s291] %v316
                  %v318 = vld [vmem:[%s298 + $0x88] sm:%s291]
                  %319 = vst [vmem:[%s299 + $0x24] sm:%s291] %v318
                  %v320 = vld [vmem:[%s298 + $0x90] sm:%s291]
                  %321 = vst [vmem:[%s299 + $0x28] sm:%s291] %v320
                  %v322 = vld [vmem:[%s298 + $0x98] sm:%s291]
                  %323 = vst [vmem:[%s299 + $0x2c] sm:%s291] %v322
                  %v324 = vld [vmem:[%s298 + $0xa0] sm:%s291]
                  %325 = vst [vmem:[%s299 + $0x30] sm:%s291] %v324
                  %v326 = vld [vmem:[%s298 + $0xa8] sm:%s291]
                  %327 = vst [vmem:[%s299 + $0x34] sm:%s291] %v326
                  %v328 = vld [vmem:[%s298 + $0xb0] sm:%s291]
                  %329 = vst [vmem:[%s299 + $0x38] sm:%s291] %v328
                  %v330 = vld [vmem:[%s298 + $0xb8] sm:%s291]
                  %331 = vst [vmem:[%s299 + $0x3c] sm:%s291] %v330
                $region63: #{transformer_forward.2} parent=50 // loop_footer
                  %s297 = sadd.s32 1, %s293
                $region64: #{transformer_forward.2} parent=50 // loop_footer_branch
                  %292 = sbr.rel target = $region60
                $region65: #{transformer_forward.2} parent=50 // loop_exit
                  _
              $region51: #{transformer_forward.2} parent=35 // pred_fallthru
                _
            $region36: #{transformer_forward.2} parent=31 // pred_fallthru
              _
            // Predicated region
            $region37: #{transformer_forward.2} parent=31 // pred_check
              _
            $region38: #{transformer_forward.2} parent=31 // pred_check_branch
              %237 = sbr.rel (0) target = $region40
            $region39: #{transformer_forward.2} parent=31 // pred_region
              %s239 = ssub.s32 16, 1
              loop: start=0, step=1, limit=1
              $region41: #{transformer_forward.2} parent=39 // loop_pre_header
                _
              $region42: #{transformer_forward.2} parent=39 // loop_header
                %s241 = sphi 0, %s245
                %p242 = scmp.ge.s32.totalorder %s241, 1
                %s246 = sphi %s231, %s231
                %s247 = sphi %s223, %s223
              $region43: #{transformer_forward.2} parent=39 // loop_header_branch
                %244 = sbr.rel (%p242) target = $region47
              $region44: #{transformer_forward.2} parent=39 // loop_body
                %v248 = vld [vmem:[%s246] sm:%s239]
                %249 = vst [vmem:[%s247] sm:%s239] %v248
                %v250 = vld [vmem:[%s246 + $0x8] sm:%s239]
                %251 = vst [vmem:[%s247 + $0x4] sm:%s239] %v250
                %v252 = vld [vmem:[%s246 + $0x10] sm:%s239]
                %253 = vst [vmem:[%s247 + $0x8] sm:%s239] %v252
                %v254 = vld [vmem:[%s246 + $0x18] sm:%s239]
                %255 = vst [vmem:[%s247 + $0xc] sm:%s239] %v254
                %v256 = vld [vmem:[%s246 + $0x20] sm:%s239]
                %257 = vst [vmem:[%s247 + $0x10] sm:%s239] %v256
                %v258 = vld [vmem:[%s246 + $0x28] sm:%s239]
                %259 = vst [vmem:[%s247 + $0x14] sm:%s239] %v258
                %v260 = vld [vmem:[%s246 + $0x30] sm:%s239]
                %261 = vst [vmem:[%s247 + $0x18] sm:%s239] %v260
                %v262 = vld [vmem:[%s246 + $0x38] sm:%s239]
                %263 = vst [vmem:[%s247 + $0x1c] sm:%s239] %v262
                %v264 = vld [vmem:[%s246 + $0x80] sm:%s239]
                %265 = vst [vmem:[%s247 + $0x20] sm:%s239] %v264
                %v266 = vld [vmem:[%s246 + $0x88] sm:%s239]
                %267 = vst [vmem:[%s247 + $0x24] sm:%s239] %v266
                %v268 = vld [vmem:[%s246 + $0x90] sm:%s239]
                %269 = vst [vmem:[%s247 + $0x28] sm:%s239] %v268
                %v270 = vld [vmem:[%s246 + $0x98] sm:%s239]
                %271 = vst [vmem:[%s247 + $0x2c] sm:%s239] %v270
                %v272 = vld [vmem:[%s246 + $0xa0] sm:%s239]
                %273 = vst [vmem:[%s247 + $0x30] sm:%s239] %v272
                %v274 = vld [vmem:[%s246 + $0xa8] sm:%s239]
                %275 = vst [vmem:[%s247 + $0x34] sm:%s239] %v274
                %v276 = vld [vmem:[%s246 + $0xb0] sm:%s239]
                %277 = vst [vmem:[%s247 + $0x38] sm:%s239] %v276
                %v278 = vld [vmem:[%s246 + $0xb8] sm:%s239]
                %279 = vst [vmem:[%s247 + $0x3c] sm:%s239] %v278
              $region45: #{transformer_forward.2} parent=39 // loop_footer
                %s245 = sadd.s32 1, %s241
              $region46: #{transformer_forward.2} parent=39 // loop_footer_branch
                %240 = sbr.rel target = $region42
              $region47: #{transformer_forward.2} parent=39 // loop_exit
                _
            $region40: #{transformer_forward.2} parent=31 // pred_fallthru
              _
          $region32: #{transformer_forward.2} parent=27 // pred_fallthru
            _
          %332 = vnop
        $region28: #{transformer_forward.2} parent=23 // pred_fallthru
          _
        // Predicated region
        $region66: #{transformer_forward.2} parent=23 // pred_check
          %p333 = pneg %p84
        $region67: #{transformer_forward.2} parent=23 // pred_check_branch
          %335 = sbr.rel (%p333) target = $region69
        $region68: #{transformer_forward.2} parent=23 // pred_region
          %s336 = sand.u32 %s74, 1
          %s337 = sand.u32 %s74, 1
          %s338 = smul.addr %s337, 64
          %s339 = scalar_lea.vmem [#allocation3], %s338
          %s340 = smul.u32 2, %s18
          %s341 = smul.u32 8, %s19
          %s342 = smul.addr %s341, 2
          %s343 = sadd.s32 %s20, %s342
          %s344 = smul.addr %s340, 32
          %s345 = sadd.s32 %s343, %s344
          %s346 = smul.addr %s345, 4
          %s347 = scalar_lea.vmem %s1, %s346
          // Predicated region
          $region70: #{transformer_forward.2} parent=68 // pred_check
            _
          $region71: #{transformer_forward.2} parent=68 // pred_check_branch
            %349 = sbr.rel (0) target = $region73
          $region72: #{transformer_forward.2} parent=68 // pred_region
            // Predicated region
            $region74: #{transformer_forward.2} parent=72 // pred_check
              _
            $region75: #{transformer_forward.2} parent=72 // pred_check_branch
              %351 = sbr.rel target = $region77
            $region76: #{transformer_forward.2} parent=72 // pred_region
              // Predicated region
              $region89: #{transformer_forward.2} parent=76 // pred_check
                _
              $region90: #{transformer_forward.2} parent=76 // pred_check_branch
                %397 = sbr.rel (0) target = $region92
              $region91: #{transformer_forward.2} parent=76 // pred_region
                loop: start=0, step=1, limit=1
                $region93: #{transformer_forward.2} parent=91 // loop_pre_header
                  _
                $region94: #{transformer_forward.2} parent=91 // loop_header
                  %s399 = sphi 0, %s403
                  %p400 = scmp.ge.s32.totalorder %s399, 1
                  %s404 = sphi %s347, %s347
                  %s405 = sphi %s339, %s339
                $region95: #{transformer_forward.2} parent=91 // loop_header_branch
                  %402 = sbr.rel (%p400) target = $region99
                $region96: #{transformer_forward.2} parent=91 // loop_body
                  _
                $region97: #{transformer_forward.2} parent=91 // loop_footer
                  %s403 = sadd.s32 1, %s399
                $region98: #{transformer_forward.2} parent=91 // loop_footer_branch
                  %398 = sbr.rel target = $region94
                $region99: #{transformer_forward.2} parent=91 // loop_exit
                  _
                %s407 = ssub.s32 16, 1
                loop: start=0, step=1, limit=1
                $region100: #{transformer_forward.2} parent=91 // loop_pre_header
                  _
                $region101: #{transformer_forward.2} parent=91 // loop_header
                  %s409 = sphi 0, %s413
                  %p410 = scmp.ge.s32.totalorder %s409, 1
                  %s414 = sphi %s347, %s347
                  %s415 = sphi %s339, %s339
                $region102: #{transformer_forward.2} parent=91 // loop_header_branch
                  %412 = sbr.rel (%p410) target = $region106
                $region103: #{transformer_forward.2} parent=91 // loop_body
                  %v416 = vld [vmem:[%s414] sm:%s407]
                  %417 = vst [vmem:[%s415] sm:%s407] %v416
                  %v418 = vld [vmem:[%s414 + $0x8] sm:%s407]
                  %419 = vst [vmem:[%s415 + $0x4] sm:%s407] %v418
                  %v420 = vld [vmem:[%s414 + $0x10] sm:%s407]
                  %421 = vst [vmem:[%s415 + $0x8] sm:%s407] %v420
                  %v422 = vld [vmem:[%s414 + $0x18] sm:%s407]
                  %423 = vst [vmem:[%s415 + $0xc] sm:%s407] %v422
                  %v424 = vld [vmem:[%s414 + $0x20] sm:%s407]
                  %425 = vst [vmem:[%s415 + $0x10] sm:%s407] %v424
                  %v426 = vld [vmem:[%s414 + $0x28] sm:%s407]
                  %427 = vst [vmem:[%s415 + $0x14] sm:%s407] %v426
                  %v428 = vld [vmem:[%s414 + $0x30] sm:%s407]
                  %429 = vst [vmem:[%s415 + $0x18] sm:%s407] %v428
                  %v430 = vld [vmem:[%s414 + $0x38] sm:%s407]
                  %431 = vst [vmem:[%s415 + $0x1c] sm:%s407] %v430
                  %v432 = vld [vmem:[%s414 + $0x80] sm:%s407]
                  %433 = vst [vmem:[%s415 + $0x20] sm:%s407] %v432
                  %v434 = vld [vmem:[%s414 + $0x88] sm:%s407]
                  %435 = vst [vmem:[%s415 + $0x24] sm:%s407] %v434
                  %v436 = vld [vmem:[%s414 + $0x90] sm:%s407]
                  %437 = vst [vmem:[%s415 + $0x28] sm:%s407] %v436
                  %v438 = vld [vmem:[%s414 + $0x98] sm:%s407]
                  %439 = vst [vmem:[%s415 + $0x2c] sm:%s407] %v438
                  %v440 = vld [vmem:[%s414 + $0xa0] sm:%s407]
                  %441 = vst [vmem:[%s415 + $0x30] sm:%s407] %v440
                  %v442 = vld [vmem:[%s414 + $0xa8] sm:%s407]
                  %443 = vst [vmem:[%s415 + $0x34] sm:%s407] %v442
                  %v444 = vld [vmem:[%s414 + $0xb0] sm:%s407]
                  %445 = vst [vmem:[%s415 + $0x38] sm:%s407] %v444
                  %v446 = vld [vmem:[%s414 + $0xb8] sm:%s407]
                  %447 = vst [vmem:[%s415 + $0x3c] sm:%s407] %v446
                $region104: #{transformer_forward.2} parent=91 // loop_footer
                  %s413 = sadd.s32 1, %s409
                $region105: #{transformer_forward.2} parent=91 // loop_footer_branch
                  %408 = sbr.rel target = $region101
                $region106: #{transformer_forward.2} parent=91 // loop_exit
                  _
              $region92: #{transformer_forward.2} parent=76 // pred_fallthru
                _
            $region77: #{transformer_forward.2} parent=72 // pred_fallthru
              _
            // Predicated region
            $region78: #{transformer_forward.2} parent=72 // pred_check
              _
            $region79: #{transformer_forward.2} parent=72 // pred_check_branch
              %353 = sbr.rel (0) target = $region81
            $region80: #{transformer_forward.2} parent=72 // pred_region
              %s355 = ssub.s32 16, 1
              loop: start=0, step=1, limit=1
              $region82: #{transformer_forward.2} parent=80 // loop_pre_header
                _
              $region83: #{transformer_forward.2} parent=80 // loop_header
                %s357 = sphi 0, %s361
                %p358 = scmp.ge.s32.totalorder %s357, 1
                %s362 = sphi %s347, %s347
                %s363 = sphi %s339, %s339
              $region84: #{transformer_forward.2} parent=80 // loop_header_branch
                %360 = sbr.rel (%p358) target = $region88
              $region85: #{transformer_forward.2} parent=80 // loop_body
                %v364 = vld [vmem:[%s362] sm:%s355]
                %365 = vst [vmem:[%s363] sm:%s355] %v364
                %v366 = vld [vmem:[%s362 + $0x8] sm:%s355]
                %367 = vst [vmem:[%s363 + $0x4] sm:%s355] %v366
                %v368 = vld [vmem:[%s362 + $0x10] sm:%s355]
                %369 = vst [vmem:[%s363 + $0x8] sm:%s355] %v368
                %v370 = vld [vmem:[%s362 + $0x18] sm:%s355]
                %371 = vst [vmem:[%s363 + $0xc] sm:%s355] %v370
                %v372 = vld [vmem:[%s362 + $0x20] sm:%s355]
                %373 = vst [vmem:[%s363 + $0x10] sm:%s355] %v372
                %v374 = vld [vmem:[%s362 + $0x28] sm:%s355]
                %375 = vst [vmem:[%s363 + $0x14] sm:%s355] %v374
                %v376 = vld [vmem:[%s362 + $0x30] sm:%s355]
                %377 = vst [vmem:[%s363 + $0x18] sm:%s355] %v376
                %v378 = vld [vmem:[%s362 + $0x38] sm:%s355]
                %379 = vst [vmem:[%s363 + $0x1c] sm:%s355] %v378
                %v380 = vld [vmem:[%s362 + $0x80] sm:%s355]
                %381 = vst [vmem:[%s363 + $0x20] sm:%s355] %v380
                %v382 = vld [vmem:[%s362 + $0x88] sm:%s355]
                %383 = vst [vmem:[%s363 + $0x24] sm:%s355] %v382
                %v384 = vld [vmem:[%s362 + $0x90] sm:%s355]
                %385 = vst [vmem:[%s363 + $0x28] sm:%s355] %v384
                %v386 = vld [vmem:[%s362 + $0x98] sm:%s355]
                %387 = vst [vmem:[%s363 + $0x2c] sm:%s355] %v386
                %v388 = vld [vmem:[%s362 + $0xa0] sm:%s355]
                %389 = vst [vmem:[%s363 + $0x30] sm:%s355] %v388
                %v390 = vld [vmem:[%s362 + $0xa8] sm:%s355]
                %391 = vst [vmem:[%s363 + $0x34] sm:%s355] %v390
                %v392 = vld [vmem:[%s362 + $0xb0] sm:%s355]
                %393 = vst [vmem:[%s363 + $0x38] sm:%s355] %v392
                %v394 = vld [vmem:[%s362 + $0xb8] sm:%s355]
                %395 = vst [vmem:[%s363 + $0x3c] sm:%s355] %v394
              $region86: #{transformer_forward.2} parent=80 // loop_footer
                %s361 = sadd.s32 1, %s357
              $region87: #{transformer_forward.2} parent=80 // loop_footer_branch
                %356 = sbr.rel target = $region83
              $region88: #{transformer_forward.2} parent=80 // loop_exit
                _
            $region81: #{transformer_forward.2} parent=72 // pred_fallthru
              _
          $region73: #{transformer_forward.2} parent=68 // pred_fallthru
            _
          %448 = vnop
        $region69: #{transformer_forward.2} parent=23 // pred_fallthru
          _
        // Predicated region
        $region107: #{transformer_forward.2} parent=23 // pred_check
          %p449 = pneg %p156
        $region108: #{transformer_forward.2} parent=23 // pred_check_branch
          %451 = sbr.rel (%p449) target = $region110
        $region109: #{transformer_forward.2} parent=23 // pred_region
          %s452 = smul.u32 %s19, 2
          %s453 = sadd.s32 %s452, %s20
          %p454 = scmp.lt.s32.totalorder %s453, 3
          %s455 = scalar_select %p454, %s453, 3
          %s456 = smul.addr %s455, 8
          %s457 = smul.addr %s456, 8
          %s458 = scalar_lea.vmem %s4, %s457
          %s459 = smul.u32 %s19, 2
          %s460 = sadd.s32 %s459, %s20
        $region110: #{transformer_forward.2} parent=23 // pred_fallthru
          _
      $region24: #{transformer_forward.2} parent=5 // pred_fallthru
        _
      %p461 = scmp.le.s32.totalorder 1, %s11
      %p462 = scmp.lt.s32.totalorder %s11, 5
      %p463 = pnand %p461, %p462
      %p464 = pneg %p463
      // Predicated region
      $region111: #{transformer_forward.2} parent=5 // pred_check
        _
      $region112: #{transformer_forward.2} parent=5 // pred_check_branch
        %466 = sbr.rel (%p463) target = $region114
      $region113: #{transformer_forward.2} parent=5 // pred_region
        %s467 = ssub.s32 %s11, 1
        %s468 = sand.u32 %s47, 1
        %s469 = sand.u32 %s47, 1
        %s470 = smul.addr %s469, 64
        %s471 = scalar_lea.vmem [#allocation2], %s470
        // Predicated region
        $region115: #{transformer_forward.2} parent=113 // pred_check
          %p472 = pneg %p60
        $region116: #{transformer_forward.2} parent=113 // pred_check_branch
          %474 = sbr.rel (%p472) target = $region118
        $region117: #{transformer_forward.2} parent=113 // pred_region
          _
        $region118: #{transformer_forward.2} parent=113 // pred_fallthru
          _
        %s475 = sand.u32 %s77, 1
        %s476 = sand.u32 %s77, 1
        %s477 = smul.addr %s476, 64
        %s478 = scalar_lea.vmem [#allocation3], %s477
        // Predicated region
        $region119: #{transformer_forward.2} parent=113 // pred_check
          %p479 = pneg %p90
        $region120: #{transformer_forward.2} parent=113 // pred_check_branch
          %481 = sbr.rel (%p479) target = $region122
        $region121: #{transformer_forward.2} parent=113 // pred_region
          _
        $region122: #{transformer_forward.2} parent=113 // pred_fallthru
          _
        %s482 = sand.u32 %s47, 1
        %s483 = sand.u32 %s47, 1
        %s484 = smul.addr %s483, 64
        %s485 = scalar_lea.vmem [#allocation2], %s484
        %p486 = pneg %p60
        %p487 = pneg %p57
        %s488 = sand.u32 %s77, 1
        %s489 = sand.u32 %s77, 1
        %s490 = smul.addr %s489, 64
        %s491 = scalar_lea.vmem [#allocation3], %s490
        %p492 = pneg %p90
        %p493 = pneg %p87
        %p494 = pneg %p111
        %p495 = pneg %p108
        %p496 = pneg %p132
        %p497 = pneg %p129
        %s498 = smul.u32 %s22, 2
        %s499 = sadd.s32 %s498, %s23
        %p500 = scmp.lt.s32.totalorder %s499, 3
        %s501 = scalar_select %p500, %s499, 3
        %s502 = smul.addr %s501, 8
        %s503 = smul.addr %s502, 8
        %s504 = scalar_lea.vmem %s4, %s503
        %p505 = pneg %p162
        %p506 = pneg %p159
        %p507 = pneg %p192
        %p508 = pneg %p189
        %s509 = sand.u32 %s179, 1
        %s510 = sand.u32 %s179, 1
        %s511 = smul.addr %s510, 64
        %s512 = scalar_lea.vmem [#allocation4], %s511
        %s513 = smul.u32 2, %s21
        %s514 = smul.u32 8, %s22
        %s515 = smul.u32 2, %s21
        %s516 = smul.u32 8, %s22
        %s517 = smul.u32 %s22, 2
        %s518 = sadd.s32 %s517, %s23
        %p519 = scmp.lt.s32.totalorder %s518, 3
        %s520 = scalar_select %p519, %s518, 3
        %s521 = smul.addr %s520, 8
        %s522 = smul.addr %s521, 8
        %s523 = scalar_lea.vmem %s4, %s522
        %s524 = smul.u32 %s22, 2
        %s525 = sadd.s32 %s524, %s23
        %s526 = smul.u32 2, %s21
        %s527 = smul.u32 8, %s22
        %v529 = vld [vmem:[%s471] sm:$0xf]
        %v530 = vld [vmem:[%s471 + $0x4] sm:$0xf]
        %v531 = vld [vmem:[%s471 + $0x8] sm:$0xf]
        %v532 = vld [vmem:[%s471 + $0xc] sm:$0xf]
        %v533 = vld [vmem:[%s471 + $0x10] sm:$0xf]
        %v534 = vld [vmem:[%s471 + $0x14] sm:$0xf]
        %v535 = vld [vmem:[%s471 + $0x18] sm:$0xf]
        %v536 = vld [vmem:[%s471 + $0x1c] sm:$0xf]
        %v537 = vld [vmem:[%s471 + $0x20] sm:$0xf]
        %v538 = vld [vmem:[%s471 + $0x24] sm:$0xf]
        %v539 = vld [vmem:[%s471 + $0x28] sm:$0xf]
        %v540 = vld [vmem:[%s471 + $0x2c] sm:$0xf]
        %v541 = vld [vmem:[%s471 + $0x30] sm:$0xf]
        %v542 = vld [vmem:[%s471 + $0x34] sm:$0xf]
        %v543 = vld [vmem:[%s471 + $0x38] sm:$0xf]
        %v544 = vld [vmem:[%s471 + $0x3c] sm:$0xf]
        %v545 = vld [vmem:[%s478] sm:$0xf]
        %v546 = vld [vmem:[%s478 + $0x4] sm:$0xf]
        %v547 = vld [vmem:[%s478 + $0x8] sm:$0xf]
        %v548 = vld [vmem:[%s478 + $0xc] sm:$0xf]
        %v549 = vld [vmem:[%s478 + $0x10] sm:$0xf]
        %v550 = vld [vmem:[%s478 + $0x14] sm:$0xf]
        %v551 = vld [vmem:[%s478 + $0x18] sm:$0xf]
        %v552 = vld [vmem:[%s478 + $0x1c] sm:$0xf]
        %v553 = vld [vmem:[%s478 + $0x20] sm:$0xf]
        %v554 = vld [vmem:[%s478 + $0x24] sm:$0xf]
        %v555 = vld [vmem:[%s478 + $0x28] sm:$0xf]
        %v556 = vld [vmem:[%s478 + $0x2c] sm:$0xf]
        %v557 = vld [vmem:[%s478 + $0x30] sm:$0xf]
        %v558 = vld [vmem:[%s478 + $0x34] sm:$0xf]
        %v559 = vld [vmem:[%s478 + $0x38] sm:$0xf]
        %v560 = vld [vmem:[%s478 + $0x3c] sm:$0xf]
        %v561 = vld [vmem:[%s2] sm:$0xf]
        %v562 = vld [vmem:[%s2 + $0x4] sm:$0xf]
        %v563 = vld [vmem:[%s2 + $0x8] sm:$0xf]
        %v564 = vld [vmem:[%s2 + $0xc] sm:$0xf]
        %v565 = vld [vmem:[%s2 + $0x10] sm:$0xf]
        %v566 = vld [vmem:[%s2 + $0x14] sm:$0xf]
        %v567 = vld [vmem:[%s2 + $0x18] sm:$0xf]
        %v568 = vld [vmem:[%s2 + $0x1c] sm:$0xf]
        %v569 = vld [vmem:[%s2 + $0x20] sm:$0xf]
        %v570 = vld [vmem:[%s2 + $0x24] sm:$0xf]
        %v571 = vld [vmem:[%s2 + $0x28] sm:$0xf]
        %v572 = vld [vmem:[%s2 + $0x2c] sm:$0xf]
        %v573 = vld [vmem:[%s2 + $0x30] sm:$0xf]
        %v574 = vld [vmem:[%s2 + $0x34] sm:$0xf]
        %v575 = vld [vmem:[%s2 + $0x38] sm:$0xf]
        %v576 = vld [vmem:[%s2 + $0x3c] sm:$0xf]
        %v593 = vunpack.c.l.b16 %v529
        %v594 = vunpack.c.l.b16 %v530
        %v595 = vunpack.c.l.b16 %v531
        %v596 = vunpack.c.l.b16 %v532
        %v597 = vunpack.c.l.b16 %v533
        %v598 = vunpack.c.l.b16 %v534
        %v599 = vunpack.c.l.b16 %v535
        %v600 = vunpack.c.l.b16 %v536
        %v601 = vunpack.c.l.b16 %v537
        %v602 = vunpack.c.l.b16 %v538
        %v603 = vunpack.c.l.b16 %v539
        %v604 = vunpack.c.l.b16 %v540
        %v605 = vunpack.c.l.b16 %v541
        %v606 = vunpack.c.l.b16 %v542
        %v607 = vunpack.c.l.b16 %v543
        %v608 = vunpack.c.l.b16 %v544
        %v609 = vpack.c.b16 %v594, %v593
        %v610 = vpack.c.b16 %v596, %v595
        %v611 = vpack.c.b16 %v598, %v597
        %v612 = vpack.c.b16 %v600, %v599
        %v613 = vpack.c.b16 %v602, %v601
        %v614 = vpack.c.b16 %v604, %v603
        %v615 = vpack.c.b16 %v606, %v605
        %v616 = vpack.c.b16 %v608, %v607
        %v641 = vunpack.c.l.b16 %v561
        %v642 = vunpack.c.l.b16 %v562
        %v643 = vunpack.c.l.b16 %v563
        %v644 = vunpack.c.l.b16 %v564
        %v645 = vunpack.c.l.b16 %v565
        %v646 = vunpack.c.l.b16 %v566
        %v647 = vunpack.c.l.b16 %v567
        %v648 = vunpack.c.l.b16 %v568
        %v649 = vunpack.c.l.b16 %v569
        %v650 = vunpack.c.l.b16 %v570
        %v651 = vunpack.c.l.b16 %v571
        %v652 = vunpack.c.l.b16 %v572
        %v653 = vunpack.c.l.b16 %v573
        %v654 = vunpack.c.l.b16 %v574
        %v655 = vunpack.c.l.b16 %v575
        %v656 = vunpack.c.l.b16 %v576
        %v657 = vpack.c.b16 %v642, %v641
        %v658 = vpack.c.b16 %v644, %v643
        %v659 = vpack.c.b16 %v646, %v645
        %v660 = vpack.c.b16 %v648, %v647
        %v661 = vpack.c.b16 %v650, %v649
        %v662 = vpack.c.b16 %v652, %v651
        %v663 = vpack.c.b16 %v654, %v653
        %v664 = vpack.c.b16 %v656, %v655
        %673 = vmatprep.subr.bf16.mxu0 0
        %674 = vmatpush1.bf16.msra.mxu0 %v664
        %675 = vmatprep.subr.bf16.mxu0 0
        %676 = vmatpush1.bf16.msra.mxu0 %v663
        %677 = vmatprep.subr.bf16.mxu0 0
        %678 = vmatpush1.bf16.msra.mxu0 %v662
        %679 = vmatprep.subr.bf16.mxu0 0
        %680 = vmatpush1.bf16.msra.mxu0 %v661
        %681 = vmatprep.subr.bf16.mxu0 0
        %682 = vmatpush1.bf16.msra.mxu0 %v660
        %683 = vmatprep.subr.bf16.mxu0 0
        %684 = vmatpush1.bf16.msra.mxu0 %v659
        %685 = vmatprep.subr.bf16.mxu0 0
        %686 = vmatpush1.bf16.msra.mxu0 %v658
        %687 = vmatprep.subr.bf16.mxu0 0
        %688 = vmatpush1.bf16.msra.mxu0 %v657
        %689 = vmatprep.subr.bf16.mxu0 0
        %690 = vmatpush2.bf16.msra.mxu0 0
        %691 = vmatprep.subr.bf16.mxu0 0
        %692 = vmatpush2.bf16.msra.mxu0 0
        %693 = vmatprep.subr.bf16.mxu0 0
        %694 = vmatpush2.bf16.msra.mxu0 0
        %695 = vmatprep.subr.bf16.mxu0 0
        %696 = vmatpush2.bf16.msra.mxu0 0
        %697 = vmatprep.subr.bf16.mxu0 0
        %698 = vmatpush2.bf16.msra.mxu0 0
        %699 = vmatprep.subr.bf16.mxu0 0
        %700 = vmatpush2.bf16.msra.mxu0 0
        %701 = vmatprep.subr.bf16.mxu0 0
        %702 = vmatpush2.bf16.msra.mxu0 0
        %703 = vmatprep.subr.bf16.mxu0 0
        %704 = vmatpush2.bf16.msra.mxu0 0
        %705 = vmatprep.mubr.bf16.mxu0 0
        %706 = vmatmul.mubr.bf16.gmra.mxu0 %v609
        %v707 = vpop.f32.mrf.mxu0
        %v708 = vadd.f32 0.0, %v707
        %v709 = vpop.f32.mrf.mxu0
        %v710 = vpop.f32.mrf.mxu0
        %v711 = vadd.f32 0.0, %v710
        %v712 = vpop.f32.mrf.mxu0
        %713 = vmatprep.mubr.bf16.mxu0 0
        %714 = vmatmul.mubr.bf16.gmra.mxu0 %v610
        %v715 = vpop.f32.mrf.mxu0
        %v716 = vadd.f32 0.0, %v715
        %v717 = vpop.f32.mrf.mxu0
        %v718 = vpop.f32.mrf.mxu0
        %v719 = vadd.f32 0.0, %v718
        %v720 = vpop.f32.mrf.mxu0
        %721 = vmatprep.mubr.bf16.mxu0 0
        %722 = vmatmul.mubr.bf16.gmra.mxu0 %v611
        %v723 = vpop.f32.mrf.mxu0
        %v724 = vadd.f32 0.0, %v723
        %v725 = vpop.f32.mrf.mxu0
        %v726 = vpop.f32.mrf.mxu0
        %v727 = vadd.f32 0.0, %v726
        %v728 = vpop.f32.mrf.mxu0
        %729 = vmatprep.mubr.bf16.mxu0 0
        %730 = vmatmul.mubr.bf16.gmra.mxu0 %v612
        %v731 = vpop.f32.mrf.mxu0
        %v732 = vadd.f32 0.0, %v731
        %v733 = vpop.f32.mrf.mxu0
        %v734 = vpop.f32.mrf.mxu0
        %v735 = vadd.f32 0.0, %v734
        %v736 = vpop.f32.mrf.mxu0
        %737 = vmatprep.mubr.bf16.mxu0 0
        %738 = vmatmul.mubr.bf16.gmra.mxu0 %v613
        %v739 = vpop.f32.mrf.mxu0
        %v740 = vadd.f32 0.0, %v739
        %v741 = vpop.f32.mrf.mxu0
        %v742 = vpop.f32.mrf.mxu0
        %v743 = vadd.f32 0.0, %v742
        %v744 = vpop.f32.mrf.mxu0
        %745 = vmatprep.mubr.bf16.mxu0 0
        %746 = vmatmul.mubr.bf16.gmra.mxu0 %v614
        %v747 = vpop.f32.mrf.mxu0
        %v748 = vadd.f32 0.0, %v747
        %v749 = vpop.f32.mrf.mxu0
        %v750 = vpop.f32.mrf.mxu0
        %v751 = vadd.f32 0.0, %v750
        %v752 = vpop.f32.mrf.mxu0
        %753 = vmatprep.mubr.bf16.mxu0 0
        %754 = vmatmul.mubr.bf16.gmra.mxu0 %v615
        %v755 = vpop.f32.mrf.mxu0
        %v756 = vadd.f32 0.0, %v755
        %v757 = vpop.f32.mrf.mxu0
        %v758 = vpop.f32.mrf.mxu0
        %v759 = vadd.f32 0.0, %v758
        %v760 = vpop.f32.mrf.mxu0
        %761 = vmatprep.mubr.bf16.mxu0 0
        %762 = vmatmul.mubr.bf16.gmra.mxu0 %v616
        %v763 = vpop.f32.mrf.mxu0
        %v764 = vadd.f32 0.0, %v763
        %v765 = vpop.f32.mrf.mxu0
        %v766 = vpop.f32.mrf.mxu0
        %v767 = vadd.f32 0.0, %v766
        %v768 = vpop.f32.mrf.mxu0
        %769 = vdwg.mxu0
        %v770 = vld [vmem:[%s3] sm:$0xff]
        %v771 = vld [vmem:[%s3 + $0x8] sm:$0xff]
        %v772 = vld [vmem:[%s3 + $0x10] sm:$0xff]
        %v773 = vld [vmem:[%s3 + $0x18] sm:$0xff]
        %v774 = vld [vmem:[%s3 + $0x20] sm:$0xff]
        %v775 = vld [vmem:[%s3 + $0x28] sm:$0xff]
        %v776 = vld [vmem:[%s3 + $0x30] sm:$0xff]
        %v777 = vld [vmem:[%s3 + $0x38] sm:$0xff]
        %v778 = vld [vmem:[%s3 + $0x40] sm:$0xff]
        %v779 = vld [vmem:[%s3 + $0x48] sm:$0xff]
        %v780 = vld [vmem:[%s3 + $0x50] sm:$0xff]
        %v781 = vld [vmem:[%s3 + $0x58] sm:$0xff]
        %v782 = vld [vmem:[%s3 + $0x60] sm:$0xff]
        %v783 = vld [vmem:[%s3 + $0x68] sm:$0xff]
        %v784 = vld [vmem:[%s3 + $0x70] sm:$0xff]
        %v785 = vld [vmem:[%s3 + $0x78] sm:$0xff]
        %v802 = vunpack.c.l.b16 %v545
        %v803 = vunpack.c.l.b16 %v546
        %v804 = vunpack.c.l.b16 %v547
        %v805 = vunpack.c.l.b16 %v548
        %v806 = vunpack.c.l.b16 %v549
        %v807 = vunpack.c.l.b16 %v550
        %v808 = vunpack.c.l.b16 %v551
        %v809 = vunpack.c.l.b16 %v552
        %v810 = vunpack.c.l.b16 %v553
        %v811 = vunpack.c.l.b16 %v554
        %v812 = vunpack.c.l.b16 %v555
        %v813 = vunpack.c.l.b16 %v556
        %v814 = vunpack.c.l.b16 %v557
        %v815 = vunpack.c.l.b16 %v558
        %v816 = vunpack.c.l.b16 %v559
        %v817 = vunpack.c.l.b16 %v560
        %v818 = vpack.c.b16 %v803, %v802
        %v819 = vpack.c.b16 %v805, %v804
        %v820 = vpack.c.b16 %v807, %v806
        %v821 = vpack.c.b16 %v809, %v808
        %v822 = vpack.c.b16 %v811, %v810
        %v823 = vpack.c.b16 %v813, %v812
        %v824 = vpack.c.b16 %v815, %v814
        %v825 = vpack.c.b16 %v817, %v816
        %v850 = vunpack.c.l.b16 %v770
        %v851 = vunpack.c.h.b16 %v770
        %v852 = vunpack.c.l.b16 %v771
        %v853 = vunpack.c.h.b16 %v771
        %v854 = vunpack.c.l.b16 %v772
        %v855 = vunpack.c.h.b16 %v772
        %v856 = vunpack.c.l.b16 %v773
        %v857 = vunpack.c.h.b16 %v773
        %v858 = vunpack.c.l.b16 %v774
        %v859 = vunpack.c.h.b16 %v774
        %v860 = vunpack.c.l.b16 %v775
        %v861 = vunpack.c.h.b16 %v775
        %v862 = vunpack.c.l.b16 %v776
        %v863 = vunpack.c.h.b16 %v776
        %v864 = vunpack.c.l.b16 %v777
        %v865 = vunpack.c.h.b16 %v777
        %v866 = vunpack.c.l.b16 %v778
        %v867 = vunpack.c.h.b16 %v778
        %v868 = vunpack.c.l.b16 %v779
        %v869 = vunpack.c.h.b16 %v779
        %v870 = vunpack.c.l.b16 %v780
        %v871 = vunpack.c.h.b16 %v780
        %v872 = vunpack.c.l.b16 %v781
        %v873 = vunpack.c.h.b16 %v781
        %v874 = vunpack.c.l.b16 %v782
        %v875 = vunpack.c.h.b16 %v782
        %v876 = vunpack.c.l.b16 %v783
        %v877 = vunpack.c.h.b16 %v783
        %v878 = vunpack.c.l.b16 %v784
        %v879 = vunpack.c.h.b16 %v784
        %v880 = vunpack.c.l.b16 %v785
        %v881 = vunpack.c.h.b16 %v785
        %v882 = vpack.c.b16 %v852, %v850
        %v883 = vpack.c.b16 %v853, %v851
        %v884 = vpack.c.b16 %v856, %v854
        %v885 = vpack.c.b16 %v857, %v855
        %v886 = vpack.c.b16 %v860, %v858
        %v887 = vpack.c.b16 %v861, %v859
        %v888 = vpack.c.b16 %v864, %v862
        %v889 = vpack.c.b16 %v865, %v863
        %v890 = vpack.c.b16 %v868, %v866
        %v891 = vpack.c.b16 %v869, %v867
        %v892 = vpack.c.b16 %v872, %v870
        %v893 = vpack.c.b16 %v873, %v871
        %v894 = vpack.c.b16 %v876, %v874
        %v895 = vpack.c.b16 %v877, %v875
        %v896 = vpack.c.b16 %v880, %v878
        %v897 = vpack.c.b16 %v881, %v879
        %914 = vmatprep.subr.bf16.mxu0 %v897
        %915 = vmatpush1.bf16.msra.mxu0 %v896
        %916 = vmatprep.subr.bf16.mxu0 %v895
        %917 = vmatpush1.bf16.msra.mxu0 %v894
        %918 = vmatprep.subr.bf16.mxu0 %v893
        %919 = vmatpush1.bf16.msra.mxu0 %v892
        %920 = vmatprep.subr.bf16.mxu0 %v891
        %921 = vmatpush1.bf16.msra.mxu0 %v890
        %922 = vmatprep.subr.bf16.mxu0 %v889
        %923 = vmatpush1.bf16.msra.mxu0 %v888
        %924 = vmatprep.subr.bf16.mxu0 %v887
        %925 = vmatpush1.bf16.msra.mxu0 %v886
        %926 = vmatprep.subr.bf16.mxu0 %v885
        %927 = vmatpush1.bf16.msra.mxu0 %v884
        %928 = vmatprep.subr.bf16.mxu0 %v883
        %929 = vmatpush1.bf16.msra.mxu0 %v882
        %930 = vmatprep.subr.bf16.mxu0 0
        %931 = vmatpush2.bf16.msra.mxu0 0
        %932 = vmatprep.subr.bf16.mxu0 0
        %933 = vmatpush2.bf16.msra.mxu0 0
        %934 = vmatprep.subr.bf16.mxu0 0
        %935 = vmatpush2.bf16.msra.mxu0 0
        %936 = vmatprep.subr.bf16.mxu0 0
        %937 = vmatpush2.bf16.msra.mxu0 0
        %938 = vmatprep.subr.bf16.mxu0 0
        %939 = vmatpush2.bf16.msra.mxu0 0
        %940 = vmatprep.subr.bf16.mxu0 0
        %941 = vmatpush2.bf16.msra.mxu0 0
        %942 = vmatprep.subr.bf16.mxu0 0
        %943 = vmatpush2.bf16.msra.mxu0 0
        %944 = vmatprep.subr.bf16.mxu0 0
        %945 = vmatpush2.bf16.msra.mxu0 0
        %946 = vmatprep.mubr.bf16.mxu0 0
        %947 = vmatmul.mubr.bf16.gmra.mxu0 %v818
        %v948 = vpop.f32.mrf.mxu0
        %v949 = vadd.f32 0.0, %v948
        %v950 = vpop.f32.mrf.mxu0
        %v951 = vadd.f32 0.0, %v950
        %v952 = vpop.f32.mrf.mxu0
        %v953 = vadd.f32 0.0, %v952
        %v954 = vpop.f32.mrf.mxu0
        %v955 = vadd.f32 0.0, %v954
        %956 = vmatprep.mubr.bf16.mxu0 0
        %957 = vmatmul.mubr.bf16.gmra.mxu0 %v819
        %v958 = vpop.f32.mrf.mxu0
        %v959 = vadd.f32 0.0, %v958
        %v960 = vpop.f32.mrf.mxu0
        %v961 = vadd.f32 0.0, %v960
        %v962 = vpop.f32.mrf.mxu0
        %v963 = vadd.f32 0.0, %v962
        %v964 = vpop.f32.mrf.mxu0
        %v965 = vadd.f32 0.0, %v964
        %966 = vmatprep.mubr.bf16.mxu0 0
        %967 = vmatmul.mubr.bf16.gmra.mxu0 %v820
        %v968 = vpop.f32.mrf.mxu0
        %v969 = vadd.f32 0.0, %v968
        %v970 = vpop.f32.mrf.mxu0
        %v971 = vadd.f32 0.0, %v970
        %v972 = vpop.f32.mrf.mxu0
        %v973 = vadd.f32 0.0, %v972
        %v974 = vpop.f32.mrf.mxu0
        %v975 = vadd.f32 0.0, %v974
        %976 = vmatprep.mubr.bf16.mxu0 0
        %977 = vmatmul.mubr.bf16.gmra.mxu0 %v821
        %v978 = vpop.f32.mrf.mxu0
        %v979 = vadd.f32 0.0, %v978
        %v980 = vpop.f32.mrf.mxu0
        %v981 = vadd.f32 0.0, %v980
        %v982 = vpop.f32.mrf.mxu0
        %v983 = vadd.f32 0.0, %v982
        %v984 = vpop.f32.mrf.mxu0
        %v985 = vadd.f32 0.0, %v984
        %986 = vmatprep.mubr.bf16.mxu0 0
        %987 = vmatmul.mubr.bf16.gmra.mxu0 %v822
        %v988 = vpop.f32.mrf.mxu0
        %v989 = vadd.f32 0.0, %v988
        %v990 = vpop.f32.mrf.mxu0
        %v991 = vadd.f32 0.0, %v990
        %v992 = vpop.f32.mrf.mxu0
        %v993 = vadd.f32 0.0, %v992
        %v994 = vpop.f32.mrf.mxu0
        %v995 = vadd.f32 0.0, %v994
        %996 = vmatprep.mubr.bf16.mxu0 0
        %997 = vmatmul.mubr.bf16.gmra.mxu0 %v823
        %v998 = vpop.f32.mrf.mxu0
        %v999 = vadd.f32 0.0, %v998
        %v1000 = vpop.f32.mrf.mxu0
        %v1001 = vadd.f32 0.0, %v1000
        %v1002 = vpop.f32.mrf.mxu0
        %v1003 = vadd.f32 0.0, %v1002
        %v1004 = vpop.f32.mrf.mxu0
        %v1005 = vadd.f32 0.0, %v1004
        %1006 = vmatprep.mubr.bf16.mxu0 0
        %1007 = vmatmul.mubr.bf16.gmra.mxu0 %v824
        %v1008 = vpop.f32.mrf.mxu0
        %v1009 = vadd.f32 0.0, %v1008
        %v1010 = vpop.f32.mrf.mxu0
        %v1011 = vadd.f32 0.0, %v1010
        %v1012 = vpop.f32.mrf.mxu0
        %v1013 = vadd.f32 0.0, %v1012
        %v1014 = vpop.f32.mrf.mxu0
        %v1015 = vadd.f32 0.0, %v1014
        %1016 = vmatprep.mubr.bf16.mxu0 0
        %1017 = vmatmul.mubr.bf16.gmra.mxu0 %v825
        %v1018 = vpop.f32.mrf.mxu0
        %v1019 = vadd.f32 0.0, %v1018
        %v1020 = vpop.f32.mrf.mxu0
        %v1021 = vadd.f32 0.0, %v1020
        %v1022 = vpop.f32.mrf.mxu0
        %v1023 = vadd.f32 0.0, %v1022
        %v1024 = vpop.f32.mrf.mxu0
        %v1025 = vadd.f32 0.0, %v1024
        %1026 = vdwg.mxu0
        %v1027 = vpack.c.bf16 %v711, %v708
        %v1028 = vpack.c.bf16 %v719, %v716
        %v1029 = vpack.c.bf16 %v727, %v724
        %v1030 = vpack.c.bf16 %v735, %v732
        %v1031 = vpack.c.bf16 %v743, %v740
        %v1032 = vpack.c.bf16 %v751, %v748
        %v1033 = vpack.c.bf16 %v759, %v756
        %v1034 = vpack.c.bf16 %v767, %v764
        %v1035 = vpack.c.bf16 %v953, %v949
        %v1036 = vpack.c.bf16 %v963, %v959
        %v1037 = vpack.c.bf16 %v973, %v969
        %v1038 = vpack.c.bf16 %v983, %v979
        %v1039 = vpack.c.bf16 %v993, %v989
        %v1040 = vpack.c.bf16 %v1003, %v999
        %v1041 = vpack.c.bf16 %v1013, %v1009
        %v1042 = vpack.c.bf16 %v1023, %v1019
        %v1043 = vpack.c.bf16 %v955, %v951
        %v1044 = vpack.c.bf16 %v965, %v961
        %v1045 = vpack.c.bf16 %v975, %v971
        %v1046 = vpack.c.bf16 %v985, %v981
        %v1047 = vpack.c.bf16 %v995, %v991
        %v1048 = vpack.c.bf16 %v1005, %v1001
        %v1049 = vpack.c.bf16 %v1015, %v1011
        %v1050 = vpack.c.bf16 %v1025, %v1021
        %v1051 = vld [vmem:[%s523] sm:$0xff]
        %v1052 = vld [vmem:[%s523 + $0x8] sm:$0xff]
        %v1053 = vld [vmem:[%s523 + $0x10] sm:$0xff]
        %v1054 = vld [vmem:[%s523 + $0x18] sm:$0xff]
        %v1055 = vld [vmem:[%s523 + $0x20] sm:$0xff]
        %v1056 = vld [vmem:[%s523 + $0x28] sm:$0xff]
        %v1057 = vld [vmem:[%s523 + $0x30] sm:$0xff]
        %v1058 = vld [vmem:[%s523 + $0x38] sm:$0xff]
        %1059 = vmatprep.subr.bf16.mxu0 0
        %1060 = vmatpush1.bf16.xpose.msra.mxu0 0
        %1061 = vmatprep.subr.bf16.mxu0 0
        %1062 = vmatpush1.bf16.xpose.msra.mxu0 0
        %1063 = vmatprep.subr.bf16.mxu0 0
        %1064 = vmatpush1.bf16.xpose.msra.mxu0 0
        %1065 = vmatprep.subr.bf16.mxu0 0
        %1066 = vmatpush1.bf16.xpose.msra.mxu0 0
        %1067 = vmatprep.subr.bf16.mxu0 0
        %1068 = vmatpush1.bf16.xpose.msra.mxu0 %v1038
        %1069 = vmatprep.subr.bf16.mxu0 0
        %1070 = vmatpush1.bf16.xpose.msra.mxu0 %v1037
        %1071 = vmatprep.subr.bf16.mxu0 0
        %1072 = vmatpush1.bf16.xpose.msra.mxu0 %v1036
        %1073 = vmatprep.subr.bf16.mxu0 0
        %1074 = vmatpush1.bf16.xpose.msra.mxu0 %v1035
        %1075 = vmatprep.subr.bf16.mxu0 0
        %1076 = vmatpush2.bf16.xpose.msra.mxu0 0
        %1077 = vmatprep.subr.bf16.mxu0 0
        %1078 = vmatpush2.bf16.xpose.msra.mxu0 0
        %1079 = vmatprep.subr.bf16.mxu0 0
        %1080 = vmatpush2.bf16.xpose.msra.mxu0 0
        %1081 = vmatprep.subr.bf16.mxu0 0
        %1082 = vmatpush2.bf16.xpose.msra.mxu0 0
        %1083 = vmatprep.subr.bf16.mxu0 0
        %1084 = vmatpush2.bf16.xpose.msra.mxu0 0
        %1085 = vmatprep.subr.bf16.mxu0 0
        %1086 = vmatpush2.bf16.xpose.msra.mxu0 0
        %1087 = vmatprep.subr.bf16.mxu0 0
        %1088 = vmatpush2.bf16.xpose.msra.mxu0 0
        %1089 = vmatprep.subr.bf16.mxu0 0
        %1090 = vmatpush2.bf16.xpose.msra.mxu0 0
        %1091 = vmatprep.mubr.bf16.mxu0 0
        %1092 = vmatmul.mubr.bf16.gmra.mxu0 %v1027
        %v1093 = vpop.f32.mrf.mxu0
        %v1094 = vadd.f32 %v1051, %v1093
        %v1095 = vpop.f32.mrf.mxu0
        %v1096 = vpop.f32.mrf.mxu0
        %v1097 = vadd.f32 %v1052, %v1096
        %v1098 = vpop.f32.mrf.mxu0
        %1099 = vmatprep.mubr.bf16.mxu0 0
        %1100 = vmatmul.mubr.bf16.gmra.mxu0 %v1028
        %v1101 = vpop.f32.mrf.mxu0
        %v1102 = vadd.f32 %v1053, %v1101
        %v1103 = vpop.f32.mrf.mxu0
        %v1104 = vpop.f32.mrf.mxu0
        %v1105 = vadd.f32 %v1054, %v1104
        %v1106 = vpop.f32.mrf.mxu0
        %1107 = vmatprep.mubr.bf16.mxu0 0
        %1108 = vmatmul.mubr.bf16.gmra.mxu0 %v1029
        %v1109 = vpop.f32.mrf.mxu0
        %v1110 = vadd.f32 %v1055, %v1109
        %v1111 = vpop.f32.mrf.mxu0
        %v1112 = vpop.f32.mrf.mxu0
        %v1113 = vadd.f32 %v1056, %v1112
        %v1114 = vpop.f32.mrf.mxu0
        %1115 = vmatprep.mubr.bf16.mxu0 0
        %1116 = vmatmul.mubr.bf16.gmra.mxu0 %v1030
        %v1117 = vpop.f32.mrf.mxu0
        %v1118 = vadd.f32 %v1057, %v1117
        %v1119 = vpop.f32.mrf.mxu0
        %v1120 = vpop.f32.mrf.mxu0
        %v1121 = vadd.f32 %v1058, %v1120
        %v1122 = vpop.f32.mrf.mxu0
        %1123 = vdwg.mxu0
        %1124 = vmatprep.subr.bf16.mxu0 0
        %1125 = vmatpush1.bf16.xpose.msra.mxu0 0
        %1126 = vmatprep.subr.bf16.mxu0 0
        %1127 = vmatpush1.bf16.xpose.msra.mxu0 0
        %1128 = vmatprep.subr.bf16.mxu0 0
        %1129 = vmatpush1.bf16.xpose.msra.mxu0 0
        %1130 = vmatprep.subr.bf16.mxu0 0
        %1131 = vmatpush1.bf16.xpose.msra.mxu0 0
        %1132 = vmatprep.subr.bf16.mxu0 0
        %1133 = vmatpush1.bf16.xpose.msra.mxu0 %v1042
        %1134 = vmatprep.subr.bf16.mxu0 0
        %1135 = vmatpush1.bf16.xpose.msra.mxu0 %v1041
        %1136 = vmatprep.subr.bf16.mxu0 0
        %1137 = vmatpush1.bf16.xpose.msra.mxu0 %v1040
        %1138 = vmatprep.subr.bf16.mxu0 0
        %1139 = vmatpush1.bf16.xpose.msra.mxu0 %v1039
        %1140 = vmatprep.subr.bf16.mxu0 0
        %1141 = vmatpush2.bf16.xpose.msra.mxu0 0
        %1142 = vmatprep.subr.bf16.mxu0 0
        %1143 = vmatpush2.bf16.xpose.msra.mxu0 0
        %1144 = vmatprep.subr.bf16.mxu0 0
        %1145 = vmatpush2.bf16.xpose.msra.mxu0 0
        %1146 = vmatprep.subr.bf16.mxu0 0
        %1147 = vmatpush2.bf16.xpose.msra.mxu0 0
        %1148 = vmatprep.subr.bf16.mxu0 0
        %1149 = vmatpush2.bf16.xpose.msra.mxu0 0
        %1150 = vmatprep.subr.bf16.mxu0 0
        %1151 = vmatpush2.bf16.xpose.msra.mxu0 0
        %1152 = vmatprep.subr.bf16.mxu0 0
        %1153 = vmatpush2.bf16.xpose.msra.mxu0 0
        %1154 = vmatprep.subr.bf16.mxu0 0
        %1155 = vmatpush2.bf16.xpose.msra.mxu0 0
        %1156 = vmatprep.mubr.bf16.mxu0 0
        %1157 = vmatmul.mubr.bf16.gmra.mxu0 %v1031
        %v1158 = vpop.f32.mrf.mxu0
        %v1159 = vadd.f32 %v1051, %v1158
        %v1160 = vpop.f32.mrf.mxu0
        %v1161 = vpop.f32.mrf.mxu0
        %v1162 = vadd.f32 %v1052, %v1161
        %v1163 = vpop.f32.mrf.mxu0
        %1164 = vmatprep.mubr.bf16.mxu0 0
        %1165 = vmatmul.mubr.bf16.gmra.mxu0 %v1032
        %v1166 = vpop.f32.mrf.mxu0
        %v1167 = vadd.f32 %v1053, %v1166
        %v1168 = vpop.f32.mrf.mxu0
        %v1169 = vpop.f32.mrf.mxu0
        %v1170 = vadd.f32 %v1054, %v1169
        %v1171 = vpop.f32.mrf.mxu0
        %1172 = vmatprep.mubr.bf16.mxu0 0
        %1173 = vmatmul.mubr.bf16.gmra.mxu0 %v1033
        %v1174 = vpop.f32.mrf.mxu0
        %v1175 = vadd.f32 %v1055, %v1174
        %v1176 = vpop.f32.mrf.mxu0
        %v1177 = vpop.f32.mrf.mxu0
        %v1178 = vadd.f32 %v1056, %v1177
        %v1179 = vpop.f32.mrf.mxu0
        %1180 = vmatprep.mubr.bf16.mxu0 0
        %1181 = vmatmul.mubr.bf16.gmra.mxu0 %v1034
        %v1182 = vpop.f32.mrf.mxu0
        %v1183 = vadd.f32 %v1057, %v1182
        %v1184 = vpop.f32.mrf.mxu0
        %v1185 = vpop.f32.mrf.mxu0
        %v1186 = vadd.f32 %v1058, %v1185
        %v1187 = vpop.f32.mrf.mxu0
        %1188 = vdwg.mxu0
        %vm1189 = vcmask 523264
        %v1190 = vsel %vm1189, %v1094, -inf
        %1191 = vmax.xlane.f32.xlu0 %v1190
        %v1192 = vpop.xlane.xlu0 %1191
        %v1193 = vsel %vm1189, %v1097, -inf
        %1194 = vmax.xlane.f32.xlu0 %v1193
        %v1195 = vpop.xlane.xlu0 %1194
        %v1196 = vsel %vm1189, %v1102, -inf
        %1197 = vmax.xlane.f32.xlu0 %v1196
        %v1198 = vpop.xlane.xlu0 %1197
        %v1199 = vsel %vm1189, %v1105, -inf
        %1200 = vmax.xlane.f32.xlu0 %v1199
        %v1201 = vpop.xlane.xlu0 %1200
        %v1202 = vsel %vm1189, %v1110, -inf
        %1203 = vmax.xlane.f32.xlu0 %v1202
        %v1204 = vpop.xlane.xlu0 %1203
        %v1205 = vsel %vm1189, %v1113, -inf
        %1206 = vmax.xlane.f32.xlu0 %v1205
        %v1207 = vpop.xlane.xlu0 %1206
        %v1208 = vsel %vm1189, %v1118, -inf
        %1209 = vmax.xlane.f32.xlu0 %v1208
        %v1210 = vpop.xlane.xlu0 %1209
        %v1211 = vsel %vm1189, %v1121, -inf
        %1212 = vmax.xlane.f32.xlu0 %v1211
        %v1213 = vpop.xlane.xlu0 %1212
        %v1214 = vsel %vm1189, %v1159, -inf
        %1215 = vmax.xlane.f32.xlu0 %v1214
        %v1216 = vpop.xlane.xlu0 %1215
        %v1217 = vsel %vm1189, %v1162, -inf
        %1218 = vmax.xlane.f32.xlu0 %v1217
        %v1219 = vpop.xlane.xlu0 %1218
        %v1220 = vsel %vm1189, %v1167, -inf
        %1221 = vmax.xlane.f32.xlu0 %v1220
        %v1222 = vpop.xlane.xlu0 %1221
        %v1223 = vsel %vm1189, %v1170, -inf
        %1224 = vmax.xlane.f32.xlu0 %v1223
        %v1225 = vpop.xlane.xlu0 %1224
        %v1226 = vsel %vm1189, %v1175, -inf
        %1227 = vmax.xlane.f32.xlu0 %v1226
        %v1228 = vpop.xlane.xlu0 %1227
        %v1229 = vsel %vm1189, %v1178, -inf
        %1230 = vmax.xlane.f32.xlu0 %v1229
        %v1231 = vpop.xlane.xlu0 %1230
        %v1232 = vsel %vm1189, %v1183, -inf
        %1233 = vmax.xlane.f32.xlu0 %v1232
        %v1234 = vpop.xlane.xlu0 %1233
        %v1235 = vsel %vm1189, %v1186, -inf
        %1236 = vmax.xlane.f32.xlu0 %v1235
        %v1237 = vpop.xlane.xlu0 %1236
        %v1238 = vsub.f32 %v1094, %v1192
        %v1239 = vsub.f32 %v1097, %v1195
        %v1240 = vsub.f32 %v1102, %v1198
        %v1241 = vsub.f32 %v1105, %v1201
        %v1242 = vsub.f32 %v1110, %v1204
        %v1243 = vsub.f32 %v1113, %v1207
        %v1244 = vsub.f32 %v1118, %v1210
        %v1245 = vsub.f32 %v1121, %v1213
        %v1246 = vsub.f32 %v1159, %v1216
        %v1247 = vsub.f32 %v1162, %v1219
        %v1248 = vsub.f32 %v1167, %v1222
        %v1249 = vsub.f32 %v1170, %v1225
        %v1250 = vsub.f32 %v1175, %v1228
        %v1251 = vsub.f32 %v1178, %v1231
        %v1252 = vsub.f32 %v1183, %v1234
        %v1253 = vsub.f32 %v1186, %v1237
        %v1254 = vmul.f32 %v1238, 1.442695
        %v1255 = vpow.pop %v1254
        %v1256 = vmul.f32 %v1239, 1.442695
        %v1257 = vpow.pop %v1256
        %v1258 = vmul.f32 %v1240, 1.442695
        %v1259 = vpow.pop %v1258
        %v1260 = vmul.f32 %v1241, 1.442695
        %v1261 = vpow.pop %v1260
        %v1262 = vmul.f32 %v1242, 1.442695
        %v1263 = vpow.pop %v1262
        %v1264 = vmul.f32 %v1243, 1.442695
        %v1265 = vpow.pop %v1264
        %v1266 = vmul.f32 %v1244, 1.442695
        %v1267 = vpow.pop %v1266
        %v1268 = vmul.f32 %v1245, 1.442695
        %v1269 = vpow.pop %v1268
        %v1270 = vmul.f32 %v1246, 1.442695
        %v1271 = vpow.pop %v1270
        %v1272 = vmul.f32 %v1247, 1.442695
        %v1273 = vpow.pop %v1272
        %v1274 = vmul.f32 %v1248, 1.442695
        %v1275 = vpow.pop %v1274
        %v1276 = vmul.f32 %v1249, 1.442695
        %v1277 = vpow.pop %v1276
        %v1278 = vmul.f32 %v1250, 1.442695
        %v1279 = vpow.pop %v1278
        %v1280 = vmul.f32 %v1251, 1.442695
        %v1281 = vpow.pop %v1280
        %v1282 = vmul.f32 %v1252, 1.442695
        %v1283 = vpow.pop %v1282
        %v1284 = vmul.f32 %v1253, 1.442695
        %v1285 = vpow.pop %v1284
        %v1286 = vsel %vm1189, %v1255, 0.0
        %1287 = vadd.xlane.f32.xlu0 %v1286
        %v1288 = vpop.xlane.xlu0 %1287
        %v1289 = vsel %vm1189, %v1257, 0.0
        %1290 = vadd.xlane.f32.xlu0 %v1289
        %v1291 = vpop.xlane.xlu0 %1290
        %v1292 = vsel %vm1189, %v1259, 0.0
        %1293 = vadd.xlane.f32.xlu0 %v1292
        %v1294 = vpop.xlane.xlu0 %1293
        %v1295 = vsel %vm1189, %v1261, 0.0
        %1296 = vadd.xlane.f32.xlu0 %v1295
        %v1297 = vpop.xlane.xlu0 %1296
        %v1298 = vsel %vm1189, %v1263, 0.0
        %1299 = vadd.xlane.f32.xlu0 %v1298
        %v1300 = vpop.xlane.xlu0 %1299
        %v1301 = vsel %vm1189, %v1265, 0.0
        %1302 = vadd.xlane.f32.xlu0 %v1301
        %v1303 = vpop.xlane.xlu0 %1302
        %v1304 = vsel %vm1189, %v1267, 0.0
        %1305 = vadd.xlane.f32.xlu0 %v1304
        %v1306 = vpop.xlane.xlu0 %1305
        %v1307 = vsel %vm1189, %v1269, 0.0
        %1308 = vadd.xlane.f32.xlu0 %v1307
        %v1309 = vpop.xlane.xlu0 %1308
        %v1310 = vsel %vm1189, %v1271, 0.0
        %1311 = vadd.xlane.f32.xlu0 %v1310
        %v1312 = vpop.xlane.xlu0 %1311
        %v1313 = vsel %vm1189, %v1273, 0.0
        %1314 = vadd.xlane.f32.xlu0 %v1313
        %v1315 = vpop.xlane.xlu0 %1314
        %v1316 = vsel %vm1189, %v1275, 0.0
        %1317 = vadd.xlane.f32.xlu0 %v1316
        %v1318 = vpop.xlane.xlu0 %1317
        %v1319 = vsel %vm1189, %v1277, 0.0
        %1320 = vadd.xlane.f32.xlu0 %v1319
        %v1321 = vpop.xlane.xlu0 %1320
        %v1322 = vsel %vm1189, %v1279, 0.0
        %1323 = vadd.xlane.f32.xlu0 %v1322
        %v1324 = vpop.xlane.xlu0 %1323
        %v1325 = vsel %vm1189, %v1281, 0.0
        %1326 = vadd.xlane.f32.xlu0 %v1325
        %v1327 = vpop.xlane.xlu0 %1326
        %v1328 = vsel %vm1189, %v1283, 0.0
        %1329 = vadd.xlane.f32.xlu0 %v1328
        %v1330 = vpop.xlane.xlu0 %1329
        %v1331 = vsel %vm1189, %v1285, 0.0
        %1332 = vadd.xlane.f32.xlu0 %v1331
        %v1333 = vpop.xlane.xlu0 %1332
        %v1334 = vrcp.pop %v1288
        %v1335 = vrcp.pop %v1291
        %v1336 = vrcp.pop %v1294
        %v1337 = vrcp.pop %v1297
        %v1338 = vrcp.pop %v1300
        %v1339 = vrcp.pop %v1303
        %v1340 = vrcp.pop %v1306
        %v1341 = vrcp.pop %v1309
        %v1342 = vrcp.pop %v1312
        %v1343 = vrcp.pop %v1315
        %v1344 = vrcp.pop %v1318
        %v1345 = vrcp.pop %v1321
        %v1346 = vrcp.pop %v1324
        %v1347 = vrcp.pop %v1327
        %v1348 = vrcp.pop %v1330
        %v1349 = vrcp.pop %v1333
        %v1350 = vmul.f32 %v1255, %v1334
        %v1351 = vmul.f32 %v1257, %v1335
        %v1352 = vmul.f32 %v1259, %v1336
        %v1353 = vmul.f32 %v1261, %v1337
        %v1354 = vmul.f32 %v1263, %v1338
        %v1355 = vmul.f32 %v1265, %v1339
        %v1356 = vmul.f32 %v1267, %v1340
        %v1357 = vmul.f32 %v1269, %v1341
        %v1358 = vmul.f32 %v1271, %v1342
        %v1359 = vmul.f32 %v1273, %v1343
        %v1360 = vmul.f32 %v1275, %v1344
        %v1361 = vmul.f32 %v1277, %v1345
        %v1362 = vmul.f32 %v1279, %v1346
        %v1363 = vmul.f32 %v1281, %v1347
        %v1364 = vmul.f32 %v1283, %v1348
        %v1365 = vmul.f32 %v1285, %v1349
        %v1366 = vpack.c.bf16 %v1351, %v1350
        %v1367 = vpack.c.bf16 %v1353, %v1352
        %v1368 = vpack.c.bf16 %v1355, %v1354
        %v1369 = vpack.c.bf16 %v1357, %v1356
        %v1370 = vpack.c.bf16 %v1359, %v1358
        %v1371 = vpack.c.bf16 %v1361, %v1360
        %v1372 = vpack.c.bf16 %v1363, %v1362
        %v1373 = vpack.c.bf16 %v1365, %v1364
        %v1375 = vsel %vm1189, %v1366, 0
        %v1378 = vsel %vm1189, %v1367, 0
        %v1381 = vsel %vm1189, %v1368, 0
        %v1384 = vsel %vm1189, %v1369, 0
        %1386 = vmatprep.subr.bf16.mxu0 0
        %1387 = vmatpush1.bf16.msra.mxu0 0
        %1388 = vmatprep.subr.bf16.mxu0 0
        %1389 = vmatpush1.bf16.msra.mxu0 0
        %1390 = vmatprep.subr.bf16.mxu0 0
        %1391 = vmatpush1.bf16.msra.mxu0 0
        %1392 = vmatprep.subr.bf16.mxu0 0
        %1393 = vmatpush1.bf16.msra.mxu0 0
        %1394 = vmatprep.subr.bf16.mxu0 0
        %1395 = vmatpush1.bf16.msra.mxu0 %v1046
        %1396 = vmatprep.subr.bf16.mxu0 0
        %1397 = vmatpush1.bf16.msra.mxu0 %v1045
        %1398 = vmatprep.subr.bf16.mxu0 0
        %1399 = vmatpush1.bf16.msra.mxu0 %v1044
        %1400 = vmatprep.subr.bf16.mxu0 0
        %1401 = vmatpush1.bf16.msra.mxu0 %v1043
        %1402 = vmatprep.subr.bf16.mxu0 0
        %1403 = vmatpush2.bf16.msra.mxu0 0
        %1404 = vmatprep.subr.bf16.mxu0 0
        %1405 = vmatpush2.bf16.msra.mxu0 0
        %1406 = vmatprep.subr.bf16.mxu0 0
        %1407 = vmatpush2.bf16.msra.mxu0 0
        %1408 = vmatprep.subr.bf16.mxu0 0
        %1409 = vmatpush2.bf16.msra.mxu0 0
        %1410 = vmatprep.subr.bf16.mxu0 0
        %1411 = vmatpush2.bf16.msra.mxu0 0
        %1412 = vmatprep.subr.bf16.mxu0 0
        %1413 = vmatpush2.bf16.msra.mxu0 0
        %1414 = vmatprep.subr.bf16.mxu0 0
        %1415 = vmatpush2.bf16.msra.mxu0 0
        %1416 = vmatprep.subr.bf16.mxu0 0
        %1417 = vmatpush2.bf16.msra.mxu0 0
        %1418 = vmatprep.mubr.bf16.mxu0 0
        %1419 = vmatmul.mubr.bf16.gmra.mxu0 %v1375
        %v1420 = vpop.f32.mrf.mxu0
        %v1421 = vadd.f32 0.0, %v1420
        %v1422 = vpop.f32.mrf.mxu0
        %v1423 = vpop.f32.mrf.mxu0
        %v1424 = vadd.f32 0.0, %v1423
        %v1425 = vpop.f32.mrf.mxu0
        %1426 = vmatprep.mubr.bf16.mxu0 0
        %1427 = vmatmul.mubr.bf16.gmra.mxu0 %v1378
        %v1428 = vpop.f32.mrf.mxu0
        %v1429 = vadd.f32 0.0, %v1428
        %v1430 = vpop.f32.mrf.mxu0
        %v1431 = vpop.f32.mrf.mxu0
        %v1432 = vadd.f32 0.0, %v1431
        %v1433 = vpop.f32.mrf.mxu0
        %1434 = vmatprep.mubr.bf16.mxu0 0
        %1435 = vmatmul.mubr.bf16.gmra.mxu0 %v1381
        %v1436 = vpop.f32.mrf.mxu0
        %v1437 = vadd.f32 0.0, %v1436
        %v1438 = vpop.f32.mrf.mxu0
        %v1439 = vpop.f32.mrf.mxu0
        %v1440 = vadd.f32 0.0, %v1439
        %v1441 = vpop.f32.mrf.mxu0
        %1442 = vmatprep.mubr.bf16.mxu0 0
        %1443 = vmatmul.mubr.bf16.gmra.mxu0 %v1384
        %v1444 = vpop.f32.mrf.mxu0
        %v1445 = vadd.f32 0.0, %v1444
        %v1446 = vpop.f32.mrf.mxu0
        %v1447 = vpop.f32.mrf.mxu0
        %v1448 = vadd.f32 0.0, %v1447
        %v1449 = vpop.f32.mrf.mxu0
        %1450 = vdwg.mxu0
        %v1452 = vsel %vm1189, %v1370, 0
        %v1455 = vsel %vm1189, %v1371, 0
        %v1458 = vsel %vm1189, %v1372, 0
        %v1461 = vsel %vm1189, %v1373, 0
        %1463 = vmatprep.subr.bf16.mxu0 0
        %1464 = vmatpush1.bf16.msra.mxu0 0
        %1465 = vmatprep.subr.bf16.mxu0 0
        %1466 = vmatpush1.bf16.msra.mxu0 0
        %1467 = vmatprep.subr.bf16.mxu0 0
        %1468 = vmatpush1.bf16.msra.mxu0 0
        %1469 = vmatprep.subr.bf16.mxu0 0
        %1470 = vmatpush1.bf16.msra.mxu0 0
        %1471 = vmatprep.subr.bf16.mxu0 0
        %1472 = vmatpush1.bf16.msra.mxu0 %v1050
        %1473 = vmatprep.subr.bf16.mxu0 0
        %1474 = vmatpush1.bf16.msra.mxu0 %v1049
        %1475 = vmatprep.subr.bf16.mxu0 0
        %1476 = vmatpush1.bf16.msra.mxu0 %v1048
        %1477 = vmatprep.subr.bf16.mxu0 0
        %1478 = vmatpush1.bf16.msra.mxu0 %v1047
        %1479 = vmatprep.subr.bf16.mxu0 0
        %1480 = vmatpush2.bf16.msra.mxu0 0
        %1481 = vmatprep.subr.bf16.mxu0 0
        %1482 = vmatpush2.bf16.msra.mxu0 0
        %1483 = vmatprep.subr.bf16.mxu0 0
        %1484 = vmatpush2.bf16.msra.mxu0 0
        %1485 = vmatprep.subr.bf16.mxu0 0
        %1486 = vmatpush2.bf16.msra.mxu0 0
        %1487 = vmatprep.subr.bf16.mxu0 0
        %1488 = vmatpush2.bf16.msra.mxu0 0
        %1489 = vmatprep.subr.bf16.mxu0 0
        %1490 = vmatpush2.bf16.msra.mxu0 0
        %1491 = vmatprep.subr.bf16.mxu0 0
        %1492 = vmatpush2.bf16.msra.mxu0 0
        %1493 = vmatprep.subr.bf16.mxu0 0
        %1494 = vmatpush2.bf16.msra.mxu0 0
        %1495 = vmatprep.mubr.bf16.mxu0 0
        %1496 = vmatmul.mubr.bf16.gmra.mxu0 %v1452
        %v1497 = vpop.f32.mrf.mxu0
        %v1498 = vadd.f32 0.0, %v1497
        %v1499 = vpop.f32.mrf.mxu0
        %v1500 = vpop.f32.mrf.mxu0
        %v1501 = vadd.f32 0.0, %v1500
        %v1502 = vpop.f32.mrf.mxu0
        %1503 = vmatprep.mubr.bf16.mxu0 0
        %1504 = vmatmul.mubr.bf16.gmra.mxu0 %v1455
        %v1505 = vpop.f32.mrf.mxu0
        %v1506 = vadd.f32 0.0, %v1505
        %v1507 = vpop.f32.mrf.mxu0
        %v1508 = vpop.f32.mrf.mxu0
        %v1509 = vadd.f32 0.0, %v1508
        %v1510 = vpop.f32.mrf.mxu0
        %1511 = vmatprep.mubr.bf16.mxu0 0
        %1512 = vmatmul.mubr.bf16.gmra.mxu0 %v1458
        %v1513 = vpop.f32.mrf.mxu0
        %v1514 = vadd.f32 0.0, %v1513
        %v1515 = vpop.f32.mrf.mxu0
        %v1516 = vpop.f32.mrf.mxu0
        %v1517 = vadd.f32 0.0, %v1516
        %v1518 = vpop.f32.mrf.mxu0
        %1519 = vmatprep.mubr.bf16.mxu0 0
        %1520 = vmatmul.mubr.bf16.gmra.mxu0 %v1461
        %v1521 = vpop.f32.mrf.mxu0
        %v1522 = vadd.f32 0.0, %v1521
        %v1523 = vpop.f32.mrf.mxu0
        %v1524 = vpop.f32.mrf.mxu0
        %v1525 = vadd.f32 0.0, %v1524
        %v1526 = vpop.f32.mrf.mxu0
        %1527 = vdwg.mxu0
        %v1528 = vpack.c.bf16 %v1421, %v1421
        %v1529 = vpack.c.bf16 %v1424, %v1424
        %v1530 = vpack.c.bf16 %v1429, %v1429
        %v1531 = vpack.c.bf16 %v1432, %v1432
        %v1532 = vpack.c.bf16 %v1437, %v1437
        %v1533 = vpack.c.bf16 %v1440, %v1440
        %v1534 = vpack.c.bf16 %v1445, %v1445
        %v1535 = vpack.c.bf16 %v1448, %v1448
        %v1536 = vpack.c.bf16 %v1498, %v1498
        %v1537 = vpack.c.bf16 %v1501, %v1501
        %v1538 = vpack.c.bf16 %v1506, %v1506
        %v1539 = vpack.c.bf16 %v1509, %v1509
        %v1540 = vpack.c.bf16 %v1514, %v1514
        %v1541 = vpack.c.bf16 %v1517, %v1517
        %v1542 = vpack.c.bf16 %v1522, %v1522
        %v1543 = vpack.c.bf16 %v1525, %v1525
        %1544 = vst [vmem:[%s512] sm:$0xf] %v1528
        %1545 = vst [vmem:[%s512 + $0x4] sm:$0xf] %v1529
        %1546 = vst [vmem:[%s512 + $0x8] sm:$0xf] %v1530
        %1547 = vst [vmem:[%s512 + $0xc] sm:$0xf] %v1531
        %1548 = vst [vmem:[%s512 + $0x10] sm:$0xf] %v1532
        %1549 = vst [vmem:[%s512 + $0x14] sm:$0xf] %v1533
        %1550 = vst [vmem:[%s512 + $0x18] sm:$0xf] %v1534
        %1551 = vst [vmem:[%s512 + $0x1c] sm:$0xf] %v1535
        %1552 = vst [vmem:[%s512 + $0x20] sm:$0xf] %v1536
        %1553 = vst [vmem:[%s512 + $0x24] sm:$0xf] %v1537
        %1554 = vst [vmem:[%s512 + $0x28] sm:$0xf] %v1538
        %1555 = vst [vmem:[%s512 + $0x2c] sm:$0xf] %v1539
        %1556 = vst [vmem:[%s512 + $0x30] sm:$0xf] %v1540
        %1557 = vst [vmem:[%s512 + $0x34] sm:$0xf] %v1541
        %1558 = vst [vmem:[%s512 + $0x38] sm:$0xf] %v1542
        %1559 = vst [vmem:[%s512 + $0x3c] sm:$0xf] %v1543
        %s1560 = sand.u32 %s179, 1
        %s1561 = sand.u32 %s179, 1
        %s1562 = smul.addr %s1561, 64
        %s1563 = scalar_lea.vmem [#allocation4], %s1562
        // Predicated region
        $region123: #{transformer_forward.2} parent=113 // pred_check
          %p1564 = pneg %p189
        $region124: #{transformer_forward.2} parent=113 // pred_check_branch
          %1566 = sbr.rel (%p1564) target = $region126
        $region125: #{transformer_forward.2} parent=113 // pred_region
          %s1567 = smul.u32 2, %s21
          %s1568 = smul.u32 8, %s22
          %s1569 = smul.addr %s1568, 2
          %s1570 = sadd.s32 %s23, %s1569
          %s1571 = smul.addr %s1567, 32
          %s1572 = sadd.s32 %s1570, %s1571
          %s1573 = smul.addr %s1572, 4
          %s1574 = scalar_lea.vmem %s5, %s1573
          // Predicated region
          $region127: #{transformer_forward.2} parent=125 // pred_check
            _
          $region128: #{transformer_forward.2} parent=125 // pred_check_branch
            %1576 = sbr.rel (0) target = $region130
          $region129: #{transformer_forward.2} parent=125 // pred_region
            // Predicated region
            $region131: #{transformer_forward.2} parent=129 // pred_check
              _
            $region132: #{transformer_forward.2} parent=129 // pred_check_branch
              %1578 = sbr.rel target = $region134
            $region133: #{transformer_forward.2} parent=129 // pred_region
              // Predicated region
              $region146: #{transformer_forward.2} parent=133 // pred_check
                _
              $region147: #{transformer_forward.2} parent=133 // pred_check_branch
                %1624 = sbr.rel (0) target = $region149
              $region148: #{transformer_forward.2} parent=133 // pred_region
                loop: start=0, step=1, limit=1
                $region150: #{transformer_forward.2} parent=148 // loop_pre_header
                  _
                $region151: #{transformer_forward.2} parent=148 // loop_header
                  %s1626 = sphi 0, %s1630
                  %p1627 = scmp.ge.s32.totalorder %s1626, 1
                  %s1631 = sphi %s1563, %s1563
                  %s1632 = sphi %s1574, %s1574
                $region152: #{transformer_forward.2} parent=148 // loop_header_branch
                  %1629 = sbr.rel (%p1627) target = $region156
                $region153: #{transformer_forward.2} parent=148 // loop_body
                  _
                $region154: #{transformer_forward.2} parent=148 // loop_footer
                  %s1630 = sadd.s32 1, %s1626
                $region155: #{transformer_forward.2} parent=148 // loop_footer_branch
                  %1625 = sbr.rel target = $region151
                $region156: #{transformer_forward.2} parent=148 // loop_exit
                  _
                %s1634 = ssub.s32 16, 1
                loop: start=0, step=1, limit=1
                $region157: #{transformer_forward.2} parent=148 // loop_pre_header
                  _
                $region158: #{transformer_forward.2} parent=148 // loop_header
                  %s1636 = sphi 0, %s1640
                  %p1637 = scmp.ge.s32.totalorder %s1636, 1
                  %s1641 = sphi %s1563, %s1563
                  %s1642 = sphi %s1574, %s1574
                $region159: #{transformer_forward.2} parent=148 // loop_header_branch
                  %1639 = sbr.rel (%p1637) target = $region163
                $region160: #{transformer_forward.2} parent=148 // loop_body
                  %v1643 = vld [vmem:[%s1641] sm:%s1634]
                  %1644 = vst [vmem:[%s1642] sm:%s1634] %v1643
                  %v1645 = vld [vmem:[%s1641 + $0x4] sm:%s1634]
                  %1646 = vst [vmem:[%s1642 + $0x8] sm:%s1634] %v1645
                  %v1647 = vld [vmem:[%s1641 + $0x8] sm:%s1634]
                  %1648 = vst [vmem:[%s1642 + $0x10] sm:%s1634] %v1647
                  %v1649 = vld [vmem:[%s1641 + $0xc] sm:%s1634]
                  %1650 = vst [vmem:[%s1642 + $0x18] sm:%s1634] %v1649
                  %v1651 = vld [vmem:[%s1641 + $0x10] sm:%s1634]
                  %1652 = vst [vmem:[%s1642 + $0x20] sm:%s1634] %v1651
                  %v1653 = vld [vmem:[%s1641 + $0x14] sm:%s1634]
                  %1654 = vst [vmem:[%s1642 + $0x28] sm:%s1634] %v1653
                  %v1655 = vld [vmem:[%s1641 + $0x18] sm:%s1634]
                  %1656 = vst [vmem:[%s1642 + $0x30] sm:%s1634] %v1655
                  %v1657 = vld [vmem:[%s1641 + $0x1c] sm:%s1634]
                  %1658 = vst [vmem:[%s1642 + $0x38] sm:%s1634] %v1657
                  %v1659 = vld [vmem:[%s1641 + $0x20] sm:%s1634]
                  %1660 = vst [vmem:[%s1642 + $0x80] sm:%s1634] %v1659
                  %v1661 = vld [vmem:[%s1641 + $0x24] sm:%s1634]
                  %1662 = vst [vmem:[%s1642 + $0x88] sm:%s1634] %v1661
                  %v1663 = vld [vmem:[%s1641 + $0x28] sm:%s1634]
                  %1664 = vst [vmem:[%s1642 + $0x90] sm:%s1634] %v1663
                  %v1665 = vld [vmem:[%s1641 + $0x2c] sm:%s1634]
                  %1666 = vst [vmem:[%s1642 + $0x98] sm:%s1634] %v1665
                  %v1667 = vld [vmem:[%s1641 + $0x30] sm:%s1634]
                  %1668 = vst [vmem:[%s1642 + $0xa0] sm:%s1634] %v1667
                  %v1669 = vld [vmem:[%s1641 + $0x34] sm:%s1634]
                  %1670 = vst [vmem:[%s1642 + $0xa8] sm:%s1634] %v1669
                  %v1671 = vld [vmem:[%s1641 + $0x38] sm:%s1634]
                  %1672 = vst [vmem:[%s1642 + $0xb0] sm:%s1634] %v1671
                  %v1673 = vld [vmem:[%s1641 + $0x3c] sm:%s1634]
                  %1674 = vst [vmem:[%s1642 + $0xb8] sm:%s1634] %v1673
                $region161: #{transformer_forward.2} parent=148 // loop_footer
                  %s1640 = sadd.s32 1, %s1636
                $region162: #{transformer_forward.2} parent=148 // loop_footer_branch
                  %1635 = sbr.rel target = $region158
                $region163: #{transformer_forward.2} parent=148 // loop_exit
                  _
              $region149: #{transformer_forward.2} parent=133 // pred_fallthru
                _
            $region134: #{transformer_forward.2} parent=129 // pred_fallthru
              _
            // Predicated region
            $region135: #{transformer_forward.2} parent=129 // pred_check
              _
            $region136: #{transformer_forward.2} parent=129 // pred_check_branch
              %1580 = sbr.rel (0) target = $region138
            $region137: #{transformer_forward.2} parent=129 // pred_region
              %s1582 = ssub.s32 16, 1
              loop: start=0, step=1, limit=1
              $region139: #{transformer_forward.2} parent=137 // loop_pre_header
                _
              $region140: #{transformer_forward.2} parent=137 // loop_header
                %s1584 = sphi 0, %s1588
                %p1585 = scmp.ge.s32.totalorder %s1584, 1
                %s1589 = sphi %s1563, %s1563
                %s1590 = sphi %s1574, %s1574
              $region141: #{transformer_forward.2} parent=137 // loop_header_branch
                %1587 = sbr.rel (%p1585) target = $region145
              $region142: #{transformer_forward.2} parent=137 // loop_body
                %v1591 = vld [vmem:[%s1589] sm:%s1582]
                %1592 = vst [vmem:[%s1590] sm:%s1582] %v1591
                %v1593 = vld [vmem:[%s1589 + $0x4] sm:%s1582]
                %1594 = vst [vmem:[%s1590 + $0x8] sm:%s1582] %v1593
                %v1595 = vld [vmem:[%s1589 + $0x8] sm:%s1582]
                %1596 = vst [vmem:[%s1590 + $0x10] sm:%s1582] %v1595
                %v1597 = vld [vmem:[%s1589 + $0xc] sm:%s1582]
                %1598 = vst [vmem:[%s1590 + $0x18] sm:%s1582] %v1597
                %v1599 = vld [vmem:[%s1589 + $0x10] sm:%s1582]
                %1600 = vst [vmem:[%s1590 + $0x20] sm:%s1582] %v1599
                %v1601 = vld [vmem:[%s1589 + $0x14] sm:%s1582]
                %1602 = vst [vmem:[%s1590 + $0x28] sm:%s1582] %v1601
                %v1603 = vld [vmem:[%s1589 + $0x18] sm:%s1582]
                %1604 = vst [vmem:[%s1590 + $0x30] sm:%s1582] %v1603
                %v1605 = vld [vmem:[%s1589 + $0x1c] sm:%s1582]
                %1606 = vst [vmem:[%s1590 + $0x38] sm:%s1582] %v1605
                %v1607 = vld [vmem:[%s1589 + $0x20] sm:%s1582]
                %1608 = vst [vmem:[%s1590 + $0x80] sm:%s1582] %v1607
                %v1609 = vld [vmem:[%s1589 + $0x24] sm:%s1582]
                %1610 = vst [vmem:[%s1590 + $0x88] sm:%s1582] %v1609
                %v1611 = vld [vmem:[%s1589 + $0x28] sm:%s1582]
                %1612 = vst [vmem:[%s1590 + $0x90] sm:%s1582] %v1611
                %v1613 = vld [vmem:[%s1589 + $0x2c] sm:%s1582]
                %1614 = vst [vmem:[%s1590 + $0x98] sm:%s1582] %v1613
                %v1615 = vld [vmem:[%s1589 + $0x30] sm:%s1582]
                %1616 = vst [vmem:[%s1590 + $0xa0] sm:%s1582] %v1615
                %v1617 = vld [vmem:[%s1589 + $0x34] sm:%s1582]
                %1618 = vst [vmem:[%s1590 + $0xa8] sm:%s1582] %v1617
                %v1619 = vld [vmem:[%s1589 + $0x38] sm:%s1582]
                %1620 = vst [vmem:[%s1590 + $0xb0] sm:%s1582] %v1619
                %v1621 = vld [vmem:[%s1589 + $0x3c] sm:%s1582]
                %1622 = vst [vmem:[%s1590 + $0xb8] sm:%s1582] %v1621
              $region143: #{transformer_forward.2} parent=137 // loop_footer
                %s1588 = sadd.s32 1, %s1584
              $region144: #{transformer_forward.2} parent=137 // loop_footer_branch
                %1583 = sbr.rel target = $region140
              $region145: #{transformer_forward.2} parent=137 // loop_exit
                _
            $region138: #{transformer_forward.2} parent=129 // pred_fallthru
              _
          $region130: #{transformer_forward.2} parent=125 // pred_fallthru
            _
          %1675 = vnop
        $region126: #{transformer_forward.2} parent=113 // pred_fallthru
          _
      $region114: #{transformer_forward.2} parent=5 // pred_fallthru
        _
      %p1676 = scmp.le.s32.totalorder 2, %s11
      // Predicated region
      $region164: #{transformer_forward.2} parent=5 // pred_check
        %p1677 = pneg %p1676
      $region165: #{transformer_forward.2} parent=5 // pred_check_branch
        %1679 = sbr.rel (%p1677) target = $region167
      $region166: #{transformer_forward.2} parent=5 // pred_region
        %s1680 = ssub.s32 %s11, 2
        // Predicated region
        $region168: #{transformer_forward.2} parent=166 // pred_check
          %p1681 = pneg %p195
        $region169: #{transformer_forward.2} parent=166 // pred_check_branch
          %1683 = sbr.rel (%p1681) target = $region171
        $region170: #{transformer_forward.2} parent=166 // pred_region
          %s1684 = sand.u32 %s180, 1
          %s1685 = sand.u32 %s180, 1
          %s1686 = smul.addr %s1685, 64
          %s1687 = scalar_lea.vmem [#allocation4], %s1686
        $region171: #{transformer_forward.2} parent=166 // pred_fallthru
          _
      $region167: #{transformer_forward.2} parent=5 // pred_fallthru
        _
    $region6: #{transformer_forward.2} parent=1 // loop_footer
      %s15 = sadd.s32 1, %s11
    $region7: #{transformer_forward.2} parent=1 // loop_footer_branch
      %10 = sbr.rel target = $region3
    $region8: #{transformer_forward.2} parent=1 // loop_exit
      _

// kernel: transformer_forward.3
$region0: #{transformer_forward.3}
  #allocation0 [shape = 'u32[]', space=smem, size = 0x4, offset = 0x4, fixed_abs, tag = 'smem constant byte address 0x4 - core index']
  #allocation1 [shape = 'u32[144,128]{1,0:T(1,128)}', space=vmem, size = 0x12000, scoped, tag = 'internal scratch']
  %s0 = inlined_call_operand.vmem [shape: f32[512,128], index: 0, kind: input, shape index: {}]
  %s1 = inlined_call_operand.vmem [shape: bf16[512,128], index: 1, kind: input, shape index: {}]
  %s2 = inlined_call_operand.vmem [shape: bf16[128,128], index: 2, kind: input, shape index: {}]
  %s3 = inlined_call_operand.vmem [shape: f32[4,128], index: 3, kind: input, shape index: {}]
  %s4 = inlined_call_operand.vmem [shape: bf16[256,512], index: 4, kind: input, shape index: {}]
  %s5 = inlined_call_operand.vmem [shape: bf16[512,128], index: 5, kind: input, shape index: {}]
  %s6 = inlined_call_operand.hbm [shape: f32[512,128], index: 6, kind: output, shape index: {}]
  %s7 = sld [smem:[#allocation0]]
  $region57: #{transformer_forward.3} parent=0
    _
  %s9 = ssub.s32 1, %s7
  %s10 = scalar_select 0, %s9, %s7
  $region1: #{transformer_forward.3} parent=0
    #allocation2 [shape = 'u8[262144]{0}', space=vmem, size = 0x40000, scoped, tag = 'output window, operand 0']
    #allocation3 [shape = 's32[2]{0}', space=sflag, size = 0x8, scoped, tag = 'scoped memory for transformer_forward.3']
    %11 = vsyncpa [#allocation3], 0
    %s12 = scalar_lea.sflag [#allocation3], 1
    %13 = vsyncpa %s12, 0
    loop: start=0, step=1, limit=4
    $region2: #{transformer_forward.3} parent=1 // loop_pre_header
      _
    $region3: #{transformer_forward.3} parent=1 // loop_header
      %s15 = sphi 0, %s19
      %p16 = scmp.ge.s32.totalorder %s15, 4
      %s25 = sphi 0, %s27
      %s28 = sphi 0, %s25
      %s29 = sphi 0, %s28
      %s45 = sphi 0, %s29
      %s51 = sphi 0, %s53
      %s54 = sphi 0, %s51
      %s55 = sphi 0, %s54
      %s71 = sphi 0, %s55
      %s75 = sphi 0, %s75
      %s77 = sphi 0, %s75
      %s78 = sphi 0, %s77
      %s92 = sphi 0, %s78
      %s96 = sphi 0, %s96
      %s98 = sphi 0, %s96
      %s99 = sphi 0, %s98
      %s113 = sphi 0, %s99
      %s117 = sphi 0, %s117
      %s119 = sphi 0, %s117
      %s120 = sphi 0, %s119
      %s134 = sphi 0, %s120
      %s138 = sphi 0, %s138
      %s140 = sphi 0, %s138
      %s141 = sphi 0, %s140
      %s155 = sphi 0, %s141
      %s161 = sphi 0, %s163
      %s164 = sphi 0, %s161
      %s165 = sphi 0, %s164
      %s181 = sphi 0, %s165
    $region4: #{transformer_forward.3} parent=1 // loop_header_branch
      %18 = sbr.rel (%p16) target = $region8
    $region5: #{transformer_forward.3} parent=1 // loop_body
      %s20 = ssub.s32 %s15, 1
      %s21 = ssub.s32 %s15, 2
      %s22 = sadd.s32 %s15, 1
      %s23 = ssub.s32 %s15, %s22
      %p24 = scmp.eq.s32.totalorder %s23, 0
      %s26 = sadd.s32 %s25, 1
      %s27 = scalar_select %p24, %s25, %s26
      %p30 = pneg %p24
      %p31 = scmp.eq.s32.totalorder %s15, 1
      %p32 = por %p30, %p31
      %p33 = scmp.ne.s32.totalorder %s25, %s28
      %p34 = scmp.eq.s32.totalorder %s15, 0
      %p35 = por %p33, %p34
      %p36 = scmp.ne.s32.totalorder %s25, %s28
      %p37 = scmp.eq.s32.totalorder %s20, 1
      %p38 = por %p36, %p37
      %p39 = scmp.ne.s32.totalorder %s28, %s29
      %p40 = scmp.eq.s32.totalorder %s20, 0
      %p41 = por %p39, %p40
      %p42 = scmp.ne.s32.totalorder %s28, %s29
      %p43 = scmp.eq.s32.totalorder %s21, 1
      %p44 = por %p42, %p43
      %p46 = scmp.ne.s32.totalorder %s29, %s45
      %p47 = scmp.eq.s32.totalorder %s21, 0
      %p48 = por %p46, %p47
      %s49 = ssub.s32 %s15, %s22
      %p50 = scmp.eq.s32.totalorder %s49, 0
      %s52 = sadd.s32 %s51, 1
      %s53 = scalar_select %p50, %s51, %s52
      %p56 = pneg %p50
      %p57 = scmp.eq.s32.totalorder %s15, 1
      %p58 = por %p56, %p57
      %p59 = scmp.ne.s32.totalorder %s51, %s54
      %p60 = scmp.eq.s32.totalorder %s15, 0
      %p61 = por %p59, %p60
      %p62 = scmp.ne.s32.totalorder %s51, %s54
      %p63 = scmp.eq.s32.totalorder %s20, 1
      %p64 = por %p62, %p63
      %p65 = scmp.ne.s32.totalorder %s54, %s55
      %p66 = scmp.eq.s32.totalorder %s20, 0
      %p67 = por %p65, %p66
      %p68 = scmp.ne.s32.totalorder %s54, %s55
      %p69 = scmp.eq.s32.totalorder %s21, 1
      %p70 = por %p68, %p69
      %p72 = scmp.ne.s32.totalorder %s55, %s71
      %p73 = scmp.eq.s32.totalorder %s21, 0
      %p74 = por %p72, %p73
      %s76 = sadd.s32 %s75, 1
      %p79 = scmp.eq.s32.totalorder %s15, 1
      %p80 = scmp.ne.s32.totalorder %s75, %s77
      %p81 = scmp.eq.s32.totalorder %s15, 0
      %p82 = por %p80, %p81
      %p83 = scmp.ne.s32.totalorder %s75, %s77
      %p84 = scmp.eq.s32.totalorder %s20, 1
      %p85 = por %p83, %p84
      %p86 = scmp.ne.s32.totalorder %s77, %s78
      %p87 = scmp.eq.s32.totalorder %s20, 0
      %p88 = por %p86, %p87
      %p89 = scmp.ne.s32.totalorder %s77, %s78
      %p90 = scmp.eq.s32.totalorder %s21, 1
      %p91 = por %p89, %p90
      %p93 = scmp.ne.s32.totalorder %s78, %s92
      %p94 = scmp.eq.s32.totalorder %s21, 0
      %p95 = por %p93, %p94
      %s97 = sadd.s32 %s96, 1
      %p100 = scmp.eq.s32.totalorder %s15, 1
      %p101 = scmp.ne.s32.totalorder %s96, %s98
      %p102 = scmp.eq.s32.totalorder %s15, 0
      %p103 = por %p101, %p102
      %p104 = scmp.ne.s32.totalorder %s96, %s98
      %p105 = scmp.eq.s32.totalorder %s20, 1
      %p106 = por %p104, %p105
      %p107 = scmp.ne.s32.totalorder %s98, %s99
      %p108 = scmp.eq.s32.totalorder %s20, 0
      %p109 = por %p107, %p108
      %p110 = scmp.ne.s32.totalorder %s98, %s99
      %p111 = scmp.eq.s32.totalorder %s21, 1
      %p112 = por %p110, %p111
      %p114 = scmp.ne.s32.totalorder %s99, %s113
      %p115 = scmp.eq.s32.totalorder %s21, 0
      %p116 = por %p114, %p115
      %s118 = sadd.s32 %s117, 1
      %p121 = scmp.eq.s32.totalorder %s15, 1
      %p122 = scmp.ne.s32.totalorder %s117, %s119
      %p123 = scmp.eq.s32.totalorder %s15, 0
      %p124 = por %p122, %p123
      %p125 = scmp.ne.s32.totalorder %s117, %s119
      %p126 = scmp.eq.s32.totalorder %s20, 1
      %p127 = por %p125, %p126
      %p128 = scmp.ne.s32.totalorder %s119, %s120
      %p129 = scmp.eq.s32.totalorder %s20, 0
      %p130 = por %p128, %p129
      %p131 = scmp.ne.s32.totalorder %s119, %s120
      %p132 = scmp.eq.s32.totalorder %s21, 1
      %p133 = por %p131, %p132
      %p135 = scmp.ne.s32.totalorder %s120, %s134
      %p136 = scmp.eq.s32.totalorder %s21, 0
      %p137 = por %p135, %p136
      %s139 = sadd.s32 %s138, 1
      %p142 = scmp.eq.s32.totalorder %s15, 1
      %p143 = scmp.ne.s32.totalorder %s138, %s140
      %p144 = scmp.eq.s32.totalorder %s15, 0
      %p145 = por %p143, %p144
      %p146 = scmp.ne.s32.totalorder %s138, %s140
      %p147 = scmp.eq.s32.totalorder %s20, 1
      %p148 = por %p146, %p147
      %p149 = scmp.ne.s32.totalorder %s140, %s141
      %p150 = scmp.eq.s32.totalorder %s20, 0
      %p151 = por %p149, %p150
      %p152 = scmp.ne.s32.totalorder %s140, %s141
      %p153 = scmp.eq.s32.totalorder %s21, 1
      %p154 = por %p152, %p153
      %p156 = scmp.ne.s32.totalorder %s141, %s155
      %p157 = scmp.eq.s32.totalorder %s21, 0
      %p158 = por %p156, %p157
      %s159 = ssub.s32 %s15, %s22
      %p160 = scmp.eq.s32.totalorder %s159, 0
      %s162 = sadd.s32 %s161, 1
      %s163 = scalar_select %p160, %s161, %s162
      %p166 = pneg %p160
      %p167 = scmp.eq.s32.totalorder %s15, 1
      %p168 = por %p166, %p167
      %p169 = scmp.ne.s32.totalorder %s161, %s164
      %p170 = scmp.eq.s32.totalorder %s15, 0
      %p171 = por %p169, %p170
      %p172 = scmp.ne.s32.totalorder %s161, %s164
      %p173 = scmp.eq.s32.totalorder %s20, 1
      %p174 = por %p172, %p173
      %p175 = scmp.ne.s32.totalorder %s164, %s165
      %p176 = scmp.eq.s32.totalorder %s20, 0
      %p177 = por %p175, %p176
      %p178 = scmp.ne.s32.totalorder %s164, %s165
      %p179 = scmp.eq.s32.totalorder %s21, 1
      %p180 = por %p178, %p179
      %p182 = scmp.ne.s32.totalorder %s165, %s181
      %p183 = scmp.eq.s32.totalorder %s21, 0
      %p184 = por %p182, %p183
      %p185 = scmp.le.s32.totalorder 1, %s15
      %p186 = scmp.lt.s32.totalorder %s15, 3
      %p187 = pnand %p185, %p186
      %p188 = pneg %p187
      // Predicated region
      $region9: #{transformer_forward.3} parent=5 // pred_check
        _
      $region10: #{transformer_forward.3} parent=5 // pred_check_branch
        %190 = sbr.rel (%p187) target = $region12
      $region11: #{transformer_forward.3} parent=5 // pred_region
        %s191 = ssub.s32 %s15, 1
        // Predicated region
        $region13: #{transformer_forward.3} parent=11 // pred_check
          %p192 = pneg %p88
        $region14: #{transformer_forward.3} parent=11 // pred_check_branch
          %194 = sbr.rel (%p192) target = $region16
        $region15: #{transformer_forward.3} parent=11 // pred_region
          _
        $region16: #{transformer_forward.3} parent=11 // pred_fallthru
          _
        // Predicated region
        $region17: #{transformer_forward.3} parent=11 // pred_check
          %p195 = pneg %p109
        $region18: #{transformer_forward.3} parent=11 // pred_check_branch
          %197 = sbr.rel (%p195) target = $region20
        $region19: #{transformer_forward.3} parent=11 // pred_region
          _
        $region20: #{transformer_forward.3} parent=11 // pred_fallthru
          _
        // Predicated region
        $region21: #{transformer_forward.3} parent=11 // pred_check
          %p198 = pneg %p130
        $region22: #{transformer_forward.3} parent=11 // pred_check_branch
          %200 = sbr.rel (%p198) target = $region24
        $region23: #{transformer_forward.3} parent=11 // pred_region
          _
        $region24: #{transformer_forward.3} parent=11 // pred_fallthru
          _
        // Predicated region
        $region25: #{transformer_forward.3} parent=11 // pred_check
          %p201 = pneg %p151
        $region26: #{transformer_forward.3} parent=11 // pred_check_branch
          %203 = sbr.rel (%p201) target = $region28
        $region27: #{transformer_forward.3} parent=11 // pred_region
          _
        $region28: #{transformer_forward.3} parent=11 // pred_fallthru
          _
      $region12: #{transformer_forward.3} parent=5 // pred_fallthru
        _
      %p204 = scmp.lt.s32.totalorder %s15, 2
      // Predicated region
      $region29: #{transformer_forward.3} parent=5 // pred_check
        %p205 = pneg %p204
      $region30: #{transformer_forward.3} parent=5 // pred_check_branch
        %207 = sbr.rel (%p205) target = $region32
      $region31: #{transformer_forward.3} parent=5 // pred_region
        // Predicated region
        $region33: #{transformer_forward.3} parent=31 // pred_check
          %p208 = pneg %p35
        $region34: #{transformer_forward.3} parent=31 // pred_check_branch
          %210 = sbr.rel (%p208) target = $region36
        $region35: #{transformer_forward.3} parent=31 // pred_region
          %s211 = smul.u32 32, %s15
          %p212 = scmp.lt.s32.totalorder %s211, 63
          %s213 = scalar_select %p212, %s211, 63
          %s214 = smul.addr %s213, 8
          %s215 = scalar_lea.vmem %s0, %s214
          %s216 = smul.u32 32, %s15
        $region36: #{transformer_forward.3} parent=31 // pred_fallthru
          _
        // Predicated region
        $region37: #{transformer_forward.3} parent=31 // pred_check
          %p217 = pneg %p61
        $region38: #{transformer_forward.3} parent=31 // pred_check_branch
          %219 = sbr.rel (%p217) target = $region40
        $region39: #{transformer_forward.3} parent=31 // pred_region
          %s220 = smul.u32 32, %s15
          %p221 = scmp.lt.s32.totalorder %s220, 63
          %s222 = scalar_select %p221, %s220, 63
          %s223 = smul.addr %s222, 4
          %s224 = scalar_lea.vmem %s1, %s223
          %s225 = smul.u32 32, %s15
        $region40: #{transformer_forward.3} parent=31 // pred_fallthru
          _
      $region32: #{transformer_forward.3} parent=5 // pred_fallthru
        _
      %p226 = scmp.le.s32.totalorder 1, %s15
      %p227 = scmp.lt.s32.totalorder %s15, 3
      %p228 = pnand %p226, %p227
      %p229 = pneg %p228
      // Predicated region
      $region41: #{transformer_forward.3} parent=5 // pred_check
        _
      $region42: #{transformer_forward.3} parent=5 // pred_check_branch
        %231 = sbr.rel (%p228) target = $region44
      $region43: #{transformer_forward.3} parent=5 // pred_region
        %s232 = ssub.s32 %s15, 1
        %s233 = smul.u32 32, %s20
        %p234 = scmp.lt.s32.totalorder %s233, 63
        %s235 = scalar_select %p234, %s233, 63
        %s236 = smul.addr %s235, 8
        %s237 = scalar_lea.vmem %s0, %s236
        %p238 = pneg %p41
        %p239 = pneg %p38
        %s240 = smul.u32 32, %s20
        %p241 = scmp.lt.s32.totalorder %s240, 63
        %s242 = scalar_select %p241, %s240, 63
        %s243 = smul.addr %s242, 4
        %s244 = scalar_lea.vmem %s1, %s243
        %p245 = pneg %p67
        %p246 = pneg %p64
        %p247 = pneg %p88
        %p248 = pneg %p85
        %p249 = pneg %p109
        %p250 = pneg %p106
        %p251 = pneg %p130
        %p252 = pneg %p127
        %p253 = pneg %p151
        %p254 = pneg %p148
        %p255 = pneg %p177
        %p256 = pneg %p174
        %s257 = sand.u32 %s164, 1
        %s258 = scalar_lea.sflag [#allocation3], %s257
        %s259 = sand.u32 %s164, 1
        %s260 = smul.addr %s259, 256
        %s261 = scalar_lea.vmem [#allocation2], %s260
        %s262 = smul.u32 32, %s20
        %p263 = scmp.lt.s32.totalorder %s262, 63
        %s264 = scalar_select %p263, %s262, 63
        %s265 = smul.addr %s264, 8
        %s266 = scalar_lea.vmem %s0, %s265
        %s267 = smul.u32 32, %s20
        %s268 = smul.u32 32, %s20
        %p269 = scmp.lt.s32.totalorder %s268, 63
        %s270 = scalar_select %p269, %s268, 63
        %s271 = smul.addr %s270, 4
        %s272 = scalar_lea.vmem %s1, %s271
        %s273 = smul.u32 32, %s20
        %s274 = smul.u32 32, %s20
        %v276 = vld [vmem:[%s266] sm:$0xff]
        %v277 = vld [vmem:[%s266 + $0x8] sm:$0xff]
        %v278 = vld [vmem:[%s266 + $0x10] sm:$0xff]
        %v279 = vld [vmem:[%s266 + $0x18] sm:$0xff]
        %v280 = vld [vmem:[%s266 + $0x20] sm:$0xff]
        %v281 = vld [vmem:[%s266 + $0x28] sm:$0xff]
        %v282 = vld [vmem:[%s266 + $0x30] sm:$0xff]
        %v283 = vld [vmem:[%s266 + $0x38] sm:$0xff]
        %v284 = vld [vmem:[%s266 + $0x40] sm:$0xff]
        %v285 = vld [vmem:[%s266 + $0x48] sm:$0xff]
        %v286 = vld [vmem:[%s266 + $0x50] sm:$0xff]
        %v287 = vld [vmem:[%s266 + $0x58] sm:$0xff]
        %v288 = vld [vmem:[%s266 + $0x60] sm:$0xff]
        %v289 = vld [vmem:[%s266 + $0x68] sm:$0xff]
        %v290 = vld [vmem:[%s266 + $0x70] sm:$0xff]
        %v291 = vld [vmem:[%s266 + $0x78] sm:$0xff]
        %v292 = vld [vmem:[%s266 + $0x80] sm:$0xff]
        %v293 = vld [vmem:[%s266 + $0x88] sm:$0xff]
        %v294 = vld [vmem:[%s266 + $0x90] sm:$0xff]
        %v295 = vld [vmem:[%s266 + $0x98] sm:$0xff]
        %v296 = vld [vmem:[%s266 + $0xa0] sm:$0xff]
        %v297 = vld [vmem:[%s266 + $0xa8] sm:$0xff]
        %v298 = vld [vmem:[%s266 + $0xb0] sm:$0xff]
        %v299 = vld [vmem:[%s266 + $0xb8] sm:$0xff]
        %v300 = vld [vmem:[%s266 + $0xc0] sm:$0xff]
        %v301 = vld [vmem:[%s266 + $0xc8] sm:$0xff]
        %v302 = vld [vmem:[%s266 + $0xd0] sm:$0xff]
        %v303 = vld [vmem:[%s266 + $0xd8] sm:$0xff]
        %v304 = vld [vmem:[%s266 + $0xe0] sm:$0xff]
        %v305 = vld [vmem:[%s266 + $0xe8] sm:$0xff]
        %v306 = vld [vmem:[%s266 + $0xf0] sm:$0xff]
        %v307 = vld [vmem:[%s266 + $0xf8] sm:$0xff]
        %v308 = vld [vmem:[%s272] sm:$0xf]
        %v309 = vld [vmem:[%s272 + $0x4] sm:$0xf]
        %v310 = vld [vmem:[%s272 + $0x8] sm:$0xf]
        %v311 = vld [vmem:[%s272 + $0xc] sm:$0xf]
        %v312 = vld [vmem:[%s272 + $0x10] sm:$0xf]
        %v313 = vld [vmem:[%s272 + $0x14] sm:$0xf]
        %v314 = vld [vmem:[%s272 + $0x18] sm:$0xf]
        %v315 = vld [vmem:[%s272 + $0x1c] sm:$0xf]
        %v316 = vld [vmem:[%s272 + $0x20] sm:$0xf]
        %v317 = vld [vmem:[%s272 + $0x24] sm:$0xf]
        %v318 = vld [vmem:[%s272 + $0x28] sm:$0xf]
        %v319 = vld [vmem:[%s272 + $0x2c] sm:$0xf]
        %v320 = vld [vmem:[%s272 + $0x30] sm:$0xf]
        %v321 = vld [vmem:[%s272 + $0x34] sm:$0xf]
        %v322 = vld [vmem:[%s272 + $0x38] sm:$0xf]
        %v323 = vld [vmem:[%s272 + $0x3c] sm:$0xf]
        %v324 = vld [vmem:[%s272 + $0x40] sm:$0xf]
        %v325 = vld [vmem:[%s272 + $0x44] sm:$0xf]
        %v326 = vld [vmem:[%s272 + $0x48] sm:$0xf]
        %v327 = vld [vmem:[%s272 + $0x4c] sm:$0xf]
        %v328 = vld [vmem:[%s272 + $0x50] sm:$0xf]
        %v329 = vld [vmem:[%s272 + $0x54] sm:$0xf]
        %v330 = vld [vmem:[%s272 + $0x58] sm:$0xf]
        %v331 = vld [vmem:[%s272 + $0x5c] sm:$0xf]
        %v332 = vld [vmem:[%s272 + $0x60] sm:$0xf]
        %v333 = vld [vmem:[%s272 + $0x64] sm:$0xf]
        %v334 = vld [vmem:[%s272 + $0x68] sm:$0xf]
        %v335 = vld [vmem:[%s272 + $0x6c] sm:$0xf]
        %v336 = vld [vmem:[%s272 + $0x70] sm:$0xf]
        %v337 = vld [vmem:[%s272 + $0x74] sm:$0xf]
        %v338 = vld [vmem:[%s272 + $0x78] sm:$0xf]
        %v339 = vld [vmem:[%s272 + $0x7c] sm:$0xf]
        %v340 = vld [vmem:[%s2] sm:$0xf]
        %v341 = vld [vmem:[%s2 + $0x4] sm:$0xf]
        %v342 = vld [vmem:[%s2 + $0x8] sm:$0xf]
        %v343 = vld [vmem:[%s2 + $0xc] sm:$0xf]
        %v344 = vld [vmem:[%s2 + $0x10] sm:$0xf]
        %v345 = vld [vmem:[%s2 + $0x14] sm:$0xf]
        %v346 = vld [vmem:[%s2 + $0x18] sm:$0xf]
        %v347 = vld [vmem:[%s2 + $0x1c] sm:$0xf]
        %v348 = vld [vmem:[%s2 + $0x20] sm:$0xf]
        %v349 = vld [vmem:[%s2 + $0x24] sm:$0xf]
        %v350 = vld [vmem:[%s2 + $0x28] sm:$0xf]
        %v351 = vld [vmem:[%s2 + $0x2c] sm:$0xf]
        %v352 = vld [vmem:[%s2 + $0x30] sm:$0xf]
        %v353 = vld [vmem:[%s2 + $0x34] sm:$0xf]
        %v354 = vld [vmem:[%s2 + $0x38] sm:$0xf]
        %v355 = vld [vmem:[%s2 + $0x3c] sm:$0xf]
        %v388 = vunpack.c.l.b16 %v308
        %v389 = vunpack.c.l.b16 %v309
        %v390 = vunpack.c.l.b16 %v310
        %v391 = vunpack.c.l.b16 %v311
        %v392 = vunpack.c.l.b16 %v312
        %v393 = vunpack.c.l.b16 %v313
        %v394 = vunpack.c.l.b16 %v314
        %v395 = vunpack.c.l.b16 %v315
        %v396 = vunpack.c.l.b16 %v316
        %v397 = vunpack.c.l.b16 %v317
        %v398 = vunpack.c.l.b16 %v318
        %v399 = vunpack.c.l.b16 %v319
        %v400 = vunpack.c.l.b16 %v320
        %v401 = vunpack.c.l.b16 %v321
        %v402 = vunpack.c.l.b16 %v322
        %v403 = vunpack.c.l.b16 %v323
        %v404 = vunpack.c.l.b16 %v324
        %v405 = vunpack.c.l.b16 %v325
        %v406 = vunpack.c.l.b16 %v326
        %v407 = vunpack.c.l.b16 %v327
        %v408 = vunpack.c.l.b16 %v328
        %v409 = vunpack.c.l.b16 %v329
        %v410 = vunpack.c.l.b16 %v330
        %v411 = vunpack.c.l.b16 %v331
        %v412 = vunpack.c.l.b16 %v332
        %v413 = vunpack.c.l.b16 %v333
        %v414 = vunpack.c.l.b16 %v334
        %v415 = vunpack.c.l.b16 %v335
        %v416 = vunpack.c.l.b16 %v336
        %v417 = vunpack.c.l.b16 %v337
        %v418 = vunpack.c.l.b16 %v338
        %v419 = vunpack.c.l.b16 %v339
        %v420 = vpack.c.b16 %v389, %v388
        %v421 = vpack.c.b16 %v391, %v390
        %v422 = vpack.c.b16 %v393, %v392
        %v423 = vpack.c.b16 %v395, %v394
        %v424 = vpack.c.b16 %v397, %v396
        %v425 = vpack.c.b16 %v399, %v398
        %v426 = vpack.c.b16 %v401, %v400
        %v427 = vpack.c.b16 %v403, %v402
        %v428 = vpack.c.b16 %v405, %v404
        %v429 = vpack.c.b16 %v407, %v406
        %v430 = vpack.c.b16 %v409, %v408
        %v431 = vpack.c.b16 %v411, %v410
        %v432 = vpack.c.b16 %v413, %v412
        %v433 = vpack.c.b16 %v415, %v414
        %v434 = vpack.c.b16 %v417, %v416
        %v435 = vpack.c.b16 %v419, %v418
        %v468 = vunpack.c.l.b16 %v340
        %v469 = vunpack.c.l.b16 %v341
        %v470 = vunpack.c.l.b16 %v342
        %v471 = vunpack.c.l.b16 %v343
        %v472 = vunpack.c.l.b16 %v344
        %v473 = vunpack.c.l.b16 %v345
        %v474 = vunpack.c.l.b16 %v346
        %v475 = vunpack.c.l.b16 %v347
        %v476 = vunpack.c.l.b16 %v348
        %v477 = vunpack.c.l.b16 %v349
        %v478 = vunpack.c.l.b16 %v350
        %v479 = vunpack.c.l.b16 %v351
        %v480 = vunpack.c.l.b16 %v352
        %v481 = vunpack.c.l.b16 %v353
        %v482 = vunpack.c.l.b16 %v354
        %v483 = vunpack.c.l.b16 %v355
        %v484 = vpack.c.b16 %v469, %v468
        %v485 = vpack.c.b16 %v471, %v470
        %v486 = vpack.c.b16 %v473, %v472
        %v487 = vpack.c.b16 %v475, %v474
        %v488 = vpack.c.b16 %v477, %v476
        %v489 = vpack.c.b16 %v479, %v478
        %v490 = vpack.c.b16 %v481, %v480
        %v491 = vpack.c.b16 %v483, %v482
        %500 = vmatprep.subr.bf16.mxu0 0
        %501 = vmatpush1.bf16.msra.mxu0 %v491
        %502 = vmatprep.subr.bf16.mxu0 0
        %503 = vmatpush1.bf16.msra.mxu0 %v490
        %504 = vmatprep.subr.bf16.mxu0 0
        %505 = vmatpush1.bf16.msra.mxu0 %v489
        %506 = vmatprep.subr.bf16.mxu0 0
        %507 = vmatpush1.bf16.msra.mxu0 %v488
        %508 = vmatprep.subr.bf16.mxu0 0
        %509 = vmatpush1.bf16.msra.mxu0 %v487
        %510 = vmatprep.subr.bf16.mxu0 0
        %511 = vmatpush1.bf16.msra.mxu0 %v486
        %512 = vmatprep.subr.bf16.mxu0 0
        %513 = vmatpush1.bf16.msra.mxu0 %v485
        %514 = vmatprep.subr.bf16.mxu0 0
        %515 = vmatpush1.bf16.msra.mxu0 %v484
        %516 = vmatprep.subr.bf16.mxu0 0
        %517 = vmatpush2.bf16.msra.mxu0 0
        %518 = vmatprep.subr.bf16.mxu0 0
        %519 = vmatpush2.bf16.msra.mxu0 0
        %520 = vmatprep.subr.bf16.mxu0 0
        %521 = vmatpush2.bf16.msra.mxu0 0
        %522 = vmatprep.subr.bf16.mxu0 0
        %523 = vmatpush2.bf16.msra.mxu0 0
        %524 = vmatprep.subr.bf16.mxu0 0
        %525 = vmatpush2.bf16.msra.mxu0 0
        %526 = vmatprep.subr.bf16.mxu0 0
        %527 = vmatpush2.bf16.msra.mxu0 0
        %528 = vmatprep.subr.bf16.mxu0 0
        %529 = vmatpush2.bf16.msra.mxu0 0
        %530 = vmatprep.subr.bf16.mxu0 0
        %531 = vmatpush2.bf16.msra.mxu0 0
        %532 = vmatprep.mubr.bf16.mxu0 0
        %533 = vmatmul.mubr.bf16.gmra.mxu0 %v420
        %v534 = vpop.f32.mrf.mxu0
        %v535 = vadd.f32 0.0, %v534
        %v536 = vpop.f32.mrf.mxu0
        %v537 = vpop.f32.mrf.mxu0
        %v538 = vadd.f32 0.0, %v537
        %v539 = vpop.f32.mrf.mxu0
        %540 = vmatprep.mubr.bf16.mxu0 0
        %541 = vmatmul.mubr.bf16.gmra.mxu0 %v421
        %v542 = vpop.f32.mrf.mxu0
        %v543 = vadd.f32 0.0, %v542
        %v544 = vpop.f32.mrf.mxu0
        %v545 = vpop.f32.mrf.mxu0
        %v546 = vadd.f32 0.0, %v545
        %v547 = vpop.f32.mrf.mxu0
        %548 = vmatprep.mubr.bf16.mxu0 0
        %549 = vmatmul.mubr.bf16.gmra.mxu0 %v422
        %v550 = vpop.f32.mrf.mxu0
        %v551 = vadd.f32 0.0, %v550
        %v552 = vpop.f32.mrf.mxu0
        %v553 = vpop.f32.mrf.mxu0
        %v554 = vadd.f32 0.0, %v553
        %v555 = vpop.f32.mrf.mxu0
        %556 = vmatprep.mubr.bf16.mxu0 0
        %557 = vmatmul.mubr.bf16.gmra.mxu0 %v423
        %v558 = vpop.f32.mrf.mxu0
        %v559 = vadd.f32 0.0, %v558
        %v560 = vpop.f32.mrf.mxu0
        %v561 = vpop.f32.mrf.mxu0
        %v562 = vadd.f32 0.0, %v561
        %v563 = vpop.f32.mrf.mxu0
        %564 = vmatprep.mubr.bf16.mxu0 0
        %565 = vmatmul.mubr.bf16.gmra.mxu0 %v424
        %v566 = vpop.f32.mrf.mxu0
        %v567 = vadd.f32 0.0, %v566
        %v568 = vpop.f32.mrf.mxu0
        %v569 = vpop.f32.mrf.mxu0
        %v570 = vadd.f32 0.0, %v569
        %v571 = vpop.f32.mrf.mxu0
        %572 = vmatprep.mubr.bf16.mxu0 0
        %573 = vmatmul.mubr.bf16.gmra.mxu0 %v425
        %v574 = vpop.f32.mrf.mxu0
        %v575 = vadd.f32 0.0, %v574
        %v576 = vpop.f32.mrf.mxu0
        %v577 = vpop.f32.mrf.mxu0
        %v578 = vadd.f32 0.0, %v577
        %v579 = vpop.f32.mrf.mxu0
        %580 = vmatprep.mubr.bf16.mxu0 0
        %581 = vmatmul.mubr.bf16.gmra.mxu0 %v426
        %v582 = vpop.f32.mrf.mxu0
        %v583 = vadd.f32 0.0, %v582
        %v584 = vpop.f32.mrf.mxu0
        %v585 = vpop.f32.mrf.mxu0
        %v586 = vadd.f32 0.0, %v585
        %v587 = vpop.f32.mrf.mxu0
        %588 = vmatprep.mubr.bf16.mxu0 0
        %589 = vmatmul.mubr.bf16.gmra.mxu0 %v427
        %v590 = vpop.f32.mrf.mxu0
        %v591 = vadd.f32 0.0, %v590
        %v592 = vpop.f32.mrf.mxu0
        %v593 = vpop.f32.mrf.mxu0
        %v594 = vadd.f32 0.0, %v593
        %v595 = vpop.f32.mrf.mxu0
        %596 = vmatprep.mubr.bf16.mxu0 0
        %597 = vmatmul.mubr.bf16.gmra.mxu0 %v428
        %v598 = vpop.f32.mrf.mxu0
        %v599 = vadd.f32 0.0, %v598
        %v600 = vpop.f32.mrf.mxu0
        %v601 = vpop.f32.mrf.mxu0
        %v602 = vadd.f32 0.0, %v601
        %v603 = vpop.f32.mrf.mxu0
        %604 = vmatprep.mubr.bf16.mxu0 0
        %605 = vmatmul.mubr.bf16.gmra.mxu0 %v429
        %v606 = vpop.f32.mrf.mxu0
        %v607 = vadd.f32 0.0, %v606
        %v608 = vpop.f32.mrf.mxu0
        %v609 = vpop.f32.mrf.mxu0
        %v610 = vadd.f32 0.0, %v609
        %v611 = vpop.f32.mrf.mxu0
        %612 = vmatprep.mubr.bf16.mxu0 0
        %613 = vmatmul.mubr.bf16.gmra.mxu0 %v430
        %v614 = vpop.f32.mrf.mxu0
        %v615 = vadd.f32 0.0, %v614
        %v616 = vpop.f32.mrf.mxu0
        %v617 = vpop.f32.mrf.mxu0
        %v618 = vadd.f32 0.0, %v617
        %v619 = vpop.f32.mrf.mxu0
        %620 = vmatprep.mubr.bf16.mxu0 0
        %621 = vmatmul.mubr.bf16.gmra.mxu0 %v431
        %v622 = vpop.f32.mrf.mxu0
        %v623 = vadd.f32 0.0, %v622
        %v624 = vpop.f32.mrf.mxu0
        %v625 = vpop.f32.mrf.mxu0
        %v626 = vadd.f32 0.0, %v625
        %v627 = vpop.f32.mrf.mxu0
        %628 = vmatprep.mubr.bf16.mxu0 0
        %629 = vmatmul.mubr.bf16.gmra.mxu0 %v432
        %v630 = vpop.f32.mrf.mxu0
        %v631 = vadd.f32 0.0, %v630
        %v632 = vpop.f32.mrf.mxu0
        %v633 = vpop.f32.mrf.mxu0
        %v634 = vadd.f32 0.0, %v633
        %v635 = vpop.f32.mrf.mxu0
        %636 = vmatprep.mubr.bf16.mxu0 0
        %637 = vmatmul.mubr.bf16.gmra.mxu0 %v433
        %v638 = vpop.f32.mrf.mxu0
        %v639 = vadd.f32 0.0, %v638
        %v640 = vpop.f32.mrf.mxu0
        %v641 = vpop.f32.mrf.mxu0
        %v642 = vadd.f32 0.0, %v641
        %v643 = vpop.f32.mrf.mxu0
        %644 = vmatprep.mubr.bf16.mxu0 0
        %645 = vmatmul.mubr.bf16.gmra.mxu0 %v434
        %v646 = vpop.f32.mrf.mxu0
        %v647 = vadd.f32 0.0, %v646
        %v648 = vpop.f32.mrf.mxu0
        %v649 = vpop.f32.mrf.mxu0
        %v650 = vadd.f32 0.0, %v649
        %v651 = vpop.f32.mrf.mxu0
        %652 = vmatprep.mubr.bf16.mxu0 0
        %653 = vmatmul.mubr.bf16.gmra.mxu0 %v435
        %v654 = vpop.f32.mrf.mxu0
        %v655 = vadd.f32 0.0, %v654
        %v656 = vpop.f32.mrf.mxu0
        %v657 = vpop.f32.mrf.mxu0
        %v658 = vadd.f32 0.0, %v657
        %v659 = vpop.f32.mrf.mxu0
        %660 = vdwg.mxu0
        %v661 = vld [vmem:[%s3] sm:$0x1]
        %v662 = vld [vmem:[%s3 + $0x1] sm:$0x1]
        %663 = vadd.xlane.f32.xlu0 %v535
        %v664 = vpop.xlane.xlu0 %663
        %665 = vadd.xlane.f32.xlu0 %v538
        %v666 = vpop.xlane.xlu0 %665
        %667 = vadd.xlane.f32.xlu0 %v543
        %v668 = vpop.xlane.xlu0 %667
        %669 = vadd.xlane.f32.xlu0 %v546
        %v670 = vpop.xlane.xlu0 %669
        %671 = vadd.xlane.f32.xlu0 %v551
        %v672 = vpop.xlane.xlu0 %671
        %673 = vadd.xlane.f32.xlu0 %v554
        %v674 = vpop.xlane.xlu0 %673
        %675 = vadd.xlane.f32.xlu0 %v559
        %v676 = vpop.xlane.xlu0 %675
        %677 = vadd.xlane.f32.xlu0 %v562
        %v678 = vpop.xlane.xlu0 %677
        %679 = vadd.xlane.f32.xlu0 %v567
        %v680 = vpop.xlane.xlu0 %679
        %681 = vadd.xlane.f32.xlu0 %v570
        %v682 = vpop.xlane.xlu0 %681
        %683 = vadd.xlane.f32.xlu0 %v575
        %v684 = vpop.xlane.xlu0 %683
        %685 = vadd.xlane.f32.xlu0 %v578
        %v686 = vpop.xlane.xlu0 %685
        %687 = vadd.xlane.f32.xlu0 %v583
        %v688 = vpop.xlane.xlu0 %687
        %689 = vadd.xlane.f32.xlu0 %v586
        %v690 = vpop.xlane.xlu0 %689
        %691 = vadd.xlane.f32.xlu0 %v591
        %v692 = vpop.xlane.xlu0 %691
        %693 = vadd.xlane.f32.xlu0 %v594
        %v694 = vpop.xlane.xlu0 %693
        %695 = vadd.xlane.f32.xlu0 %v599
        %v696 = vpop.xlane.xlu0 %695
        %697 = vadd.xlane.f32.xlu0 %v602
        %v698 = vpop.xlane.xlu0 %697
        %699 = vadd.xlane.f32.xlu0 %v607
        %v700 = vpop.xlane.xlu0 %699
        %701 = vadd.xlane.f32.xlu0 %v610
        %v702 = vpop.xlane.xlu0 %701
        %703 = vadd.xlane.f32.xlu0 %v615
        %v704 = vpop.xlane.xlu0 %703
        %705 = vadd.xlane.f32.xlu0 %v618
        %v706 = vpop.xlane.xlu0 %705
        %707 = vadd.xlane.f32.xlu0 %v623
        %v708 = vpop.xlane.xlu0 %707
        %709 = vadd.xlane.f32.xlu0 %v626
        %v710 = vpop.xlane.xlu0 %709
        %711 = vadd.xlane.f32.xlu0 %v631
        %v712 = vpop.xlane.xlu0 %711
        %713 = vadd.xlane.f32.xlu0 %v634
        %v714 = vpop.xlane.xlu0 %713
        %715 = vadd.xlane.f32.xlu0 %v639
        %v716 = vpop.xlane.xlu0 %715
        %717 = vadd.xlane.f32.xlu0 %v642
        %v718 = vpop.xlane.xlu0 %717
        %719 = vadd.xlane.f32.xlu0 %v647
        %v720 = vpop.xlane.xlu0 %719
        %721 = vadd.xlane.f32.xlu0 %v650
        %v722 = vpop.xlane.xlu0 %721
        %723 = vadd.xlane.f32.xlu0 %v655
        %v724 = vpop.xlane.xlu0 %723
        %725 = vadd.xlane.f32.xlu0 %v658
        %v726 = vpop.xlane.xlu0 %725
        %v727 = vrcp.pop 128.0
        %v728 = vmul.f32 %v664, %v727
        %v729 = vmul.f32 %v666, %v727
        %v730 = vmul.f32 %v668, %v727
        %v731 = vmul.f32 %v670, %v727
        %v732 = vmul.f32 %v672, %v727
        %v733 = vmul.f32 %v674, %v727
        %v734 = vmul.f32 %v676, %v727
        %v735 = vmul.f32 %v678, %v727
        %v736 = vmul.f32 %v680, %v727
        %v737 = vmul.f32 %v682, %v727
        %v738 = vmul.f32 %v684, %v727
        %v739 = vmul.f32 %v686, %v727
        %v740 = vmul.f32 %v688, %v727
        %v741 = vmul.f32 %v690, %v727
        %v742 = vmul.f32 %v692, %v727
        %v743 = vmul.f32 %v694, %v727
        %v744 = vmul.f32 %v696, %v727
        %v745 = vmul.f32 %v698, %v727
        %v746 = vmul.f32 %v700, %v727
        %v747 = vmul.f32 %v702, %v727
        %v748 = vmul.f32 %v704, %v727
        %v749 = vmul.f32 %v706, %v727
        %v750 = vmul.f32 %v708, %v727
        %v751 = vmul.f32 %v710, %v727
        %v752 = vmul.f32 %v712, %v727
        %v753 = vmul.f32 %v714, %v727
        %v754 = vmul.f32 %v716, %v727
        %v755 = vmul.f32 %v718, %v727
        %v756 = vmul.f32 %v720, %v727
        %v757 = vmul.f32 %v722, %v727
        %v758 = vmul.f32 %v724, %v727
        %v759 = vmul.f32 %v726, %v727
        %v760 = vsub.f32 %v535, %v728
        %v761 = vsub.f32 %v538, %v729
        %v762 = vsub.f32 %v543, %v730
        %v763 = vsub.f32 %v546, %v731
        %v764 = vsub.f32 %v551, %v732
        %v765 = vsub.f32 %v554, %v733
        %v766 = vsub.f32 %v559, %v734
        %v767 = vsub.f32 %v562, %v735
        %v768 = vsub.f32 %v567, %v736
        %v769 = vsub.f32 %v570, %v737
        %v770 = vsub.f32 %v575, %v738
        %v771 = vsub.f32 %v578, %v739
        %v772 = vsub.f32 %v583, %v740
        %v773 = vsub.f32 %v586, %v741
        %v774 = vsub.f32 %v591, %v742
        %v775 = vsub.f32 %v594, %v743
        %v776 = vsub.f32 %v599, %v744
        %v777 = vsub.f32 %v602, %v745
        %v778 = vsub.f32 %v607, %v746
        %v779 = vsub.f32 %v610, %v747
        %v780 = vsub.f32 %v615, %v748
        %v781 = vsub.f32 %v618, %v749
        %v782 = vsub.f32 %v623, %v750
        %v783 = vsub.f32 %v626, %v751
        %v784 = vsub.f32 %v631, %v752
        %v785 = vsub.f32 %v634, %v753
        %v786 = vsub.f32 %v639, %v754
        %v787 = vsub.f32 %v642, %v755
        %v788 = vsub.f32 %v647, %v756
        %v789 = vsub.f32 %v650, %v757
        %v790 = vsub.f32 %v655, %v758
        %v791 = vsub.f32 %v658, %v759
        %v792 = vmul.f32 %v760, %v760
        %v793 = vmul.f32 %v761, %v761
        %v794 = vmul.f32 %v762, %v762
        %v795 = vmul.f32 %v763, %v763
        %v796 = vmul.f32 %v764, %v764
        %v797 = vmul.f32 %v765, %v765
        %v798 = vmul.f32 %v766, %v766
        %v799 = vmul.f32 %v767, %v767
        %v800 = vmul.f32 %v768, %v768
        %v801 = vmul.f32 %v769, %v769
        %v802 = vmul.f32 %v770, %v770
        %v803 = vmul.f32 %v771, %v771
        %v804 = vmul.f32 %v772, %v772
        %v805 = vmul.f32 %v773, %v773
        %v806 = vmul.f32 %v774, %v774
        %v807 = vmul.f32 %v775, %v775
        %v808 = vmul.f32 %v776, %v776
        %v809 = vmul.f32 %v777, %v777
        %v810 = vmul.f32 %v778, %v778
        %v811 = vmul.f32 %v779, %v779
        %v812 = vmul.f32 %v780, %v780
        %v813 = vmul.f32 %v781, %v781
        %v814 = vmul.f32 %v782, %v782
        %v815 = vmul.f32 %v783, %v783
        %v816 = vmul.f32 %v784, %v784
        %v817 = vmul.f32 %v785, %v785
        %v818 = vmul.f32 %v786, %v786
        %v819 = vmul.f32 %v787, %v787
        %v820 = vmul.f32 %v788, %v788
        %v821 = vmul.f32 %v789, %v789
        %v822 = vmul.f32 %v790, %v790
        %v823 = vmul.f32 %v791, %v791
        %824 = vadd.xlane.f32.xlu0 %v792
        %v825 = vpop.xlane.xlu0 %824
        %826 = vadd.xlane.f32.xlu0 %v793
        %v827 = vpop.xlane.xlu0 %826
        %828 = vadd.xlane.f32.xlu0 %v794
        %v829 = vpop.xlane.xlu0 %828
        %830 = vadd.xlane.f32.xlu0 %v795
        %v831 = vpop.xlane.xlu0 %830
        %832 = vadd.xlane.f32.xlu0 %v796
        %v833 = vpop.xlane.xlu0 %832
        %834 = vadd.xlane.f32.xlu0 %v797
        %v835 = vpop.xlane.xlu0 %834
        %836 = vadd.xlane.f32.xlu0 %v798
        %v837 = vpop.xlane.xlu0 %836
        %838 = vadd.xlane.f32.xlu0 %v799
        %v839 = vpop.xlane.xlu0 %838
        %840 = vadd.xlane.f32.xlu0 %v800
        %v841 = vpop.xlane.xlu0 %840
        %842 = vadd.xlane.f32.xlu0 %v801
        %v843 = vpop.xlane.xlu0 %842
        %844 = vadd.xlane.f32.xlu0 %v802
        %v845 = vpop.xlane.xlu0 %844
        %846 = vadd.xlane.f32.xlu0 %v803
        %v847 = vpop.xlane.xlu0 %846
        %848 = vadd.xlane.f32.xlu0 %v804
        %v849 = vpop.xlane.xlu0 %848
        %850 = vadd.xlane.f32.xlu0 %v805
        %v851 = vpop.xlane.xlu0 %850
        %852 = vadd.xlane.f32.xlu0 %v806
        %v853 = vpop.xlane.xlu0 %852
        %854 = vadd.xlane.f32.xlu0 %v807
        %v855 = vpop.xlane.xlu0 %854
        %856 = vadd.xlane.f32.xlu0 %v808
        %v857 = vpop.xlane.xlu0 %856
        %858 = vadd.xlane.f32.xlu0 %v809
        %v859 = vpop.xlane.xlu0 %858
        %860 = vadd.xlane.f32.xlu0 %v810
        %v861 = vpop.xlane.xlu0 %860
        %862 = vadd.xlane.f32.xlu0 %v811
        %v863 = vpop.xlane.xlu0 %862
        %864 = vadd.xlane.f32.xlu0 %v812
        %v865 = vpop.xlane.xlu0 %864
        %866 = vadd.xlane.f32.xlu0 %v813
        %v867 = vpop.xlane.xlu0 %866
        %868 = vadd.xlane.f32.xlu0 %v814
        %v869 = vpop.xlane.xlu0 %868
        %870 = vadd.xlane.f32.xlu0 %v815
        %v871 = vpop.xlane.xlu0 %870
        %872 = vadd.xlane.f32.xlu0 %v816
        %v873 = vpop.xlane.xlu0 %872
        %874 = vadd.xlane.f32.xlu0 %v817
        %v875 = vpop.xlane.xlu0 %874
        %876 = vadd.xlane.f32.xlu0 %v818
        %v877 = vpop.xlane.xlu0 %876
        %878 = vadd.xlane.f32.xlu0 %v819
        %v879 = vpop.xlane.xlu0 %878
        %880 = vadd.xlane.f32.xlu0 %v820
        %v881 = vpop.xlane.xlu0 %880
        %882 = vadd.xlane.f32.xlu0 %v821
        %v883 = vpop.xlane.xlu0 %882
        %884 = vadd.xlane.f32.xlu0 %v822
        %v885 = vpop.xlane.xlu0 %884
        %886 = vadd.xlane.f32.xlu0 %v823
        %v887 = vpop.xlane.xlu0 %886
        %v888 = vmul.f32 %v825, %v727
        %v889 = vmul.f32 %v827, %v727
        %v890 = vmul.f32 %v829, %v727
        %v891 = vmul.f32 %v831, %v727
        %v892 = vmul.f32 %v833, %v727
        %v893 = vmul.f32 %v835, %v727
        %v894 = vmul.f32 %v837, %v727
        %v895 = vmul.f32 %v839, %v727
        %v896 = vmul.f32 %v841, %v727
        %v897 = vmul.f32 %v843, %v727
        %v898 = vmul.f32 %v845, %v727
        %v899 = vmul.f32 %v847, %v727
        %v900 = vmul.f32 %v849, %v727
        %v901 = vmul.f32 %v851, %v727
        %v902 = vmul.f32 %v853, %v727
        %v903 = vmul.f32 %v855, %v727
        %v904 = vmul.f32 %v857, %v727
        %v905 = vmul.f32 %v859, %v727
        %v906 = vmul.f32 %v861, %v727
        %v907 = vmul.f32 %v863, %v727
        %v908 = vmul.f32 %v865, %v727
        %v909 = vmul.f32 %v867, %v727
        %v910 = vmul.f32 %v869, %v727
        %v911 = vmul.f32 %v871, %v727
        %v912 = vmul.f32 %v873, %v727
        %v913 = vmul.f32 %v875, %v727
        %v914 = vmul.f32 %v877, %v727
        %v915 = vmul.f32 %v879, %v727
        %v916 = vmul.f32 %v881, %v727
        %v917 = vmul.f32 %v883, %v727
        %v918 = vmul.f32 %v885, %v727
        %v919 = vmul.f32 %v887, %v727
        %v920 = vadd.f32 %v888, 1e-05
        %v921 = vadd.f32 %v889, 1e-05
        %v922 = vadd.f32 %v890, 1e-05
        %v923 = vadd.f32 %v891, 1e-05
        %v924 = vadd.f32 %v892, 1e-05
        %v925 = vadd.f32 %v893, 1e-05
        %v926 = vadd.f32 %v894, 1e-05
        %v927 = vadd.f32 %v895, 1e-05
        %v928 = vadd.f32 %v896, 1e-05
        %v929 = vadd.f32 %v897, 1e-05
        %v930 = vadd.f32 %v898, 1e-05
        %v931 = vadd.f32 %v899, 1e-05
        %v932 = vadd.f32 %v900, 1e-05
        %v933 = vadd.f32 %v901, 1e-05
        %v934 = vadd.f32 %v902, 1e-05
        %v935 = vadd.f32 %v903, 1e-05
        %v936 = vadd.f32 %v904, 1e-05
        %v937 = vadd.f32 %v905, 1e-05
        %v938 = vadd.f32 %v906, 1e-05
        %v939 = vadd.f32 %v907, 1e-05
        %v940 = vadd.f32 %v908, 1e-05
        %v941 = vadd.f32 %v909, 1e-05
        %v942 = vadd.f32 %v910, 1e-05
        %v943 = vadd.f32 %v911, 1e-05
        %v944 = vadd.f32 %v912, 1e-05
        %v945 = vadd.f32 %v913, 1e-05
        %v946 = vadd.f32 %v914, 1e-05
        %v947 = vadd.f32 %v915, 1e-05
        %v948 = vadd.f32 %v916, 1e-05
        %v949 = vadd.f32 %v917, 1e-05
        %v950 = vadd.f32 %v918, 1e-05
        %v951 = vadd.f32 %v919, 1e-05
        %v952 = vrsqrt.pop %v920
        %v953 = vrsqrt.pop %v921
        %v954 = vrsqrt.pop %v922
        %v955 = vrsqrt.pop %v923
        %v956 = vrsqrt.pop %v924
        %v957 = vrsqrt.pop %v925
        %v958 = vrsqrt.pop %v926
        %v959 = vrsqrt.pop %v927
        %v960 = vrsqrt.pop %v928
        %v961 = vrsqrt.pop %v929
        %v962 = vrsqrt.pop %v930
        %v963 = vrsqrt.pop %v931
        %v964 = vrsqrt.pop %v932
        %v965 = vrsqrt.pop %v933
        %v966 = vrsqrt.pop %v934
        %v967 = vrsqrt.pop %v935
        %v968 = vrsqrt.pop %v936
        %v969 = vrsqrt.pop %v937
        %v970 = vrsqrt.pop %v938
        %v971 = vrsqrt.pop %v939
        %v972 = vrsqrt.pop %v940
        %v973 = vrsqrt.pop %v941
        %v974 = vrsqrt.pop %v942
        %v975 = vrsqrt.pop %v943
        %v976 = vrsqrt.pop %v944
        %v977 = vrsqrt.pop %v945
        %v978 = vrsqrt.pop %v946
        %v979 = vrsqrt.pop %v947
        %v980 = vrsqrt.pop %v948
        %v981 = vrsqrt.pop %v949
        %v982 = vrsqrt.pop %v950
        %v983 = vrsqrt.pop %v951
        %v984 = vmul.f32 %v760, %v952
        %v985 = vmul.f32 %v761, %v953
        %v986 = vmul.f32 %v762, %v954
        %v987 = vmul.f32 %v763, %v955
        %v988 = vmul.f32 %v764, %v956
        %v989 = vmul.f32 %v765, %v957
        %v990 = vmul.f32 %v766, %v958
        %v991 = vmul.f32 %v767, %v959
        %v992 = vmul.f32 %v768, %v960
        %v993 = vmul.f32 %v769, %v961
        %v994 = vmul.f32 %v770, %v962
        %v995 = vmul.f32 %v771, %v963
        %v996 = vmul.f32 %v772, %v964
        %v997 = vmul.f32 %v773, %v965
        %v998 = vmul.f32 %v774, %v966
        %v999 = vmul.f32 %v775, %v967
        %v1000 = vmul.f32 %v776, %v968
        %v1001 = vmul.f32 %v777, %v969
        %v1002 = vmul.f32 %v778, %v970
        %v1003 = vmul.f32 %v779, %v971
        %v1004 = vmul.f32 %v780, %v972
        %v1005 = vmul.f32 %v781, %v973
        %v1006 = vmul.f32 %v782, %v974
        %v1007 = vmul.f32 %v783, %v975
        %v1008 = vmul.f32 %v784, %v976
        %v1009 = vmul.f32 %v785, %v977
        %v1010 = vmul.f32 %v786, %v978
        %v1011 = vmul.f32 %v787, %v979
        %v1012 = vmul.f32 %v788, %v980
        %v1013 = vmul.f32 %v789, %v981
        %v1014 = vmul.f32 %v790, %v982
        %v1015 = vmul.f32 %v791, %v983
        %v1016 = vlaneseq
        %v1017 = vshrl.u32 %v1016, 7
        %v1018 = vsub.s32 0, %v1017
        %v1019 = vrot.slane %v661, %v1018
        %v1020 = vmul.f32 %v984, %v1019
        %v1021 = vmul.f32 %v985, %v1019
        %v1022 = vmul.f32 %v986, %v1019
        %v1023 = vmul.f32 %v987, %v1019
        %v1024 = vmul.f32 %v988, %v1019
        %v1025 = vmul.f32 %v989, %v1019
        %v1026 = vmul.f32 %v990, %v1019
        %v1027 = vmul.f32 %v991, %v1019
        %v1028 = vmul.f32 %v992, %v1019
        %v1029 = vmul.f32 %v993, %v1019
        %v1030 = vmul.f32 %v994, %v1019
        %v1031 = vmul.f32 %v995, %v1019
        %v1032 = vmul.f32 %v996, %v1019
        %v1033 = vmul.f32 %v997, %v1019
        %v1034 = vmul.f32 %v998, %v1019
        %v1035 = vmul.f32 %v999, %v1019
        %v1036 = vmul.f32 %v1000, %v1019
        %v1037 = vmul.f32 %v1001, %v1019
        %v1038 = vmul.f32 %v1002, %v1019
        %v1039 = vmul.f32 %v1003, %v1019
        %v1040 = vmul.f32 %v1004, %v1019
        %v1041 = vmul.f32 %v1005, %v1019
        %v1042 = vmul.f32 %v1006, %v1019
        %v1043 = vmul.f32 %v1007, %v1019
        %v1044 = vmul.f32 %v1008, %v1019
        %v1045 = vmul.f32 %v1009, %v1019
        %v1046 = vmul.f32 %v1010, %v1019
        %v1047 = vmul.f32 %v1011, %v1019
        %v1048 = vmul.f32 %v1012, %v1019
        %v1049 = vmul.f32 %v1013, %v1019
        %v1050 = vmul.f32 %v1014, %v1019
        %v1051 = vmul.f32 %v1015, %v1019
        %v1052 = vlaneseq
        %v1053 = vshrl.u32 %v1052, 7
        %v1054 = vsub.s32 0, %v1053
        %v1055 = vrot.slane %v662, %v1054
        %v1056 = vadd.f32 %v1020, %v1055
        %v1057 = vadd.f32 %v1021, %v1055
        %v1058 = vadd.f32 %v1022, %v1055
        %v1059 = vadd.f32 %v1023, %v1055
        %v1060 = vadd.f32 %v1024, %v1055
        %v1061 = vadd.f32 %v1025, %v1055
        %v1062 = vadd.f32 %v1026, %v1055
        %v1063 = vadd.f32 %v1027, %v1055
        %v1064 = vadd.f32 %v1028, %v1055
        %v1065 = vadd.f32 %v1029, %v1055
        %v1066 = vadd.f32 %v1030, %v1055
        %v1067 = vadd.f32 %v1031, %v1055
        %v1068 = vadd.f32 %v1032, %v1055
        %v1069 = vadd.f32 %v1033, %v1055
        %v1070 = vadd.f32 %v1034, %v1055
        %v1071 = vadd.f32 %v1035, %v1055
        %v1072 = vadd.f32 %v1036, %v1055
        %v1073 = vadd.f32 %v1037, %v1055
        %v1074 = vadd.f32 %v1038, %v1055
        %v1075 = vadd.f32 %v1039, %v1055
        %v1076 = vadd.f32 %v1040, %v1055
        %v1077 = vadd.f32 %v1041, %v1055
        %v1078 = vadd.f32 %v1042, %v1055
        %v1079 = vadd.f32 %v1043, %v1055
        %v1080 = vadd.f32 %v1044, %v1055
        %v1081 = vadd.f32 %v1045, %v1055
        %v1082 = vadd.f32 %v1046, %v1055
        %v1083 = vadd.f32 %v1047, %v1055
        %v1084 = vadd.f32 %v1048, %v1055
        %v1085 = vadd.f32 %v1049, %v1055
        %v1086 = vadd.f32 %v1050, %v1055
        %v1087 = vadd.f32 %v1051, %v1055
        %v1088 = vpack.c.bf16 %v277, %v276
        %v1089 = vpack.c.bf16 %v279, %v278
        %v1090 = vpack.c.bf16 %v281, %v280
        %v1091 = vpack.c.bf16 %v283, %v282
        %v1092 = vpack.c.bf16 %v285, %v284
        %v1093 = vpack.c.bf16 %v287, %v286
        %v1094 = vpack.c.bf16 %v289, %v288
        %v1095 = vpack.c.bf16 %v291, %v290
        %v1096 = vpack.c.bf16 %v293, %v292
        %v1097 = vpack.c.bf16 %v295, %v294
        %v1098 = vpack.c.bf16 %v297, %v296
        %v1099 = vpack.c.bf16 %v299, %v298
        %v1100 = vpack.c.bf16 %v301, %v300
        %v1101 = vpack.c.bf16 %v303, %v302
        %v1102 = vpack.c.bf16 %v305, %v304
        %v1103 = vpack.c.bf16 %v307, %v306
        %v1104 = vpack.c.bf16 %v1057, %v1056
        %v1105 = vpack.c.bf16 %v1059, %v1058
        %v1106 = vpack.c.bf16 %v1061, %v1060
        %v1107 = vpack.c.bf16 %v1063, %v1062
        %v1108 = vpack.c.bf16 %v1065, %v1064
        %v1109 = vpack.c.bf16 %v1067, %v1066
        %v1110 = vpack.c.bf16 %v1069, %v1068
        %v1111 = vpack.c.bf16 %v1071, %v1070
        %v1112 = vpack.c.bf16 %v1073, %v1072
        %v1113 = vpack.c.bf16 %v1075, %v1074
        %v1114 = vpack.c.bf16 %v1077, %v1076
        %v1115 = vpack.c.bf16 %v1079, %v1078
        %v1116 = vpack.c.bf16 %v1081, %v1080
        %v1117 = vpack.c.bf16 %v1083, %v1082
        %v1118 = vpack.c.bf16 %v1085, %v1084
        %v1119 = vpack.c.bf16 %v1087, %v1086
        %v1120 = vld [vmem:[%s4] sm:$0xff]
        %v1121 = vld [vmem:[%s4 + $0x8] sm:$0xff]
        %v1122 = vld [vmem:[%s4 + $0x10] sm:$0xff]
        %v1123 = vld [vmem:[%s4 + $0x18] sm:$0xff]
        %v1124 = vld [vmem:[%s4 + $0x20] sm:$0xff]
        %v1125 = vld [vmem:[%s4 + $0x28] sm:$0xff]
        %v1126 = vld [vmem:[%s4 + $0x30] sm:$0xff]
        %v1127 = vld [vmem:[%s4 + $0x38] sm:$0xff]
        %v1128 = vld [vmem:[%s4 + $0x40] sm:$0xff]
        %v1129 = vld [vmem:[%s4 + $0x48] sm:$0xff]
        %v1130 = vld [vmem:[%s4 + $0x50] sm:$0xff]
        %v1131 = vld [vmem:[%s4 + $0x58] sm:$0xff]
        %v1132 = vld [vmem:[%s4 + $0x60] sm:$0xff]
        %v1133 = vld [vmem:[%s4 + $0x68] sm:$0xff]
        %v1134 = vld [vmem:[%s4 + $0x70] sm:$0xff]
        %v1135 = vld [vmem:[%s4 + $0x78] sm:$0xff]
        %v1136 = vld [vmem:[%s4 + $0x80] sm:$0xff]
        %v1137 = vld [vmem:[%s4 + $0x88] sm:$0xff]
        %v1138 = vld [vmem:[%s4 + $0x90] sm:$0xff]
        %v1139 = vld [vmem:[%s4 + $0x98] sm:$0xff]
        %v1140 = vld [vmem:[%s4 + $0xa0] sm:$0xff]
        %v1141 = vld [vmem:[%s4 + $0xa8] sm:$0xff]
        %v1142 = vld [vmem:[%s4 + $0xb0] sm:$0xff]
        %v1143 = vld [vmem:[%s4 + $0xb8] sm:$0xff]
        %v1144 = vld [vmem:[%s4 + $0xc0] sm:$0xff]
        %v1145 = vld [vmem:[%s4 + $0xc8] sm:$0xff]
        %v1146 = vld [vmem:[%s4 + $0xd0] sm:$0xff]
        %v1147 = vld [vmem:[%s4 + $0xd8] sm:$0xff]
        %v1148 = vld [vmem:[%s4 + $0xe0] sm:$0xff]
        %v1149 = vld [vmem:[%s4 + $0xe8] sm:$0xff]
        %v1150 = vld [vmem:[%s4 + $0xf0] sm:$0xff]
        %v1151 = vld [vmem:[%s4 + $0xf8] sm:$0xff]
        %v1152 = vld [vmem:[%s4 + $0x100] sm:$0xff]
        %v1153 = vld [vmem:[%s4 + $0x108] sm:$0xff]
        %v1154 = vld [vmem:[%s4 + $0x110] sm:$0xff]
        %v1155 = vld [vmem:[%s4 + $0x118] sm:$0xff]
        %v1156 = vld [vmem:[%s4 + $0x120] sm:$0xff]
        %v1157 = vld [vmem:[%s4 + $0x128] sm:$0xff]
        %v1158 = vld [vmem:[%s4 + $0x130] sm:$0xff]
        %v1159 = vld [vmem:[%s4 + $0x138] sm:$0xff]
        %v1160 = vld [vmem:[%s4 + $0x140] sm:$0xff]
        %v1161 = vld [vmem:[%s4 + $0x148] sm:$0xff]
        %v1162 = vld [vmem:[%s4 + $0x150] sm:$0xff]
        %v1163 = vld [vmem:[%s4 + $0x158] sm:$0xff]
        %v1164 = vld [vmem:[%s4 + $0x160] sm:$0xff]
        %v1165 = vld [vmem:[%s4 + $0x168] sm:$0xff]
        %v1166 = vld [vmem:[%s4 + $0x170] sm:$0xff]
        %v1167 = vld [vmem:[%s4 + $0x178] sm:$0xff]
        %v1168 = vld [vmem:[%s4 + $0x180] sm:$0xff]
        %v1169 = vld [vmem:[%s4 + $0x188] sm:$0xff]
        %v1170 = vld [vmem:[%s4 + $0x190] sm:$0xff]
        %v1171 = vld [vmem:[%s4 + $0x198] sm:$0xff]
        %v1172 = vld [vmem:[%s4 + $0x1a0] sm:$0xff]
        %v1173 = vld [vmem:[%s4 + $0x1a8] sm:$0xff]
        %v1174 = vld [vmem:[%s4 + $0x1b0] sm:$0xff]
        %v1175 = vld [vmem:[%s4 + $0x1b8] sm:$0xff]
        %v1176 = vld [vmem:[%s4 + $0x1c0] sm:$0xff]
        %v1177 = vld [vmem:[%s4 + $0x1c8] sm:$0xff]
        %v1178 = vld [vmem:[%s4 + $0x1d0] sm:$0xff]
        %v1179 = vld [vmem:[%s4 + $0x1d8] sm:$0xff]
        %v1180 = vld [vmem:[%s4 + $0x1e0] sm:$0xff]
        %v1181 = vld [vmem:[%s4 + $0x1e8] sm:$0xff]
        %v1182 = vld [vmem:[%s4 + $0x1f0] sm:$0xff]
        %v1183 = vld [vmem:[%s4 + $0x1f8] sm:$0xff]
        %v1248 = vunpack.c.l.b16 %v1120
        %v1249 = vunpack.c.h.b16 %v1120
        %v1250 = vunpack.c.l.b16 %v1121
        %v1251 = vunpack.c.h.b16 %v1121
        %v1252 = vunpack.c.l.b16 %v1122
        %v1253 = vunpack.c.h.b16 %v1122
        %v1254 = vunpack.c.l.b16 %v1123
        %v1255 = vunpack.c.h.b16 %v1123
        %v1256 = vunpack.c.l.b16 %v1124
        %v1257 = vunpack.c.h.b16 %v1124
        %v1258 = vunpack.c.l.b16 %v1125
        %v1259 = vunpack.c.h.b16 %v1125
        %v1260 = vunpack.c.l.b16 %v1126
        %v1261 = vunpack.c.h.b16 %v1126
        %v1262 = vunpack.c.l.b16 %v1127
        %v1263 = vunpack.c.h.b16 %v1127
        %v1264 = vunpack.c.l.b16 %v1128
        %v1265 = vunpack.c.h.b16 %v1128
        %v1266 = vunpack.c.l.b16 %v1129
        %v1267 = vunpack.c.h.b16 %v1129
        %v1268 = vunpack.c.l.b16 %v1130
        %v1269 = vunpack.c.h.b16 %v1130
        %v1270 = vunpack.c.l.b16 %v1131
        %v1271 = vunpack.c.h.b16 %v1131
        %v1272 = vunpack.c.l.b16 %v1132
        %v1273 = vunpack.c.h.b16 %v1132
        %v1274 = vunpack.c.l.b16 %v1133
        %v1275 = vunpack.c.h.b16 %v1133
        %v1276 = vunpack.c.l.b16 %v1134
        %v1277 = vunpack.c.h.b16 %v1134
        %v1278 = vunpack.c.l.b16 %v1135
        %v1279 = vunpack.c.h.b16 %v1135
        %v1280 = vunpack.c.l.b16 %v1136
        %v1281 = vunpack.c.h.b16 %v1136
        %v1282 = vunpack.c.l.b16 %v1137
        %v1283 = vunpack.c.h.b16 %v1137
        %v1284 = vunpack.c.l.b16 %v1138
        %v1285 = vunpack.c.h.b16 %v1138
        %v1286 = vunpack.c.l.b16 %v1139
        %v1287 = vunpack.c.h.b16 %v1139
        %v1288 = vunpack.c.l.b16 %v1140
        %v1289 = vunpack.c.h.b16 %v1140
        %v1290 = vunpack.c.l.b16 %v1141
        %v1291 = vunpack.c.h.b16 %v1141
        %v1292 = vunpack.c.l.b16 %v1142
        %v1293 = vunpack.c.h.b16 %v1142
        %v1294 = vunpack.c.l.b16 %v1143
        %v1295 = vunpack.c.h.b16 %v1143
        %v1296 = vunpack.c.l.b16 %v1144
        %v1297 = vunpack.c.h.b16 %v1144
        %v1298 = vunpack.c.l.b16 %v1145
        %v1299 = vunpack.c.h.b16 %v1145
        %v1300 = vunpack.c.l.b16 %v1146
        %v1301 = vunpack.c.h.b16 %v1146
        %v1302 = vunpack.c.l.b16 %v1147
        %v1303 = vunpack.c.h.b16 %v1147
        %v1304 = vunpack.c.l.b16 %v1148
        %v1305 = vunpack.c.h.b16 %v1148
        %v1306 = vunpack.c.l.b16 %v1149
        %v1307 = vunpack.c.h.b16 %v1149
        %v1308 = vunpack.c.l.b16 %v1150
        %v1309 = vunpack.c.h.b16 %v1150
        %v1310 = vunpack.c.l.b16 %v1151
        %v1311 = vunpack.c.h.b16 %v1151
        %v1312 = vunpack.c.l.b16 %v1152
        %v1313 = vunpack.c.h.b16 %v1152
        %v1314 = vunpack.c.l.b16 %v1153
        %v1315 = vunpack.c.h.b16 %v1153
        %v1316 = vunpack.c.l.b16 %v1154
        %v1317 = vunpack.c.h.b16 %v1154
        %v1318 = vunpack.c.l.b16 %v1155
        %v1319 = vunpack.c.h.b16 %v1155
        %v1320 = vunpack.c.l.b16 %v1156
        %v1321 = vunpack.c.h.b16 %v1156
        %v1322 = vunpack.c.l.b16 %v1157
        %v1323 = vunpack.c.h.b16 %v1157
        %v1324 = vunpack.c.l.b16 %v1158
        %v1325 = vunpack.c.h.b16 %v1158
        %v1326 = vunpack.c.l.b16 %v1159
        %v1327 = vunpack.c.h.b16 %v1159
        %v1328 = vunpack.c.l.b16 %v1160
        %v1329 = vunpack.c.h.b16 %v1160
        %v1330 = vunpack.c.l.b16 %v1161
        %v1331 = vunpack.c.h.b16 %v1161
        %v1332 = vunpack.c.l.b16 %v1162
        %v1333 = vunpack.c.h.b16 %v1162
        %v1334 = vunpack.c.l.b16 %v1163
        %v1335 = vunpack.c.h.b16 %v1163
        %v1336 = vunpack.c.l.b16 %v1164
        %v1337 = vunpack.c.h.b16 %v1164
        %v1338 = vunpack.c.l.b16 %v1165
        %v1339 = vunpack.c.h.b16 %v1165
        %v1340 = vunpack.c.l.b16 %v1166
        %v1341 = vunpack.c.h.b16 %v1166
        %v1342 = vunpack.c.l.b16 %v1167
        %v1343 = vunpack.c.h.b16 %v1167
        %v1344 = vunpack.c.l.b16 %v1168
        %v1345 = vunpack.c.h.b16 %v1168
        %v1346 = vunpack.c.l.b16 %v1169
        %v1347 = vunpack.c.h.b16 %v1169
        %v1348 = vunpack.c.l.b16 %v1170
        %v1349 = vunpack.c.h.b16 %v1170
        %v1350 = vunpack.c.l.b16 %v1171
        %v1351 = vunpack.c.h.b16 %v1171
        %v1352 = vunpack.c.l.b16 %v1172
        %v1353 = vunpack.c.h.b16 %v1172
        %v1354 = vunpack.c.l.b16 %v1173
        %v1355 = vunpack.c.h.b16 %v1173
        %v1356 = vunpack.c.l.b16 %v1174
        %v1357 = vunpack.c.h.b16 %v1174
        %v1358 = vunpack.c.l.b16 %v1175
        %v1359 = vunpack.c.h.b16 %v1175
        %v1360 = vunpack.c.l.b16 %v1176
        %v1361 = vunpack.c.h.b16 %v1176
        %v1362 = vunpack.c.l.b16 %v1177
        %v1363 = vunpack.c.h.b16 %v1177
        %v1364 = vunpack.c.l.b16 %v1178
        %v1365 = vunpack.c.h.b16 %v1178
        %v1366 = vunpack.c.l.b16 %v1179
        %v1367 = vunpack.c.h.b16 %v1179
        %v1368 = vunpack.c.l.b16 %v1180
        %v1369 = vunpack.c.h.b16 %v1180
        %v1370 = vunpack.c.l.b16 %v1181
        %v1371 = vunpack.c.h.b16 %v1181
        %v1372 = vunpack.c.l.b16 %v1182
        %v1373 = vunpack.c.h.b16 %v1182
        %v1374 = vunpack.c.l.b16 %v1183
        %v1375 = vunpack.c.h.b16 %v1183
        %v1376 = vpack.c.b16 %v1252, %v1248
        %v1377 = vpack.c.b16 %v1253, %v1249
        %v1378 = vpack.c.b16 %v1254, %v1250
        %v1379 = vpack.c.b16 %v1255, %v1251
        %v1380 = vpack.c.b16 %v1260, %v1256
        %v1381 = vpack.c.b16 %v1261, %v1257
        %v1382 = vpack.c.b16 %v1262, %v1258
        %v1383 = vpack.c.b16 %v1263, %v1259
        %v1384 = vpack.c.b16 %v1268, %v1264
        %v1385 = vpack.c.b16 %v1269, %v1265
        %v1386 = vpack.c.b16 %v1270, %v1266
        %v1387 = vpack.c.b16 %v1271, %v1267
        %v1388 = vpack.c.b16 %v1276, %v1272
        %v1389 = vpack.c.b16 %v1277, %v1273
        %v1390 = vpack.c.b16 %v1278, %v1274
        %v1391 = vpack.c.b16 %v1279, %v1275
        %v1392 = vpack.c.b16 %v1284, %v1280
        %v1393 = vpack.c.b16 %v1285, %v1281
        %v1394 = vpack.c.b16 %v1286, %v1282
        %v1395 = vpack.c.b16 %v1287, %v1283
        %v1396 = vpack.c.b16 %v1292, %v1288
        %v1397 = vpack.c.b16 %v1293, %v1289
        %v1398 = vpack.c.b16 %v1294, %v1290
        %v1399 = vpack.c.b16 %v1295, %v1291
        %v1400 = vpack.c.b16 %v1300, %v1296
        %v1401 = vpack.c.b16 %v1301, %v1297
        %v1402 = vpack.c.b16 %v1302, %v1298
        %v1403 = vpack.c.b16 %v1303, %v1299
        %v1404 = vpack.c.b16 %v1308, %v1304
        %v1405 = vpack.c.b16 %v1309, %v1305
        %v1406 = vpack.c.b16 %v1310, %v1306
        %v1407 = vpack.c.b16 %v1311, %v1307
        %v1408 = vpack.c.b16 %v1316, %v1312
        %v1409 = vpack.c.b16 %v1317, %v1313
        %v1410 = vpack.c.b16 %v1318, %v1314
        %v1411 = vpack.c.b16 %v1319, %v1315
        %v1412 = vpack.c.b16 %v1324, %v1320
        %v1413 = vpack.c.b16 %v1325, %v1321
        %v1414 = vpack.c.b16 %v1326, %v1322
        %v1415 = vpack.c.b16 %v1327, %v1323
        %v1416 = vpack.c.b16 %v1332, %v1328
        %v1417 = vpack.c.b16 %v1333, %v1329
        %v1418 = vpack.c.b16 %v1334, %v1330
        %v1419 = vpack.c.b16 %v1335, %v1331
        %v1420 = vpack.c.b16 %v1340, %v1336
        %v1421 = vpack.c.b16 %v1341, %v1337
        %v1422 = vpack.c.b16 %v1342, %v1338
        %v1423 = vpack.c.b16 %v1343, %v1339
        %v1424 = vpack.c.b16 %v1348, %v1344
        %v1425 = vpack.c.b16 %v1349, %v1345
        %v1426 = vpack.c.b16 %v1350, %v1346
        %v1427 = vpack.c.b16 %v1351, %v1347
        %v1428 = vpack.c.b16 %v1356, %v1352
        %v1429 = vpack.c.b16 %v1357, %v1353
        %v1430 = vpack.c.b16 %v1358, %v1354
        %v1431 = vpack.c.b16 %v1359, %v1355
        %v1432 = vpack.c.b16 %v1364, %v1360
        %v1433 = vpack.c.b16 %v1365, %v1361
        %v1434 = vpack.c.b16 %v1366, %v1362
        %v1435 = vpack.c.b16 %v1367, %v1363
        %v1436 = vpack.c.b16 %v1372, %v1368
        %v1437 = vpack.c.b16 %v1373, %v1369
        %v1438 = vpack.c.b16 %v1374, %v1370
        %v1439 = vpack.c.b16 %v1375, %v1371
        %1504 = vmatprep.subr.bf16.mxu0 %v1405
        %1505 = vmatpush1.bf16.msra.mxu0 %v1404
        %1506 = vmatprep.subr.bf16.mxu0 %v1401
        %1507 = vmatpush1.bf16.msra.mxu0 %v1400
        %1508 = vmatprep.subr.bf16.mxu0 %v1397
        %1509 = vmatpush1.bf16.msra.mxu0 %v1396
        %1510 = vmatprep.subr.bf16.mxu0 %v1393
        %1511 = vmatpush1.bf16.msra.mxu0 %v1392
        %1512 = vmatprep.subr.bf16.mxu0 %v1389
        %1513 = vmatpush1.bf16.msra.mxu0 %v1388
        %1514 = vmatprep.subr.bf16.mxu0 %v1385
        %1515 = vmatpush1.bf16.msra.mxu0 %v1384
        %1516 = vmatprep.subr.bf16.mxu0 %v1381
        %1517 = vmatpush1.bf16.msra.mxu0 %v1380
        %1518 = vmatprep.subr.bf16.mxu0 %v1377
        %1519 = vmatpush1.bf16.msra.mxu0 %v1376
        %1520 = vmatprep.subr.bf16.mxu0 %v1437
        %1521 = vmatpush2.bf16.msra.mxu0 %v1436
        %1522 = vmatprep.subr.bf16.mxu0 %v1433
        %1523 = vmatpush2.bf16.msra.mxu0 %v1432
        %1524 = vmatprep.subr.bf16.mxu0 %v1429
        %1525 = vmatpush2.bf16.msra.mxu0 %v1428
        %1526 = vmatprep.subr.bf16.mxu0 %v1425
        %1527 = vmatpush2.bf16.msra.mxu0 %v1424
        %1528 = vmatprep.subr.bf16.mxu0 %v1421
        %1529 = vmatpush2.bf16.msra.mxu0 %v1420
        %1530 = vmatprep.subr.bf16.mxu0 %v1417
        %1531 = vmatpush2.bf16.msra.mxu0 %v1416
        %1532 = vmatprep.subr.bf16.mxu0 %v1413
        %1533 = vmatpush2.bf16.msra.mxu0 %v1412
        %1534 = vmatprep.subr.bf16.mxu0 %v1409
        %1535 = vmatpush2.bf16.msra.mxu0 %v1408
        %1536 = vmatprep.mubr.bf16.mxu0 %v1104
        %1537 = vmatmul.mubr.bf16.gmra.mxu0 %v1088
        %v1538 = vpop.f32.mrf.mxu0
        %v1539 = vadd.f32 0.0, %v1538
        %v1540 = vpop.f32.mrf.mxu0
        %v1541 = vadd.f32 0.0, %v1540
        %v1542 = vpop.f32.mrf.mxu0
        %v1543 = vadd.f32 0.0, %v1542
        %v1544 = vpop.f32.mrf.mxu0
        %v1545 = vadd.f32 0.0, %v1544
        %1546 = vmatprep.mubr.bf16.mxu0 %v1105
        %1547 = vmatmul.mubr.bf16.gmra.mxu0 %v1089
        %v1548 = vpop.f32.mrf.mxu0
        %v1549 = vadd.f32 0.0, %v1548
        %v1550 = vpop.f32.mrf.mxu0
        %v1551 = vadd.f32 0.0, %v1550
        %v1552 = vpop.f32.mrf.mxu0
        %v1553 = vadd.f32 0.0, %v1552
        %v1554 = vpop.f32.mrf.mxu0
        %v1555 = vadd.f32 0.0, %v1554
        %1556 = vmatprep.mubr.bf16.mxu0 %v1106
        %1557 = vmatmul.mubr.bf16.gmra.mxu0 %v1090
        %v1558 = vpop.f32.mrf.mxu0
        %v1559 = vadd.f32 0.0, %v1558
        %v1560 = vpop.f32.mrf.mxu0
        %v1561 = vadd.f32 0.0, %v1560
        %v1562 = vpop.f32.mrf.mxu0
        %v1563 = vadd.f32 0.0, %v1562
        %v1564 = vpop.f32.mrf.mxu0
        %v1565 = vadd.f32 0.0, %v1564
        %1566 = vmatprep.mubr.bf16.mxu0 %v1107
        %1567 = vmatmul.mubr.bf16.gmra.mxu0 %v1091
        %v1568 = vpop.f32.mrf.mxu0
        %v1569 = vadd.f32 0.0, %v1568
        %v1570 = vpop.f32.mrf.mxu0
        %v1571 = vadd.f32 0.0, %v1570
        %v1572 = vpop.f32.mrf.mxu0
        %v1573 = vadd.f32 0.0, %v1572
        %v1574 = vpop.f32.mrf.mxu0
        %v1575 = vadd.f32 0.0, %v1574
        %1576 = vmatprep.mubr.bf16.mxu0 %v1108
        %1577 = vmatmul.mubr.bf16.gmra.mxu0 %v1092
        %v1578 = vpop.f32.mrf.mxu0
        %v1579 = vadd.f32 0.0, %v1578
        %v1580 = vpop.f32.mrf.mxu0
        %v1581 = vadd.f32 0.0, %v1580
        %v1582 = vpop.f32.mrf.mxu0
        %v1583 = vadd.f32 0.0, %v1582
        %v1584 = vpop.f32.mrf.mxu0
        %v1585 = vadd.f32 0.0, %v1584
        %1586 = vmatprep.mubr.bf16.mxu0 %v1109
        %1587 = vmatmul.mubr.bf16.gmra.mxu0 %v1093
        %v1588 = vpop.f32.mrf.mxu0
        %v1589 = vadd.f32 0.0, %v1588
        %v1590 = vpop.f32.mrf.mxu0
        %v1591 = vadd.f32 0.0, %v1590
        %v1592 = vpop.f32.mrf.mxu0
        %v1593 = vadd.f32 0.0, %v1592
        %v1594 = vpop.f32.mrf.mxu0
        %v1595 = vadd.f32 0.0, %v1594
        %1596 = vmatprep.mubr.bf16.mxu0 %v1110
        %1597 = vmatmul.mubr.bf16.gmra.mxu0 %v1094
        %v1598 = vpop.f32.mrf.mxu0
        %v1599 = vadd.f32 0.0, %v1598
        %v1600 = vpop.f32.mrf.mxu0
        %v1601 = vadd.f32 0.0, %v1600
        %v1602 = vpop.f32.mrf.mxu0
        %v1603 = vadd.f32 0.0, %v1602
        %v1604 = vpop.f32.mrf.mxu0
        %v1605 = vadd.f32 0.0, %v1604
        %1606 = vmatprep.mubr.bf16.mxu0 %v1111
        %1607 = vmatmul.mubr.bf16.gmra.mxu0 %v1095
        %v1608 = vpop.f32.mrf.mxu0
        %v1609 = vadd.f32 0.0, %v1608
        %v1610 = vpop.f32.mrf.mxu0
        %v1611 = vadd.f32 0.0, %v1610
        %v1612 = vpop.f32.mrf.mxu0
        %v1613 = vadd.f32 0.0, %v1612
        %v1614 = vpop.f32.mrf.mxu0
        %v1615 = vadd.f32 0.0, %v1614
        %1616 = vmatprep.mubr.bf16.mxu0 %v1112
        %1617 = vmatmul.mubr.bf16.gmra.mxu0 %v1096
        %v1618 = vpop.f32.mrf.mxu0
        %v1619 = vadd.f32 0.0, %v1618
        %v1620 = vpop.f32.mrf.mxu0
        %v1621 = vadd.f32 0.0, %v1620
        %v1622 = vpop.f32.mrf.mxu0
        %v1623 = vadd.f32 0.0, %v1622
        %v1624 = vpop.f32.mrf.mxu0
        %v1625 = vadd.f32 0.0, %v1624
        %1626 = vmatprep.mubr.bf16.mxu0 %v1113
        %1627 = vmatmul.mubr.bf16.gmra.mxu0 %v1097
        %v1628 = vpop.f32.mrf.mxu0
        %v1629 = vadd.f32 0.0, %v1628
        %v1630 = vpop.f32.mrf.mxu0
        %v1631 = vadd.f32 0.0, %v1630
        %v1632 = vpop.f32.mrf.mxu0
        %v1633 = vadd.f32 0.0, %v1632
        %v1634 = vpop.f32.mrf.mxu0
        %v1635 = vadd.f32 0.0, %v1634
        %1636 = vmatprep.mubr.bf16.mxu0 %v1114
        %1637 = vmatmul.mubr.bf16.gmra.mxu0 %v1098
        %v1638 = vpop.f32.mrf.mxu0
        %v1639 = vadd.f32 0.0, %v1638
        %v1640 = vpop.f32.mrf.mxu0
        %v1641 = vadd.f32 0.0, %v1640
        %v1642 = vpop.f32.mrf.mxu0
        %v1643 = vadd.f32 0.0, %v1642
        %v1644 = vpop.f32.mrf.mxu0
        %v1645 = vadd.f32 0.0, %v1644
        %1646 = vmatprep.mubr.bf16.mxu0 %v1115
        %1647 = vmatmul.mubr.bf16.gmra.mxu0 %v1099
        %v1648 = vpop.f32.mrf.mxu0
        %v1649 = vadd.f32 0.0, %v1648
        %v1650 = vpop.f32.mrf.mxu0
        %v1651 = vadd.f32 0.0, %v1650
        %v1652 = vpop.f32.mrf.mxu0
        %v1653 = vadd.f32 0.0, %v1652
        %v1654 = vpop.f32.mrf.mxu0
        %v1655 = vadd.f32 0.0, %v1654
        %1656 = vmatprep.mubr.bf16.mxu0 %v1116
        %1657 = vmatmul.mubr.bf16.gmra.mxu0 %v1100
        %v1658 = vpop.f32.mrf.mxu0
        %v1659 = vadd.f32 0.0, %v1658
        %v1660 = vpop.f32.mrf.mxu0
        %v1661 = vadd.f32 0.0, %v1660
        %v1662 = vpop.f32.mrf.mxu0
        %v1663 = vadd.f32 0.0, %v1662
        %v1664 = vpop.f32.mrf.mxu0
        %v1665 = vadd.f32 0.0, %v1664
        %1666 = vmatprep.mubr.bf16.mxu0 %v1117
        %1667 = vmatmul.mubr.bf16.gmra.mxu0 %v1101
        %v1668 = vpop.f32.mrf.mxu0
        %v1669 = vadd.f32 0.0, %v1668
        %v1670 = vpop.f32.mrf.mxu0
        %v1671 = vadd.f32 0.0, %v1670
        %v1672 = vpop.f32.mrf.mxu0
        %v1673 = vadd.f32 0.0, %v1672
        %v1674 = vpop.f32.mrf.mxu0
        %v1675 = vadd.f32 0.0, %v1674
        %1676 = vmatprep.mubr.bf16.mxu0 %v1118
        %1677 = vmatmul.mubr.bf16.gmra.mxu0 %v1102
        %v1678 = vpop.f32.mrf.mxu0
        %v1679 = vadd.f32 0.0, %v1678
        %v1680 = vpop.f32.mrf.mxu0
        %v1681 = vadd.f32 0.0, %v1680
        %v1682 = vpop.f32.mrf.mxu0
        %v1683 = vadd.f32 0.0, %v1682
        %v1684 = vpop.f32.mrf.mxu0
        %v1685 = vadd.f32 0.0, %v1684
        %1686 = vmatprep.mubr.bf16.mxu0 %v1119
        %1687 = vmatmul.mubr.bf16.gmra.mxu0 %v1103
        %v1688 = vpop.f32.mrf.mxu0
        %v1689 = vadd.f32 0.0, %v1688
        %v1690 = vpop.f32.mrf.mxu0
        %v1691 = vadd.f32 0.0, %v1690
        %v1692 = vpop.f32.mrf.mxu0
        %v1693 = vadd.f32 0.0, %v1692
        %v1694 = vpop.f32.mrf.mxu0
        %v1695 = vadd.f32 0.0, %v1694
        %1696 = vdwg.mxu0
        %1697 = vmatprep.subr.bf16.mxu0 %v1407
        %1698 = vmatpush1.bf16.msra.mxu0 %v1406
        %1699 = vmatprep.subr.bf16.mxu0 %v1403
        %1700 = vmatpush1.bf16.msra.mxu0 %v1402
        %1701 = vmatprep.subr.bf16.mxu0 %v1399
        %1702 = vmatpush1.bf16.msra.mxu0 %v1398
        %1703 = vmatprep.subr.bf16.mxu0 %v1395
        %1704 = vmatpush1.bf16.msra.mxu0 %v1394
        %1705 = vmatprep.subr.bf16.mxu0 %v1391
        %1706 = vmatpush1.bf16.msra.mxu0 %v1390
        %1707 = vmatprep.subr.bf16.mxu0 %v1387
        %1708 = vmatpush1.bf16.msra.mxu0 %v1386
        %1709 = vmatprep.subr.bf16.mxu0 %v1383
        %1710 = vmatpush1.bf16.msra.mxu0 %v1382
        %1711 = vmatprep.subr.bf16.mxu0 %v1379
        %1712 = vmatpush1.bf16.msra.mxu0 %v1378
        %1713 = vmatprep.subr.bf16.mxu0 %v1439
        %1714 = vmatpush2.bf16.msra.mxu0 %v1438
        %1715 = vmatprep.subr.bf16.mxu0 %v1435
        %1716 = vmatpush2.bf16.msra.mxu0 %v1434
        %1717 = vmatprep.subr.bf16.mxu0 %v1431
        %1718 = vmatpush2.bf16.msra.mxu0 %v1430
        %1719 = vmatprep.subr.bf16.mxu0 %v1427
        %1720 = vmatpush2.bf16.msra.mxu0 %v1426
        %1721 = vmatprep.subr.bf16.mxu0 %v1423
        %1722 = vmatpush2.bf16.msra.mxu0 %v1422
        %1723 = vmatprep.subr.bf16.mxu0 %v1419
        %1724 = vmatpush2.bf16.msra.mxu0 %v1418
        %1725 = vmatprep.subr.bf16.mxu0 %v1415
        %1726 = vmatpush2.bf16.msra.mxu0 %v1414
        %1727 = vmatprep.subr.bf16.mxu0 %v1411
        %1728 = vmatpush2.bf16.msra.mxu0 %v1410
        %1729 = vmatprep.mubr.bf16.mxu0 %v1104
        %1730 = vmatmul.mubr.bf16.gmra.mxu0 %v1088
        %v1731 = vpop.f32.mrf.mxu0
        %v1732 = vadd.f32 0.0, %v1731
        %v1733 = vpop.f32.mrf.mxu0
        %v1734 = vadd.f32 0.0, %v1733
        %v1735 = vpop.f32.mrf.mxu0
        %v1736 = vadd.f32 0.0, %v1735
        %v1737 = vpop.f32.mrf.mxu0
        %v1738 = vadd.f32 0.0, %v1737
        %1739 = vmatprep.mubr.bf16.mxu0 %v1105
        %1740 = vmatmul.mubr.bf16.gmra.mxu0 %v1089
        %v1741 = vpop.f32.mrf.mxu0
        %v1742 = vadd.f32 0.0, %v1741
        %v1743 = vpop.f32.mrf.mxu0
        %v1744 = vadd.f32 0.0, %v1743
        %v1745 = vpop.f32.mrf.mxu0
        %v1746 = vadd.f32 0.0, %v1745
        %v1747 = vpop.f32.mrf.mxu0
        %v1748 = vadd.f32 0.0, %v1747
        %1749 = vmatprep.mubr.bf16.mxu0 %v1106
        %1750 = vmatmul.mubr.bf16.gmra.mxu0 %v1090
        %v1751 = vpop.f32.mrf.mxu0
        %v1752 = vadd.f32 0.0, %v1751
        %v1753 = vpop.f32.mrf.mxu0
        %v1754 = vadd.f32 0.0, %v1753
        %v1755 = vpop.f32.mrf.mxu0
        %v1756 = vadd.f32 0.0, %v1755
        %v1757 = vpop.f32.mrf.mxu0
        %v1758 = vadd.f32 0.0, %v1757
        %1759 = vmatprep.mubr.bf16.mxu0 %v1107
        %1760 = vmatmul.mubr.bf16.gmra.mxu0 %v1091
        %v1761 = vpop.f32.mrf.mxu0
        %v1762 = vadd.f32 0.0, %v1761
        %v1763 = vpop.f32.mrf.mxu0
        %v1764 = vadd.f32 0.0, %v1763
        %v1765 = vpop.f32.mrf.mxu0
        %v1766 = vadd.f32 0.0, %v1765
        %v1767 = vpop.f32.mrf.mxu0
        %v1768 = vadd.f32 0.0, %v1767
        %1769 = vmatprep.mubr.bf16.mxu0 %v1108
        %1770 = vmatmul.mubr.bf16.gmra.mxu0 %v1092
        %v1771 = vpop.f32.mrf.mxu0
        %v1772 = vadd.f32 0.0, %v1771
        %v1773 = vpop.f32.mrf.mxu0
        %v1774 = vadd.f32 0.0, %v1773
        %v1775 = vpop.f32.mrf.mxu0
        %v1776 = vadd.f32 0.0, %v1775
        %v1777 = vpop.f32.mrf.mxu0
        %v1778 = vadd.f32 0.0, %v1777
        %1779 = vmatprep.mubr.bf16.mxu0 %v1109
        %1780 = vmatmul.mubr.bf16.gmra.mxu0 %v1093
        %v1781 = vpop.f32.mrf.mxu0
        %v1782 = vadd.f32 0.0, %v1781
        %v1783 = vpop.f32.mrf.mxu0
        %v1784 = vadd.f32 0.0, %v1783
        %v1785 = vpop.f32.mrf.mxu0
        %v1786 = vadd.f32 0.0, %v1785
        %v1787 = vpop.f32.mrf.mxu0
        %v1788 = vadd.f32 0.0, %v1787
        %1789 = vmatprep.mubr.bf16.mxu0 %v1110
        %1790 = vmatmul.mubr.bf16.gmra.mxu0 %v1094
        %v1791 = vpop.f32.mrf.mxu0
        %v1792 = vadd.f32 0.0, %v1791
        %v1793 = vpop.f32.mrf.mxu0
        %v1794 = vadd.f32 0.0, %v1793
        %v1795 = vpop.f32.mrf.mxu0
        %v1796 = vadd.f32 0.0, %v1795
        %v1797 = vpop.f32.mrf.mxu0
        %v1798 = vadd.f32 0.0, %v1797
        %1799 = vmatprep.mubr.bf16.mxu0 %v1111
        %1800 = vmatmul.mubr.bf16.gmra.mxu0 %v1095
        %v1801 = vpop.f32.mrf.mxu0
        %v1802 = vadd.f32 0.0, %v1801
        %v1803 = vpop.f32.mrf.mxu0
        %v1804 = vadd.f32 0.0, %v1803
        %v1805 = vpop.f32.mrf.mxu0
        %v1806 = vadd.f32 0.0, %v1805
        %v1807 = vpop.f32.mrf.mxu0
        %v1808 = vadd.f32 0.0, %v1807
        %1809 = vmatprep.mubr.bf16.mxu0 %v1112
        %1810 = vmatmul.mubr.bf16.gmra.mxu0 %v1096
        %v1811 = vpop.f32.mrf.mxu0
        %v1812 = vadd.f32 0.0, %v1811
        %v1813 = vpop.f32.mrf.mxu0
        %v1814 = vadd.f32 0.0, %v1813
        %v1815 = vpop.f32.mrf.mxu0
        %v1816 = vadd.f32 0.0, %v1815
        %v1817 = vpop.f32.mrf.mxu0
        %v1818 = vadd.f32 0.0, %v1817
        %1819 = vmatprep.mubr.bf16.mxu0 %v1113
        %1820 = vmatmul.mubr.bf16.gmra.mxu0 %v1097
        %v1821 = vpop.f32.mrf.mxu0
        %v1822 = vadd.f32 0.0, %v1821
        %v1823 = vpop.f32.mrf.mxu0
        %v1824 = vadd.f32 0.0, %v1823
        %v1825 = vpop.f32.mrf.mxu0
        %v1826 = vadd.f32 0.0, %v1825
        %v1827 = vpop.f32.mrf.mxu0
        %v1828 = vadd.f32 0.0, %v1827
        %1829 = vmatprep.mubr.bf16.mxu0 %v1114
        %1830 = vmatmul.mubr.bf16.gmra.mxu0 %v1098
        %v1831 = vpop.f32.mrf.mxu0
        %v1832 = vadd.f32 0.0, %v1831
        %v1833 = vpop.f32.mrf.mxu0
        %v1834 = vadd.f32 0.0, %v1833
        %v1835 = vpop.f32.mrf.mxu0
        %v1836 = vadd.f32 0.0, %v1835
        %v1837 = vpop.f32.mrf.mxu0
        %v1838 = vadd.f32 0.0, %v1837
        %1839 = vmatprep.mubr.bf16.mxu0 %v1115
        %1840 = vmatmul.mubr.bf16.gmra.mxu0 %v1099
        %v1841 = vpop.f32.mrf.mxu0
        %v1842 = vadd.f32 0.0, %v1841
        %v1843 = vpop.f32.mrf.mxu0
        %v1844 = vadd.f32 0.0, %v1843
        %v1845 = vpop.f32.mrf.mxu0
        %v1846 = vadd.f32 0.0, %v1845
        %v1847 = vpop.f32.mrf.mxu0
        %v1848 = vadd.f32 0.0, %v1847
        %1849 = vmatprep.mubr.bf16.mxu0 %v1116
        %1850 = vmatmul.mubr.bf16.gmra.mxu0 %v1100
        %v1851 = vpop.f32.mrf.mxu0
        %v1852 = vadd.f32 0.0, %v1851
        %v1853 = vpop.f32.mrf.mxu0
        %v1854 = vadd.f32 0.0, %v1853
        %v1855 = vpop.f32.mrf.mxu0
        %v1856 = vadd.f32 0.0, %v1855
        %v1857 = vpop.f32.mrf.mxu0
        %v1858 = vadd.f32 0.0, %v1857
        %1859 = vmatprep.mubr.bf16.mxu0 %v1117
        %1860 = vmatmul.mubr.bf16.gmra.mxu0 %v1101
        %v1861 = vpop.f32.mrf.mxu0
        %v1862 = vadd.f32 0.0, %v1861
        %v1863 = vpop.f32.mrf.mxu0
        %v1864 = vadd.f32 0.0, %v1863
        %v1865 = vpop.f32.mrf.mxu0
        %v1866 = vadd.f32 0.0, %v1865
        %v1867 = vpop.f32.mrf.mxu0
        %v1868 = vadd.f32 0.0, %v1867
        %1869 = vmatprep.mubr.bf16.mxu0 %v1118
        %1870 = vmatmul.mubr.bf16.gmra.mxu0 %v1102
        %v1871 = vpop.f32.mrf.mxu0
        %v1872 = vadd.f32 0.0, %v1871
        %v1873 = vpop.f32.mrf.mxu0
        %v1874 = vadd.f32 0.0, %v1873
        %v1875 = vpop.f32.mrf.mxu0
        %v1876 = vadd.f32 0.0, %v1875
        %v1877 = vpop.f32.mrf.mxu0
        %v1878 = vadd.f32 0.0, %v1877
        %1879 = vmatprep.mubr.bf16.mxu0 %v1119
        %1880 = vmatmul.mubr.bf16.gmra.mxu0 %v1103
        %v1881 = vpop.f32.mrf.mxu0
        %v1882 = vadd.f32 0.0, %v1881
        %v1883 = vpop.f32.mrf.mxu0
        %v1884 = vadd.f32 0.0, %v1883
        %v1885 = vpop.f32.mrf.mxu0
        %v1886 = vadd.f32 0.0, %v1885
        %v1887 = vpop.f32.mrf.mxu0
        %v1888 = vadd.f32 0.0, %v1887
        %1889 = vdwg.mxu0
        %v1890 = vmul.f32 %v1539, 0.5
        %v1891 = vmul.f32 %v1541, 0.5
        %v1892 = vmul.f32 %v1732, 0.5
        %v1893 = vmul.f32 %v1734, 0.5
        %v1894 = vmul.f32 %v1543, 0.5
        %v1895 = vmul.f32 %v1545, 0.5
        %v1896 = vmul.f32 %v1736, 0.5
        %v1897 = vmul.f32 %v1738, 0.5
        %v1898 = vmul.f32 %v1549, 0.5
        %v1899 = vmul.f32 %v1551, 0.5
        %v1900 = vmul.f32 %v1742, 0.5
        %v1901 = vmul.f32 %v1744, 0.5
        %v1902 = vmul.f32 %v1553, 0.5
        %v1903 = vmul.f32 %v1555, 0.5
        %v1904 = vmul.f32 %v1746, 0.5
        %v1905 = vmul.f32 %v1748, 0.5
        %v1906 = vmul.f32 %v1559, 0.5
        %v1907 = vmul.f32 %v1561, 0.5
        %v1908 = vmul.f32 %v1752, 0.5
        %v1909 = vmul.f32 %v1754, 0.5
        %v1910 = vmul.f32 %v1563, 0.5
        %v1911 = vmul.f32 %v1565, 0.5
        %v1912 = vmul.f32 %v1756, 0.5
        %v1913 = vmul.f32 %v1758, 0.5
        %v1914 = vmul.f32 %v1569, 0.5
        %v1915 = vmul.f32 %v1571, 0.5
        %v1916 = vmul.f32 %v1762, 0.5
        %v1917 = vmul.f32 %v1764, 0.5
        %v1918 = vmul.f32 %v1573, 0.5
        %v1919 = vmul.f32 %v1575, 0.5
        %v1920 = vmul.f32 %v1766, 0.5
        %v1921 = vmul.f32 %v1768, 0.5
        %v1922 = vmul.f32 %v1579, 0.5
        %v1923 = vmul.f32 %v1581, 0.5
        %v1924 = vmul.f32 %v1772, 0.5
        %v1925 = vmul.f32 %v1774, 0.5
        %v1926 = vmul.f32 %v1583, 0.5
        %v1927 = vmul.f32 %v1585, 0.5
        %v1928 = vmul.f32 %v1776, 0.5
        %v1929 = vmul.f32 %v1778, 0.5
        %v1930 = vmul.f32 %v1589, 0.5
        %v1931 = vmul.f32 %v1591, 0.5
        %v1932 = vmul.f32 %v1782, 0.5
        %v1933 = vmul.f32 %v1784, 0.5
        %v1934 = vmul.f32 %v1593, 0.5
        %v1935 = vmul.f32 %v1595, 0.5
        %v1936 = vmul.f32 %v1786, 0.5
        %v1937 = vmul.f32 %v1788, 0.5
        %v1938 = vmul.f32 %v1599, 0.5
        %v1939 = vmul.f32 %v1601, 0.5
        %v1940 = vmul.f32 %v1792, 0.5
        %v1941 = vmul.f32 %v1794, 0.5
        %v1942 = vmul.f32 %v1603, 0.5
        %v1943 = vmul.f32 %v1605, 0.5
        %v1944 = vmul.f32 %v1796, 0.5
        %v1945 = vmul.f32 %v1798, 0.5
        %v1946 = vmul.f32 %v1609, 0.5
        %v1947 = vmul.f32 %v1611, 0.5
        %v1948 = vmul.f32 %v1802, 0.5
        %v1949 = vmul.f32 %v1804, 0.5
        %v1950 = vmul.f32 %v1613, 0.5
        %v1951 = vmul.f32 %v1615, 0.5
        %v1952 = vmul.f32 %v1806, 0.5
        %v1953 = vmul.f32 %v1808, 0.5
        %v1954 = vmul.f32 %v1619, 0.5
        %v1955 = vmul.f32 %v1621, 0.5
        %v1956 = vmul.f32 %v1812, 0.5
        %v1957 = vmul.f32 %v1814, 0.5
        %v1958 = vmul.f32 %v1623, 0.5
        %v1959 = vmul.f32 %v1625, 0.5
        %v1960 = vmul.f32 %v1816, 0.5
        %v1961 = vmul.f32 %v1818, 0.5
        %v1962 = vmul.f32 %v1629, 0.5
        %v1963 = vmul.f32 %v1631, 0.5
        %v1964 = vmul.f32 %v1822, 0.5
        %v1965 = vmul.f32 %v1824, 0.5
        %v1966 = vmul.f32 %v1633, 0.5
        %v1967 = vmul.f32 %v1635, 0.5
        %v1968 = vmul.f32 %v1826, 0.5
        %v1969 = vmul.f32 %v1828, 0.5
        %v1970 = vmul.f32 %v1639, 0.5
        %v1971 = vmul.f32 %v1641, 0.5
        %v1972 = vmul.f32 %v1832, 0.5
        %v1973 = vmul.f32 %v1834, 0.5
        %v1974 = vmul.f32 %v1643, 0.5
        %v1975 = vmul.f32 %v1645, 0.5
        %v1976 = vmul.f32 %v1836, 0.5
        %v1977 = vmul.f32 %v1838, 0.5
        %v1978 = vmul.f32 %v1649, 0.5
        %v1979 = vmul.f32 %v1651, 0.5
        %v1980 = vmul.f32 %v1842, 0.5
        %v1981 = vmul.f32 %v1844, 0.5
        %v1982 = vmul.f32 %v1653, 0.5
        %v1983 = vmul.f32 %v1655, 0.5
        %v1984 = vmul.f32 %v1846, 0.5
        %v1985 = vmul.f32 %v1848, 0.5
        %v1986 = vmul.f32 %v1659, 0.5
        %v1987 = vmul.f32 %v1661, 0.5
        %v1988 = vmul.f32 %v1852, 0.5
        %v1989 = vmul.f32 %v1854, 0.5
        %v1990 = vmul.f32 %v1663, 0.5
        %v1991 = vmul.f32 %v1665, 0.5
        %v1992 = vmul.f32 %v1856, 0.5
        %v1993 = vmul.f32 %v1858, 0.5
        %v1994 = vmul.f32 %v1669, 0.5
        %v1995 = vmul.f32 %v1671, 0.5
        %v1996 = vmul.f32 %v1862, 0.5
        %v1997 = vmul.f32 %v1864, 0.5
        %v1998 = vmul.f32 %v1673, 0.5
        %v1999 = vmul.f32 %v1675, 0.5
        %v2000 = vmul.f32 %v1866, 0.5
        %v2001 = vmul.f32 %v1868, 0.5
        %v2002 = vmul.f32 %v1679, 0.5
        %v2003 = vmul.f32 %v1681, 0.5
        %v2004 = vmul.f32 %v1872, 0.5
        %v2005 = vmul.f32 %v1874, 0.5
        %v2006 = vmul.f32 %v1683, 0.5
        %v2007 = vmul.f32 %v1685, 0.5
        %v2008 = vmul.f32 %v1876, 0.5
        %v2009 = vmul.f32 %v1878, 0.5
        %v2010 = vmul.f32 %v1689, 0.5
        %v2011 = vmul.f32 %v1691, 0.5
        %v2012 = vmul.f32 %v1882, 0.5
        %v2013 = vmul.f32 %v1884, 0.5
        %v2014 = vmul.f32 %v1693, 0.5
        %v2015 = vmul.f32 %v1695, 0.5
        %v2016 = vmul.f32 %v1886, 0.5
        %v2017 = vmul.f32 %v1888, 0.5
        %v2018 = vmul.f32 %v1539, 0.70710677
        %v2019 = vmul.f32 %v1541, 0.70710677
        %v2020 = vmul.f32 %v1732, 0.70710677
        %v2021 = vmul.f32 %v1734, 0.70710677
        %v2022 = vmul.f32 %v1543, 0.70710677
        %v2023 = vmul.f32 %v1545, 0.70710677
        %v2024 = vmul.f32 %v1736, 0.70710677
        %v2025 = vmul.f32 %v1738, 0.70710677
        %v2026 = vmul.f32 %v1549, 0.70710677
        %v2027 = vmul.f32 %v1551, 0.70710677
        %v2028 = vmul.f32 %v1742, 0.70710677
        %v2029 = vmul.f32 %v1744, 0.70710677
        %v2030 = vmul.f32 %v1553, 0.70710677
        %v2031 = vmul.f32 %v1555, 0.70710677
        %v2032 = vmul.f32 %v1746, 0.70710677
        %v2033 = vmul.f32 %v1748, 0.70710677
        %v2034 = vmul.f32 %v1559, 0.70710677
        %v2035 = vmul.f32 %v1561, 0.70710677
        %v2036 = vmul.f32 %v1752, 0.70710677
        %v2037 = vmul.f32 %v1754, 0.70710677
        %v2038 = vmul.f32 %v1563, 0.70710677
        %v2039 = vmul.f32 %v1565, 0.70710677
        %v2040 = vmul.f32 %v1756, 0.70710677
        %v2041 = vmul.f32 %v1758, 0.70710677
        %v2042 = vmul.f32 %v1569, 0.70710677
        %v2043 = vmul.f32 %v1571, 0.70710677
        %v2044 = vmul.f32 %v1762, 0.70710677
        %v2045 = vmul.f32 %v1764, 0.70710677
        %v2046 = vmul.f32 %v1573, 0.70710677
        %v2047 = vmul.f32 %v1575, 0.70710677
        %v2048 = vmul.f32 %v1766, 0.70710677
        %v2049 = vmul.f32 %v1768, 0.70710677
        %v2050 = vmul.f32 %v1579, 0.70710677
        %v2051 = vmul.f32 %v1581, 0.70710677
        %v2052 = vmul.f32 %v1772, 0.70710677
        %v2053 = vmul.f32 %v1774, 0.70710677
        %v2054 = vmul.f32 %v1583, 0.70710677
        %v2055 = vmul.f32 %v1585, 0.70710677
        %v2056 = vmul.f32 %v1776, 0.70710677
        %v2057 = vmul.f32 %v1778, 0.70710677
        %v2058 = vmul.f32 %v1589, 0.70710677
        %v2059 = vmul.f32 %v1591, 0.70710677
        %v2060 = vmul.f32 %v1782, 0.70710677
        %v2061 = vmul.f32 %v1784, 0.70710677
        %v2062 = vmul.f32 %v1593, 0.70710677
        %v2063 = vmul.f32 %v1595, 0.70710677
        %v2064 = vmul.f32 %v1786, 0.70710677
        %v2065 = vmul.f32 %v1788, 0.70710677
        %v2066 = vmul.f32 %v1599, 0.70710677
        %v2067 = vmul.f32 %v1601, 0.70710677
        %v2068 = vmul.f32 %v1792, 0.70710677
        %v2069 = vmul.f32 %v1794, 0.70710677
        %v2070 = vmul.f32 %v1603, 0.70710677
        %v2071 = vmul.f32 %v1605, 0.70710677
        %v2072 = vmul.f32 %v1796, 0.70710677
        %v2073 = vmul.f32 %v1798, 0.70710677
        %v2074 = vmul.f32 %v1609, 0.70710677
        %v2075 = vmul.f32 %v1611, 0.70710677
        %v2076 = vmul.f32 %v1802, 0.70710677
        %v2077 = vmul.f32 %v1804, 0.70710677
        %v2078 = vmul.f32 %v1613, 0.70710677
        %v2079 = vmul.f32 %v1615, 0.70710677
        %v2080 = vmul.f32 %v1806, 0.70710677
        %v2081 = vmul.f32 %v1808, 0.70710677
        %v2082 = vmul.f32 %v1619, 0.70710677
        %v2083 = vmul.f32 %v1621, 0.70710677
        %v2084 = vmul.f32 %v1812, 0.70710677
        %v2085 = vmul.f32 %v1814, 0.70710677
        %v2086 = vmul.f32 %v1623, 0.70710677
        %v2087 = vmul.f32 %v1625, 0.70710677
        %v2088 = vmul.f32 %v1816, 0.70710677
        %v2089 = vmul.f32 %v1818, 0.70710677
        %v2090 = vmul.f32 %v1629, 0.70710677
        %v2091 = vmul.f32 %v1631, 0.70710677
        %v2092 = vmul.f32 %v1822, 0.70710677
        %v2093 = vmul.f32 %v1824, 0.70710677
        %v2094 = vmul.f32 %v1633, 0.70710677
        %v2095 = vmul.f32 %v1635, 0.70710677
        %v2096 = vmul.f32 %v1826, 0.70710677
        %v2097 = vmul.f32 %v1828, 0.70710677
        %v2098 = vmul.f32 %v1639, 0.70710677
        %v2099 = vmul.f32 %v1641, 0.70710677
        %v2100 = vmul.f32 %v1832, 0.70710677
        %v2101 = vmul.f32 %v1834, 0.70710677
        %v2102 = vmul.f32 %v1643, 0.70710677
        %v2103 = vmul.f32 %v1645, 0.70710677
        %v2104 = vmul.f32 %v1836, 0.70710677
        %v2105 = vmul.f32 %v1838, 0.70710677
        %v2106 = vmul.f32 %v1649, 0.70710677
        %v2107 = vmul.f32 %v1651, 0.70710677
        %v2108 = vmul.f32 %v1842, 0.70710677
        %v2109 = vmul.f32 %v1844, 0.70710677
        %v2110 = vmul.f32 %v1653, 0.70710677
        %v2111 = vmul.f32 %v1655, 0.70710677
        %v2112 = vmul.f32 %v1846, 0.70710677
        %v2113 = vmul.f32 %v1848, 0.70710677
        %v2114 = vmul.f32 %v1659, 0.70710677
        %v2115 = vmul.f32 %v1661, 0.70710677
        %v2116 = vmul.f32 %v1852, 0.70710677
        %v2117 = vmul.f32 %v1854, 0.70710677
        %v2118 = vmul.f32 %v1663, 0.70710677
        %v2119 = vmul.f32 %v1665, 0.70710677
        %v2120 = vmul.f32 %v1856, 0.70710677
        %v2121 = vmul.f32 %v1858, 0.70710677
        %v2122 = vmul.f32 %v1669, 0.70710677
        %v2123 = vmul.f32 %v1671, 0.70710677
        %v2124 = vmul.f32 %v1862, 0.70710677
        %v2125 = vmul.f32 %v1864, 0.70710677
        %v2126 = vmul.f32 %v1673, 0.70710677
        %v2127 = vmul.f32 %v1675, 0.70710677
        %v2128 = vmul.f32 %v1866, 0.70710677
        %v2129 = vmul.f32 %v1868, 0.70710677
        %v2130 = vmul.f32 %v1679, 0.70710677
        %v2131 = vmul.f32 %v1681, 0.70710677
        %v2132 = vmul.f32 %v1872, 0.70710677
        %v2133 = vmul.f32 %v1874, 0.70710677
        %v2134 = vmul.f32 %v1683, 0.70710677
        %v2135 = vmul.f32 %v1685, 0.70710677
        %v2136 = vmul.f32 %v1876, 0.70710677
        %v2137 = vmul.f32 %v1878, 0.70710677
        %v2138 = vmul.f32 %v1689, 0.70710677
        %v2139 = vmul.f32 %v1691, 0.70710677
        %v2140 = vmul.f32 %v1882, 0.70710677
        %v2141 = vmul.f32 %v1884, 0.70710677
        %v2142 = vmul.f32 %v1693, 0.70710677
        %v2143 = vmul.f32 %v1695, 0.70710677
        %v2144 = vmul.f32 %v1886, 0.70710677
        %v2145 = vmul.f32 %v1888, 0.70710677
        %vm2146 = vcmp.ge.f32.partialorder %v2018, 0.0
        %vm2147 = vcmp.ge.f32.partialorder %v2019, 0.0
        %vm2148 = vcmp.ge.f32.partialorder %v2020, 0.0
        %vm2149 = vcmp.ge.f32.partialorder %v2021, 0.0
        %vm2150 = vcmp.ge.f32.partialorder %v2022, 0.0
        %vm2151 = vcmp.ge.f32.partialorder %v2023, 0.0
        %vm2152 = vcmp.ge.f32.partialorder %v2024, 0.0
        %vm2153 = vcmp.ge.f32.partialorder %v2025, 0.0
        %vm2154 = vcmp.ge.f32.partialorder %v2026, 0.0
        %vm2155 = vcmp.ge.f32.partialorder %v2027, 0.0
        %vm2156 = vcmp.ge.f32.partialorder %v2028, 0.0
        %vm2157 = vcmp.ge.f32.partialorder %v2029, 0.0
        %vm2158 = vcmp.ge.f32.partialorder %v2030, 0.0
        %vm2159 = vcmp.ge.f32.partialorder %v2031, 0.0
        %vm2160 = vcmp.ge.f32.partialorder %v2032, 0.0
        %vm2161 = vcmp.ge.f32.partialorder %v2033, 0.0
        %vm2162 = vcmp.ge.f32.partialorder %v2034, 0.0
        %vm2163 = vcmp.ge.f32.partialorder %v2035, 0.0
        %vm2164 = vcmp.ge.f32.partialorder %v2036, 0.0
        %vm2165 = vcmp.ge.f32.partialorder %v2037, 0.0
        %vm2166 = vcmp.ge.f32.partialorder %v2038, 0.0
        %vm2167 = vcmp.ge.f32.partialorder %v2039, 0.0
        %vm2168 = vcmp.ge.f32.partialorder %v2040, 0.0
        %vm2169 = vcmp.ge.f32.partialorder %v2041, 0.0
        %vm2170 = vcmp.ge.f32.partialorder %v2042, 0.0
        %vm2171 = vcmp.ge.f32.partialorder %v2043, 0.0
        %vm2172 = vcmp.ge.f32.partialorder %v2044, 0.0
        %vm2173 = vcmp.ge.f32.partialorder %v2045, 0.0
        %vm2174 = vcmp.ge.f32.partialorder %v2046, 0.0
        %vm2175 = vcmp.ge.f32.partialorder %v2047, 0.0
        %vm2176 = vcmp.ge.f32.partialorder %v2048, 0.0
        %vm2177 = vcmp.ge.f32.partialorder %v2049, 0.0
        %vm2178 = vcmp.ge.f32.partialorder %v2050, 0.0
        %vm2179 = vcmp.ge.f32.partialorder %v2051, 0.0
        %vm2180 = vcmp.ge.f32.partialorder %v2052, 0.0
        %vm2181 = vcmp.ge.f32.partialorder %v2053, 0.0
        %vm2182 = vcmp.ge.f32.partialorder %v2054, 0.0
        %vm2183 = vcmp.ge.f32.partialorder %v2055, 0.0
        %vm2184 = vcmp.ge.f32.partialorder %v2056, 0.0
        %vm2185 = vcmp.ge.f32.partialorder %v2057, 0.0
        %vm2186 = vcmp.ge.f32.partialorder %v2058, 0.0
        %vm2187 = vcmp.ge.f32.partialorder %v2059, 0.0
        %vm2188 = vcmp.ge.f32.partialorder %v2060, 0.0
        %vm2189 = vcmp.ge.f32.partialorder %v2061, 0.0
        %vm2190 = vcmp.ge.f32.partialorder %v2062, 0.0
        %vm2191 = vcmp.ge.f32.partialorder %v2063, 0.0
        %vm2192 = vcmp.ge.f32.partialorder %v2064, 0.0
        %vm2193 = vcmp.ge.f32.partialorder %v2065, 0.0
        %vm2194 = vcmp.ge.f32.partialorder %v2066, 0.0
        %vm2195 = vcmp.ge.f32.partialorder %v2067, 0.0
        %vm2196 = vcmp.ge.f32.partialorder %v2068, 0.0
        %vm2197 = vcmp.ge.f32.partialorder %v2069, 0.0
        %vm2198 = vcmp.ge.f32.partialorder %v2070, 0.0
        %vm2199 = vcmp.ge.f32.partialorder %v2071, 0.0
        %vm2200 = vcmp.ge.f32.partialorder %v2072, 0.0
        %vm2201 = vcmp.ge.f32.partialorder %v2073, 0.0
        %vm2202 = vcmp.ge.f32.partialorder %v2074, 0.0
        %vm2203 = vcmp.ge.f32.partialorder %v2075, 0.0
        %vm2204 = vcmp.ge.f32.partialorder %v2076, 0.0
        %vm2205 = vcmp.ge.f32.partialorder %v2077, 0.0
        %vm2206 = vcmp.ge.f32.partialorder %v2078, 0.0
        %vm2207 = vcmp.ge.f32.partialorder %v2079, 0.0
        %vm2208 = vcmp.ge.f32.partialorder %v2080, 0.0
        %vm2209 = vcmp.ge.f32.partialorder %v2081, 0.0
        %vm2210 = vcmp.ge.f32.partialorder %v2082, 0.0
        %vm2211 = vcmp.ge.f32.partialorder %v2083, 0.0
        %vm2212 = vcmp.ge.f32.partialorder %v2084, 0.0
        %vm2213 = vcmp.ge.f32.partialorder %v2085, 0.0
        %vm2214 = vcmp.ge.f32.partialorder %v2086, 0.0
        %vm2215 = vcmp.ge.f32.partialorder %v2087, 0.0
        %vm2216 = vcmp.ge.f32.partialorder %v2088, 0.0
        %vm2217 = vcmp.ge.f32.partialorder %v2089, 0.0
        %vm2218 = vcmp.ge.f32.partialorder %v2090, 0.0
        %vm2219 = vcmp.ge.f32.partialorder %v2091, 0.0
        %vm2220 = vcmp.ge.f32.partialorder %v2092, 0.0
        %vm2221 = vcmp.ge.f32.partialorder %v2093, 0.0
        %vm2222 = vcmp.ge.f32.partialorder %v2094, 0.0
        %vm2223 = vcmp.ge.f32.partialorder %v2095, 0.0
        %vm2224 = vcmp.ge.f32.partialorder %v2096, 0.0
        %vm2225 = vcmp.ge.f32.partialorder %v2097, 0.0
        %vm2226 = vcmp.ge.f32.partialorder %v2098, 0.0
        %vm2227 = vcmp.ge.f32.partialorder %v2099, 0.0
        %vm2228 = vcmp.ge.f32.partialorder %v2100, 0.0
        %vm2229 = vcmp.ge.f32.partialorder %v2101, 0.0
        %vm2230 = vcmp.ge.f32.partialorder %v2102, 0.0
        %vm2231 = vcmp.ge.f32.partialorder %v2103, 0.0
        %vm2232 = vcmp.ge.f32.partialorder %v2104, 0.0
        %vm2233 = vcmp.ge.f32.partialorder %v2105, 0.0
        %vm2234 = vcmp.ge.f32.partialorder %v2106, 0.0
        %vm2235 = vcmp.ge.f32.partialorder %v2107, 0.0
        %vm2236 = vcmp.ge.f32.partialorder %v2108, 0.0
        %vm2237 = vcmp.ge.f32.partialorder %v2109, 0.0
        %vm2238 = vcmp.ge.f32.partialorder %v2110, 0.0
        %vm2239 = vcmp.ge.f32.partialorder %v2111, 0.0
        %vm2240 = vcmp.ge.f32.partialorder %v2112, 0.0
        %vm2241 = vcmp.ge.f32.partialorder %v2113, 0.0
        %vm2242 = vcmp.ge.f32.partialorder %v2114, 0.0
        %vm2243 = vcmp.ge.f32.partialorder %v2115, 0.0
        %vm2244 = vcmp.ge.f32.partialorder %v2116, 0.0
        %vm2245 = vcmp.ge.f32.partialorder %v2117, 0.0
        %vm2246 = vcmp.ge.f32.partialorder %v2118, 0.0
        %vm2247 = vcmp.ge.f32.partialorder %v2119, 0.0
        %vm2248 = vcmp.ge.f32.partialorder %v2120, 0.0
        %vm2249 = vcmp.ge.f32.partialorder %v2121, 0.0
        %vm2250 = vcmp.ge.f32.partialorder %v2122, 0.0
        %vm2251 = vcmp.ge.f32.partialorder %v2123, 0.0
        %vm2252 = vcmp.ge.f32.partialorder %v2124, 0.0
        %vm2253 = vcmp.ge.f32.partialorder %v2125, 0.0
        %vm2254 = vcmp.ge.f32.partialorder %v2126, 0.0
        %vm2255 = vcmp.ge.f32.partialorder %v2127, 0.0
        %vm2256 = vcmp.ge.f32.partialorder %v2128, 0.0
        %vm2257 = vcmp.ge.f32.partialorder %v2129, 0.0
        %vm2258 = vcmp.ge.f32.partialorder %v2130, 0.0
        %vm2259 = vcmp.ge.f32.partialorder %v2131, 0.0
        %vm2260 = vcmp.ge.f32.partialorder %v2132, 0.0
        %vm2261 = vcmp.ge.f32.partialorder %v2133, 0.0
        %vm2262 = vcmp.ge.f32.partialorder %v2134, 0.0
        %vm2263 = vcmp.ge.f32.partialorder %v2135, 0.0
        %vm2264 = vcmp.ge.f32.partialorder %v2136, 0.0
        %vm2265 = vcmp.ge.f32.partialorder %v2137, 0.0
        %vm2266 = vcmp.ge.f32.partialorder %v2138, 0.0
        %vm2267 = vcmp.ge.f32.partialorder %v2139, 0.0
        %vm2268 = vcmp.ge.f32.partialorder %v2140, 0.0
        %vm2269 = vcmp.ge.f32.partialorder %v2141, 0.0
        %vm2270 = vcmp.ge.f32.partialorder %v2142, 0.0
        %vm2271 = vcmp.ge.f32.partialorder %v2143, 0.0
        %vm2272 = vcmp.ge.f32.partialorder %v2144, 0.0
        %vm2273 = vcmp.ge.f32.partialorder %v2145, 0.0
        %v2274 = vsel %vm2146, 1.0, -1.0
        %v2275 = vsel %vm2147, 1.0, -1.0
        %v2276 = vsel %vm2148, 1.0, -1.0
        %v2277 = vsel %vm2149, 1.0, -1.0
        %v2278 = vsel %vm2150, 1.0, -1.0
        %v2279 = vsel %vm2151, 1.0, -1.0
        %v2280 = vsel %vm2152, 1.0, -1.0
        %v2281 = vsel %vm2153, 1.0, -1.0
        %v2282 = vsel %vm2154, 1.0, -1.0
        %v2283 = vsel %vm2155, 1.0, -1.0
        %v2284 = vsel %vm2156, 1.0, -1.0
        %v2285 = vsel %vm2157, 1.0, -1.0
        %v2286 = vsel %vm2158, 1.0, -1.0
        %v2287 = vsel %vm2159, 1.0, -1.0
        %v2288 = vsel %vm2160, 1.0, -1.0
        %v2289 = vsel %vm2161, 1.0, -1.0
        %v2290 = vsel %vm2162, 1.0, -1.0
        %v2291 = vsel %vm2163, 1.0, -1.0
        %v2292 = vsel %vm2164, 1.0, -1.0
        %v2293 = vsel %vm2165, 1.0, -1.0
        %v2294 = vsel %vm2166, 1.0, -1.0
        %v2295 = vsel %vm2167, 1.0, -1.0
        %v2296 = vsel %vm2168, 1.0, -1.0
        %v2297 = vsel %vm2169, 1.0, -1.0
        %v2298 = vsel %vm2170, 1.0, -1.0
        %v2299 = vsel %vm2171, 1.0, -1.0
        %v2300 = vsel %vm2172, 1.0, -1.0
        %v2301 = vsel %vm2173, 1.0, -1.0
        %v2302 = vsel %vm2174, 1.0, -1.0
        %v2303 = vsel %vm2175, 1.0, -1.0
        %v2304 = vsel %vm2176, 1.0, -1.0
        %v2305 = vsel %vm2177, 1.0, -1.0
        %v2306 = vsel %vm2178, 1.0, -1.0
        %v2307 = vsel %vm2179, 1.0, -1.0
        %v2308 = vsel %vm2180, 1.0, -1.0
        %v2309 = vsel %vm2181, 1.0, -1.0
        %v2310 = vsel %vm2182, 1.0, -1.0
        %v2311 = vsel %vm2183, 1.0, -1.0
        %v2312 = vsel %vm2184, 1.0, -1.0
        %v2313 = vsel %vm2185, 1.0, -1.0
        %v2314 = vsel %vm2186, 1.0, -1.0
        %v2315 = vsel %vm2187, 1.0, -1.0
        %v2316 = vsel %vm2188, 1.0, -1.0
        %v2317 = vsel %vm2189, 1.0, -1.0
        %v2318 = vsel %vm2190, 1.0, -1.0
        %v2319 = vsel %vm2191, 1.0, -1.0
        %v2320 = vsel %vm2192, 1.0, -1.0
        %v2321 = vsel %vm2193, 1.0, -1.0
        %v2322 = vsel %vm2194, 1.0, -1.0
        %v2323 = vsel %vm2195, 1.0, -1.0
        %v2324 = vsel %vm2196, 1.0, -1.0
        %v2325 = vsel %vm2197, 1.0, -1.0
        %v2326 = vsel %vm2198, 1.0, -1.0
        %v2327 = vsel %vm2199, 1.0, -1.0
        %v2328 = vsel %vm2200, 1.0, -1.0
        %v2329 = vsel %vm2201, 1.0, -1.0
        %v2330 = vsel %vm2202, 1.0, -1.0
        %v2331 = vsel %vm2203, 1.0, -1.0
        %v2332 = vsel %vm2204, 1.0, -1.0
        %v2333 = vsel %vm2205, 1.0, -1.0
        %v2334 = vsel %vm2206, 1.0, -1.0
        %v2335 = vsel %vm2207, 1.0, -1.0
        %v2336 = vsel %vm2208, 1.0, -1.0
        %v2337 = vsel %vm2209, 1.0, -1.0
        %v2338 = vsel %vm2210, 1.0, -1.0
        %v2339 = vsel %vm2211, 1.0, -1.0
        %v2340 = vsel %vm2212, 1.0, -1.0
        %v2341 = vsel %vm2213, 1.0, -1.0
        %v2342 = vsel %vm2214, 1.0, -1.0
        %v2343 = vsel %vm2215, 1.0, -1.0
        %v2344 = vsel %vm2216, 1.0, -1.0
        %v2345 = vsel %vm2217, 1.0, -1.0
        %v2346 = vsel %vm2218, 1.0, -1.0
        %v2347 = vsel %vm2219, 1.0, -1.0
        %v2348 = vsel %vm2220, 1.0, -1.0
        %v2349 = vsel %vm2221, 1.0, -1.0
        %v2350 = vsel %vm2222, 1.0, -1.0
        %v2351 = vsel %vm2223, 1.0, -1.0
        %v2352 = vsel %vm2224, 1.0, -1.0
        %v2353 = vsel %vm2225, 1.0, -1.0
        %v2354 = vsel %vm2226, 1.0, -1.0
        %v2355 = vsel %vm2227, 1.0, -1.0
        %v2356 = vsel %vm2228, 1.0, -1.0
        %v2357 = vsel %vm2229, 1.0, -1.0
        %v2358 = vsel %vm2230, 1.0, -1.0
        %v2359 = vsel %vm2231, 1.0, -1.0
        %v2360 = vsel %vm2232, 1.0, -1.0
        %v2361 = vsel %vm2233, 1.0, -1.0
        %v2362 = vsel %vm2234, 1.0, -1.0
        %v2363 = vsel %vm2235, 1.0, -1.0
        %v2364 = vsel %vm2236, 1.0, -1.0
        %v2365 = vsel %vm2237, 1.0, -1.0
        %v2366 = vsel %vm2238, 1.0, -1.0
        %v2367 = vsel %vm2239, 1.0, -1.0
        %v2368 = vsel %vm2240, 1.0, -1.0
        %v2369 = vsel %vm2241, 1.0, -1.0
        %v2370 = vsel %vm2242, 1.0, -1.0
        %v2371 = vsel %vm2243, 1.0, -1.0
        %v2372 = vsel %vm2244, 1.0, -1.0
        %v2373 = vsel %vm2245, 1.0, -1.0
        %v2374 = vsel %vm2246, 1.0, -1.0
        %v2375 = vsel %vm2247, 1.0, -1.0
        %v2376 = vsel %vm2248, 1.0, -1.0
        %v2377 = vsel %vm2249, 1.0, -1.0
        %v2378 = vsel %vm2250, 1.0, -1.0
        %v2379 = vsel %vm2251, 1.0, -1.0
        %v2380 = vsel %vm2252, 1.0, -1.0
        %v2381 = vsel %vm2253, 1.0, -1.0
        %v2382 = vsel %vm2254, 1.0, -1.0
        %v2383 = vsel %vm2255, 1.0, -1.0
        %v2384 = vsel %vm2256, 1.0, -1.0
        %v2385 = vsel %vm2257, 1.0, -1.0
        %v2386 = vsel %vm2258, 1.0, -1.0
        %v2387 = vsel %vm2259, 1.0, -1.0
        %v2388 = vsel %vm2260, 1.0, -1.0
        %v2389 = vsel %vm2261, 1.0, -1.0
        %v2390 = vsel %vm2262, 1.0, -1.0
        %v2391 = vsel %vm2263, 1.0, -1.0
        %v2392 = vsel %vm2264, 1.0, -1.0
        %v2393 = vsel %vm2265, 1.0, -1.0
        %v2394 = vsel %vm2266, 1.0, -1.0
        %v2395 = vsel %vm2267, 1.0, -1.0
        %v2396 = vsel %vm2268, 1.0, -1.0
        %v2397 = vsel %vm2269, 1.0, -1.0
        %v2398 = vsel %vm2270, 1.0, -1.0
        %v2399 = vsel %vm2271, 1.0, -1.0
        %v2400 = vsel %vm2272, 1.0, -1.0
        %v2401 = vsel %vm2273, 1.0, -1.0
        %v2402 = vand.u32 2147483647, %v2018
        %v2403 = vand.u32 2147483647, %v2019
        %v2404 = vand.u32 2147483647, %v2020
        %v2405 = vand.u32 2147483647, %v2021
        %v2406 = vand.u32 2147483647, %v2022
        %v2407 = vand.u32 2147483647, %v2023
        %v2408 = vand.u32 2147483647, %v2024
        %v2409 = vand.u32 2147483647, %v2025
        %v2410 = vand.u32 2147483647, %v2026
        %v2411 = vand.u32 2147483647, %v2027
        %v2412 = vand.u32 2147483647, %v2028
        %v2413 = vand.u32 2147483647, %v2029
        %v2414 = vand.u32 2147483647, %v2030
        %v2415 = vand.u32 2147483647, %v2031
        %v2416 = vand.u32 2147483647, %v2032
        %v2417 = vand.u32 2147483647, %v2033
        %v2418 = vand.u32 2147483647, %v2034
        %v2419 = vand.u32 2147483647, %v2035
        %v2420 = vand.u32 2147483647, %v2036
        %v2421 = vand.u32 2147483647, %v2037
        %v2422 = vand.u32 2147483647, %v2038
        %v2423 = vand.u32 2147483647, %v2039
        %v2424 = vand.u32 2147483647, %v2040
        %v2425 = vand.u32 2147483647, %v2041
        %v2426 = vand.u32 2147483647, %v2042
        %v2427 = vand.u32 2147483647, %v2043
        %v2428 = vand.u32 2147483647, %v2044
        %v2429 = vand.u32 2147483647, %v2045
        %v2430 = vand.u32 2147483647, %v2046
        %v2431 = vand.u32 2147483647, %v2047
        %v2432 = vand.u32 2147483647, %v2048
        %v2433 = vand.u32 2147483647, %v2049
        %v2434 = vand.u32 2147483647, %v2050
        %v2435 = vand.u32 2147483647, %v2051
        %v2436 = vand.u32 2147483647, %v2052
        %v2437 = vand.u32 2147483647, %v2053
        %v2438 = vand.u32 2147483647, %v2054
        %v2439 = vand.u32 2147483647, %v2055
        %v2440 = vand.u32 2147483647, %v2056
        %v2441 = vand.u32 2147483647, %v2057
        %v2442 = vand.u32 2147483647, %v2058
        %v2443 = vand.u32 2147483647, %v2059
        %v2444 = vand.u32 2147483647, %v2060
        %v2445 = vand.u32 2147483647, %v2061
        %v2446 = vand.u32 2147483647, %v2062
        %v2447 = vand.u32 2147483647, %v2063
        %v2448 = vand.u32 2147483647, %v2064
        %v2449 = vand.u32 2147483647, %v2065
        %v2450 = vand.u32 2147483647, %v2066
        %v2451 = vand.u32 2147483647, %v2067
        %v2452 = vand.u32 2147483647, %v2068
        %v2453 = vand.u32 2147483647, %v2069
        %v2454 = vand.u32 2147483647, %v2070
        %v2455 = vand.u32 2147483647, %v2071
        %v2456 = vand.u32 2147483647, %v2072
        %v2457 = vand.u32 2147483647, %v2073
        %v2458 = vand.u32 2147483647, %v2074
        %v2459 = vand.u32 2147483647, %v2075
        %v2460 = vand.u32 2147483647, %v2076
        %v2461 = vand.u32 2147483647, %v2077
        %v2462 = vand.u32 2147483647, %v2078
        %v2463 = vand.u32 2147483647, %v2079
        %v2464 = vand.u32 2147483647, %v2080
        %v2465 = vand.u32 2147483647, %v2081
        %v2466 = vand.u32 2147483647, %v2082
        %v2467 = vand.u32 2147483647, %v2083
        %v2468 = vand.u32 2147483647, %v2084
        %v2469 = vand.u32 2147483647, %v2085
        %v2470 = vand.u32 2147483647, %v2086
        %v2471 = vand.u32 2147483647, %v2087
        %v2472 = vand.u32 2147483647, %v2088
        %v2473 = vand.u32 2147483647, %v2089
        %v2474 = vand.u32 2147483647, %v2090
        %v2475 = vand.u32 2147483647, %v2091
        %v2476 = vand.u32 2147483647, %v2092
        %v2477 = vand.u32 2147483647, %v2093
        %v2478 = vand.u32 2147483647, %v2094
        %v2479 = vand.u32 2147483647, %v2095
        %v2480 = vand.u32 2147483647, %v2096
        %v2481 = vand.u32 2147483647, %v2097
        %v2482 = vand.u32 2147483647, %v2098
        %v2483 = vand.u32 2147483647, %v2099
        %v2484 = vand.u32 2147483647, %v2100
        %v2485 = vand.u32 2147483647, %v2101
        %v2486 = vand.u32 2147483647, %v2102
        %v2487 = vand.u32 2147483647, %v2103
        %v2488 = vand.u32 2147483647, %v2104
        %v2489 = vand.u32 2147483647, %v2105
        %v2490 = vand.u32 2147483647, %v2106
        %v2491 = vand.u32 2147483647, %v2107
        %v2492 = vand.u32 2147483647, %v2108
        %v2493 = vand.u32 2147483647, %v2109
        %v2494 = vand.u32 2147483647, %v2110
        %v2495 = vand.u32 2147483647, %v2111
        %v2496 = vand.u32 2147483647, %v2112
        %v2497 = vand.u32 2147483647, %v2113
        %v2498 = vand.u32 2147483647, %v2114
        %v2499 = vand.u32 2147483647, %v2115
        %v2500 = vand.u32 2147483647, %v2116
        %v2501 = vand.u32 2147483647, %v2117
        %v2502 = vand.u32 2147483647, %v2118
        %v2503 = vand.u32 2147483647, %v2119
        %v2504 = vand.u32 2147483647, %v2120
        %v2505 = vand.u32 2147483647, %v2121
        %v2506 = vand.u32 2147483647, %v2122
        %v2507 = vand.u32 2147483647, %v2123
        %v2508 = vand.u32 2147483647, %v2124
        %v2509 = vand.u32 2147483647, %v2125
        %v2510 = vand.u32 2147483647, %v2126
        %v2511 = vand.u32 2147483647, %v2127
        %v2512 = vand.u32 2147483647, %v2128
        %v2513 = vand.u32 2147483647, %v2129
        %v2514 = vand.u32 2147483647, %v2130
        %v2515 = vand.u32 2147483647, %v2131
        %v2516 = vand.u32 2147483647, %v2132
        %v2517 = vand.u32 2147483647, %v2133
        %v2518 = vand.u32 2147483647, %v2134
        %v2519 = vand.u32 2147483647, %v2135
        %v2520 = vand.u32 2147483647, %v2136
        %v2521 = vand.u32 2147483647, %v2137
        %v2522 = vand.u32 2147483647, %v2138
        %v2523 = vand.u32 2147483647, %v2139
        %v2524 = vand.u32 2147483647, %v2140
        %v2525 = vand.u32 2147483647, %v2141
        %v2526 = vand.u32 2147483647, %v2142
        %v2527 = vand.u32 2147483647, %v2143
        %v2528 = vand.u32 2147483647, %v2144
        %v2529 = vand.u32 2147483647, %v2145
        %v2530 = vmul.f32 %v2402, 0.3275911
        %v2531 = vmul.f32 %v2403, 0.3275911
        %v2532 = vmul.f32 %v2404, 0.3275911
        %v2533 = vmul.f32 %v2405, 0.3275911
        %v2534 = vmul.f32 %v2406, 0.3275911
        %v2535 = vmul.f32 %v2407, 0.3275911
        %v2536 = vmul.f32 %v2408, 0.3275911
        %v2537 = vmul.f32 %v2409, 0.3275911
        %v2538 = vmul.f32 %v2410, 0.3275911
        %v2539 = vmul.f32 %v2411, 0.3275911
        %v2540 = vmul.f32 %v2412, 0.3275911
        %v2541 = vmul.f32 %v2413, 0.3275911
        %v2542 = vmul.f32 %v2414, 0.3275911
        %v2543 = vmul.f32 %v2415, 0.3275911
        %v2544 = vmul.f32 %v2416, 0.3275911
        %v2545 = vmul.f32 %v2417, 0.3275911
        %v2546 = vmul.f32 %v2418, 0.3275911
        %v2547 = vmul.f32 %v2419, 0.3275911
        %v2548 = vmul.f32 %v2420, 0.3275911
        %v2549 = vmul.f32 %v2421, 0.3275911
        %v2550 = vmul.f32 %v2422, 0.3275911
        %v2551 = vmul.f32 %v2423, 0.3275911
        %v2552 = vmul.f32 %v2424, 0.3275911
        %v2553 = vmul.f32 %v2425, 0.3275911
        %v2554 = vmul.f32 %v2426, 0.3275911
        %v2555 = vmul.f32 %v2427, 0.3275911
        %v2556 = vmul.f32 %v2428, 0.3275911
        %v2557 = vmul.f32 %v2429, 0.3275911
        %v2558 = vmul.f32 %v2430, 0.3275911
        %v2559 = vmul.f32 %v2431, 0.3275911
        %v2560 = vmul.f32 %v2432, 0.3275911
        %v2561 = vmul.f32 %v2433, 0.3275911
        %v2562 = vmul.f32 %v2434, 0.3275911
        %v2563 = vmul.f32 %v2435, 0.3275911
        %v2564 = vmul.f32 %v2436, 0.3275911
        %v2565 = vmul.f32 %v2437, 0.3275911
        %v2566 = vmul.f32 %v2438, 0.3275911
        %v2567 = vmul.f32 %v2439, 0.3275911
        %v2568 = vmul.f32 %v2440, 0.3275911
        %v2569 = vmul.f32 %v2441, 0.3275911
        %v2570 = vmul.f32 %v2442, 0.3275911
        %v2571 = vmul.f32 %v2443, 0.3275911
        %v2572 = vmul.f32 %v2444, 0.3275911
        %v2573 = vmul.f32 %v2445, 0.3275911
        %v2574 = vmul.f32 %v2446, 0.3275911
        %v2575 = vmul.f32 %v2447, 0.3275911
        %v2576 = vmul.f32 %v2448, 0.3275911
        %v2577 = vmul.f32 %v2449, 0.3275911
        %v2578 = vmul.f32 %v2450, 0.3275911
        %v2579 = vmul.f32 %v2451, 0.3275911
        %v2580 = vmul.f32 %v2452, 0.3275911
        %v2581 = vmul.f32 %v2453, 0.3275911
        %v2582 = vmul.f32 %v2454, 0.3275911
        %v2583 = vmul.f32 %v2455, 0.3275911
        %v2584 = vmul.f32 %v2456, 0.3275911
        %v2585 = vmul.f32 %v2457, 0.3275911
        %v2586 = vmul.f32 %v2458, 0.3275911
        %v2587 = vmul.f32 %v2459, 0.3275911
        %v2588 = vmul.f32 %v2460, 0.3275911
        %v2589 = vmul.f32 %v2461, 0.3275911
        %v2590 = vmul.f32 %v2462, 0.3275911
        %v2591 = vmul.f32 %v2463, 0.3275911
        %v2592 = vmul.f32 %v2464, 0.3275911
        %v2593 = vmul.f32 %v2465, 0.3275911
        %v2594 = vmul.f32 %v2466, 0.3275911
        %v2595 = vmul.f32 %v2467, 0.3275911
        %v2596 = vmul.f32 %v2468, 0.3275911
        %v2597 = vmul.f32 %v2469, 0.3275911
        %v2598 = vmul.f32 %v2470, 0.3275911
        %v2599 = vmul.f32 %v2471, 0.3275911
        %v2600 = vmul.f32 %v2472, 0.3275911
        %v2601 = vmul.f32 %v2473, 0.3275911
        %v2602 = vmul.f32 %v2474, 0.3275911
        %v2603 = vmul.f32 %v2475, 0.3275911
        %v2604 = vmul.f32 %v2476, 0.3275911
        %v2605 = vmul.f32 %v2477, 0.3275911
        %v2606 = vmul.f32 %v2478, 0.3275911
        %v2607 = vmul.f32 %v2479, 0.3275911
        %v2608 = vmul.f32 %v2480, 0.3275911
        %v2609 = vmul.f32 %v2481, 0.3275911
        %v2610 = vmul.f32 %v2482, 0.3275911
        %v2611 = vmul.f32 %v2483, 0.3275911
        %v2612 = vmul.f32 %v2484, 0.3275911
        %v2613 = vmul.f32 %v2485, 0.3275911
        %v2614 = vmul.f32 %v2486, 0.3275911
        %v2615 = vmul.f32 %v2487, 0.3275911
        %v2616 = vmul.f32 %v2488, 0.3275911
        %v2617 = vmul.f32 %v2489, 0.3275911
        %v2618 = vmul.f32 %v2490, 0.3275911
        %v2619 = vmul.f32 %v2491, 0.3275911
        %v2620 = vmul.f32 %v2492, 0.3275911
        %v2621 = vmul.f32 %v2493, 0.3275911
        %v2622 = vmul.f32 %v2494, 0.3275911
        %v2623 = vmul.f32 %v2495, 0.3275911
        %v2624 = vmul.f32 %v2496, 0.3275911
        %v2625 = vmul.f32 %v2497, 0.3275911
        %v2626 = vmul.f32 %v2498, 0.3275911
        %v2627 = vmul.f32 %v2499, 0.3275911
        %v2628 = vmul.f32 %v2500, 0.3275911
        %v2629 = vmul.f32 %v2501, 0.3275911
        %v2630 = vmul.f32 %v2502, 0.3275911
        %v2631 = vmul.f32 %v2503, 0.3275911
        %v2632 = vmul.f32 %v2504, 0.3275911
        %v2633 = vmul.f32 %v2505, 0.3275911
        %v2634 = vmul.f32 %v2506, 0.3275911
        %v2635 = vmul.f32 %v2507, 0.3275911
        %v2636 = vmul.f32 %v2508, 0.3275911
        %v2637 = vmul.f32 %v2509, 0.3275911
        %v2638 = vmul.f32 %v2510, 0.3275911
        %v2639 = vmul.f32 %v2511, 0.3275911
        %v2640 = vmul.f32 %v2512, 0.3275911
        %v2641 = vmul.f32 %v2513, 0.3275911
        %v2642 = vmul.f32 %v2514, 0.3275911
        %v2643 = vmul.f32 %v2515, 0.3275911
        %v2644 = vmul.f32 %v2516, 0.3275911
        %v2645 = vmul.f32 %v2517, 0.3275911
        %v2646 = vmul.f32 %v2518, 0.3275911
        %v2647 = vmul.f32 %v2519, 0.3275911
        %v2648 = vmul.f32 %v2520, 0.3275911
        %v2649 = vmul.f32 %v2521, 0.3275911
        %v2650 = vmul.f32 %v2522, 0.3275911
        %v2651 = vmul.f32 %v2523, 0.3275911
        %v2652 = vmul.f32 %v2524, 0.3275911
        %v2653 = vmul.f32 %v2525, 0.3275911
        %v2654 = vmul.f32 %v2526, 0.3275911
        %v2655 = vmul.f32 %v2527, 0.3275911
        %v2656 = vmul.f32 %v2528, 0.3275911
        %v2657 = vmul.f32 %v2529, 0.3275911
        %v2658 = vadd.f32 %v2530, 1.0
        %v2659 = vadd.f32 %v2531, 1.0
        %v2660 = vadd.f32 %v2532, 1.0
        %v2661 = vadd.f32 %v2533, 1.0
        %v2662 = vadd.f32 %v2534, 1.0
        %v2663 = vadd.f32 %v2535, 1.0
        %v2664 = vadd.f32 %v2536, 1.0
        %v2665 = vadd.f32 %v2537, 1.0
        %v2666 = vadd.f32 %v2538, 1.0
        %v2667 = vadd.f32 %v2539, 1.0
        %v2668 = vadd.f32 %v2540, 1.0
        %v2669 = vadd.f32 %v2541, 1.0
        %v2670 = vadd.f32 %v2542, 1.0
        %v2671 = vadd.f32 %v2543, 1.0
        %v2672 = vadd.f32 %v2544, 1.0
        %v2673 = vadd.f32 %v2545, 1.0
        %v2674 = vadd.f32 %v2546, 1.0
        %v2675 = vadd.f32 %v2547, 1.0
        %v2676 = vadd.f32 %v2548, 1.0
        %v2677 = vadd.f32 %v2549, 1.0
        %v2678 = vadd.f32 %v2550, 1.0
        %v2679 = vadd.f32 %v2551, 1.0
        %v2680 = vadd.f32 %v2552, 1.0
        %v2681 = vadd.f32 %v2553, 1.0
        %v2682 = vadd.f32 %v2554, 1.0
        %v2683 = vadd.f32 %v2555, 1.0
        %v2684 = vadd.f32 %v2556, 1.0
        %v2685 = vadd.f32 %v2557, 1.0
        %v2686 = vadd.f32 %v2558, 1.0
        %v2687 = vadd.f32 %v2559, 1.0
        %v2688 = vadd.f32 %v2560, 1.0
        %v2689 = vadd.f32 %v2561, 1.0
        %v2690 = vadd.f32 %v2562, 1.0
        %v2691 = vadd.f32 %v2563, 1.0
        %v2692 = vadd.f32 %v2564, 1.0
        %v2693 = vadd.f32 %v2565, 1.0
        %v2694 = vadd.f32 %v2566, 1.0
        %v2695 = vadd.f32 %v2567, 1.0
        %v2696 = vadd.f32 %v2568, 1.0
        %v2697 = vadd.f32 %v2569, 1.0
        %v2698 = vadd.f32 %v2570, 1.0
        %v2699 = vadd.f32 %v2571, 1.0
        %v2700 = vadd.f32 %v2572, 1.0
        %v2701 = vadd.f32 %v2573, 1.0
        %v2702 = vadd.f32 %v2574, 1.0
        %v2703 = vadd.f32 %v2575, 1.0
        %v2704 = vadd.f32 %v2576, 1.0
        %v2705 = vadd.f32 %v2577, 1.0
        %v2706 = vadd.f32 %v2578, 1.0
        %v2707 = vadd.f32 %v2579, 1.0
        %v2708 = vadd.f32 %v2580, 1.0
        %v2709 = vadd.f32 %v2581, 1.0
        %v2710 = vadd.f32 %v2582, 1.0
        %v2711 = vadd.f32 %v2583, 1.0
        %v2712 = vadd.f32 %v2584, 1.0
        %v2713 = vadd.f32 %v2585, 1.0
        %v2714 = vadd.f32 %v2586, 1.0
        %v2715 = vadd.f32 %v2587, 1.0
        %v2716 = vadd.f32 %v2588, 1.0
        %v2717 = vadd.f32 %v2589, 1.0
        %v2718 = vadd.f32 %v2590, 1.0
        %v2719 = vadd.f32 %v2591, 1.0
        %v2720 = vadd.f32 %v2592, 1.0
        %v2721 = vadd.f32 %v2593, 1.0
        %v2722 = vadd.f32 %v2594, 1.0
        %v2723 = vadd.f32 %v2595, 1.0
        %v2724 = vadd.f32 %v2596, 1.0
        %v2725 = vadd.f32 %v2597, 1.0
        %v2726 = vadd.f32 %v2598, 1.0
        %v2727 = vadd.f32 %v2599, 1.0
        %v2728 = vadd.f32 %v2600, 1.0
        %v2729 = vadd.f32 %v2601, 1.0
        %v2730 = vadd.f32 %v2602, 1.0
        %v2731 = vadd.f32 %v2603, 1.0
        %v2732 = vadd.f32 %v2604, 1.0
        %v2733 = vadd.f32 %v2605, 1.0
        %v2734 = vadd.f32 %v2606, 1.0
        %v2735 = vadd.f32 %v2607, 1.0
        %v2736 = vadd.f32 %v2608, 1.0
        %v2737 = vadd.f32 %v2609, 1.0
        %v2738 = vadd.f32 %v2610, 1.0
        %v2739 = vadd.f32 %v2611, 1.0
        %v2740 = vadd.f32 %v2612, 1.0
        %v2741 = vadd.f32 %v2613, 1.0
        %v2742 = vadd.f32 %v2614, 1.0
        %v2743 = vadd.f32 %v2615, 1.0
        %v2744 = vadd.f32 %v2616, 1.0
        %v2745 = vadd.f32 %v2617, 1.0
        %v2746 = vadd.f32 %v2618, 1.0
        %v2747 = vadd.f32 %v2619, 1.0
        %v2748 = vadd.f32 %v2620, 1.0
        %v2749 = vadd.f32 %v2621, 1.0
        %v2750 = vadd.f32 %v2622, 1.0
        %v2751 = vadd.f32 %v2623, 1.0
        %v2752 = vadd.f32 %v2624, 1.0
        %v2753 = vadd.f32 %v2625, 1.0
        %v2754 = vadd.f32 %v2626, 1.0
        %v2755 = vadd.f32 %v2627, 1.0
        %v2756 = vadd.f32 %v2628, 1.0
        %v2757 = vadd.f32 %v2629, 1.0
        %v2758 = vadd.f32 %v2630, 1.0
        %v2759 = vadd.f32 %v2631, 1.0
        %v2760 = vadd.f32 %v2632, 1.0
        %v2761 = vadd.f32 %v2633, 1.0
        %v2762 = vadd.f32 %v2634, 1.0
        %v2763 = vadd.f32 %v2635, 1.0
        %v2764 = vadd.f32 %v2636, 1.0
        %v2765 = vadd.f32 %v2637, 1.0
        %v2766 = vadd.f32 %v2638, 1.0
        %v2767 = vadd.f32 %v2639, 1.0
        %v2768 = vadd.f32 %v2640, 1.0
        %v2769 = vadd.f32 %v2641, 1.0
        %v2770 = vadd.f32 %v2642, 1.0
        %v2771 = vadd.f32 %v2643, 1.0
        %v2772 = vadd.f32 %v2644, 1.0
        %v2773 = vadd.f32 %v2645, 1.0
        %v2774 = vadd.f32 %v2646, 1.0
        %v2775 = vadd.f32 %v2647, 1.0
        %v2776 = vadd.f32 %v2648, 1.0
        %v2777 = vadd.f32 %v2649, 1.0
        %v2778 = vadd.f32 %v2650, 1.0
        %v2779 = vadd.f32 %v2651, 1.0
        %v2780 = vadd.f32 %v2652, 1.0
        %v2781 = vadd.f32 %v2653, 1.0
        %v2782 = vadd.f32 %v2654, 1.0
        %v2783 = vadd.f32 %v2655, 1.0
        %v2784 = vadd.f32 %v2656, 1.0
        %v2785 = vadd.f32 %v2657, 1.0
        %v2786 = vrcp.pop %v2658
        %v2787 = vmul.f32 1.0, %v2786
        %v2788 = vrcp.pop %v2659
        %v2789 = vmul.f32 1.0, %v2788
        %v2790 = vrcp.pop %v2660
        %v2791 = vmul.f32 1.0, %v2790
        %v2792 = vrcp.pop %v2661
        %v2793 = vmul.f32 1.0, %v2792
        %v2794 = vrcp.pop %v2662
        %v2795 = vmul.f32 1.0, %v2794
        %v2796 = vrcp.pop %v2663
        %v2797 = vmul.f32 1.0, %v2796
        %v2798 = vrcp.pop %v2664
        %v2799 = vmul.f32 1.0, %v2798
        %v2800 = vrcp.pop %v2665
        %v2801 = vmul.f32 1.0, %v2800
        %v2802 = vrcp.pop %v2666
        %v2803 = vmul.f32 1.0, %v2802
        %v2804 = vrcp.pop %v2667
        %v2805 = vmul.f32 1.0, %v2804
        %v2806 = vrcp.pop %v2668
        %v2807 = vmul.f32 1.0, %v2806
        %v2808 = vrcp.pop %v2669
        %v2809 = vmul.f32 1.0, %v2808
        %v2810 = vrcp.pop %v2670
        %v2811 = vmul.f32 1.0, %v2810
        %v2812 = vrcp.pop %v2671
        %v2813 = vmul.f32 1.0, %v2812
        %v2814 = vrcp.pop %v2672
        %v2815 = vmul.f32 1.0, %v2814
        %v2816 = vrcp.pop %v2673
        %v2817 = vmul.f32 1.0, %v2816
        %v2818 = vrcp.pop %v2674
        %v2819 = vmul.f32 1.0, %v2818
        %v2820 = vrcp.pop %v2675
        %v2821 = vmul.f32 1.0, %v2820
        %v2822 = vrcp.pop %v2676
        %v2823 = vmul.f32 1.0, %v2822
        %v2824 = vrcp.pop %v2677
        %v2825 = vmul.f32 1.0, %v2824
        %v2826 = vrcp.pop %v2678
        %v2827 = vmul.f32 1.0, %v2826
        %v2828 = vrcp.pop %v2679
        %v2829 = vmul.f32 1.0, %v2828
        %v2830 = vrcp.pop %v2680
        %v2831 = vmul.f32 1.0, %v2830
        %v2832 = vrcp.pop %v2681
        %v2833 = vmul.f32 1.0, %v2832
        %v2834 = vrcp.pop %v2682
        %v2835 = vmul.f32 1.0, %v2834
        %v2836 = vrcp.pop %v2683
        %v2837 = vmul.f32 1.0, %v2836
        %v2838 = vrcp.pop %v2684
        %v2839 = vmul.f32 1.0, %v2838
        %v2840 = vrcp.pop %v2685
        %v2841 = vmul.f32 1.0, %v2840
        %v2842 = vrcp.pop %v2686
        %v2843 = vmul.f32 1.0, %v2842
        %v2844 = vrcp.pop %v2687
        %v2845 = vmul.f32 1.0, %v2844
        %v2846 = vrcp.pop %v2688
        %v2847 = vmul.f32 1.0, %v2846
        %v2848 = vrcp.pop %v2689
        %v2849 = vmul.f32 1.0, %v2848
        %v2850 = vrcp.pop %v2690
        %v2851 = vmul.f32 1.0, %v2850
        %v2852 = vrcp.pop %v2691
        %v2853 = vmul.f32 1.0, %v2852
        %v2854 = vrcp.pop %v2692
        %v2855 = vmul.f32 1.0, %v2854
        %v2856 = vrcp.pop %v2693
        %v2857 = vmul.f32 1.0, %v2856
        %v2858 = vrcp.pop %v2694
        %v2859 = vmul.f32 1.0, %v2858
        %v2860 = vrcp.pop %v2695
        %v2861 = vmul.f32 1.0, %v2860
        %v2862 = vrcp.pop %v2696
        %v2863 = vmul.f32 1.0, %v2862
        %v2864 = vrcp.pop %v2697
        %v2865 = vmul.f32 1.0, %v2864
        %v2866 = vrcp.pop %v2698
        %v2867 = vmul.f32 1.0, %v2866
        %v2868 = vrcp.pop %v2699
        %v2869 = vmul.f32 1.0, %v2868
        %v2870 = vrcp.pop %v2700
        %v2871 = vmul.f32 1.0, %v2870
        %v2872 = vrcp.pop %v2701
        %v2873 = vmul.f32 1.0, %v2872
        %v2874 = vrcp.pop %v2702
        %v2875 = vmul.f32 1.0, %v2874
        %v2876 = vrcp.pop %v2703
        %v2877 = vmul.f32 1.0, %v2876
        %v2878 = vrcp.pop %v2704
        %v2879 = vmul.f32 1.0, %v2878
        %v2880 = vrcp.pop %v2705
        %v2881 = vmul.f32 1.0, %v2880
        %v2882 = vrcp.pop %v2706
        %v2883 = vmul.f32 1.0, %v2882
        %v2884 = vrcp.pop %v2707
        %v2885 = vmul.f32 1.0, %v2884
        %v2886 = vrcp.pop %v2708
        %v2887 = vmul.f32 1.0, %v2886
        %v2888 = vrcp.pop %v2709
        %v2889 = vmul.f32 1.0, %v2888
        %v2890 = vrcp.pop %v2710
        %v2891 = vmul.f32 1.0, %v2890
        %v2892 = vrcp.pop %v2711
        %v2893 = vmul.f32 1.0, %v2892
        %v2894 = vrcp.pop %v2712
        %v2895 = vmul.f32 1.0, %v2894
        %v2896 = vrcp.pop %v2713
        %v2897 = vmul.f32 1.0, %v2896
        %v2898 = vrcp.pop %v2714
        %v2899 = vmul.f32 1.0, %v2898
        %v2900 = vrcp.pop %v2715
        %v2901 = vmul.f32 1.0, %v2900
        %v2902 = vrcp.pop %v2716
        %v2903 = vmul.f32 1.0, %v2902
        %v2904 = vrcp.pop %v2717
        %v2905 = vmul.f32 1.0, %v2904
        %v2906 = vrcp.pop %v2718
        %v2907 = vmul.f32 1.0, %v2906
        %v2908 = vrcp.pop %v2719
        %v2909 = vmul.f32 1.0, %v2908
        %v2910 = vrcp.pop %v2720
        %v2911 = vmul.f32 1.0, %v2910
        %v2912 = vrcp.pop %v2721
        %v2913 = vmul.f32 1.0, %v2912
        %v2914 = vrcp.pop %v2722
        %v2915 = vmul.f32 1.0, %v2914
        %v2916 = vrcp.pop %v2723
        %v2917 = vmul.f32 1.0, %v2916
        %v2918 = vrcp.pop %v2724
        %v2919 = vmul.f32 1.0, %v2918
        %v2920 = vrcp.pop %v2725
        %v2921 = vmul.f32 1.0, %v2920
        %v2922 = vrcp.pop %v2726
        %v2923 = vmul.f32 1.0, %v2922
        %v2924 = vrcp.pop %v2727
        %v2925 = vmul.f32 1.0, %v2924
        %v2926 = vrcp.pop %v2728
        %v2927 = vmul.f32 1.0, %v2926
        %v2928 = vrcp.pop %v2729
        %v2929 = vmul.f32 1.0, %v2928
        %v2930 = vrcp.pop %v2730
        %v2931 = vmul.f32 1.0, %v2930
        %v2932 = vrcp.pop %v2731
        %v2933 = vmul.f32 1.0, %v2932
        %v2934 = vrcp.pop %v2732
        %v2935 = vmul.f32 1.0, %v2934
        %v2936 = vrcp.pop %v2733
        %v2937 = vmul.f32 1.0, %v2936
        %v2938 = vrcp.pop %v2734
        %v2939 = vmul.f32 1.0, %v2938
        %v2940 = vrcp.pop %v2735
        %v2941 = vmul.f32 1.0, %v2940
        %v2942 = vrcp.pop %v2736
        %v2943 = vmul.f32 1.0, %v2942
        %v2944 = vrcp.pop %v2737
        %v2945 = vmul.f32 1.0, %v2944
        %v2946 = vrcp.pop %v2738
        %v2947 = vmul.f32 1.0, %v2946
        %v2948 = vrcp.pop %v2739
        %v2949 = vmul.f32 1.0, %v2948
        %v2950 = vrcp.pop %v2740
        %v2951 = vmul.f32 1.0, %v2950
        %v2952 = vrcp.pop %v2741
        %v2953 = vmul.f32 1.0, %v2952
        %v2954 = vrcp.pop %v2742
        %v2955 = vmul.f32 1.0, %v2954
        %v2956 = vrcp.pop %v2743
        %v2957 = vmul.f32 1.0, %v2956
        %v2958 = vrcp.pop %v2744
        %v2959 = vmul.f32 1.0, %v2958
        %v2960 = vrcp.pop %v2745
        %v2961 = vmul.f32 1.0, %v2960
        %v2962 = vrcp.pop %v2746
        %v2963 = vmul.f32 1.0, %v2962
        %v2964 = vrcp.pop %v2747
        %v2965 = vmul.f32 1.0, %v2964
        %v2966 = vrcp.pop %v2748
        %v2967 = vmul.f32 1.0, %v2966
        %v2968 = vrcp.pop %v2749
        %v2969 = vmul.f32 1.0, %v2968
        %v2970 = vrcp.pop %v2750
        %v2971 = vmul.f32 1.0, %v2970
        %v2972 = vrcp.pop %v2751
        %v2973 = vmul.f32 1.0, %v2972
        %v2974 = vrcp.pop %v2752
        %v2975 = vmul.f32 1.0, %v2974
        %v2976 = vrcp.pop %v2753
        %v2977 = vmul.f32 1.0, %v2976
        %v2978 = vrcp.pop %v2754
        %v2979 = vmul.f32 1.0, %v2978
        %v2980 = vrcp.pop %v2755
        %v2981 = vmul.f32 1.0, %v2980
        %v2982 = vrcp.pop %v2756
        %v2983 = vmul.f32 1.0, %v2982
        %v2984 = vrcp.pop %v2757
        %v2985 = vmul.f32 1.0, %v2984
        %v2986 = vrcp.pop %v2758
        %v2987 = vmul.f32 1.0, %v2986
        %v2988 = vrcp.pop %v2759
        %v2989 = vmul.f32 1.0, %v2988
        %v2990 = vrcp.pop %v2760
        %v2991 = vmul.f32 1.0, %v2990
        %v2992 = vrcp.pop %v2761
        %v2993 = vmul.f32 1.0, %v2992
        %v2994 = vrcp.pop %v2762
        %v2995 = vmul.f32 1.0, %v2994
        %v2996 = vrcp.pop %v2763
        %v2997 = vmul.f32 1.0, %v2996
        %v2998 = vrcp.pop %v2764
        %v2999 = vmul.f32 1.0, %v2998
        %v3000 = vrcp.pop %v2765
        %v3001 = vmul.f32 1.0, %v3000
        %v3002 = vrcp.pop %v2766
        %v3003 = vmul.f32 1.0, %v3002
        %v3004 = vrcp.pop %v2767
        %v3005 = vmul.f32 1.0, %v3004
        %v3006 = vrcp.pop %v2768
        %v3007 = vmul.f32 1.0, %v3006
        %v3008 = vrcp.pop %v2769
        %v3009 = vmul.f32 1.0, %v3008
        %v3010 = vrcp.pop %v2770
        %v3011 = vmul.f32 1.0, %v3010
        %v3012 = vrcp.pop %v2771
        %v3013 = vmul.f32 1.0, %v3012
        %v3014 = vrcp.pop %v2772
        %v3015 = vmul.f32 1.0, %v3014
        %v3016 = vrcp.pop %v2773
        %v3017 = vmul.f32 1.0, %v3016
        %v3018 = vrcp.pop %v2774
        %v3019 = vmul.f32 1.0, %v3018
        %v3020 = vrcp.pop %v2775
        %v3021 = vmul.f32 1.0, %v3020
        %v3022 = vrcp.pop %v2776
        %v3023 = vmul.f32 1.0, %v3022
        %v3024 = vrcp.pop %v2777
        %v3025 = vmul.f32 1.0, %v3024
        %v3026 = vrcp.pop %v2778
        %v3027 = vmul.f32 1.0, %v3026
        %v3028 = vrcp.pop %v2779
        %v3029 = vmul.f32 1.0, %v3028
        %v3030 = vrcp.pop %v2780
        %v3031 = vmul.f32 1.0, %v3030
        %v3032 = vrcp.pop %v2781
        %v3033 = vmul.f32 1.0, %v3032
        %v3034 = vrcp.pop %v2782
        %v3035 = vmul.f32 1.0, %v3034
        %v3036 = vrcp.pop %v2783
        %v3037 = vmul.f32 1.0, %v3036
        %v3038 = vrcp.pop %v2784
        %v3039 = vmul.f32 1.0, %v3038
        %v3040 = vrcp.pop %v2785
        %v3041 = vmul.f32 1.0, %v3040
        %v3042 = vmul.f32 %v2787, 1.0614054
        %v3043 = vmul.f32 %v2789, 1.0614054
        %v3044 = vmul.f32 %v2791, 1.0614054
        %v3045 = vmul.f32 %v2793, 1.0614054
        %v3046 = vmul.f32 %v2795, 1.0614054
        %v3047 = vmul.f32 %v2797, 1.0614054
        %v3048 = vmul.f32 %v2799, 1.0614054
        %v3049 = vmul.f32 %v2801, 1.0614054
        %v3050 = vmul.f32 %v2803, 1.0614054
        %v3051 = vmul.f32 %v2805, 1.0614054
        %v3052 = vmul.f32 %v2807, 1.0614054
        %v3053 = vmul.f32 %v2809, 1.0614054
        %v3054 = vmul.f32 %v2811, 1.0614054
        %v3055 = vmul.f32 %v2813, 1.0614054
        %v3056 = vmul.f32 %v2815, 1.0614054
        %v3057 = vmul.f32 %v2817, 1.0614054
        %v3058 = vmul.f32 %v2819, 1.0614054
        %v3059 = vmul.f32 %v2821, 1.0614054
        %v3060 = vmul.f32 %v2823, 1.0614054
        %v3061 = vmul.f32 %v2825, 1.0614054
        %v3062 = vmul.f32 %v2827, 1.0614054
        %v3063 = vmul.f32 %v2829, 1.0614054
        %v3064 = vmul.f32 %v2831, 1.0614054
        %v3065 = vmul.f32 %v2833, 1.0614054
        %v3066 = vmul.f32 %v2835, 1.0614054
        %v3067 = vmul.f32 %v2837, 1.0614054
        %v3068 = vmul.f32 %v2839, 1.0614054
        %v3069 = vmul.f32 %v2841, 1.0614054
        %v3070 = vmul.f32 %v2843, 1.0614054
        %v3071 = vmul.f32 %v2845, 1.0614054
        %v3072 = vmul.f32 %v2847, 1.0614054
        %v3073 = vmul.f32 %v2849, 1.0614054
        %v3074 = vmul.f32 %v2851, 1.0614054
        %v3075 = vmul.f32 %v2853, 1.0614054
        %v3076 = vmul.f32 %v2855, 1.0614054
        %v3077 = vmul.f32 %v2857, 1.0614054
        %v3078 = vmul.f32 %v2859, 1.0614054
        %v3079 = vmul.f32 %v2861, 1.0614054
        %v3080 = vmul.f32 %v2863, 1.0614054
        %v3081 = vmul.f32 %v2865, 1.0614054
        %v3082 = vmul.f32 %v2867, 1.0614054
        %v3083 = vmul.f32 %v2869, 1.0614054
        %v3084 = vmul.f32 %v2871, 1.0614054
        %v3085 = vmul.f32 %v2873, 1.0614054
        %v3086 = vmul.f32 %v2875, 1.0614054
        %v3087 = vmul.f32 %v2877, 1.0614054
        %v3088 = vmul.f32 %v2879, 1.0614054
        %v3089 = vmul.f32 %v2881, 1.0614054
        %v3090 = vmul.f32 %v2883, 1.0614054
        %v3091 = vmul.f32 %v2885, 1.0614054
        %v3092 = vmul.f32 %v2887, 1.0614054
        %v3093 = vmul.f32 %v2889, 1.0614054
        %v3094 = vmul.f32 %v2891, 1.0614054
        %v3095 = vmul.f32 %v2893, 1.0614054
        %v3096 = vmul.f32 %v2895, 1.0614054
        %v3097 = vmul.f32 %v2897, 1.0614054
        %v3098 = vmul.f32 %v2899, 1.0614054
        %v3099 = vmul.f32 %v2901, 1.0614054
        %v3100 = vmul.f32 %v2903, 1.0614054
        %v3101 = vmul.f32 %v2905, 1.0614054
        %v3102 = vmul.f32 %v2907, 1.0614054
        %v3103 = vmul.f32 %v2909, 1.0614054
        %v3104 = vmul.f32 %v2911, 1.0614054
        %v3105 = vmul.f32 %v2913, 1.0614054
        %v3106 = vmul.f32 %v2915, 1.0614054
        %v3107 = vmul.f32 %v2917, 1.0614054
        %v3108 = vmul.f32 %v2919, 1.0614054
        %v3109 = vmul.f32 %v2921, 1.0614054
        %v3110 = vmul.f32 %v2923, 1.0614054
        %v3111 = vmul.f32 %v2925, 1.0614054
        %v3112 = vmul.f32 %v2927, 1.0614054
        %v3113 = vmul.f32 %v2929, 1.0614054
        %v3114 = vmul.f32 %v2931, 1.0614054
        %v3115 = vmul.f32 %v2933, 1.0614054
        %v3116 = vmul.f32 %v2935, 1.0614054
        %v3117 = vmul.f32 %v2937, 1.0614054
        %v3118 = vmul.f32 %v2939, 1.0614054
        %v3119 = vmul.f32 %v2941, 1.0614054
        %v3120 = vmul.f32 %v2943, 1.0614054
        %v3121 = vmul.f32 %v2945, 1.0614054
        %v3122 = vmul.f32 %v2947, 1.0614054
        %v3123 = vmul.f32 %v2949, 1.0614054
        %v3124 = vmul.f32 %v2951, 1.0614054
        %v3125 = vmul.f32 %v2953, 1.0614054
        %v3126 = vmul.f32 %v2955, 1.0614054
        %v3127 = vmul.f32 %v2957, 1.0614054
        %v3128 = vmul.f32 %v2959, 1.0614054
        %v3129 = vmul.f32 %v2961, 1.0614054
        %v3130 = vmul.f32 %v2963, 1.0614054
        %v3131 = vmul.f32 %v2965, 1.0614054
        %v3132 = vmul.f32 %v2967, 1.0614054
        %v3133 = vmul.f32 %v2969, 1.0614054
        %v3134 = vmul.f32 %v2971, 1.0614054
        %v3135 = vmul.f32 %v2973, 1.0614054
        %v3136 = vmul.f32 %v2975, 1.0614054
        %v3137 = vmul.f32 %v2977, 1.0614054
        %v3138 = vmul.f32 %v2979, 1.0614054
        %v3139 = vmul.f32 %v2981, 1.0614054
        %v3140 = vmul.f32 %v2983, 1.0614054
        %v3141 = vmul.f32 %v2985, 1.0614054
        %v3142 = vmul.f32 %v2987, 1.0614054
        %v3143 = vmul.f32 %v2989, 1.0614054
        %v3144 = vmul.f32 %v2991, 1.0614054
        %v3145 = vmul.f32 %v2993, 1.0614054
        %v3146 = vmul.f32 %v2995, 1.0614054
        %v3147 = vmul.f32 %v2997, 1.0614054
        %v3148 = vmul.f32 %v2999, 1.0614054
        %v3149 = vmul.f32 %v3001, 1.0614054
        %v3150 = vmul.f32 %v3003, 1.0614054
        %v3151 = vmul.f32 %v3005, 1.0614054
        %v3152 = vmul.f32 %v3007, 1.0614054
        %v3153 = vmul.f32 %v3009, 1.0614054
        %v3154 = vmul.f32 %v3011, 1.0614054
        %v3155 = vmul.f32 %v3013, 1.0614054
        %v3156 = vmul.f32 %v3015, 1.0614054
        %v3157 = vmul.f32 %v3017, 1.0614054
        %v3158 = vmul.f32 %v3019, 1.0614054
        %v3159 = vmul.f32 %v3021, 1.0614054
        %v3160 = vmul.f32 %v3023, 1.0614054
        %v3161 = vmul.f32 %v3025, 1.0614054
        %v3162 = vmul.f32 %v3027, 1.0614054
        %v3163 = vmul.f32 %v3029, 1.0614054
        %v3164 = vmul.f32 %v3031, 1.0614054
        %v3165 = vmul.f32 %v3033, 1.0614054
        %v3166 = vmul.f32 %v3035, 1.0614054
        %v3167 = vmul.f32 %v3037, 1.0614054
        %v3168 = vmul.f32 %v3039, 1.0614054
        %v3169 = vmul.f32 %v3041, 1.0614054
        %v3170 = vadd.f32 %v3042, -1.4531521
        %v3171 = vadd.f32 %v3043, -1.4531521
        %v3172 = vadd.f32 %v3044, -1.4531521
        %v3173 = vadd.f32 %v3045, -1.4531521
        %v3174 = vadd.f32 %v3046, -1.4531521
        %v3175 = vadd.f32 %v3047, -1.4531521
        %v3176 = vadd.f32 %v3048, -1.4531521
        %v3177 = vadd.f32 %v3049, -1.4531521
        %v3178 = vadd.f32 %v3050, -1.4531521
        %v3179 = vadd.f32 %v3051, -1.4531521
        %v3180 = vadd.f32 %v3052, -1.4531521
        %v3181 = vadd.f32 %v3053, -1.4531521
        %v3182 = vadd.f32 %v3054, -1.4531521
        %v3183 = vadd.f32 %v3055, -1.4531521
        %v3184 = vadd.f32 %v3056, -1.4531521
        %v3185 = vadd.f32 %v3057, -1.4531521
        %v3186 = vadd.f32 %v3058, -1.4531521
        %v3187 = vadd.f32 %v3059, -1.4531521
        %v3188 = vadd.f32 %v3060, -1.4531521
        %v3189 = vadd.f32 %v3061, -1.4531521
        %v3190 = vadd.f32 %v3062, -1.4531521
        %v3191 = vadd.f32 %v3063, -1.4531521
        %v3192 = vadd.f32 %v3064, -1.4531521
        %v3193 = vadd.f32 %v3065, -1.4531521
        %v3194 = vadd.f32 %v3066, -1.4531521
        %v3195 = vadd.f32 %v3067, -1.4531521
        %v3196 = vadd.f32 %v3068, -1.4531521
        %v3197 = vadd.f32 %v3069, -1.4531521
        %v3198 = vadd.f32 %v3070, -1.4531521
        %v3199 = vadd.f32 %v3071, -1.4531521
        %v3200 = vadd.f32 %v3072, -1.4531521
        %v3201 = vadd.f32 %v3073, -1.4531521
        %v3202 = vadd.f32 %v3074, -1.4531521
        %v3203 = vadd.f32 %v3075, -1.4531521
        %v3204 = vadd.f32 %v3076, -1.4531521
        %v3205 = vadd.f32 %v3077, -1.4531521
        %v3206 = vadd.f32 %v3078, -1.4531521
        %v3207 = vadd.f32 %v3079, -1.4531521
        %v3208 = vadd.f32 %v3080, -1.4531521
        %v3209 = vadd.f32 %v3081, -1.4531521
        %v3210 = vadd.f32 %v3082, -1.4531521
        %v3211 = vadd.f32 %v3083, -1.4531521
        %v3212 = vadd.f32 %v3084, -1.4531521
        %v3213 = vadd.f32 %v3085, -1.4531521
        %v3214 = vadd.f32 %v3086, -1.4531521
        %v3215 = vadd.f32 %v3087, -1.4531521
        %v3216 = vadd.f32 %v3088, -1.4531521
        %v3217 = vadd.f32 %v3089, -1.4531521
        %v3218 = vadd.f32 %v3090, -1.4531521
        %v3219 = vadd.f32 %v3091, -1.4531521
        %v3220 = vadd.f32 %v3092, -1.4531521
        %v3221 = vadd.f32 %v3093, -1.4531521
        %v3222 = vadd.f32 %v3094, -1.4531521
        %v3223 = vadd.f32 %v3095, -1.4531521
        %v3224 = vadd.f32 %v3096, -1.4531521
        %v3225 = vadd.f32 %v3097, -1.4531521
        %v3226 = vadd.f32 %v3098, -1.4531521
        %v3227 = vadd.f32 %v3099, -1.4531521
        %v3228 = vadd.f32 %v3100, -1.4531521
        %v3229 = vadd.f32 %v3101, -1.4531521
        %v3230 = vadd.f32 %v3102, -1.4531521
        %v3231 = vadd.f32 %v3103, -1.4531521
        %v3232 = vadd.f32 %v3104, -1.4531521
        %v3233 = vadd.f32 %v3105, -1.4531521
        %v3234 = vadd.f32 %v3106, -1.4531521
        %v3235 = vadd.f32 %v3107, -1.4531521
        %v3236 = vadd.f32 %v3108, -1.4531521
        %v3237 = vadd.f32 %v3109, -1.4531521
        %v3238 = vadd.f32 %v3110, -1.4531521
        %v3239 = vadd.f32 %v3111, -1.4531521
        %v3240 = vadd.f32 %v3112, -1.4531521
        %v3241 = vadd.f32 %v3113, -1.4531521
        %v3242 = vadd.f32 %v3114, -1.4531521
        %v3243 = vadd.f32 %v3115, -1.4531521
        %v3244 = vadd.f32 %v3116, -1.4531521
        %v3245 = vadd.f32 %v3117, -1.4531521
        %v3246 = vadd.f32 %v3118, -1.4531521
        %v3247 = vadd.f32 %v3119, -1.4531521
        %v3248 = vadd.f32 %v3120, -1.4531521
        %v3249 = vadd.f32 %v3121, -1.4531521
        %v3250 = vadd.f32 %v3122, -1.4531521
        %v3251 = vadd.f32 %v3123, -1.4531521
        %v3252 = vadd.f32 %v3124, -1.4531521
        %v3253 = vadd.f32 %v3125, -1.4531521
        %v3254 = vadd.f32 %v3126, -1.4531521
        %v3255 = vadd.f32 %v3127, -1.4531521
        %v3256 = vadd.f32 %v3128, -1.4531521
        %v3257 = vadd.f32 %v3129, -1.4531521
        %v3258 = vadd.f32 %v3130, -1.4531521
        %v3259 = vadd.f32 %v3131, -1.4531521
        %v3260 = vadd.f32 %v3132, -1.4531521
        %v3261 = vadd.f32 %v3133, -1.4531521
        %v3262 = vadd.f32 %v3134, -1.4531521
        %v3263 = vadd.f32 %v3135, -1.4531521
        %v3264 = vadd.f32 %v3136, -1.4531521
        %v3265 = vadd.f32 %v3137, -1.4531521
        %v3266 = vadd.f32 %v3138, -1.4531521
        %v3267 = vadd.f32 %v3139, -1.4531521
        %v3268 = vadd.f32 %v3140, -1.4531521
        %v3269 = vadd.f32 %v3141, -1.4531521
        %v3270 = vadd.f32 %v3142, -1.4531521
        %v3271 = vadd.f32 %v3143, -1.4531521
        %v3272 = vadd.f32 %v3144, -1.4531521
        %v3273 = vadd.f32 %v3145, -1.4531521
        %v3274 = vadd.f32 %v3146, -1.4531521
        %v3275 = vadd.f32 %v3147, -1.4531521
        %v3276 = vadd.f32 %v3148, -1.4531521
        %v3277 = vadd.f32 %v3149, -1.4531521
        %v3278 = vadd.f32 %v3150, -1.4531521
        %v3279 = vadd.f32 %v3151, -1.4531521
        %v3280 = vadd.f32 %v3152, -1.4531521
        %v3281 = vadd.f32 %v3153, -1.4531521
        %v3282 = vadd.f32 %v3154, -1.4531521
        %v3283 = vadd.f32 %v3155, -1.4531521
        %v3284 = vadd.f32 %v3156, -1.4531521
        %v3285 = vadd.f32 %v3157, -1.4531521
        %v3286 = vadd.f32 %v3158, -1.4531521
        %v3287 = vadd.f32 %v3159, -1.4531521
        %v3288 = vadd.f32 %v3160, -1.4531521
        %v3289 = vadd.f32 %v3161, -1.4531521
        %v3290 = vadd.f32 %v3162, -1.4531521
        %v3291 = vadd.f32 %v3163, -1.4531521
        %v3292 = vadd.f32 %v3164, -1.4531521
        %v3293 = vadd.f32 %v3165, -1.4531521
        %v3294 = vadd.f32 %v3166, -1.4531521
        %v3295 = vadd.f32 %v3167, -1.4531521
        %v3296 = vadd.f32 %v3168, -1.4531521
        %v3297 = vadd.f32 %v3169, -1.4531521
        %v3298 = vmul.f32 %v2787, %v3170
        %v3299 = vmul.f32 %v2789, %v3171
        %v3300 = vmul.f32 %v2791, %v3172
        %v3301 = vmul.f32 %v2793, %v3173
        %v3302 = vmul.f32 %v2795, %v3174
        %v3303 = vmul.f32 %v2797, %v3175
        %v3304 = vmul.f32 %v2799, %v3176
        %v3305 = vmul.f32 %v2801, %v3177
        %v3306 = vmul.f32 %v2803, %v3178
        %v3307 = vmul.f32 %v2805, %v3179
        %v3308 = vmul.f32 %v2807, %v3180
        %v3309 = vmul.f32 %v2809, %v3181
        %v3310 = vmul.f32 %v2811, %v3182
        %v3311 = vmul.f32 %v2813, %v3183
        %v3312 = vmul.f32 %v2815, %v3184
        %v3313 = vmul.f32 %v2817, %v3185
        %v3314 = vmul.f32 %v2819, %v3186
        %v3315 = vmul.f32 %v2821, %v3187
        %v3316 = vmul.f32 %v2823, %v3188
        %v3317 = vmul.f32 %v2825, %v3189
        %v3318 = vmul.f32 %v2827, %v3190
        %v3319 = vmul.f32 %v2829, %v3191
        %v3320 = vmul.f32 %v2831, %v3192
        %v3321 = vmul.f32 %v2833, %v3193
        %v3322 = vmul.f32 %v2835, %v3194
        %v3323 = vmul.f32 %v2837, %v3195
        %v3324 = vmul.f32 %v2839, %v3196
        %v3325 = vmul.f32 %v2841, %v3197
        %v3326 = vmul.f32 %v2843, %v3198
        %v3327 = vmul.f32 %v2845, %v3199
        %v3328 = vmul.f32 %v2847, %v3200
        %v3329 = vmul.f32 %v2849, %v3201
        %v3330 = vmul.f32 %v2851, %v3202
        %v3331 = vmul.f32 %v2853, %v3203
        %v3332 = vmul.f32 %v2855, %v3204
        %v3333 = vmul.f32 %v2857, %v3205
        %v3334 = vmul.f32 %v2859, %v3206
        %v3335 = vmul.f32 %v2861, %v3207
        %v3336 = vmul.f32 %v2863, %v3208
        %v3337 = vmul.f32 %v2865, %v3209
        %v3338 = vmul.f32 %v2867, %v3210
        %v3339 = vmul.f32 %v2869, %v3211
        %v3340 = vmul.f32 %v2871, %v3212
        %v3341 = vmul.f32 %v2873, %v3213
        %v3342 = vmul.f32 %v2875, %v3214
        %v3343 = vmul.f32 %v2877, %v3215
        %v3344 = vmul.f32 %v2879, %v3216
        %v3345 = vmul.f32 %v2881, %v3217
        %v3346 = vmul.f32 %v2883, %v3218
        %v3347 = vmul.f32 %v2885, %v3219
        %v3348 = vmul.f32 %v2887, %v3220
        %v3349 = vmul.f32 %v2889, %v3221
        %v3350 = vmul.f32 %v2891, %v3222
        %v3351 = vmul.f32 %v2893, %v3223
        %v3352 = vmul.f32 %v2895, %v3224
        %v3353 = vmul.f32 %v2897, %v3225
        %v3354 = vmul.f32 %v2899, %v3226
        %v3355 = vmul.f32 %v2901, %v3227
        %v3356 = vmul.f32 %v2903, %v3228
        %v3357 = vmul.f32 %v2905, %v3229
        %v3358 = vmul.f32 %v2907, %v3230
        %v3359 = vmul.f32 %v2909, %v3231
        %v3360 = vmul.f32 %v2911, %v3232
        %v3361 = vmul.f32 %v2913, %v3233
        %v3362 = vmul.f32 %v2915, %v3234
        %v3363 = vmul.f32 %v2917, %v3235
        %v3364 = vmul.f32 %v2919, %v3236
        %v3365 = vmul.f32 %v2921, %v3237
        %v3366 = vmul.f32 %v2923, %v3238
        %v3367 = vmul.f32 %v2925, %v3239
        %v3368 = vmul.f32 %v2927, %v3240
        %v3369 = vmul.f32 %v2929, %v3241
        %v3370 = vmul.f32 %v2931, %v3242
        %v3371 = vmul.f32 %v2933, %v3243
        %v3372 = vmul.f32 %v2935, %v3244
        %v3373 = vmul.f32 %v2937, %v3245
        %v3374 = vmul.f32 %v2939, %v3246
        %v3375 = vmul.f32 %v2941, %v3247
        %v3376 = vmul.f32 %v2943, %v3248
        %v3377 = vmul.f32 %v2945, %v3249
        %v3378 = vmul.f32 %v2947, %v3250
        %v3379 = vmul.f32 %v2949, %v3251
        %v3380 = vmul.f32 %v2951, %v3252
        %v3381 = vmul.f32 %v2953, %v3253
        %v3382 = vmul.f32 %v2955, %v3254
        %v3383 = vmul.f32 %v2957, %v3255
        %v3384 = vmul.f32 %v2959, %v3256
        %v3385 = vmul.f32 %v2961, %v3257
        %v3386 = vmul.f32 %v2963, %v3258
        %v3387 = vmul.f32 %v2965, %v3259
        %v3388 = vmul.f32 %v2967, %v3260
        %v3389 = vmul.f32 %v2969, %v3261
        %v3390 = vmul.f32 %v2971, %v3262
        %v3391 = vmul.f32 %v2973, %v3263
        %v3392 = vmul.f32 %v2975, %v3264
        %v3393 = vmul.f32 %v2977, %v3265
        %v3394 = vmul.f32 %v2979, %v3266
        %v3395 = vmul.f32 %v2981, %v3267
        %v3396 = vmul.f32 %v2983, %v3268
        %v3397 = vmul.f32 %v2985, %v3269
        %v3398 = vmul.f32 %v2987, %v3270
        %v3399 = vmul.f32 %v2989, %v3271
        %v3400 = vmul.f32 %v2991, %v3272
        %v3401 = vmul.f32 %v2993, %v3273
        %v3402 = vmul.f32 %v2995, %v3274
        %v3403 = vmul.f32 %v2997, %v3275
        %v3404 = vmul.f32 %v2999, %v3276
        %v3405 = vmul.f32 %v3001, %v3277
        %v3406 = vmul.f32 %v3003, %v3278
        %v3407 = vmul.f32 %v3005, %v3279
        %v3408 = vmul.f32 %v3007, %v3280
        %v3409 = vmul.f32 %v3009, %v3281
        %v3410 = vmul.f32 %v3011, %v3282
        %v3411 = vmul.f32 %v3013, %v3283
        %v3412 = vmul.f32 %v3015, %v3284
        %v3413 = vmul.f32 %v3017, %v3285
        %v3414 = vmul.f32 %v3019, %v3286
        %v3415 = vmul.f32 %v3021, %v3287
        %v3416 = vmul.f32 %v3023, %v3288
        %v3417 = vmul.f32 %v3025, %v3289
        %v3418 = vmul.f32 %v3027, %v3290
        %v3419 = vmul.f32 %v3029, %v3291
        %v3420 = vmul.f32 %v3031, %v3292
        %v3421 = vmul.f32 %v3033, %v3293
        %v3422 = vmul.f32 %v3035, %v3294
        %v3423 = vmul.f32 %v3037, %v3295
        %v3424 = vmul.f32 %v3039, %v3296
        %v3425 = vmul.f32 %v3041, %v3297
        %v3426 = vadd.f32 %v3298, 1.4214138
        %v3427 = vadd.f32 %v3299, 1.4214138
        %v3428 = vadd.f32 %v3300, 1.4214138
        %v3429 = vadd.f32 %v3301, 1.4214138
        %v3430 = vadd.f32 %v3302, 1.4214138
        %v3431 = vadd.f32 %v3303, 1.4214138
        %v3432 = vadd.f32 %v3304, 1.4214138
        %v3433 = vadd.f32 %v3305, 1.4214138
        %v3434 = vadd.f32 %v3306, 1.4214138
        %v3435 = vadd.f32 %v3307, 1.4214138
        %v3436 = vadd.f32 %v3308, 1.4214138
        %v3437 = vadd.f32 %v3309, 1.4214138
        %v3438 = vadd.f32 %v3310, 1.4214138
        %v3439 = vadd.f32 %v3311, 1.4214138
        %v3440 = vadd.f32 %v3312, 1.4214138
        %v3441 = vadd.f32 %v3313, 1.4214138
        %v3442 = vadd.f32 %v3314, 1.4214138
        %v3443 = vadd.f32 %v3315, 1.4214138
        %v3444 = vadd.f32 %v3316, 1.4214138
        %v3445 = vadd.f32 %v3317, 1.4214138
        %v3446 = vadd.f32 %v3318, 1.4214138
        %v3447 = vadd.f32 %v3319, 1.4214138
        %v3448 = vadd.f32 %v3320, 1.4214138
        %v3449 = vadd.f32 %v3321, 1.4214138
        %v3450 = vadd.f32 %v3322, 1.4214138
        %v3451 = vadd.f32 %v3323, 1.4214138
        %v3452 = vadd.f32 %v3324, 1.4214138
        %v3453 = vadd.f32 %v3325, 1.4214138
        %v3454 = vadd.f32 %v3326, 1.4214138
        %v3455 = vadd.f32 %v3327, 1.4214138
        %v3456 = vadd.f32 %v3328, 1.4214138
        %v3457 = vadd.f32 %v3329, 1.4214138
        %v3458 = vadd.f32 %v3330, 1.4214138
        %v3459 = vadd.f32 %v3331, 1.4214138
        %v3460 = vadd.f32 %v3332, 1.4214138
        %v3461 = vadd.f32 %v3333, 1.4214138
        %v3462 = vadd.f32 %v3334, 1.4214138
        %v3463 = vadd.f32 %v3335, 1.4214138
        %v3464 = vadd.f32 %v3336, 1.4214138
        %v3465 = vadd.f32 %v3337, 1.4214138
        %v3466 = vadd.f32 %v3338, 1.4214138
        %v3467 = vadd.f32 %v3339, 1.4214138
        %v3468 = vadd.f32 %v3340, 1.4214138
        %v3469 = vadd.f32 %v3341, 1.4214138
        %v3470 = vadd.f32 %v3342, 1.4214138
        %v3471 = vadd.f32 %v3343, 1.4214138
        %v3472 = vadd.f32 %v3344, 1.4214138
        %v3473 = vadd.f32 %v3345, 1.4214138
        %v3474 = vadd.f32 %v3346, 1.4214138
        %v3475 = vadd.f32 %v3347, 1.4214138
        %v3476 = vadd.f32 %v3348, 1.4214138
        %v3477 = vadd.f32 %v3349, 1.4214138
        %v3478 = vadd.f32 %v3350, 1.4214138
        %v3479 = vadd.f32 %v3351, 1.4214138
        %v3480 = vadd.f32 %v3352, 1.4214138
        %v3481 = vadd.f32 %v3353, 1.4214138
        %v3482 = vadd.f32 %v3354, 1.4214138
        %v3483 = vadd.f32 %v3355, 1.4214138
        %v3484 = vadd.f32 %v3356, 1.4214138
        %v3485 = vadd.f32 %v3357, 1.4214138
        %v3486 = vadd.f32 %v3358, 1.4214138
        %v3487 = vadd.f32 %v3359, 1.4214138
        %v3488 = vadd.f32 %v3360, 1.4214138
        %v3489 = vadd.f32 %v3361, 1.4214138
        %v3490 = vadd.f32 %v3362, 1.4214138
        %v3491 = vadd.f32 %v3363, 1.4214138
        %v3492 = vadd.f32 %v3364, 1.4214138
        %v3493 = vadd.f32 %v3365, 1.4214138
        %v3494 = vadd.f32 %v3366, 1.4214138
        %v3495 = vadd.f32 %v3367, 1.4214138
        %v3496 = vadd.f32 %v3368, 1.4214138
        %v3497 = vadd.f32 %v3369, 1.4214138
        %v3498 = vadd.f32 %v3370, 1.4214138
        %v3499 = vadd.f32 %v3371, 1.4214138
        %v3500 = vadd.f32 %v3372, 1.4214138
        %v3501 = vadd.f32 %v3373, 1.4214138
        %v3502 = vadd.f32 %v3374, 1.4214138
        %v3503 = vadd.f32 %v3375, 1.4214138
        %v3504 = vadd.f32 %v3376, 1.4214138
        %v3505 = vadd.f32 %v3377, 1.4214138
        %v3506 = vadd.f32 %v3378, 1.4214138
        %v3507 = vadd.f32 %v3379, 1.4214138
        %v3508 = vadd.f32 %v3380, 1.4214138
        %v3509 = vadd.f32 %v3381, 1.4214138
        %v3510 = vadd.f32 %v3382, 1.4214138
        %v3511 = vadd.f32 %v3383, 1.4214138
        %v3512 = vadd.f32 %v3384, 1.4214138
        %v3513 = vadd.f32 %v3385, 1.4214138
        %v3514 = vadd.f32 %v3386, 1.4214138
        %v3515 = vadd.f32 %v3387, 1.4214138
        %v3516 = vadd.f32 %v3388, 1.4214138
        %v3517 = vadd.f32 %v3389, 1.4214138
        %v3518 = vadd.f32 %v3390, 1.4214138
        %v3519 = vadd.f32 %v3391, 1.4214138
        %v3520 = vadd.f32 %v3392, 1.4214138
        %v3521 = vadd.f32 %v3393, 1.4214138
        %v3522 = vadd.f32 %v3394, 1.4214138
        %v3523 = vadd.f32 %v3395, 1.4214138
        %v3524 = vadd.f32 %v3396, 1.4214138
        %v3525 = vadd.f32 %v3397, 1.4214138
        %v3526 = vadd.f32 %v3398, 1.4214138
        %v3527 = vadd.f32 %v3399, 1.4214138
        %v3528 = vadd.f32 %v3400, 1.4214138
        %v3529 = vadd.f32 %v3401, 1.4214138
        %v3530 = vadd.f32 %v3402, 1.4214138
        %v3531 = vadd.f32 %v3403, 1.4214138
        %v3532 = vadd.f32 %v3404, 1.4214138
        %v3533 = vadd.f32 %v3405, 1.4214138
        %v3534 = vadd.f32 %v3406, 1.4214138
        %v3535 = vadd.f32 %v3407, 1.4214138
        %v3536 = vadd.f32 %v3408, 1.4214138
        %v3537 = vadd.f32 %v3409, 1.4214138
        %v3538 = vadd.f32 %v3410, 1.4214138
        %v3539 = vadd.f32 %v3411, 1.4214138
        %v3540 = vadd.f32 %v3412, 1.4214138
        %v3541 = vadd.f32 %v3413, 1.4214138
        %v3542 = vadd.f32 %v3414, 1.4214138
        %v3543 = vadd.f32 %v3415, 1.4214138
        %v3544 = vadd.f32 %v3416, 1.4214138
        %v3545 = vadd.f32 %v3417, 1.4214138
        %v3546 = vadd.f32 %v3418, 1.4214138
        %v3547 = vadd.f32 %v3419, 1.4214138
        %v3548 = vadd.f32 %v3420, 1.4214138
        %v3549 = vadd.f32 %v3421, 1.4214138
        %v3550 = vadd.f32 %v3422, 1.4214138
        %v3551 = vadd.f32 %v3423, 1.4214138
        %v3552 = vadd.f32 %v3424, 1.4214138
        %v3553 = vadd.f32 %v3425, 1.4214138
        %v3554 = vmul.f32 %v2787, %v3426
        %v3555 = vmul.f32 %v2789, %v3427
        %v3556 = vmul.f32 %v2791, %v3428
        %v3557 = vmul.f32 %v2793, %v3429
        %v3558 = vmul.f32 %v2795, %v3430
        %v3559 = vmul.f32 %v2797, %v3431
        %v3560 = vmul.f32 %v2799, %v3432
        %v3561 = vmul.f32 %v2801, %v3433
        %v3562 = vmul.f32 %v2803, %v3434
        %v3563 = vmul.f32 %v2805, %v3435
        %v3564 = vmul.f32 %v2807, %v3436
        %v3565 = vmul.f32 %v2809, %v3437
        %v3566 = vmul.f32 %v2811, %v3438
        %v3567 = vmul.f32 %v2813, %v3439
        %v3568 = vmul.f32 %v2815, %v3440
        %v3569 = vmul.f32 %v2817, %v3441
        %v3570 = vmul.f32 %v2819, %v3442
        %v3571 = vmul.f32 %v2821, %v3443
        %v3572 = vmul.f32 %v2823, %v3444
        %v3573 = vmul.f32 %v2825, %v3445
        %v3574 = vmul.f32 %v2827, %v3446
        %v3575 = vmul.f32 %v2829, %v3447
        %v3576 = vmul.f32 %v2831, %v3448
        %v3577 = vmul.f32 %v2833, %v3449
        %v3578 = vmul.f32 %v2835, %v3450
        %v3579 = vmul.f32 %v2837, %v3451
        %v3580 = vmul.f32 %v2839, %v3452
        %v3581 = vmul.f32 %v2841, %v3453
        %v3582 = vmul.f32 %v2843, %v3454
        %v3583 = vmul.f32 %v2845, %v3455
        %v3584 = vmul.f32 %v2847, %v3456
        %v3585 = vmul.f32 %v2849, %v3457
        %v3586 = vmul.f32 %v2851, %v3458
        %v3587 = vmul.f32 %v2853, %v3459
        %v3588 = vmul.f32 %v2855, %v3460
        %v3589 = vmul.f32 %v2857, %v3461
        %v3590 = vmul.f32 %v2859, %v3462
        %v3591 = vmul.f32 %v2861, %v3463
        %v3592 = vmul.f32 %v2863, %v3464
        %v3593 = vmul.f32 %v2865, %v3465
        %v3594 = vmul.f32 %v2867, %v3466
        %v3595 = vmul.f32 %v2869, %v3467
        %v3596 = vmul.f32 %v2871, %v3468
        %v3597 = vmul.f32 %v2873, %v3469
        %v3598 = vmul.f32 %v2875, %v3470
        %v3599 = vmul.f32 %v2877, %v3471
        %v3600 = vmul.f32 %v2879, %v3472
        %v3601 = vmul.f32 %v2881, %v3473
        %v3602 = vmul.f32 %v2883, %v3474
        %v3603 = vmul.f32 %v2885, %v3475
        %v3604 = vmul.f32 %v2887, %v3476
        %v3605 = vmul.f32 %v2889, %v3477
        %v3606 = vmul.f32 %v2891, %v3478
        %v3607 = vmul.f32 %v2893, %v3479
        %v3608 = vmul.f32 %v2895, %v3480
        %v3609 = vmul.f32 %v2897, %v3481
        %v3610 = vmul.f32 %v2899, %v3482
        %v3611 = vmul.f32 %v2901, %v3483
        %v3612 = vmul.f32 %v2903, %v3484
        %v3613 = vmul.f32 %v2905, %v3485
        %v3614 = vmul.f32 %v2907, %v3486
        %v3615 = vmul.f32 %v2909, %v3487
        %v3616 = vmul.f32 %v2911, %v3488
        %v3617 = vmul.f32 %v2913, %v3489
        %v3618 = vmul.f32 %v2915, %v3490
        %v3619 = vmul.f32 %v2917, %v3491
        %v3620 = vmul.f32 %v2919, %v3492
        %v3621 = vmul.f32 %v2921, %v3493
        %v3622 = vmul.f32 %v2923, %v3494
        %v3623 = vmul.f32 %v2925, %v3495
        %v3624 = vmul.f32 %v2927, %v3496
        %v3625 = vmul.f32 %v2929, %v3497
        %v3626 = vmul.f32 %v2931, %v3498
        %v3627 = vmul.f32 %v2933, %v3499
        %v3628 = vmul.f32 %v2935, %v3500
        %v3629 = vmul.f32 %v2937, %v3501
        %v3630 = vmul.f32 %v2939, %v3502
        %v3631 = vmul.f32 %v2941, %v3503
        %v3632 = vmul.f32 %v2943, %v3504
        %v3633 = vmul.f32 %v2945, %v3505
        %v3634 = vmul.f32 %v2947, %v3506
        %v3635 = vmul.f32 %v2949, %v3507
        %v3636 = vmul.f32 %v2951, %v3508
        %v3637 = vmul.f32 %v2953, %v3509
        %v3638 = vmul.f32 %v2955, %v3510
        %v3639 = vmul.f32 %v2957, %v3511
        %v3640 = vmul.f32 %v2959, %v3512
        %v3641 = vmul.f32 %v2961, %v3513
        %v3642 = vmul.f32 %v2963, %v3514
        %v3643 = vmul.f32 %v2965, %v3515
        %v3644 = vmul.f32 %v2967, %v3516
        %v3645 = vmul.f32 %v2969, %v3517
        %v3646 = vmul.f32 %v2971, %v3518
        %v3647 = vmul.f32 %v2973, %v3519
        %v3648 = vmul.f32 %v2975, %v3520
        %v3649 = vmul.f32 %v2977, %v3521
        %v3650 = vmul.f32 %v2979, %v3522
        %v3651 = vmul.f32 %v2981, %v3523
        %v3652 = vmul.f32 %v2983, %v3524
        %v3653 = vmul.f32 %v2985, %v3525
        %v3654 = vmul.f32 %v2987, %v3526
        %v3655 = vmul.f32 %v2989, %v3527
        %v3656 = vmul.f32 %v2991, %v3528
        %v3657 = vmul.f32 %v2993, %v3529
        %v3658 = vmul.f32 %v2995, %v3530
        %v3659 = vmul.f32 %v2997, %v3531
        %v3660 = vmul.f32 %v2999, %v3532
        %v3661 = vmul.f32 %v3001, %v3533
        %v3662 = vmul.f32 %v3003, %v3534
        %v3663 = vmul.f32 %v3005, %v3535
        %v3664 = vmul.f32 %v3007, %v3536
        %v3665 = vmul.f32 %v3009, %v3537
        %v3666 = vmul.f32 %v3011, %v3538
        %v3667 = vmul.f32 %v3013, %v3539
        %v3668 = vmul.f32 %v3015, %v3540
        %v3669 = vmul.f32 %v3017, %v3541
        %v3670 = vmul.f32 %v3019, %v3542
        %v3671 = vmul.f32 %v3021, %v3543
        %v3672 = vmul.f32 %v3023, %v3544
        %v3673 = vmul.f32 %v3025, %v3545
        %v3674 = vmul.f32 %v3027, %v3546
        %v3675 = vmul.f32 %v3029, %v3547
        %v3676 = vmul.f32 %v3031, %v3548
        %v3677 = vmul.f32 %v3033, %v3549
        %v3678 = vmul.f32 %v3035, %v3550
        %v3679 = vmul.f32 %v3037, %v3551
        %v3680 = vmul.f32 %v3039, %v3552
        %v3681 = vmul.f32 %v3041, %v3553
        %v3682 = vadd.f32 %v3554, -0.28449672
        %v3683 = vadd.f32 %v3555, -0.28449672
        %v3684 = vadd.f32 %v3556, -0.28449672
        %v3685 = vadd.f32 %v3557, -0.28449672
        %v3686 = vadd.f32 %v3558, -0.28449672
        %v3687 = vadd.f32 %v3559, -0.28449672
        %v3688 = vadd.f32 %v3560, -0.28449672
        %v3689 = vadd.f32 %v3561, -0.28449672
        %v3690 = vadd.f32 %v3562, -0.28449672
        %v3691 = vadd.f32 %v3563, -0.28449672
        %v3692 = vadd.f32 %v3564, -0.28449672
        %v3693 = vadd.f32 %v3565, -0.28449672
        %v3694 = vadd.f32 %v3566, -0.28449672
        %v3695 = vadd.f32 %v3567, -0.28449672
        %v3696 = vadd.f32 %v3568, -0.28449672
        %v3697 = vadd.f32 %v3569, -0.28449672
        %v3698 = vadd.f32 %v3570, -0.28449672
        %v3699 = vadd.f32 %v3571, -0.28449672
        %v3700 = vadd.f32 %v3572, -0.28449672
        %v3701 = vadd.f32 %v3573, -0.28449672
        %v3702 = vadd.f32 %v3574, -0.28449672
        %v3703 = vadd.f32 %v3575, -0.28449672
        %v3704 = vadd.f32 %v3576, -0.28449672
        %v3705 = vadd.f32 %v3577, -0.28449672
        %v3706 = vadd.f32 %v3578, -0.28449672
        %v3707 = vadd.f32 %v3579, -0.28449672
        %v3708 = vadd.f32 %v3580, -0.28449672
        %v3709 = vadd.f32 %v3581, -0.28449672
        %v3710 = vadd.f32 %v3582, -0.28449672
        %v3711 = vadd.f32 %v3583, -0.28449672
        %v3712 = vadd.f32 %v3584, -0.28449672
        %v3713 = vadd.f32 %v3585, -0.28449672
        %v3714 = vadd.f32 %v3586, -0.28449672
        %v3715 = vadd.f32 %v3587, -0.28449672
        %v3716 = vadd.f32 %v3588, -0.28449672
        %v3717 = vadd.f32 %v3589, -0.28449672
        %v3718 = vadd.f32 %v3590, -0.28449672
        %v3719 = vadd.f32 %v3591, -0.28449672
        %v3720 = vadd.f32 %v3592, -0.28449672
        %v3721 = vadd.f32 %v3593, -0.28449672
        %v3722 = vadd.f32 %v3594, -0.28449672
        %v3723 = vadd.f32 %v3595, -0.28449672
        %v3724 = vadd.f32 %v3596, -0.28449672
        %v3725 = vadd.f32 %v3597, -0.28449672
        %v3726 = vadd.f32 %v3598, -0.28449672
        %v3727 = vadd.f32 %v3599, -0.28449672
        %v3728 = vadd.f32 %v3600, -0.28449672
        %v3729 = vadd.f32 %v3601, -0.28449672
        %v3730 = vadd.f32 %v3602, -0.28449672
        %v3731 = vadd.f32 %v3603, -0.28449672
        %v3732 = vadd.f32 %v3604, -0.28449672
        %v3733 = vadd.f32 %v3605, -0.28449672
        %v3734 = vadd.f32 %v3606, -0.28449672
        %v3735 = vadd.f32 %v3607, -0.28449672
        %v3736 = vadd.f32 %v3608, -0.28449672
        %v3737 = vadd.f32 %v3609, -0.28449672
        %v3738 = vadd.f32 %v3610, -0.28449672
        %v3739 = vadd.f32 %v3611, -0.28449672
        %v3740 = vadd.f32 %v3612, -0.28449672
        %v3741 = vadd.f32 %v3613, -0.28449672
        %v3742 = vadd.f32 %v3614, -0.28449672
        %v3743 = vadd.f32 %v3615, -0.28449672
        %v3744 = vadd.f32 %v3616, -0.28449672
        %v3745 = vadd.f32 %v3617, -0.28449672
        %v3746 = vadd.f32 %v3618, -0.28449672
        %v3747 = vadd.f32 %v3619, -0.28449672
        %v3748 = vadd.f32 %v3620, -0.28449672
        %v3749 = vadd.f32 %v3621, -0.28449672
        %v3750 = vadd.f32 %v3622, -0.28449672
        %v3751 = vadd.f32 %v3623, -0.28449672
        %v3752 = vadd.f32 %v3624, -0.28449672
        %v3753 = vadd.f32 %v3625, -0.28449672
        %v3754 = vadd.f32 %v3626, -0.28449672
        %v3755 = vadd.f32 %v3627, -0.28449672
        %v3756 = vadd.f32 %v3628, -0.28449672
        %v3757 = vadd.f32 %v3629, -0.28449672
        %v3758 = vadd.f32 %v3630, -0.28449672
        %v3759 = vadd.f32 %v3631, -0.28449672
        %v3760 = vadd.f32 %v3632, -0.28449672
        %v3761 = vadd.f32 %v3633, -0.28449672
        %v3762 = vadd.f32 %v3634, -0.28449672
        %v3763 = vadd.f32 %v3635, -0.28449672
        %v3764 = vadd.f32 %v3636, -0.28449672
        %v3765 = vadd.f32 %v3637, -0.28449672
        %v3766 = vadd.f32 %v3638, -0.28449672
        %v3767 = vadd.f32 %v3639, -0.28449672
        %v3768 = vadd.f32 %v3640, -0.28449672
        %v3769 = vadd.f32 %v3641, -0.28449672
        %v3770 = vadd.f32 %v3642, -0.28449672
        %v3771 = vadd.f32 %v3643, -0.28449672
        %v3772 = vadd.f32 %v3644, -0.28449672
        %v3773 = vadd.f32 %v3645, -0.28449672
        %v3774 = vadd.f32 %v3646, -0.28449672
        %v3775 = vadd.f32 %v3647, -0.28449672
        %v3776 = vadd.f32 %v3648, -0.28449672
        %v3777 = vadd.f32 %v3649, -0.28449672
        %v3778 = vadd.f32 %v3650, -0.28449672
        %v3779 = vadd.f32 %v3651, -0.28449672
        %v3780 = vadd.f32 %v3652, -0.28449672
        %v3781 = vadd.f32 %v3653, -0.28449672
        %v3782 = vadd.f32 %v3654, -0.28449672
        %v3783 = vadd.f32 %v3655, -0.28449672
        %v3784 = vadd.f32 %v3656, -0.28449672
        %v3785 = vadd.f32 %v3657, -0.28449672
        %v3786 = vadd.f32 %v3658, -0.28449672
        %v3787 = vadd.f32 %v3659, -0.28449672
        %v3788 = vadd.f32 %v3660, -0.28449672
        %v3789 = vadd.f32 %v3661, -0.28449672
        %v3790 = vadd.f32 %v3662, -0.28449672
        %v3791 = vadd.f32 %v3663, -0.28449672
        %v3792 = vadd.f32 %v3664, -0.28449672
        %v3793 = vadd.f32 %v3665, -0.28449672
        %v3794 = vadd.f32 %v3666, -0.28449672
        %v3795 = vadd.f32 %v3667, -0.28449672
        %v3796 = vadd.f32 %v3668, -0.28449672
        %v3797 = vadd.f32 %v3669, -0.28449672
        %v3798 = vadd.f32 %v3670, -0.28449672
        %v3799 = vadd.f32 %v3671, -0.28449672
        %v3800 = vadd.f32 %v3672, -0.28449672
        %v3801 = vadd.f32 %v3673, -0.28449672
        %v3802 = vadd.f32 %v3674, -0.28449672
        %v3803 = vadd.f32 %v3675, -0.28449672
        %v3804 = vadd.f32 %v3676, -0.28449672
        %v3805 = vadd.f32 %v3677, -0.28449672
        %v3806 = vadd.f32 %v3678, -0.28449672
        %v3807 = vadd.f32 %v3679, -0.28449672
        %v3808 = vadd.f32 %v3680, -0.28449672
        %v3809 = vadd.f32 %v3681, -0.28449672
        %v3810 = vmul.f32 %v2787, %v3682
        %v3811 = vmul.f32 %v2789, %v3683
        %v3812 = vmul.f32 %v2791, %v3684
        %v3813 = vmul.f32 %v2793, %v3685
        %v3814 = vmul.f32 %v2795, %v3686
        %v3815 = vmul.f32 %v2797, %v3687
        %v3816 = vmul.f32 %v2799, %v3688
        %v3817 = vmul.f32 %v2801, %v3689
        %v3818 = vmul.f32 %v2803, %v3690
        %v3819 = vmul.f32 %v2805, %v3691
        %v3820 = vmul.f32 %v2807, %v3692
        %v3821 = vmul.f32 %v2809, %v3693
        %v3822 = vmul.f32 %v2811, %v3694
        %v3823 = vmul.f32 %v2813, %v3695
        %v3824 = vmul.f32 %v2815, %v3696
        %v3825 = vmul.f32 %v2817, %v3697
        %v3826 = vmul.f32 %v2819, %v3698
        %v3827 = vmul.f32 %v2821, %v3699
        %v3828 = vmul.f32 %v2823, %v3700
        %v3829 = vmul.f32 %v2825, %v3701
        %v3830 = vmul.f32 %v2827, %v3702
        %v3831 = vmul.f32 %v2829, %v3703
        %v3832 = vmul.f32 %v2831, %v3704
        %v3833 = vmul.f32 %v2833, %v3705
        %v3834 = vmul.f32 %v2835, %v3706
        %v3835 = vmul.f32 %v2837, %v3707
        %v3836 = vmul.f32 %v2839, %v3708
        %v3837 = vmul.f32 %v2841, %v3709
        %v3838 = vmul.f32 %v2843, %v3710
        %v3839 = vmul.f32 %v2845, %v3711
        %v3840 = vmul.f32 %v2847, %v3712
        %v3841 = vmul.f32 %v2849, %v3713
        %v3842 = vmul.f32 %v2851, %v3714
        %v3843 = vmul.f32 %v2853, %v3715
        %v3844 = vmul.f32 %v2855, %v3716
        %v3845 = vmul.f32 %v2857, %v3717
        %v3846 = vmul.f32 %v2859, %v3718
        %v3847 = vmul.f32 %v2861, %v3719
        %v3848 = vmul.f32 %v2863, %v3720
        %v3849 = vmul.f32 %v2865, %v3721
        %v3850 = vmul.f32 %v2867, %v3722
        %v3851 = vmul.f32 %v2869, %v3723
        %v3852 = vmul.f32 %v2871, %v3724
        %v3853 = vmul.f32 %v2873, %v3725
        %v3854 = vmul.f32 %v2875, %v3726
        %v3855 = vmul.f32 %v2877, %v3727
        %v3856 = vmul.f32 %v2879, %v3728
        %v3857 = vmul.f32 %v2881, %v3729
        %v3858 = vmul.f32 %v2883, %v3730
        %v3859 = vmul.f32 %v2885, %v3731
        %v3860 = vmul.f32 %v2887, %v3732
        %v3861 = vmul.f32 %v2889, %v3733
        %v3862 = vmul.f32 %v2891, %v3734
        %v3863 = vmul.f32 %v2893, %v3735
        %v3864 = vmul.f32 %v2895, %v3736
        %v3865 = vmul.f32 %v2897, %v3737
        %v3866 = vmul.f32 %v2899, %v3738
        %v3867 = vmul.f32 %v2901, %v3739
        %v3868 = vmul.f32 %v2903, %v3740
        %v3869 = vmul.f32 %v2905, %v3741
        %v3870 = vmul.f32 %v2907, %v3742
        %v3871 = vmul.f32 %v2909, %v3743
        %v3872 = vmul.f32 %v2911, %v3744
        %v3873 = vmul.f32 %v2913, %v3745
        %v3874 = vmul.f32 %v2915, %v3746
        %v3875 = vmul.f32 %v2917, %v3747
        %v3876 = vmul.f32 %v2919, %v3748
        %v3877 = vmul.f32 %v2921, %v3749
        %v3878 = vmul.f32 %v2923, %v3750
        %v3879 = vmul.f32 %v2925, %v3751
        %v3880 = vmul.f32 %v2927, %v3752
        %v3881 = vmul.f32 %v2929, %v3753
        %v3882 = vmul.f32 %v2931, %v3754
        %v3883 = vmul.f32 %v2933, %v3755
        %v3884 = vmul.f32 %v2935, %v3756
        %v3885 = vmul.f32 %v2937, %v3757
        %v3886 = vmul.f32 %v2939, %v3758
        %v3887 = vmul.f32 %v2941, %v3759
        %v3888 = vmul.f32 %v2943, %v3760
        %v3889 = vmul.f32 %v2945, %v3761
        %v3890 = vmul.f32 %v2947, %v3762
        %v3891 = vmul.f32 %v2949, %v3763
        %v3892 = vmul.f32 %v2951, %v3764
        %v3893 = vmul.f32 %v2953, %v3765
        %v3894 = vmul.f32 %v2955, %v3766
        %v3895 = vmul.f32 %v2957, %v3767
        %v3896 = vmul.f32 %v2959, %v3768
        %v3897 = vmul.f32 %v2961, %v3769
        %v3898 = vmul.f32 %v2963, %v3770
        %v3899 = vmul.f32 %v2965, %v3771
        %v3900 = vmul.f32 %v2967, %v3772
        %v3901 = vmul.f32 %v2969, %v3773
        %v3902 = vmul.f32 %v2971, %v3774
        %v3903 = vmul.f32 %v2973, %v3775
        %v3904 = vmul.f32 %v2975, %v3776
        %v3905 = vmul.f32 %v2977, %v3777
        %v3906 = vmul.f32 %v2979, %v3778
        %v3907 = vmul.f32 %v2981, %v3779
        %v3908 = vmul.f32 %v2983, %v3780
        %v3909 = vmul.f32 %v2985, %v3781
        %v3910 = vmul.f32 %v2987, %v3782
        %v3911 = vmul.f32 %v2989, %v3783
        %v3912 = vmul.f32 %v2991, %v3784
        %v3913 = vmul.f32 %v2993, %v3785
        %v3914 = vmul.f32 %v2995, %v3786
        %v3915 = vmul.f32 %v2997, %v3787
        %v3916 = vmul.f32 %v2999, %v3788
        %v3917 = vmul.f32 %v3001, %v3789
        %v3918 = vmul.f32 %v3003, %v3790
        %v3919 = vmul.f32 %v3005, %v3791
        %v3920 = vmul.f32 %v3007, %v3792
        %v3921 = vmul.f32 %v3009, %v3793
        %v3922 = vmul.f32 %v3011, %v3794
        %v3923 = vmul.f32 %v3013, %v3795
        %v3924 = vmul.f32 %v3015, %v3796
        %v3925 = vmul.f32 %v3017, %v3797
        %v3926 = vmul.f32 %v3019, %v3798
        %v3927 = vmul.f32 %v3021, %v3799
        %v3928 = vmul.f32 %v3023, %v3800
        %v3929 = vmul.f32 %v3025, %v3801
        %v3930 = vmul.f32 %v3027, %v3802
        %v3931 = vmul.f32 %v3029, %v3803
        %v3932 = vmul.f32 %v3031, %v3804
        %v3933 = vmul.f32 %v3033, %v3805
        %v3934 = vmul.f32 %v3035, %v3806
        %v3935 = vmul.f32 %v3037, %v3807
        %v3936 = vmul.f32 %v3039, %v3808
        %v3937 = vmul.f32 %v3041, %v3809
        %v3938 = vadd.f32 %v3810, 0.2548296
        %v3939 = vadd.f32 %v3811, 0.2548296
        %v3940 = vadd.f32 %v3812, 0.2548296
        %v3941 = vadd.f32 %v3813, 0.2548296
        %v3942 = vadd.f32 %v3814, 0.2548296
        %v3943 = vadd.f32 %v3815, 0.2548296
        %v3944 = vadd.f32 %v3816, 0.2548296
        %v3945 = vadd.f32 %v3817, 0.2548296
        %v3946 = vadd.f32 %v3818, 0.2548296
        %v3947 = vadd.f32 %v3819, 0.2548296
        %v3948 = vadd.f32 %v3820, 0.2548296
        %v3949 = vadd.f32 %v3821, 0.2548296
        %v3950 = vadd.f32 %v3822, 0.2548296
        %v3951 = vadd.f32 %v3823, 0.2548296
        %v3952 = vadd.f32 %v3824, 0.2548296
        %v3953 = vadd.f32 %v3825, 0.2548296
        %v3954 = vadd.f32 %v3826, 0.2548296
        %v3955 = vadd.f32 %v3827, 0.2548296
        %v3956 = vadd.f32 %v3828, 0.2548296
        %v3957 = vadd.f32 %v3829, 0.2548296
        %v3958 = vadd.f32 %v3830, 0.2548296
        %v3959 = vadd.f32 %v3831, 0.2548296
        %v3960 = vadd.f32 %v3832, 0.2548296
        %v3961 = vadd.f32 %v3833, 0.2548296
        %v3962 = vadd.f32 %v3834, 0.2548296
        %v3963 = vadd.f32 %v3835, 0.2548296
        %v3964 = vadd.f32 %v3836, 0.2548296
        %v3965 = vadd.f32 %v3837, 0.2548296
        %v3966 = vadd.f32 %v3838, 0.2548296
        %v3967 = vadd.f32 %v3839, 0.2548296
        %v3968 = vadd.f32 %v3840, 0.2548296
        %v3969 = vadd.f32 %v3841, 0.2548296
        %v3970 = vadd.f32 %v3842, 0.2548296
        %v3971 = vadd.f32 %v3843, 0.2548296
        %v3972 = vadd.f32 %v3844, 0.2548296
        %v3973 = vadd.f32 %v3845, 0.2548296
        %v3974 = vadd.f32 %v3846, 0.2548296
        %v3975 = vadd.f32 %v3847, 0.2548296
        %v3976 = vadd.f32 %v3848, 0.2548296
        %v3977 = vadd.f32 %v3849, 0.2548296
        %v3978 = vadd.f32 %v3850, 0.2548296
        %v3979 = vadd.f32 %v3851, 0.2548296
        %v3980 = vadd.f32 %v3852, 0.2548296
        %v3981 = vadd.f32 %v3853, 0.2548296
        %v3982 = vadd.f32 %v3854, 0.2548296
        %v3983 = vadd.f32 %v3855, 0.2548296
        %v3984 = vadd.f32 %v3856, 0.2548296
        %v3985 = vadd.f32 %v3857, 0.2548296
        %v3986 = vadd.f32 %v3858, 0.2548296
        %v3987 = vadd.f32 %v3859, 0.2548296
        %v3988 = vadd.f32 %v3860, 0.2548296
        %v3989 = vadd.f32 %v3861, 0.2548296
        %v3990 = vadd.f32 %v3862, 0.2548296
        %v3991 = vadd.f32 %v3863, 0.2548296
        %v3992 = vadd.f32 %v3864, 0.2548296
        %v3993 = vadd.f32 %v3865, 0.2548296
        %v3994 = vadd.f32 %v3866, 0.2548296
        %v3995 = vadd.f32 %v3867, 0.2548296
        %v3996 = vadd.f32 %v3868, 0.2548296
        %v3997 = vadd.f32 %v3869, 0.2548296
        %v3998 = vadd.f32 %v3870, 0.2548296
        %v3999 = vadd.f32 %v3871, 0.2548296
        %v4000 = vadd.f32 %v3872, 0.2548296
        %v4001 = vadd.f32 %v3873, 0.2548296
        %v4002 = vadd.f32 %v3874, 0.2548296
        %v4003 = vadd.f32 %v3875, 0.2548296
        %v4004 = vadd.f32 %v3876, 0.2548296
        %v4005 = vadd.f32 %v3877, 0.2548296
        %v4006 = vadd.f32 %v3878, 0.2548296
        %v4007 = vadd.f32 %v3879, 0.2548296
        %v4008 = vadd.f32 %v3880, 0.2548296
        %v4009 = vadd.f32 %v3881, 0.2548296
        %v4010 = vadd.f32 %v3882, 0.2548296
        %v4011 = vadd.f32 %v3883, 0.2548296
        %v4012 = vadd.f32 %v3884, 0.2548296
        %v4013 = vadd.f32 %v3885, 0.2548296
        %v4014 = vadd.f32 %v3886, 0.2548296
        %v4015 = vadd.f32 %v3887, 0.2548296
        %v4016 = vadd.f32 %v3888, 0.2548296
        %v4017 = vadd.f32 %v3889, 0.2548296
        %v4018 = vadd.f32 %v3890, 0.2548296
        %v4019 = vadd.f32 %v3891, 0.2548296
        %v4020 = vadd.f32 %v3892, 0.2548296
        %v4021 = vadd.f32 %v3893, 0.2548296
        %v4022 = vadd.f32 %v3894, 0.2548296
        %v4023 = vadd.f32 %v3895, 0.2548296
        %v4024 = vadd.f32 %v3896, 0.2548296
        %v4025 = vadd.f32 %v3897, 0.2548296
        %v4026 = vadd.f32 %v3898, 0.2548296
        %v4027 = vadd.f32 %v3899, 0.2548296
        %v4028 = vadd.f32 %v3900, 0.2548296
        %v4029 = vadd.f32 %v3901, 0.2548296
        %v4030 = vadd.f32 %v3902, 0.2548296
        %v4031 = vadd.f32 %v3903, 0.2548296
        %v4032 = vadd.f32 %v3904, 0.2548296
        %v4033 = vadd.f32 %v3905, 0.2548296
        %v4034 = vadd.f32 %v3906, 0.2548296
        %v4035 = vadd.f32 %v3907, 0.2548296
        %v4036 = vadd.f32 %v3908, 0.2548296
        %v4037 = vadd.f32 %v3909, 0.2548296
        %v4038 = vadd.f32 %v3910, 0.2548296
        %v4039 = vadd.f32 %v3911, 0.2548296
        %v4040 = vadd.f32 %v3912, 0.2548296
        %v4041 = vadd.f32 %v3913, 0.2548296
        %v4042 = vadd.f32 %v3914, 0.2548296
        %v4043 = vadd.f32 %v3915, 0.2548296
        %v4044 = vadd.f32 %v3916, 0.2548296
        %v4045 = vadd.f32 %v3917, 0.2548296
        %v4046 = vadd.f32 %v3918, 0.2548296
        %v4047 = vadd.f32 %v3919, 0.2548296
        %v4048 = vadd.f32 %v3920, 0.2548296
        %v4049 = vadd.f32 %v3921, 0.2548296
        %v4050 = vadd.f32 %v3922, 0.2548296
        %v4051 = vadd.f32 %v3923, 0.2548296
        %v4052 = vadd.f32 %v3924, 0.2548296
        %v4053 = vadd.f32 %v3925, 0.2548296
        %v4054 = vadd.f32 %v3926, 0.2548296
        %v4055 = vadd.f32 %v3927, 0.2548296
        %v4056 = vadd.f32 %v3928, 0.2548296
        %v4057 = vadd.f32 %v3929, 0.2548296
        %v4058 = vadd.f32 %v3930, 0.2548296
        %v4059 = vadd.f32 %v3931, 0.2548296
        %v4060 = vadd.f32 %v3932, 0.2548296
        %v4061 = vadd.f32 %v3933, 0.2548296
        %v4062 = vadd.f32 %v3934, 0.2548296
        %v4063 = vadd.f32 %v3935, 0.2548296
        %v4064 = vadd.f32 %v3936, 0.2548296
        %v4065 = vadd.f32 %v3937, 0.2548296
        %v4066 = vmul.f32 %v2787, %v3938
        %v4067 = vmul.f32 %v2789, %v3939
        %v4068 = vmul.f32 %v2791, %v3940
        %v4069 = vmul.f32 %v2793, %v3941
        %v4070 = vmul.f32 %v2795, %v3942
        %v4071 = vmul.f32 %v2797, %v3943
        %v4072 = vmul.f32 %v2799, %v3944
        %v4073 = vmul.f32 %v2801, %v3945
        %v4074 = vmul.f32 %v2803, %v3946
        %v4075 = vmul.f32 %v2805, %v3947
        %v4076 = vmul.f32 %v2807, %v3948
        %v4077 = vmul.f32 %v2809, %v3949
        %v4078 = vmul.f32 %v2811, %v3950
        %v4079 = vmul.f32 %v2813, %v3951
        %v4080 = vmul.f32 %v2815, %v3952
        %v4081 = vmul.f32 %v2817, %v3953
        %v4082 = vmul.f32 %v2819, %v3954
        %v4083 = vmul.f32 %v2821, %v3955
        %v4084 = vmul.f32 %v2823, %v3956
        %v4085 = vmul.f32 %v2825, %v3957
        %v4086 = vmul.f32 %v2827, %v3958
        %v4087 = vmul.f32 %v2829, %v3959
        %v4088 = vmul.f32 %v2831, %v3960
        %v4089 = vmul.f32 %v2833, %v3961
        %v4090 = vmul.f32 %v2835, %v3962
        %v4091 = vmul.f32 %v2837, %v3963
        %v4092 = vmul.f32 %v2839, %v3964
        %v4093 = vmul.f32 %v2841, %v3965
        %v4094 = vmul.f32 %v2843, %v3966
        %v4095 = vmul.f32 %v2845, %v3967
        %v4096 = vmul.f32 %v2847, %v3968
        %v4097 = vmul.f32 %v2849, %v3969
        %v4098 = vmul.f32 %v2851, %v3970
        %v4099 = vmul.f32 %v2853, %v3971
        %v4100 = vmul.f32 %v2855, %v3972
        %v4101 = vmul.f32 %v2857, %v3973
        %v4102 = vmul.f32 %v2859, %v3974
        %v4103 = vmul.f32 %v2861, %v3975
        %v4104 = vmul.f32 %v2863, %v3976
        %v4105 = vmul.f32 %v2865, %v3977
        %v4106 = vmul.f32 %v2867, %v3978
        %v4107 = vmul.f32 %v2869, %v3979
        %v4108 = vmul.f32 %v2871, %v3980
        %v4109 = vmul.f32 %v2873, %v3981
        %v4110 = vmul.f32 %v2875, %v3982
        %v4111 = vmul.f32 %v2877, %v3983
        %v4112 = vmul.f32 %v2879, %v3984
        %v4113 = vmul.f32 %v2881, %v3985
        %v4114 = vmul.f32 %v2883, %v3986
        %v4115 = vmul.f32 %v2885, %v3987
        %v4116 = vmul.f32 %v2887, %v3988
        %v4117 = vmul.f32 %v2889, %v3989
        %v4118 = vmul.f32 %v2891, %v3990
        %v4119 = vmul.f32 %v2893, %v3991
        %v4120 = vmul.f32 %v2895, %v3992
        %v4121 = vmul.f32 %v2897, %v3993
        %v4122 = vmul.f32 %v2899, %v3994
        %v4123 = vmul.f32 %v2901, %v3995
        %v4124 = vmul.f32 %v2903, %v3996
        %v4125 = vmul.f32 %v2905, %v3997
        %v4126 = vmul.f32 %v2907, %v3998
        %v4127 = vmul.f32 %v2909, %v3999
        %v4128 = vmul.f32 %v2911, %v4000
        %v4129 = vmul.f32 %v2913, %v4001
        %v4130 = vmul.f32 %v2915, %v4002
        %v4131 = vmul.f32 %v2917, %v4003
        %v4132 = vmul.f32 %v2919, %v4004
        %v4133 = vmul.f32 %v2921, %v4005
        %v4134 = vmul.f32 %v2923, %v4006
        %v4135 = vmul.f32 %v2925, %v4007
        %v4136 = vmul.f32 %v2927, %v4008
        %v4137 = vmul.f32 %v2929, %v4009
        %v4138 = vmul.f32 %v2931, %v4010
        %v4139 = vmul.f32 %v2933, %v4011
        %v4140 = vmul.f32 %v2935, %v4012
        %v4141 = vmul.f32 %v2937, %v4013
        %v4142 = vmul.f32 %v2939, %v4014
        %v4143 = vmul.f32 %v2941, %v4015
        %v4144 = vmul.f32 %v2943, %v4016
        %v4145 = vmul.f32 %v2945, %v4017
        %v4146 = vmul.f32 %v2947, %v4018
        %v4147 = vmul.f32 %v2949, %v4019
        %v4148 = vmul.f32 %v2951, %v4020
        %v4149 = vmul.f32 %v2953, %v4021
        %v4150 = vmul.f32 %v2955, %v4022
        %v4151 = vmul.f32 %v2957, %v4023
        %v4152 = vmul.f32 %v2959, %v4024
        %v4153 = vmul.f32 %v2961, %v4025
        %v4154 = vmul.f32 %v2963, %v4026
        %v4155 = vmul.f32 %v2965, %v4027
        %v4156 = vmul.f32 %v2967, %v4028
        %v4157 = vmul.f32 %v2969, %v4029
        %v4158 = vmul.f32 %v2971, %v4030
        %v4159 = vmul.f32 %v2973, %v4031
        %v4160 = vmul.f32 %v2975, %v4032
        %v4161 = vmul.f32 %v2977, %v4033
        %v4162 = vmul.f32 %v2979, %v4034
        %v4163 = vmul.f32 %v2981, %v4035
        %v4164 = vmul.f32 %v2983, %v4036
        %v4165 = vmul.f32 %v2985, %v4037
        %v4166 = vmul.f32 %v2987, %v4038
        %v4167 = vmul.f32 %v2989, %v4039
        %v4168 = vmul.f32 %v2991, %v4040
        %v4169 = vmul.f32 %v2993, %v4041
        %v4170 = vmul.f32 %v2995, %v4042
        %v4171 = vmul.f32 %v2997, %v4043
        %v4172 = vmul.f32 %v2999, %v4044
        %v4173 = vmul.f32 %v3001, %v4045
        %v4174 = vmul.f32 %v3003, %v4046
        %v4175 = vmul.f32 %v3005, %v4047
        %v4176 = vmul.f32 %v3007, %v4048
        %v4177 = vmul.f32 %v3009, %v4049
        %v4178 = vmul.f32 %v3011, %v4050
        %v4179 = vmul.f32 %v3013, %v4051
        %v4180 = vmul.f32 %v3015, %v4052
        %v4181 = vmul.f32 %v3017, %v4053
        %v4182 = vmul.f32 %v3019, %v4054
        %v4183 = vmul.f32 %v3021, %v4055
        %v4184 = vmul.f32 %v3023, %v4056
        %v4185 = vmul.f32 %v3025, %v4057
        %v4186 = vmul.f32 %v3027, %v4058
        %v4187 = vmul.f32 %v3029, %v4059
        %v4188 = vmul.f32 %v3031, %v4060
        %v4189 = vmul.f32 %v3033, %v4061
        %v4190 = vmul.f32 %v3035, %v4062
        %v4191 = vmul.f32 %v3037, %v4063
        %v4192 = vmul.f32 %v3039, %v4064
        %v4193 = vmul.f32 %v3041, %v4065
        %v4194 = vsub.f32 0.0, %v2402
        %v4195 = vsub.f32 0.0, %v2403
        %v4196 = vsub.f32 0.0, %v2404
        %v4197 = vsub.f32 0.0, %v2405
        %v4198 = vsub.f32 0.0, %v2406
        %v4199 = vsub.f32 0.0, %v2407
        %v4200 = vsub.f32 0.0, %v2408
        %v4201 = vsub.f32 0.0, %v2409
        %v4202 = vsub.f32 0.0, %v2410
        %v4203 = vsub.f32 0.0, %v2411
        %v4204 = vsub.f32 0.0, %v2412
        %v4205 = vsub.f32 0.0, %v2413
        %v4206 = vsub.f32 0.0, %v2414
        %v4207 = vsub.f32 0.0, %v2415
        %v4208 = vsub.f32 0.0, %v2416
        %v4209 = vsub.f32 0.0, %v2417
        %v4210 = vsub.f32 0.0, %v2418
        %v4211 = vsub.f32 0.0, %v2419
        %v4212 = vsub.f32 0.0, %v2420
        %v4213 = vsub.f32 0.0, %v2421
        %v4214 = vsub.f32 0.0, %v2422
        %v4215 = vsub.f32 0.0, %v2423
        %v4216 = vsub.f32 0.0, %v2424
        %v4217 = vsub.f32 0.0, %v2425
        %v4218 = vsub.f32 0.0, %v2426
        %v4219 = vsub.f32 0.0, %v2427
        %v4220 = vsub.f32 0.0, %v2428
        %v4221 = vsub.f32 0.0, %v2429
        %v4222 = vsub.f32 0.0, %v2430
        %v4223 = vsub.f32 0.0, %v2431
        %v4224 = vsub.f32 0.0, %v2432
        %v4225 = vsub.f32 0.0, %v2433
        %v4226 = vsub.f32 0.0, %v2434
        %v4227 = vsub.f32 0.0, %v2435
        %v4228 = vsub.f32 0.0, %v2436
        %v4229 = vsub.f32 0.0, %v2437
        %v4230 = vsub.f32 0.0, %v2438
        %v4231 = vsub.f32 0.0, %v2439
        %v4232 = vsub.f32 0.0, %v2440
        %v4233 = vsub.f32 0.0, %v2441
        %v4234 = vsub.f32 0.0, %v2442
        %v4235 = vsub.f32 0.0, %v2443
        %v4236 = vsub.f32 0.0, %v2444
        %v4237 = vsub.f32 0.0, %v2445
        %v4238 = vsub.f32 0.0, %v2446
        %v4239 = vsub.f32 0.0, %v2447
        %v4240 = vsub.f32 0.0, %v2448
        %v4241 = vsub.f32 0.0, %v2449
        %v4242 = vsub.f32 0.0, %v2450
        %v4243 = vsub.f32 0.0, %v2451
        %v4244 = vsub.f32 0.0, %v2452
        %v4245 = vsub.f32 0.0, %v2453
        %v4246 = vsub.f32 0.0, %v2454
        %v4247 = vsub.f32 0.0, %v2455
        %v4248 = vsub.f32 0.0, %v2456
        %v4249 = vsub.f32 0.0, %v2457
        %v4250 = vsub.f32 0.0, %v2458
        %v4251 = vsub.f32 0.0, %v2459
        %v4252 = vsub.f32 0.0, %v2460
        %v4253 = vsub.f32 0.0, %v2461
        %v4254 = vsub.f32 0.0, %v2462
        %v4255 = vsub.f32 0.0, %v2463
        %v4256 = vsub.f32 0.0, %v2464
        %v4257 = vsub.f32 0.0, %v2465
        %v4258 = vsub.f32 0.0, %v2466
        %v4259 = vsub.f32 0.0, %v2467
        %v4260 = vsub.f32 0.0, %v2468
        %v4261 = vsub.f32 0.0, %v2469
        %v4262 = vsub.f32 0.0, %v2470
        %v4263 = vsub.f32 0.0, %v2471
        %v4264 = vsub.f32 0.0, %v2472
        %v4265 = vsub.f32 0.0, %v2473
        %v4266 = vsub.f32 0.0, %v2474
        %v4267 = vsub.f32 0.0, %v2475
        %v4268 = vsub.f32 0.0, %v2476
        %v4269 = vsub.f32 0.0, %v2477
        %v4270 = vsub.f32 0.0, %v2478
        %v4271 = vsub.f32 0.0, %v2479
        %v4272 = vsub.f32 0.0, %v2480
        %v4273 = vsub.f32 0.0, %v2481
        %v4274 = vsub.f32 0.0, %v2482
        %v4275 = vsub.f32 0.0, %v2483
        %v4276 = vsub.f32 0.0, %v2484
        %v4277 = vsub.f32 0.0, %v2485
        %v4278 = vsub.f32 0.0, %v2486
        %v4279 = vsub.f32 0.0, %v2487
        %v4280 = vsub.f32 0.0, %v2488
        %v4281 = vsub.f32 0.0, %v2489
        %v4282 = vsub.f32 0.0, %v2490
        %v4283 = vsub.f32 0.0, %v2491
        %v4284 = vsub.f32 0.0, %v2492
        %v4285 = vsub.f32 0.0, %v2493
        %v4286 = vsub.f32 0.0, %v2494
        %v4287 = vsub.f32 0.0, %v2495
        %v4288 = vsub.f32 0.0, %v2496
        %v4289 = vsub.f32 0.0, %v2497
        %v4290 = vsub.f32 0.0, %v2498
        %v4291 = vsub.f32 0.0, %v2499
        %v4292 = vsub.f32 0.0, %v2500
        %v4293 = vsub.f32 0.0, %v2501
        %v4294 = vsub.f32 0.0, %v2502
        %v4295 = vsub.f32 0.0, %v2503
        %v4296 = vsub.f32 0.0, %v2504
        %v4297 = vsub.f32 0.0, %v2505
        %v4298 = vsub.f32 0.0, %v2506
        %v4299 = vsub.f32 0.0, %v2507
        %v4300 = vsub.f32 0.0, %v2508
        %v4301 = vsub.f32 0.0, %v2509
        %v4302 = vsub.f32 0.0, %v2510
        %v4303 = vsub.f32 0.0, %v2511
        %v4304 = vsub.f32 0.0, %v2512
        %v4305 = vsub.f32 0.0, %v2513
        %v4306 = vsub.f32 0.0, %v2514
        %v4307 = vsub.f32 0.0, %v2515
        %v4308 = vsub.f32 0.0, %v2516
        %v4309 = vsub.f32 0.0, %v2517
        %v4310 = vsub.f32 0.0, %v2518
        %v4311 = vsub.f32 0.0, %v2519
        %v4312 = vsub.f32 0.0, %v2520
        %v4313 = vsub.f32 0.0, %v2521
        %v4314 = vsub.f32 0.0, %v2522
        %v4315 = vsub.f32 0.0, %v2523
        %v4316 = vsub.f32 0.0, %v2524
        %v4317 = vsub.f32 0.0, %v2525
        %v4318 = vsub.f32 0.0, %v2526
        %v4319 = vsub.f32 0.0, %v2527
        %v4320 = vsub.f32 0.0, %v2528
        %v4321 = vsub.f32 0.0, %v2529
        %v4322 = vmul.f32 %v4194, %v2402
        %v4323 = vmul.f32 %v4195, %v2403
        %v4324 = vmul.f32 %v4196, %v2404
        %v4325 = vmul.f32 %v4197, %v2405
        %v4326 = vmul.f32 %v4198, %v2406
        %v4327 = vmul.f32 %v4199, %v2407
        %v4328 = vmul.f32 %v4200, %v2408
        %v4329 = vmul.f32 %v4201, %v2409
        %v4330 = vmul.f32 %v4202, %v2410
        %v4331 = vmul.f32 %v4203, %v2411
        %v4332 = vmul.f32 %v4204, %v2412
        %v4333 = vmul.f32 %v4205, %v2413
        %v4334 = vmul.f32 %v4206, %v2414
        %v4335 = vmul.f32 %v4207, %v2415
        %v4336 = vmul.f32 %v4208, %v2416
        %v4337 = vmul.f32 %v4209, %v2417
        %v4338 = vmul.f32 %v4210, %v2418
        %v4339 = vmul.f32 %v4211, %v2419
        %v4340 = vmul.f32 %v4212, %v2420
        %v4341 = vmul.f32 %v4213, %v2421
        %v4342 = vmul.f32 %v4214, %v2422
        %v4343 = vmul.f32 %v4215, %v2423
        %v4344 = vmul.f32 %v4216, %v2424
        %v4345 = vmul.f32 %v4217, %v2425
        %v4346 = vmul.f32 %v4218, %v2426
        %v4347 = vmul.f32 %v4219, %v2427
        %v4348 = vmul.f32 %v4220, %v2428
        %v4349 = vmul.f32 %v4221, %v2429
        %v4350 = vmul.f32 %v4222, %v2430
        %v4351 = vmul.f32 %v4223, %v2431
        %v4352 = vmul.f32 %v4224, %v2432
        %v4353 = vmul.f32 %v4225, %v2433
        %v4354 = vmul.f32 %v4226, %v2434
        %v4355 = vmul.f32 %v4227, %v2435
        %v4356 = vmul.f32 %v4228, %v2436
        %v4357 = vmul.f32 %v4229, %v2437
        %v4358 = vmul.f32 %v4230, %v2438
        %v4359 = vmul.f32 %v4231, %v2439
        %v4360 = vmul.f32 %v4232, %v2440
        %v4361 = vmul.f32 %v4233, %v2441
        %v4362 = vmul.f32 %v4234, %v2442
        %v4363 = vmul.f32 %v4235, %v2443
        %v4364 = vmul.f32 %v4236, %v2444
        %v4365 = vmul.f32 %v4237, %v2445
        %v4366 = vmul.f32 %v4238, %v2446
        %v4367 = vmul.f32 %v4239, %v2447
        %v4368 = vmul.f32 %v4240, %v2448
        %v4369 = vmul.f32 %v4241, %v2449
        %v4370 = vmul.f32 %v4242, %v2450
        %v4371 = vmul.f32 %v4243, %v2451
        %v4372 = vmul.f32 %v4244, %v2452
        %v4373 = vmul.f32 %v4245, %v2453
        %v4374 = vmul.f32 %v4246, %v2454
        %v4375 = vmul.f32 %v4247, %v2455
        %v4376 = vmul.f32 %v4248, %v2456
        %v4377 = vmul.f32 %v4249, %v2457
        %v4378 = vmul.f32 %v4250, %v2458
        %v4379 = vmul.f32 %v4251, %v2459
        %v4380 = vmul.f32 %v4252, %v2460
        %v4381 = vmul.f32 %v4253, %v2461
        %v4382 = vmul.f32 %v4254, %v2462
        %v4383 = vmul.f32 %v4255, %v2463
        %v4384 = vmul.f32 %v4256, %v2464
        %v4385 = vmul.f32 %v4257, %v2465
        %v4386 = vmul.f32 %v4258, %v2466
        %v4387 = vmul.f32 %v4259, %v2467
        %v4388 = vmul.f32 %v4260, %v2468
        %v4389 = vmul.f32 %v4261, %v2469
        %v4390 = vmul.f32 %v4262, %v2470
        %v4391 = vmul.f32 %v4263, %v2471
        %v4392 = vmul.f32 %v4264, %v2472
        %v4393 = vmul.f32 %v4265, %v2473
        %v4394 = vmul.f32 %v4266, %v2474
        %v4395 = vmul.f32 %v4267, %v2475
        %v4396 = vmul.f32 %v4268, %v2476
        %v4397 = vmul.f32 %v4269, %v2477
        %v4398 = vmul.f32 %v4270, %v2478
        %v4399 = vmul.f32 %v4271, %v2479
        %v4400 = vmul.f32 %v4272, %v2480
        %v4401 = vmul.f32 %v4273, %v2481
        %v4402 = vmul.f32 %v4274, %v2482
        %v4403 = vmul.f32 %v4275, %v2483
        %v4404 = vmul.f32 %v4276, %v2484
        %v4405 = vmul.f32 %v4277, %v2485
        %v4406 = vmul.f32 %v4278, %v2486
        %v4407 = vmul.f32 %v4279, %v2487
        %v4408 = vmul.f32 %v4280, %v2488
        %v4409 = vmul.f32 %v4281, %v2489
        %v4410 = vmul.f32 %v4282, %v2490
        %v4411 = vmul.f32 %v4283, %v2491
        %v4412 = vmul.f32 %v4284, %v2492
        %v4413 = vmul.f32 %v4285, %v2493
        %v4414 = vmul.f32 %v4286, %v2494
        %v4415 = vmul.f32 %v4287, %v2495
        %v4416 = vmul.f32 %v4288, %v2496
        %v4417 = vmul.f32 %v4289, %v2497
        %v4418 = vmul.f32 %v4290, %v2498
        %v4419 = vmul.f32 %v4291, %v2499
        %v4420 = vmul.f32 %v4292, %v2500
        %v4421 = vmul.f32 %v4293, %v2501
        %v4422 = vmul.f32 %v4294, %v2502
        %v4423 = vmul.f32 %v4295, %v2503
        %v4424 = vmul.f32 %v4296, %v2504
        %v4425 = vmul.f32 %v4297, %v2505
        %v4426 = vmul.f32 %v4298, %v2506
        %v4427 = vmul.f32 %v4299, %v2507
        %v4428 = vmul.f32 %v4300, %v2508
        %v4429 = vmul.f32 %v4301, %v2509
        %v4430 = vmul.f32 %v4302, %v2510
        %v4431 = vmul.f32 %v4303, %v2511
        %v4432 = vmul.f32 %v4304, %v2512
        %v4433 = vmul.f32 %v4305, %v2513
        %v4434 = vmul.f32 %v4306, %v2514
        %v4435 = vmul.f32 %v4307, %v2515
        %v4436 = vmul.f32 %v4308, %v2516
        %v4437 = vmul.f32 %v4309, %v2517
        %v4438 = vmul.f32 %v4310, %v2518
        %v4439 = vmul.f32 %v4311, %v2519
        %v4440 = vmul.f32 %v4312, %v2520
        %v4441 = vmul.f32 %v4313, %v2521
        %v4442 = vmul.f32 %v4314, %v2522
        %v4443 = vmul.f32 %v4315, %v2523
        %v4444 = vmul.f32 %v4316, %v2524
        %v4445 = vmul.f32 %v4317, %v2525
        %v4446 = vmul.f32 %v4318, %v2526
        %v4447 = vmul.f32 %v4319, %v2527
        %v4448 = vmul.f32 %v4320, %v2528
        %v4449 = vmul.f32 %v4321, %v2529
        %v4450 = vmul.f32 %v4322, 1.442695
        %v4451 = vpow.pop %v4450
        %v4452 = vmul.f32 %v4323, 1.442695
        %v4453 = vpow.pop %v4452
        %v4454 = vmul.f32 %v4324, 1.442695
        %v4455 = vpow.pop %v4454
        %v4456 = vmul.f32 %v4325, 1.442695
        %v4457 = vpow.pop %v4456
        %v4458 = vmul.f32 %v4326, 1.442695
        %v4459 = vpow.pop %v4458
        %v4460 = vmul.f32 %v4327, 1.442695
        %v4461 = vpow.pop %v4460
        %v4462 = vmul.f32 %v4328, 1.442695
        %v4463 = vpow.pop %v4462
        %v4464 = vmul.f32 %v4329, 1.442695
        %v4465 = vpow.pop %v4464
        %v4466 = vmul.f32 %v4330, 1.442695
        %v4467 = vpow.pop %v4466
        %v4468 = vmul.f32 %v4331, 1.442695
        %v4469 = vpow.pop %v4468
        %v4470 = vmul.f32 %v4332, 1.442695
        %v4471 = vpow.pop %v4470
        %v4472 = vmul.f32 %v4333, 1.442695
        %v4473 = vpow.pop %v4472
        %v4474 = vmul.f32 %v4334, 1.442695
        %v4475 = vpow.pop %v4474
        %v4476 = vmul.f32 %v4335, 1.442695
        %v4477 = vpow.pop %v4476
        %v4478 = vmul.f32 %v4336, 1.442695
        %v4479 = vpow.pop %v4478
        %v4480 = vmul.f32 %v4337, 1.442695
        %v4481 = vpow.pop %v4480
        %v4482 = vmul.f32 %v4338, 1.442695
        %v4483 = vpow.pop %v4482
        %v4484 = vmul.f32 %v4339, 1.442695
        %v4485 = vpow.pop %v4484
        %v4486 = vmul.f32 %v4340, 1.442695
        %v4487 = vpow.pop %v4486
        %v4488 = vmul.f32 %v4341, 1.442695
        %v4489 = vpow.pop %v4488
        %v4490 = vmul.f32 %v4342, 1.442695
        %v4491 = vpow.pop %v4490
        %v4492 = vmul.f32 %v4343, 1.442695
        %v4493 = vpow.pop %v4492
        %v4494 = vmul.f32 %v4344, 1.442695
        %v4495 = vpow.pop %v4494
        %v4496 = vmul.f32 %v4345, 1.442695
        %v4497 = vpow.pop %v4496
        %v4498 = vmul.f32 %v4346, 1.442695
        %v4499 = vpow.pop %v4498
        %v4500 = vmul.f32 %v4347, 1.442695
        %v4501 = vpow.pop %v4500
        %v4502 = vmul.f32 %v4348, 1.442695
        %v4503 = vpow.pop %v4502
        %v4504 = vmul.f32 %v4349, 1.442695
        %v4505 = vpow.pop %v4504
        %v4506 = vmul.f32 %v4350, 1.442695
        %v4507 = vpow.pop %v4506
        %v4508 = vmul.f32 %v4351, 1.442695
        %v4509 = vpow.pop %v4508
        %v4510 = vmul.f32 %v4352, 1.442695
        %v4511 = vpow.pop %v4510
        %v4512 = vmul.f32 %v4353, 1.442695
        %v4513 = vpow.pop %v4512
        %v4514 = vmul.f32 %v4354, 1.442695
        %v4515 = vpow.pop %v4514
        %v4516 = vmul.f32 %v4355, 1.442695
        %v4517 = vpow.pop %v4516
        %v4518 = vmul.f32 %v4356, 1.442695
        %v4519 = vpow.pop %v4518
        %v4520 = vmul.f32 %v4357, 1.442695
        %v4521 = vpow.pop %v4520
        %v4522 = vmul.f32 %v4358, 1.442695
        %v4523 = vpow.pop %v4522
        %v4524 = vmul.f32 %v4359, 1.442695
        %v4525 = vpow.pop %v4524
        %v4526 = vmul.f32 %v4360, 1.442695
        %v4527 = vpow.pop %v4526
        %v4528 = vmul.f32 %v4361, 1.442695
        %v4529 = vpow.pop %v4528
        %v4530 = vmul.f32 %v4362, 1.442695
        %v4531 = vpow.pop %v4530
        %v4532 = vmul.f32 %v4363, 1.442695
        %v4533 = vpow.pop %v4532
        %v4534 = vmul.f32 %v4364, 1.442695
        %v4535 = vpow.pop %v4534
        %v4536 = vmul.f32 %v4365, 1.442695
        %v4537 = vpow.pop %v4536
        %v4538 = vmul.f32 %v4366, 1.442695
        %v4539 = vpow.pop %v4538
        %v4540 = vmul.f32 %v4367, 1.442695
        %v4541 = vpow.pop %v4540
        %v4542 = vmul.f32 %v4368, 1.442695
        %v4543 = vpow.pop %v4542
        %v4544 = vmul.f32 %v4369, 1.442695
        %v4545 = vpow.pop %v4544
        %v4546 = vmul.f32 %v4370, 1.442695
        %v4547 = vpow.pop %v4546
        %v4548 = vmul.f32 %v4371, 1.442695
        %v4549 = vpow.pop %v4548
        %v4550 = vmul.f32 %v4372, 1.442695
        %v4551 = vpow.pop %v4550
        %v4552 = vmul.f32 %v4373, 1.442695
        %v4553 = vpow.pop %v4552
        %v4554 = vmul.f32 %v4374, 1.442695
        %v4555 = vpow.pop %v4554
        %v4556 = vmul.f32 %v4375, 1.442695
        %v4557 = vpow.pop %v4556
        %v4558 = vmul.f32 %v4376, 1.442695
        %v4559 = vpow.pop %v4558
        %v4560 = vmul.f32 %v4377, 1.442695
        %v4561 = vpow.pop %v4560
        %v4562 = vmul.f32 %v4378, 1.442695
        %v4563 = vpow.pop %v4562
        %v4564 = vmul.f32 %v4379, 1.442695
        %v4565 = vpow.pop %v4564
        %v4566 = vmul.f32 %v4380, 1.442695
        %v4567 = vpow.pop %v4566
        %v4568 = vmul.f32 %v4381, 1.442695
        %v4569 = vpow.pop %v4568
        %v4570 = vmul.f32 %v4382, 1.442695
        %v4571 = vpow.pop %v4570
        %v4572 = vmul.f32 %v4383, 1.442695
        %v4573 = vpow.pop %v4572
        %v4574 = vmul.f32 %v4384, 1.442695
        %v4575 = vpow.pop %v4574
        %v4576 = vmul.f32 %v4385, 1.442695
        %v4577 = vpow.pop %v4576
        %v4578 = vmul.f32 %v4386, 1.442695
        %v4579 = vpow.pop %v4578
        %v4580 = vmul.f32 %v4387, 1.442695
        %v4581 = vpow.pop %v4580
        %v4582 = vmul.f32 %v4388, 1.442695
        %v4583 = vpow.pop %v4582
        %v4584 = vmul.f32 %v4389, 1.442695
        %v4585 = vpow.pop %v4584
        %v4586 = vmul.f32 %v4390, 1.442695
        %v4587 = vpow.pop %v4586
        %v4588 = vmul.f32 %v4391, 1.442695
        %v4589 = vpow.pop %v4588
        %v4590 = vmul.f32 %v4392, 1.442695
        %v4591 = vpow.pop %v4590
        %v4592 = vmul.f32 %v4393, 1.442695
        %v4593 = vpow.pop %v4592
        %v4594 = vmul.f32 %v4394, 1.442695
        %v4595 = vpow.pop %v4594
        %v4596 = vmul.f32 %v4395, 1.442695
        %v4597 = vpow.pop %v4596
        %v4598 = vmul.f32 %v4396, 1.442695
        %v4599 = vpow.pop %v4598
        %v4600 = vmul.f32 %v4397, 1.442695
        %v4601 = vpow.pop %v4600
        %v4602 = vmul.f32 %v4398, 1.442695
        %v4603 = vpow.pop %v4602
        %v4604 = vmul.f32 %v4399, 1.442695
        %v4605 = vpow.pop %v4604
        %v4606 = vmul.f32 %v4400, 1.442695
        %v4607 = vpow.pop %v4606
        %v4608 = vmul.f32 %v4401, 1.442695
        %v4609 = vpow.pop %v4608
        %v4610 = vmul.f32 %v4402, 1.442695
        %v4611 = vpow.pop %v4610
        %v4612 = vmul.f32 %v4403, 1.442695
        %v4613 = vpow.pop %v4612
        %v4614 = vmul.f32 %v4404, 1.442695
        %v4615 = vpow.pop %v4614
        %v4616 = vmul.f32 %v4405, 1.442695
        %v4617 = vpow.pop %v4616
        %v4618 = vmul.f32 %v4406, 1.442695
        %v4619 = vpow.pop %v4618
        %v4620 = vmul.f32 %v4407, 1.442695
        %v4621 = vpow.pop %v4620
        %v4622 = vmul.f32 %v4408, 1.442695
        %v4623 = vpow.pop %v4622
        %v4624 = vmul.f32 %v4409, 1.442695
        %v4625 = vpow.pop %v4624
        %v4626 = vmul.f32 %v4410, 1.442695
        %v4627 = vpow.pop %v4626
        %v4628 = vmul.f32 %v4411, 1.442695
        %v4629 = vpow.pop %v4628
        %v4630 = vmul.f32 %v4412, 1.442695
        %v4631 = vpow.pop %v4630
        %v4632 = vmul.f32 %v4413, 1.442695
        %v4633 = vpow.pop %v4632
        %v4634 = vmul.f32 %v4414, 1.442695
        %v4635 = vpow.pop %v4634
        %v4636 = vmul.f32 %v4415, 1.442695
        %v4637 = vpow.pop %v4636
        %v4638 = vmul.f32 %v4416, 1.442695
        %v4639 = vpow.pop %v4638
        %v4640 = vmul.f32 %v4417, 1.442695
        %v4641 = vpow.pop %v4640
        %v4642 = vmul.f32 %v4418, 1.442695
        %v4643 = vpow.pop %v4642
        %v4644 = vmul.f32 %v4419, 1.442695
        %v4645 = vpow.pop %v4644
        %v4646 = vmul.f32 %v4420, 1.442695
        %v4647 = vpow.pop %v4646
        %v4648 = vmul.f32 %v4421, 1.442695
        %v4649 = vpow.pop %v4648
        %v4650 = vmul.f32 %v4422, 1.442695
        %v4651 = vpow.pop %v4650
        %v4652 = vmul.f32 %v4423, 1.442695
        %v4653 = vpow.pop %v4652
        %v4654 = vmul.f32 %v4424, 1.442695
        %v4655 = vpow.pop %v4654
        %v4656 = vmul.f32 %v4425, 1.442695
        %v4657 = vpow.pop %v4656
        %v4658 = vmul.f32 %v4426, 1.442695
        %v4659 = vpow.pop %v4658
        %v4660 = vmul.f32 %v4427, 1.442695
        %v4661 = vpow.pop %v4660
        %v4662 = vmul.f32 %v4428, 1.442695
        %v4663 = vpow.pop %v4662
        %v4664 = vmul.f32 %v4429, 1.442695
        %v4665 = vpow.pop %v4664
        %v4666 = vmul.f32 %v4430, 1.442695
        %v4667 = vpow.pop %v4666
        %v4668 = vmul.f32 %v4431, 1.442695
        %v4669 = vpow.pop %v4668
        %v4670 = vmul.f32 %v4432, 1.442695
        %v4671 = vpow.pop %v4670
        %v4672 = vmul.f32 %v4433, 1.442695
        %v4673 = vpow.pop %v4672
        %v4674 = vmul.f32 %v4434, 1.442695
        %v4675 = vpow.pop %v4674
        %v4676 = vmul.f32 %v4435, 1.442695
        %v4677 = vpow.pop %v4676
        %v4678 = vmul.f32 %v4436, 1.442695
        %v4679 = vpow.pop %v4678
        %v4680 = vmul.f32 %v4437, 1.442695
        %v4681 = vpow.pop %v4680
        %v4682 = vmul.f32 %v4438, 1.442695
        %v4683 = vpow.pop %v4682
        %v4684 = vmul.f32 %v4439, 1.442695
        %v4685 = vpow.pop %v4684
        %v4686 = vmul.f32 %v4440, 1.442695
        %v4687 = vpow.pop %v4686
        %v4688 = vmul.f32 %v4441, 1.442695
        %v4689 = vpow.pop %v4688
        %v4690 = vmul.f32 %v4442, 1.442695
        %v4691 = vpow.pop %v4690
        %v4692 = vmul.f32 %v4443, 1.442695
        %v4693 = vpow.pop %v4692
        %v4694 = vmul.f32 %v4444, 1.442695
        %v4695 = vpow.pop %v4694
        %v4696 = vmul.f32 %v4445, 1.442695
        %v4697 = vpow.pop %v4696
        %v4698 = vmul.f32 %v4446, 1.442695
        %v4699 = vpow.pop %v4698
        %v4700 = vmul.f32 %v4447, 1.442695
        %v4701 = vpow.pop %v4700
        %v4702 = vmul.f32 %v4448, 1.442695
        %v4703 = vpow.pop %v4702
        %v4704 = vmul.f32 %v4449, 1.442695
        %v4705 = vpow.pop %v4704
        %v4706 = vmul.f32 %v4066, %v4451
        %v4707 = vmul.f32 %v4067, %v4453
        %v4708 = vmul.f32 %v4068, %v4455
        %v4709 = vmul.f32 %v4069, %v4457
        %v4710 = vmul.f32 %v4070, %v4459
        %v4711 = vmul.f32 %v4071, %v4461
        %v4712 = vmul.f32 %v4072, %v4463
        %v4713 = vmul.f32 %v4073, %v4465
        %v4714 = vmul.f32 %v4074, %v4467
        %v4715 = vmul.f32 %v4075, %v4469
        %v4716 = vmul.f32 %v4076, %v4471
        %v4717 = vmul.f32 %v4077, %v4473
        %v4718 = vmul.f32 %v4078, %v4475
        %v4719 = vmul.f32 %v4079, %v4477
        %v4720 = vmul.f32 %v4080, %v4479
        %v4721 = vmul.f32 %v4081, %v4481
        %v4722 = vmul.f32 %v4082, %v4483
        %v4723 = vmul.f32 %v4083, %v4485
        %v4724 = vmul.f32 %v4084, %v4487
        %v4725 = vmul.f32 %v4085, %v4489
        %v4726 = vmul.f32 %v4086, %v4491
        %v4727 = vmul.f32 %v4087, %v4493
        %v4728 = vmul.f32 %v4088, %v4495
        %v4729 = vmul.f32 %v4089, %v4497
        %v4730 = vmul.f32 %v4090, %v4499
        %v4731 = vmul.f32 %v4091, %v4501
        %v4732 = vmul.f32 %v4092, %v4503
        %v4733 = vmul.f32 %v4093, %v4505
        %v4734 = vmul.f32 %v4094, %v4507
        %v4735 = vmul.f32 %v4095, %v4509
        %v4736 = vmul.f32 %v4096, %v4511
        %v4737 = vmul.f32 %v4097, %v4513
        %v4738 = vmul.f32 %v4098, %v4515
        %v4739 = vmul.f32 %v4099, %v4517
        %v4740 = vmul.f32 %v4100, %v4519
        %v4741 = vmul.f32 %v4101, %v4521
        %v4742 = vmul.f32 %v4102, %v4523
        %v4743 = vmul.f32 %v4103, %v4525
        %v4744 = vmul.f32 %v4104, %v4527
        %v4745 = vmul.f32 %v4105, %v4529
        %v4746 = vmul.f32 %v4106, %v4531
        %v4747 = vmul.f32 %v4107, %v4533
        %v4748 = vmul.f32 %v4108, %v4535
        %v4749 = vmul.f32 %v4109, %v4537
        %v4750 = vmul.f32 %v4110, %v4539
        %v4751 = vmul.f32 %v4111, %v4541
        %v4752 = vmul.f32 %v4112, %v4543
        %v4753 = vmul.f32 %v4113, %v4545
        %v4754 = vmul.f32 %v4114, %v4547
        %v4755 = vmul.f32 %v4115, %v4549
        %v4756 = vmul.f32 %v4116, %v4551
        %v4757 = vmul.f32 %v4117, %v4553
        %v4758 = vmul.f32 %v4118, %v4555
        %v4759 = vmul.f32 %v4119, %v4557
        %v4760 = vmul.f32 %v4120, %v4559
        %v4761 = vmul.f32 %v4121, %v4561
        %v4762 = vmul.f32 %v4122, %v4563
        %v4763 = vmul.f32 %v4123, %v4565
        %v4764 = vmul.f32 %v4124, %v4567
        %v4765 = vmul.f32 %v4125, %v4569
        %v4766 = vmul.f32 %v4126, %v4571
        %v4767 = vmul.f32 %v4127, %v4573
        %v4768 = vmul.f32 %v4128, %v4575
        %v4769 = vmul.f32 %v4129, %v4577
        %v4770 = vmul.f32 %v4130, %v4579
        %v4771 = vmul.f32 %v4131, %v4581
        %v4772 = vmul.f32 %v4132, %v4583
        %v4773 = vmul.f32 %v4133, %v4585
        %v4774 = vmul.f32 %v4134, %v4587
        %v4775 = vmul.f32 %v4135, %v4589
        %v4776 = vmul.f32 %v4136, %v4591
        %v4777 = vmul.f32 %v4137, %v4593
        %v4778 = vmul.f32 %v4138, %v4595
        %v4779 = vmul.f32 %v4139, %v4597
        %v4780 = vmul.f32 %v4140, %v4599
        %v4781 = vmul.f32 %v4141, %v4601
        %v4782 = vmul.f32 %v4142, %v4603
        %v4783 = vmul.f32 %v4143, %v4605
        %v4784 = vmul.f32 %v4144, %v4607
        %v4785 = vmul.f32 %v4145, %v4609
        %v4786 = vmul.f32 %v4146, %v4611
        %v4787 = vmul.f32 %v4147, %v4613
        %v4788 = vmul.f32 %v4148, %v4615
        %v4789 = vmul.f32 %v4149, %v4617
        %v4790 = vmul.f32 %v4150, %v4619
        %v4791 = vmul.f32 %v4151, %v4621
        %v4792 = vmul.f32 %v4152, %v4623
        %v4793 = vmul.f32 %v4153, %v4625
        %v4794 = vmul.f32 %v4154, %v4627
        %v4795 = vmul.f32 %v4155, %v4629
        %v4796 = vmul.f32 %v4156, %v4631
        %v4797 = vmul.f32 %v4157, %v4633
        %v4798 = vmul.f32 %v4158, %v4635
        %v4799 = vmul.f32 %v4159, %v4637
        %v4800 = vmul.f32 %v4160, %v4639
        %v4801 = vmul.f32 %v4161, %v4641
        %v4802 = vmul.f32 %v4162, %v4643
        %v4803 = vmul.f32 %v4163, %v4645
        %v4804 = vmul.f32 %v4164, %v4647
        %v4805 = vmul.f32 %v4165, %v4649
        %v4806 = vmul.f32 %v4166, %v4651
        %v4807 = vmul.f32 %v4167, %v4653
        %v4808 = vmul.f32 %v4168, %v4655
        %v4809 = vmul.f32 %v4169, %v4657
        %v4810 = vmul.f32 %v4170, %v4659
        %v4811 = vmul.f32 %v4171, %v4661
        %v4812 = vmul.f32 %v4172, %v4663
        %v4813 = vmul.f32 %v4173, %v4665
        %v4814 = vmul.f32 %v4174, %v4667
        %v4815 = vmul.f32 %v4175, %v4669
        %v4816 = vmul.f32 %v4176, %v4671
        %v4817 = vmul.f32 %v4177, %v4673
        %v4818 = vmul.f32 %v4178, %v4675
        %v4819 = vmul.f32 %v4179, %v4677
        %v4820 = vmul.f32 %v4180, %v4679
        %v4821 = vmul.f32 %v4181, %v4681
        %v4822 = vmul.f32 %v4182, %v4683
        %v4823 = vmul.f32 %v4183, %v4685
        %v4824 = vmul.f32 %v4184, %v4687
        %v4825 = vmul.f32 %v4185, %v4689
        %v4826 = vmul.f32 %v4186, %v4691
        %v4827 = vmul.f32 %v4187, %v4693
        %v4828 = vmul.f32 %v4188, %v4695
        %v4829 = vmul.f32 %v4189, %v4697
        %v4830 = vmul.f32 %v4190, %v4699
        %v4831 = vmul.f32 %v4191, %v4701
        %v4832 = vmul.f32 %v4192, %v4703
        %v4833 = vmul.f32 %v4193, %v4705
        %v4834 = vsub.f32 1.0, %v4706
        %v4835 = vsub.f32 1.0, %v4707
        %v4836 = vsub.f32 1.0, %v4708
        %v4837 = vsub.f32 1.0, %v4709
        %v4838 = vsub.f32 1.0, %v4710
        %v4839 = vsub.f32 1.0, %v4711
        %v4840 = vsub.f32 1.0, %v4712
        %v4841 = vsub.f32 1.0, %v4713
        %v4842 = vsub.f32 1.0, %v4714
        %v4843 = vsub.f32 1.0, %v4715
        %v4844 = vsub.f32 1.0, %v4716
        %v4845 = vsub.f32 1.0, %v4717
        %v4846 = vsub.f32 1.0, %v4718
        %v4847 = vsub.f32 1.0, %v4719
        %v4848 = vsub.f32 1.0, %v4720
        %v4849 = vsub.f32 1.0, %v4721
        %v4850 = vsub.f32 1.0, %v4722
        %v4851 = vsub.f32 1.0, %v4723
        %v4852 = vsub.f32 1.0, %v4724
        %v4853 = vsub.f32 1.0, %v4725
        %v4854 = vsub.f32 1.0, %v4726
        %v4855 = vsub.f32 1.0, %v4727
        %v4856 = vsub.f32 1.0, %v4728
        %v4857 = vsub.f32 1.0, %v4729
        %v4858 = vsub.f32 1.0, %v4730
        %v4859 = vsub.f32 1.0, %v4731
        %v4860 = vsub.f32 1.0, %v4732
        %v4861 = vsub.f32 1.0, %v4733
        %v4862 = vsub.f32 1.0, %v4734
        %v4863 = vsub.f32 1.0, %v4735
        %v4864 = vsub.f32 1.0, %v4736
        %v4865 = vsub.f32 1.0, %v4737
        %v4866 = vsub.f32 1.0, %v4738
        %v4867 = vsub.f32 1.0, %v4739
        %v4868 = vsub.f32 1.0, %v4740
        %v4869 = vsub.f32 1.0, %v4741
        %v4870 = vsub.f32 1.0, %v4742
        %v4871 = vsub.f32 1.0, %v4743
        %v4872 = vsub.f32 1.0, %v4744
        %v4873 = vsub.f32 1.0, %v4745
        %v4874 = vsub.f32 1.0, %v4746
        %v4875 = vsub.f32 1.0, %v4747
        %v4876 = vsub.f32 1.0, %v4748
        %v4877 = vsub.f32 1.0, %v4749
        %v4878 = vsub.f32 1.0, %v4750
        %v4879 = vsub.f32 1.0, %v4751
        %v4880 = vsub.f32 1.0, %v4752
        %v4881 = vsub.f32 1.0, %v4753
        %v4882 = vsub.f32 1.0, %v4754
        %v4883 = vsub.f32 1.0, %v4755
        %v4884 = vsub.f32 1.0, %v4756
        %v4885 = vsub.f32 1.0, %v4757
        %v4886 = vsub.f32 1.0, %v4758
        %v4887 = vsub.f32 1.0, %v4759
        %v4888 = vsub.f32 1.0, %v4760
        %v4889 = vsub.f32 1.0, %v4761
        %v4890 = vsub.f32 1.0, %v4762
        %v4891 = vsub.f32 1.0, %v4763
        %v4892 = vsub.f32 1.0, %v4764
        %v4893 = vsub.f32 1.0, %v4765
        %v4894 = vsub.f32 1.0, %v4766
        %v4895 = vsub.f32 1.0, %v4767
        %v4896 = vsub.f32 1.0, %v4768
        %v4897 = vsub.f32 1.0, %v4769
        %v4898 = vsub.f32 1.0, %v4770
        %v4899 = vsub.f32 1.0, %v4771
        %v4900 = vsub.f32 1.0, %v4772
        %v4901 = vsub.f32 1.0, %v4773
        %v4902 = vsub.f32 1.0, %v4774
        %v4903 = vsub.f32 1.0, %v4775
        %v4904 = vsub.f32 1.0, %v4776
        %v4905 = vsub.f32 1.0, %v4777
        %v4906 = vsub.f32 1.0, %v4778
        %v4907 = vsub.f32 1.0, %v4779
        %v4908 = vsub.f32 1.0, %v4780
        %v4909 = vsub.f32 1.0, %v4781
        %v4910 = vsub.f32 1.0, %v4782
        %v4911 = vsub.f32 1.0, %v4783
        %v4912 = vsub.f32 1.0, %v4784
        %v4913 = vsub.f32 1.0, %v4785
        %v4914 = vsub.f32 1.0, %v4786
        %v4915 = vsub.f32 1.0, %v4787
        %v4916 = vsub.f32 1.0, %v4788
        %v4917 = vsub.f32 1.0, %v4789
        %v4918 = vsub.f32 1.0, %v4790
        %v4919 = vsub.f32 1.0, %v4791
        %v4920 = vsub.f32 1.0, %v4792
        %v4921 = vsub.f32 1.0, %v4793
        %v4922 = vsub.f32 1.0, %v4794
        %v4923 = vsub.f32 1.0, %v4795
        %v4924 = vsub.f32 1.0, %v4796
        %v4925 = vsub.f32 1.0, %v4797
        %v4926 = vsub.f32 1.0, %v4798
        %v4927 = vsub.f32 1.0, %v4799
        %v4928 = vsub.f32 1.0, %v4800
        %v4929 = vsub.f32 1.0, %v4801
        %v4930 = vsub.f32 1.0, %v4802
        %v4931 = vsub.f32 1.0, %v4803
        %v4932 = vsub.f32 1.0, %v4804
        %v4933 = vsub.f32 1.0, %v4805
        %v4934 = vsub.f32 1.0, %v4806
        %v4935 = vsub.f32 1.0, %v4807
        %v4936 = vsub.f32 1.0, %v4808
        %v4937 = vsub.f32 1.0, %v4809
        %v4938 = vsub.f32 1.0, %v4810
        %v4939 = vsub.f32 1.0, %v4811
        %v4940 = vsub.f32 1.0, %v4812
        %v4941 = vsub.f32 1.0, %v4813
        %v4942 = vsub.f32 1.0, %v4814
        %v4943 = vsub.f32 1.0, %v4815
        %v4944 = vsub.f32 1.0, %v4816
        %v4945 = vsub.f32 1.0, %v4817
        %v4946 = vsub.f32 1.0, %v4818
        %v4947 = vsub.f32 1.0, %v4819
        %v4948 = vsub.f32 1.0, %v4820
        %v4949 = vsub.f32 1.0, %v4821
        %v4950 = vsub.f32 1.0, %v4822
        %v4951 = vsub.f32 1.0, %v4823
        %v4952 = vsub.f32 1.0, %v4824
        %v4953 = vsub.f32 1.0, %v4825
        %v4954 = vsub.f32 1.0, %v4826
        %v4955 = vsub.f32 1.0, %v4827
        %v4956 = vsub.f32 1.0, %v4828
        %v4957 = vsub.f32 1.0, %v4829
        %v4958 = vsub.f32 1.0, %v4830
        %v4959 = vsub.f32 1.0, %v4831
        %v4960 = vsub.f32 1.0, %v4832
        %v4961 = vsub.f32 1.0, %v4833
        %v4962 = vmul.f32 %v2274, %v4834
        %v4963 = vmul.f32 %v2275, %v4835
        %v4964 = vmul.f32 %v2276, %v4836
        %v4965 = vmul.f32 %v2277, %v4837
        %v4966 = vmul.f32 %v2278, %v4838
        %v4967 = vmul.f32 %v2279, %v4839
        %v4968 = vmul.f32 %v2280, %v4840
        %v4969 = vmul.f32 %v2281, %v4841
        %v4970 = vmul.f32 %v2282, %v4842
        %v4971 = vmul.f32 %v2283, %v4843
        %v4972 = vmul.f32 %v2284, %v4844
        %v4973 = vmul.f32 %v2285, %v4845
        %v4974 = vmul.f32 %v2286, %v4846
        %v4975 = vmul.f32 %v2287, %v4847
        %v4976 = vmul.f32 %v2288, %v4848
        %v4977 = vmul.f32 %v2289, %v4849
        %v4978 = vmul.f32 %v2290, %v4850
        %v4979 = vmul.f32 %v2291, %v4851
        %v4980 = vmul.f32 %v2292, %v4852
        %v4981 = vmul.f32 %v2293, %v4853
        %v4982 = vmul.f32 %v2294, %v4854
        %v4983 = vmul.f32 %v2295, %v4855
        %v4984 = vmul.f32 %v2296, %v4856
        %v4985 = vmul.f32 %v2297, %v4857
        %v4986 = vmul.f32 %v2298, %v4858
        %v4987 = vmul.f32 %v2299, %v4859
        %v4988 = vmul.f32 %v2300, %v4860
        %v4989 = vmul.f32 %v2301, %v4861
        %v4990 = vmul.f32 %v2302, %v4862
        %v4991 = vmul.f32 %v2303, %v4863
        %v4992 = vmul.f32 %v2304, %v4864
        %v4993 = vmul.f32 %v2305, %v4865
        %v4994 = vmul.f32 %v2306, %v4866
        %v4995 = vmul.f32 %v2307, %v4867
        %v4996 = vmul.f32 %v2308, %v4868
        %v4997 = vmul.f32 %v2309, %v4869
        %v4998 = vmul.f32 %v2310, %v4870
        %v4999 = vmul.f32 %v2311, %v4871
        %v5000 = vmul.f32 %v2312, %v4872
        %v5001 = vmul.f32 %v2313, %v4873
        %v5002 = vmul.f32 %v2314, %v4874
        %v5003 = vmul.f32 %v2315, %v4875
        %v5004 = vmul.f32 %v2316, %v4876
        %v5005 = vmul.f32 %v2317, %v4877
        %v5006 = vmul.f32 %v2318, %v4878
        %v5007 = vmul.f32 %v2319, %v4879
        %v5008 = vmul.f32 %v2320, %v4880
        %v5009 = vmul.f32 %v2321, %v4881
        %v5010 = vmul.f32 %v2322, %v4882
        %v5011 = vmul.f32 %v2323, %v4883
        %v5012 = vmul.f32 %v2324, %v4884
        %v5013 = vmul.f32 %v2325, %v4885
        %v5014 = vmul.f32 %v2326, %v4886
        %v5015 = vmul.f32 %v2327, %v4887
        %v5016 = vmul.f32 %v2328, %v4888
        %v5017 = vmul.f32 %v2329, %v4889
        %v5018 = vmul.f32 %v2330, %v4890
        %v5019 = vmul.f32 %v2331, %v4891
        %v5020 = vmul.f32 %v2332, %v4892
        %v5021 = vmul.f32 %v2333, %v4893
        %v5022 = vmul.f32 %v2334, %v4894
        %v5023 = vmul.f32 %v2335, %v4895
        %v5024 = vmul.f32 %v2336, %v4896
        %v5025 = vmul.f32 %v2337, %v4897
        %v5026 = vmul.f32 %v2338, %v4898
        %v5027 = vmul.f32 %v2339, %v4899
        %v5028 = vmul.f32 %v2340, %v4900
        %v5029 = vmul.f32 %v2341, %v4901
        %v5030 = vmul.f32 %v2342, %v4902
        %v5031 = vmul.f32 %v2343, %v4903
        %v5032 = vmul.f32 %v2344, %v4904
        %v5033 = vmul.f32 %v2345, %v4905
        %v5034 = vmul.f32 %v2346, %v4906
        %v5035 = vmul.f32 %v2347, %v4907
        %v5036 = vmul.f32 %v2348, %v4908
        %v5037 = vmul.f32 %v2349, %v4909
        %v5038 = vmul.f32 %v2350, %v4910
        %v5039 = vmul.f32 %v2351, %v4911
        %v5040 = vmul.f32 %v2352, %v4912
        %v5041 = vmul.f32 %v2353, %v4913
        %v5042 = vmul.f32 %v2354, %v4914
        %v5043 = vmul.f32 %v2355, %v4915
        %v5044 = vmul.f32 %v2356, %v4916
        %v5045 = vmul.f32 %v2357, %v4917
        %v5046 = vmul.f32 %v2358, %v4918
        %v5047 = vmul.f32 %v2359, %v4919
        %v5048 = vmul.f32 %v2360, %v4920
        %v5049 = vmul.f32 %v2361, %v4921
        %v5050 = vmul.f32 %v2362, %v4922
        %v5051 = vmul.f32 %v2363, %v4923
        %v5052 = vmul.f32 %v2364, %v4924
        %v5053 = vmul.f32 %v2365, %v4925
        %v5054 = vmul.f32 %v2366, %v4926
        %v5055 = vmul.f32 %v2367, %v4927
        %v5056 = vmul.f32 %v2368, %v4928
        %v5057 = vmul.f32 %v2369, %v4929
        %v5058 = vmul.f32 %v2370, %v4930
        %v5059 = vmul.f32 %v2371, %v4931
        %v5060 = vmul.f32 %v2372, %v4932
        %v5061 = vmul.f32 %v2373, %v4933
        %v5062 = vmul.f32 %v2374, %v4934
        %v5063 = vmul.f32 %v2375, %v4935
        %v5064 = vmul.f32 %v2376, %v4936
        %v5065 = vmul.f32 %v2377, %v4937
        %v5066 = vmul.f32 %v2378, %v4938
        %v5067 = vmul.f32 %v2379, %v4939
        %v5068 = vmul.f32 %v2380, %v4940
        %v5069 = vmul.f32 %v2381, %v4941
        %v5070 = vmul.f32 %v2382, %v4942
        %v5071 = vmul.f32 %v2383, %v4943
        %v5072 = vmul.f32 %v2384, %v4944
        %v5073 = vmul.f32 %v2385, %v4945
        %v5074 = vmul.f32 %v2386, %v4946
        %v5075 = vmul.f32 %v2387, %v4947
        %v5076 = vmul.f32 %v2388, %v4948
        %v5077 = vmul.f32 %v2389, %v4949
        %v5078 = vmul.f32 %v2390, %v4950
        %v5079 = vmul.f32 %v2391, %v4951
        %v5080 = vmul.f32 %v2392, %v4952
        %v5081 = vmul.f32 %v2393, %v4953
        %v5082 = vmul.f32 %v2394, %v4954
        %v5083 = vmul.f32 %v2395, %v4955
        %v5084 = vmul.f32 %v2396, %v4956
        %v5085 = vmul.f32 %v2397, %v4957
        %v5086 = vmul.f32 %v2398, %v4958
        %v5087 = vmul.f32 %v2399, %v4959
        %v5088 = vmul.f32 %v2400, %v4960
        %v5089 = vmul.f32 %v2401, %v4961
        %v5090 = vadd.f32 %v4962, 1.0
        %v5091 = vadd.f32 %v4963, 1.0
        %v5092 = vadd.f32 %v4964, 1.0
        %v5093 = vadd.f32 %v4965, 1.0
        %v5094 = vadd.f32 %v4966, 1.0
        %v5095 = vadd.f32 %v4967, 1.0
        %v5096 = vadd.f32 %v4968, 1.0
        %v5097 = vadd.f32 %v4969, 1.0
        %v5098 = vadd.f32 %v4970, 1.0
        %v5099 = vadd.f32 %v4971, 1.0
        %v5100 = vadd.f32 %v4972, 1.0
        %v5101 = vadd.f32 %v4973, 1.0
        %v5102 = vadd.f32 %v4974, 1.0
        %v5103 = vadd.f32 %v4975, 1.0
        %v5104 = vadd.f32 %v4976, 1.0
        %v5105 = vadd.f32 %v4977, 1.0
        %v5106 = vadd.f32 %v4978, 1.0
        %v5107 = vadd.f32 %v4979, 1.0
        %v5108 = vadd.f32 %v4980, 1.0
        %v5109 = vadd.f32 %v4981, 1.0
        %v5110 = vadd.f32 %v4982, 1.0
        %v5111 = vadd.f32 %v4983, 1.0
        %v5112 = vadd.f32 %v4984, 1.0
        %v5113 = vadd.f32 %v4985, 1.0
        %v5114 = vadd.f32 %v4986, 1.0
        %v5115 = vadd.f32 %v4987, 1.0
        %v5116 = vadd.f32 %v4988, 1.0
        %v5117 = vadd.f32 %v4989, 1.0
        %v5118 = vadd.f32 %v4990, 1.0
        %v5119 = vadd.f32 %v4991, 1.0
        %v5120 = vadd.f32 %v4992, 1.0
        %v5121 = vadd.f32 %v4993, 1.0
        %v5122 = vadd.f32 %v4994, 1.0
        %v5123 = vadd.f32 %v4995, 1.0
        %v5124 = vadd.f32 %v4996, 1.0
        %v5125 = vadd.f32 %v4997, 1.0
        %v5126 = vadd.f32 %v4998, 1.0
        %v5127 = vadd.f32 %v4999, 1.0
        %v5128 = vadd.f32 %v5000, 1.0
        %v5129 = vadd.f32 %v5001, 1.0
        %v5130 = vadd.f32 %v5002, 1.0
        %v5131 = vadd.f32 %v5003, 1.0
        %v5132 = vadd.f32 %v5004, 1.0
        %v5133 = vadd.f32 %v5005, 1.0
        %v5134 = vadd.f32 %v5006, 1.0
        %v5135 = vadd.f32 %v5007, 1.0
        %v5136 = vadd.f32 %v5008, 1.0
        %v5137 = vadd.f32 %v5009, 1.0
        %v5138 = vadd.f32 %v5010, 1.0
        %v5139 = vadd.f32 %v5011, 1.0
        %v5140 = vadd.f32 %v5012, 1.0
        %v5141 = vadd.f32 %v5013, 1.0
        %v5142 = vadd.f32 %v5014, 1.0
        %v5143 = vadd.f32 %v5015, 1.0
        %v5144 = vadd.f32 %v5016, 1.0
        %v5145 = vadd.f32 %v5017, 1.0
        %v5146 = vadd.f32 %v5018, 1.0
        %v5147 = vadd.f32 %v5019, 1.0
        %v5148 = vadd.f32 %v5020, 1.0
        %v5149 = vadd.f32 %v5021, 1.0
        %v5150 = vadd.f32 %v5022, 1.0
        %v5151 = vadd.f32 %v5023, 1.0
        %v5152 = vadd.f32 %v5024, 1.0
        %v5153 = vadd.f32 %v5025, 1.0
        %v5154 = vadd.f32 %v5026, 1.0
        %v5155 = vadd.f32 %v5027, 1.0
        %v5156 = vadd.f32 %v5028, 1.0
        %v5157 = vadd.f32 %v5029, 1.0
        %v5158 = vadd.f32 %v5030, 1.0
        %v5159 = vadd.f32 %v5031, 1.0
        %v5160 = vadd.f32 %v5032, 1.0
        %v5161 = vadd.f32 %v5033, 1.0
        %v5162 = vadd.f32 %v5034, 1.0
        %v5163 = vadd.f32 %v5035, 1.0
        %v5164 = vadd.f32 %v5036, 1.0
        %v5165 = vadd.f32 %v5037, 1.0
        %v5166 = vadd.f32 %v5038, 1.0
        %v5167 = vadd.f32 %v5039, 1.0
        %v5168 = vadd.f32 %v5040, 1.0
        %v5169 = vadd.f32 %v5041, 1.0
        %v5170 = vadd.f32 %v5042, 1.0
        %v5171 = vadd.f32 %v5043, 1.0
        %v5172 = vadd.f32 %v5044, 1.0
        %v5173 = vadd.f32 %v5045, 1.0
        %v5174 = vadd.f32 %v5046, 1.0
        %v5175 = vadd.f32 %v5047, 1.0
        %v5176 = vadd.f32 %v5048, 1.0
        %v5177 = vadd.f32 %v5049, 1.0
        %v5178 = vadd.f32 %v5050, 1.0
        %v5179 = vadd.f32 %v5051, 1.0
        %v5180 = vadd.f32 %v5052, 1.0
        %v5181 = vadd.f32 %v5053, 1.0
        %v5182 = vadd.f32 %v5054, 1.0
        %v5183 = vadd.f32 %v5055, 1.0
        %v5184 = vadd.f32 %v5056, 1.0
        %v5185 = vadd.f32 %v5057, 1.0
        %v5186 = vadd.f32 %v5058, 1.0
        %v5187 = vadd.f32 %v5059, 1.0
        %v5188 = vadd.f32 %v5060, 1.0
        %v5189 = vadd.f32 %v5061, 1.0
        %v5190 = vadd.f32 %v5062, 1.0
        %v5191 = vadd.f32 %v5063, 1.0
        %v5192 = vadd.f32 %v5064, 1.0
        %v5193 = vadd.f32 %v5065, 1.0
        %v5194 = vadd.f32 %v5066, 1.0
        %v5195 = vadd.f32 %v5067, 1.0
        %v5196 = vadd.f32 %v5068, 1.0
        %v5197 = vadd.f32 %v5069, 1.0
        %v5198 = vadd.f32 %v5070, 1.0
        %v5199 = vadd.f32 %v5071, 1.0
        %v5200 = vadd.f32 %v5072, 1.0
        %v5201 = vadd.f32 %v5073, 1.0
        %v5202 = vadd.f32 %v5074, 1.0
        %v5203 = vadd.f32 %v5075, 1.0
        %v5204 = vadd.f32 %v5076, 1.0
        %v5205 = vadd.f32 %v5077, 1.0
        %v5206 = vadd.f32 %v5078, 1.0
        %v5207 = vadd.f32 %v5079, 1.0
        %v5208 = vadd.f32 %v5080, 1.0
        %v5209 = vadd.f32 %v5081, 1.0
        %v5210 = vadd.f32 %v5082, 1.0
        %v5211 = vadd.f32 %v5083, 1.0
        %v5212 = vadd.f32 %v5084, 1.0
        %v5213 = vadd.f32 %v5085, 1.0
        %v5214 = vadd.f32 %v5086, 1.0
        %v5215 = vadd.f32 %v5087, 1.0
        %v5216 = vadd.f32 %v5088, 1.0
        %v5217 = vadd.f32 %v5089, 1.0
        %v5218 = vmul.f32 %v1890, %v5090
        %v5219 = vmul.f32 %v1891, %v5091
        %v5220 = vmul.f32 %v1892, %v5092
        %v5221 = vmul.f32 %v1893, %v5093
        %v5222 = vmul.f32 %v1894, %v5094
        %v5223 = vmul.f32 %v1895, %v5095
        %v5224 = vmul.f32 %v1896, %v5096
        %v5225 = vmul.f32 %v1897, %v5097
        %v5226 = vmul.f32 %v1898, %v5098
        %v5227 = vmul.f32 %v1899, %v5099
        %v5228 = vmul.f32 %v1900, %v5100
        %v5229 = vmul.f32 %v1901, %v5101
        %v5230 = vmul.f32 %v1902, %v5102
        %v5231 = vmul.f32 %v1903, %v5103
        %v5232 = vmul.f32 %v1904, %v5104
        %v5233 = vmul.f32 %v1905, %v5105
        %v5234 = vmul.f32 %v1906, %v5106
        %v5235 = vmul.f32 %v1907, %v5107
        %v5236 = vmul.f32 %v1908, %v5108
        %v5237 = vmul.f32 %v1909, %v5109
        %v5238 = vmul.f32 %v1910, %v5110
        %v5239 = vmul.f32 %v1911, %v5111
        %v5240 = vmul.f32 %v1912, %v5112
        %v5241 = vmul.f32 %v1913, %v5113
        %v5242 = vmul.f32 %v1914, %v5114
        %v5243 = vmul.f32 %v1915, %v5115
        %v5244 = vmul.f32 %v1916, %v5116
        %v5245 = vmul.f32 %v1917, %v5117
        %v5246 = vmul.f32 %v1918, %v5118
        %v5247 = vmul.f32 %v1919, %v5119
        %v5248 = vmul.f32 %v1920, %v5120
        %v5249 = vmul.f32 %v1921, %v5121
        %v5250 = vmul.f32 %v1922, %v5122
        %v5251 = vmul.f32 %v1923, %v5123
        %v5252 = vmul.f32 %v1924, %v5124
        %v5253 = vmul.f32 %v1925, %v5125
        %v5254 = vmul.f32 %v1926, %v5126
        %v5255 = vmul.f32 %v1927, %v5127
        %v5256 = vmul.f32 %v1928, %v5128
        %v5257 = vmul.f32 %v1929, %v5129
        %v5258 = vmul.f32 %v1930, %v5130
        %v5259 = vmul.f32 %v1931, %v5131
        %v5260 = vmul.f32 %v1932, %v5132
        %v5261 = vmul.f32 %v1933, %v5133
        %v5262 = vmul.f32 %v1934, %v5134
        %v5263 = vmul.f32 %v1935, %v5135
        %v5264 = vmul.f32 %v1936, %v5136
        %v5265 = vmul.f32 %v1937, %v5137
        %v5266 = vmul.f32 %v1938, %v5138
        %v5267 = vmul.f32 %v1939, %v5139
        %v5268 = vmul.f32 %v1940, %v5140
        %v5269 = vmul.f32 %v1941, %v5141
        %v5270 = vmul.f32 %v1942, %v5142
        %v5271 = vmul.f32 %v1943, %v5143
        %v5272 = vmul.f32 %v1944, %v5144
        %v5273 = vmul.f32 %v1945, %v5145
        %v5274 = vmul.f32 %v1946, %v5146
        %v5275 = vmul.f32 %v1947, %v5147
        %v5276 = vmul.f32 %v1948, %v5148
        %v5277 = vmul.f32 %v1949, %v5149
        %v5278 = vmul.f32 %v1950, %v5150
        %v5279 = vmul.f32 %v1951, %v5151
        %v5280 = vmul.f32 %v1952, %v5152
        %v5281 = vmul.f32 %v1953, %v5153
        %v5282 = vmul.f32 %v1954, %v5154
        %v5283 = vmul.f32 %v1955, %v5155
        %v5284 = vmul.f32 %v1956, %v5156
        %v5285 = vmul.f32 %v1957, %v5157
        %v5286 = vmul.f32 %v1958, %v5158
        %v5287 = vmul.f32 %v1959, %v5159
        %v5288 = vmul.f32 %v1960, %v5160
        %v5289 = vmul.f32 %v1961, %v5161
        %v5290 = vmul.f32 %v1962, %v5162
        %v5291 = vmul.f32 %v1963, %v5163
        %v5292 = vmul.f32 %v1964, %v5164
        %v5293 = vmul.f32 %v1965, %v5165
        %v5294 = vmul.f32 %v1966, %v5166
        %v5295 = vmul.f32 %v1967, %v5167
        %v5296 = vmul.f32 %v1968, %v5168
        %v5297 = vmul.f32 %v1969, %v5169
        %v5298 = vmul.f32 %v1970, %v5170
        %v5299 = vmul.f32 %v1971, %v5171
        %v5300 = vmul.f32 %v1972, %v5172
        %v5301 = vmul.f32 %v1973, %v5173
        %v5302 = vmul.f32 %v1974, %v5174
        %v5303 = vmul.f32 %v1975, %v5175
        %v5304 = vmul.f32 %v1976, %v5176
        %v5305 = vmul.f32 %v1977, %v5177
        %v5306 = vmul.f32 %v1978, %v5178
        %v5307 = vmul.f32 %v1979, %v5179
        %v5308 = vmul.f32 %v1980, %v5180
        %v5309 = vmul.f32 %v1981, %v5181
        %v5310 = vmul.f32 %v1982, %v5182
        %v5311 = vmul.f32 %v1983, %v5183
        %v5312 = vmul.f32 %v1984, %v5184
        %v5313 = vmul.f32 %v1985, %v5185
        %v5314 = vmul.f32 %v1986, %v5186
        %v5315 = vmul.f32 %v1987, %v5187
        %v5316 = vmul.f32 %v1988, %v5188
        %v5317 = vmul.f32 %v1989, %v5189
        %v5318 = vmul.f32 %v1990, %v5190
        %v5319 = vmul.f32 %v1991, %v5191
        %v5320 = vmul.f32 %v1992, %v5192
        %v5321 = vmul.f32 %v1993, %v5193
        %v5322 = vmul.f32 %v1994, %v5194
        %v5323 = vmul.f32 %v1995, %v5195
        %v5324 = vmul.f32 %v1996, %v5196
        %v5325 = vmul.f32 %v1997, %v5197
        %v5326 = vmul.f32 %v1998, %v5198
        %v5327 = vmul.f32 %v1999, %v5199
        %v5328 = vmul.f32 %v2000, %v5200
        %v5329 = vmul.f32 %v2001, %v5201
        %v5330 = vmul.f32 %v2002, %v5202
        %v5331 = vmul.f32 %v2003, %v5203
        %v5332 = vmul.f32 %v2004, %v5204
        %v5333 = vmul.f32 %v2005, %v5205
        %v5334 = vmul.f32 %v2006, %v5206
        %v5335 = vmul.f32 %v2007, %v5207
        %v5336 = vmul.f32 %v2008, %v5208
        %v5337 = vmul.f32 %v2009, %v5209
        %v5338 = vmul.f32 %v2010, %v5210
        %v5339 = vmul.f32 %v2011, %v5211
        %v5340 = vmul.f32 %v2012, %v5212
        %v5341 = vmul.f32 %v2013, %v5213
        %v5342 = vmul.f32 %v2014, %v5214
        %v5343 = vmul.f32 %v2015, %v5215
        %v5344 = vmul.f32 %v2016, %v5216
        %v5345 = vmul.f32 %v2017, %v5217
        %v5346 = vpack.c.bf16 %v5222, %v5218
        %v5347 = vpack.c.bf16 %v5223, %v5219
        %v5348 = vpack.c.bf16 %v5224, %v5220
        %v5349 = vpack.c.bf16 %v5225, %v5221
        %v5350 = vpack.c.bf16 %v5230, %v5226
        %v5351 = vpack.c.bf16 %v5231, %v5227
        %v5352 = vpack.c.bf16 %v5232, %v5228
        %v5353 = vpack.c.bf16 %v5233, %v5229
        %v5354 = vpack.c.bf16 %v5238, %v5234
        %v5355 = vpack.c.bf16 %v5239, %v5235
        %v5356 = vpack.c.bf16 %v5240, %v5236
        %v5357 = vpack.c.bf16 %v5241, %v5237
        %v5358 = vpack.c.bf16 %v5246, %v5242
        %v5359 = vpack.c.bf16 %v5247, %v5243
        %v5360 = vpack.c.bf16 %v5248, %v5244
        %v5361 = vpack.c.bf16 %v5249, %v5245
        %v5362 = vpack.c.bf16 %v5254, %v5250
        %v5363 = vpack.c.bf16 %v5255, %v5251
        %v5364 = vpack.c.bf16 %v5256, %v5252
        %v5365 = vpack.c.bf16 %v5257, %v5253
        %v5366 = vpack.c.bf16 %v5262, %v5258
        %v5367 = vpack.c.bf16 %v5263, %v5259
        %v5368 = vpack.c.bf16 %v5264, %v5260
        %v5369 = vpack.c.bf16 %v5265, %v5261
        %v5370 = vpack.c.bf16 %v5270, %v5266
        %v5371 = vpack.c.bf16 %v5271, %v5267
        %v5372 = vpack.c.bf16 %v5272, %v5268
        %v5373 = vpack.c.bf16 %v5273, %v5269
        %v5374 = vpack.c.bf16 %v5278, %v5274
        %v5375 = vpack.c.bf16 %v5279, %v5275
        %v5376 = vpack.c.bf16 %v5280, %v5276
        %v5377 = vpack.c.bf16 %v5281, %v5277
        %v5378 = vpack.c.bf16 %v5286, %v5282
        %v5379 = vpack.c.bf16 %v5287, %v5283
        %v5380 = vpack.c.bf16 %v5288, %v5284
        %v5381 = vpack.c.bf16 %v5289, %v5285
        %v5382 = vpack.c.bf16 %v5294, %v5290
        %v5383 = vpack.c.bf16 %v5295, %v5291
        %v5384 = vpack.c.bf16 %v5296, %v5292
        %v5385 = vpack.c.bf16 %v5297, %v5293
        %v5386 = vpack.c.bf16 %v5302, %v5298
        %v5387 = vpack.c.bf16 %v5303, %v5299
        %v5388 = vpack.c.bf16 %v5304, %v5300
        %v5389 = vpack.c.bf16 %v5305, %v5301
        %v5390 = vpack.c.bf16 %v5310, %v5306
        %v5391 = vpack.c.bf16 %v5311, %v5307
        %v5392 = vpack.c.bf16 %v5312, %v5308
        %v5393 = vpack.c.bf16 %v5313, %v5309
        %v5394 = vpack.c.bf16 %v5318, %v5314
        %v5395 = vpack.c.bf16 %v5319, %v5315
        %v5396 = vpack.c.bf16 %v5320, %v5316
        %v5397 = vpack.c.bf16 %v5321, %v5317
        %v5398 = vpack.c.bf16 %v5326, %v5322
        %v5399 = vpack.c.bf16 %v5327, %v5323
        %v5400 = vpack.c.bf16 %v5328, %v5324
        %v5401 = vpack.c.bf16 %v5329, %v5325
        %v5402 = vpack.c.bf16 %v5334, %v5330
        %v5403 = vpack.c.bf16 %v5335, %v5331
        %v5404 = vpack.c.bf16 %v5336, %v5332
        %v5405 = vpack.c.bf16 %v5337, %v5333
        %v5406 = vpack.c.bf16 %v5342, %v5338
        %v5407 = vpack.c.bf16 %v5343, %v5339
        %v5408 = vpack.c.bf16 %v5344, %v5340
        %v5409 = vpack.c.bf16 %v5345, %v5341
        %v5410 = vld [vmem:[%s5] sm:$0xf]
        %v5411 = vld [vmem:[%s5 + $0x4] sm:$0xf]
        %v5412 = vld [vmem:[%s5 + $0x8] sm:$0xf]
        %v5413 = vld [vmem:[%s5 + $0xc] sm:$0xf]
        %v5414 = vld [vmem:[%s5 + $0x10] sm:$0xf]
        %v5415 = vld [vmem:[%s5 + $0x14] sm:$0xf]
        %v5416 = vld [vmem:[%s5 + $0x18] sm:$0xf]
        %v5417 = vld [vmem:[%s5 + $0x1c] sm:$0xf]
        %v5418 = vld [vmem:[%s5 + $0x20] sm:$0xf]
        %v5419 = vld [vmem:[%s5 + $0x24] sm:$0xf]
        %v5420 = vld [vmem:[%s5 + $0x28] sm:$0xf]
        %v5421 = vld [vmem:[%s5 + $0x2c] sm:$0xf]
        %v5422 = vld [vmem:[%s5 + $0x30] sm:$0xf]
        %v5423 = vld [vmem:[%s5 + $0x34] sm:$0xf]
        %v5424 = vld [vmem:[%s5 + $0x38] sm:$0xf]
        %v5425 = vld [vmem:[%s5 + $0x3c] sm:$0xf]
        %v5426 = vld [vmem:[%s5 + $0x40] sm:$0xf]
        %v5427 = vld [vmem:[%s5 + $0x44] sm:$0xf]
        %v5428 = vld [vmem:[%s5 + $0x48] sm:$0xf]
        %v5429 = vld [vmem:[%s5 + $0x4c] sm:$0xf]
        %v5430 = vld [vmem:[%s5 + $0x50] sm:$0xf]
        %v5431 = vld [vmem:[%s5 + $0x54] sm:$0xf]
        %v5432 = vld [vmem:[%s5 + $0x58] sm:$0xf]
        %v5433 = vld [vmem:[%s5 + $0x5c] sm:$0xf]
        %v5434 = vld [vmem:[%s5 + $0x60] sm:$0xf]
        %v5435 = vld [vmem:[%s5 + $0x64] sm:$0xf]
        %v5436 = vld [vmem:[%s5 + $0x68] sm:$0xf]
        %v5437 = vld [vmem:[%s5 + $0x6c] sm:$0xf]
        %v5438 = vld [vmem:[%s5 + $0x70] sm:$0xf]
        %v5439 = vld [vmem:[%s5 + $0x74] sm:$0xf]
        %v5440 = vld [vmem:[%s5 + $0x78] sm:$0xf]
        %v5441 = vld [vmem:[%s5 + $0x7c] sm:$0xf]
        %v5442 = vld [vmem:[%s5 + $0x80] sm:$0xf]
        %v5443 = vld [vmem:[%s5 + $0x84] sm:$0xf]
        %v5444 = vld [vmem:[%s5 + $0x88] sm:$0xf]
        %v5445 = vld [vmem:[%s5 + $0x8c] sm:$0xf]
        %v5446 = vld [vmem:[%s5 + $0x90] sm:$0xf]
        %v5447 = vld [vmem:[%s5 + $0x94] sm:$0xf]
        %v5448 = vld [vmem:[%s5 + $0x98] sm:$0xf]
        %v5449 = vld [vmem:[%s5 + $0x9c] sm:$0xf]
        %v5450 = vld [vmem:[%s5 + $0xa0] sm:$0xf]
        %v5451 = vld [vmem:[%s5 + $0xa4] sm:$0xf]
        %v5452 = vld [vmem:[%s5 + $0xa8] sm:$0xf]
        %v5453 = vld [vmem:[%s5 + $0xac] sm:$0xf]
        %v5454 = vld [vmem:[%s5 + $0xb0] sm:$0xf]
        %v5455 = vld [vmem:[%s5 + $0xb4] sm:$0xf]
        %v5456 = vld [vmem:[%s5 + $0xb8] sm:$0xf]
        %v5457 = vld [vmem:[%s5 + $0xbc] sm:$0xf]
        %v5458 = vld [vmem:[%s5 + $0xc0] sm:$0xf]
        %v5459 = vld [vmem:[%s5 + $0xc4] sm:$0xf]
        %v5460 = vld [vmem:[%s5 + $0xc8] sm:$0xf]
        %v5461 = vld [vmem:[%s5 + $0xcc] sm:$0xf]
        %v5462 = vld [vmem:[%s5 + $0xd0] sm:$0xf]
        %v5463 = vld [vmem:[%s5 + $0xd4] sm:$0xf]
        %v5464 = vld [vmem:[%s5 + $0xd8] sm:$0xf]
        %v5465 = vld [vmem:[%s5 + $0xdc] sm:$0xf]
        %v5466 = vld [vmem:[%s5 + $0xe0] sm:$0xf]
        %v5467 = vld [vmem:[%s5 + $0xe4] sm:$0xf]
        %v5468 = vld [vmem:[%s5 + $0xe8] sm:$0xf]
        %v5469 = vld [vmem:[%s5 + $0xec] sm:$0xf]
        %v5470 = vld [vmem:[%s5 + $0xf0] sm:$0xf]
        %v5471 = vld [vmem:[%s5 + $0xf4] sm:$0xf]
        %v5472 = vld [vmem:[%s5 + $0xf8] sm:$0xf]
        %v5473 = vld [vmem:[%s5 + $0xfc] sm:$0xf]
        %v5538 = vunpack.c.l.b16 %v5410
        %v5539 = vunpack.c.l.b16 %v5411
        %v5540 = vunpack.c.l.b16 %v5412
        %v5541 = vunpack.c.l.b16 %v5413
        %v5542 = vunpack.c.l.b16 %v5414
        %v5543 = vunpack.c.l.b16 %v5415
        %v5544 = vunpack.c.l.b16 %v5416
        %v5545 = vunpack.c.l.b16 %v5417
        %v5546 = vunpack.c.l.b16 %v5418
        %v5547 = vunpack.c.l.b16 %v5419
        %v5548 = vunpack.c.l.b16 %v5420
        %v5549 = vunpack.c.l.b16 %v5421
        %v5550 = vunpack.c.l.b16 %v5422
        %v5551 = vunpack.c.l.b16 %v5423
        %v5552 = vunpack.c.l.b16 %v5424
        %v5553 = vunpack.c.l.b16 %v5425
        %v5554 = vunpack.c.l.b16 %v5426
        %v5555 = vunpack.c.l.b16 %v5427
        %v5556 = vunpack.c.l.b16 %v5428
        %v5557 = vunpack.c.l.b16 %v5429
        %v5558 = vunpack.c.l.b16 %v5430
        %v5559 = vunpack.c.l.b16 %v5431
        %v5560 = vunpack.c.l.b16 %v5432
        %v5561 = vunpack.c.l.b16 %v5433
        %v5562 = vunpack.c.l.b16 %v5434
        %v5563 = vunpack.c.l.b16 %v5435
        %v5564 = vunpack.c.l.b16 %v5436
        %v5565 = vunpack.c.l.b16 %v5437
        %v5566 = vunpack.c.l.b16 %v5438
        %v5567 = vunpack.c.l.b16 %v5439
        %v5568 = vunpack.c.l.b16 %v5440
        %v5569 = vunpack.c.l.b16 %v5441
        %v5570 = vunpack.c.l.b16 %v5442
        %v5571 = vunpack.c.l.b16 %v5443
        %v5572 = vunpack.c.l.b16 %v5444
        %v5573 = vunpack.c.l.b16 %v5445
        %v5574 = vunpack.c.l.b16 %v5446
        %v5575 = vunpack.c.l.b16 %v5447
        %v5576 = vunpack.c.l.b16 %v5448
        %v5577 = vunpack.c.l.b16 %v5449
        %v5578 = vunpack.c.l.b16 %v5450
        %v5579 = vunpack.c.l.b16 %v5451
        %v5580 = vunpack.c.l.b16 %v5452
        %v5581 = vunpack.c.l.b16 %v5453
        %v5582 = vunpack.c.l.b16 %v5454
        %v5583 = vunpack.c.l.b16 %v5455
        %v5584 = vunpack.c.l.b16 %v5456
        %v5585 = vunpack.c.l.b16 %v5457
        %v5586 = vunpack.c.l.b16 %v5458
        %v5587 = vunpack.c.l.b16 %v5459
        %v5588 = vunpack.c.l.b16 %v5460
        %v5589 = vunpack.c.l.b16 %v5461
        %v5590 = vunpack.c.l.b16 %v5462
        %v5591 = vunpack.c.l.b16 %v5463
        %v5592 = vunpack.c.l.b16 %v5464
        %v5593 = vunpack.c.l.b16 %v5465
        %v5594 = vunpack.c.l.b16 %v5466
        %v5595 = vunpack.c.l.b16 %v5467
        %v5596 = vunpack.c.l.b16 %v5468
        %v5597 = vunpack.c.l.b16 %v5469
        %v5598 = vunpack.c.l.b16 %v5470
        %v5599 = vunpack.c.l.b16 %v5471
        %v5600 = vunpack.c.l.b16 %v5472
        %v5601 = vunpack.c.l.b16 %v5473
        %v5602 = vpack.c.b16 %v5539, %v5538
        %v5603 = vpack.c.b16 %v5541, %v5540
        %v5604 = vpack.c.b16 %v5543, %v5542
        %v5605 = vpack.c.b16 %v5545, %v5544
        %v5606 = vpack.c.b16 %v5547, %v5546
        %v5607 = vpack.c.b16 %v5549, %v5548
        %v5608 = vpack.c.b16 %v5551, %v5550
        %v5609 = vpack.c.b16 %v5553, %v5552
        %v5610 = vpack.c.b16 %v5555, %v5554
        %v5611 = vpack.c.b16 %v5557, %v5556
        %v5612 = vpack.c.b16 %v5559, %v5558
        %v5613 = vpack.c.b16 %v5561, %v5560
        %v5614 = vpack.c.b16 %v5563, %v5562
        %v5615 = vpack.c.b16 %v5565, %v5564
        %v5616 = vpack.c.b16 %v5567, %v5566
        %v5617 = vpack.c.b16 %v5569, %v5568
        %v5618 = vpack.c.b16 %v5571, %v5570
        %v5619 = vpack.c.b16 %v5573, %v5572
        %v5620 = vpack.c.b16 %v5575, %v5574
        %v5621 = vpack.c.b16 %v5577, %v5576
        %v5622 = vpack.c.b16 %v5579, %v5578
        %v5623 = vpack.c.b16 %v5581, %v5580
        %v5624 = vpack.c.b16 %v5583, %v5582
        %v5625 = vpack.c.b16 %v5585, %v5584
        %v5626 = vpack.c.b16 %v5587, %v5586
        %v5627 = vpack.c.b16 %v5589, %v5588
        %v5628 = vpack.c.b16 %v5591, %v5590
        %v5629 = vpack.c.b16 %v5593, %v5592
        %v5630 = vpack.c.b16 %v5595, %v5594
        %v5631 = vpack.c.b16 %v5597, %v5596
        %v5632 = vpack.c.b16 %v5599, %v5598
        %v5633 = vpack.c.b16 %v5601, %v5600
        %5666 = vmatprep.subr.bf16.mxu0 0
        %5667 = vmatpush1.bf16.msra.mxu0 %v5609
        %5668 = vmatprep.subr.bf16.mxu0 0
        %5669 = vmatpush1.bf16.msra.mxu0 %v5608
        %5670 = vmatprep.subr.bf16.mxu0 0
        %5671 = vmatpush1.bf16.msra.mxu0 %v5607
        %5672 = vmatprep.subr.bf16.mxu0 0
        %5673 = vmatpush1.bf16.msra.mxu0 %v5606
        %5674 = vmatprep.subr.bf16.mxu0 0
        %5675 = vmatpush1.bf16.msra.mxu0 %v5605
        %5676 = vmatprep.subr.bf16.mxu0 0
        %5677 = vmatpush1.bf16.msra.mxu0 %v5604
        %5678 = vmatprep.subr.bf16.mxu0 0
        %5679 = vmatpush1.bf16.msra.mxu0 %v5603
        %5680 = vmatprep.subr.bf16.mxu0 0
        %5681 = vmatpush1.bf16.msra.mxu0 %v5602
        %5682 = vmatprep.subr.bf16.mxu0 0
        %5683 = vmatpush2.bf16.msra.mxu0 %v5617
        %5684 = vmatprep.subr.bf16.mxu0 0
        %5685 = vmatpush2.bf16.msra.mxu0 %v5616
        %5686 = vmatprep.subr.bf16.mxu0 0
        %5687 = vmatpush2.bf16.msra.mxu0 %v5615
        %5688 = vmatprep.subr.bf16.mxu0 0
        %5689 = vmatpush2.bf16.msra.mxu0 %v5614
        %5690 = vmatprep.subr.bf16.mxu0 0
        %5691 = vmatpush2.bf16.msra.mxu0 %v5613
        %5692 = vmatprep.subr.bf16.mxu0 0
        %5693 = vmatpush2.bf16.msra.mxu0 %v5612
        %5694 = vmatprep.subr.bf16.mxu0 0
        %5695 = vmatpush2.bf16.msra.mxu0 %v5611
        %5696 = vmatprep.subr.bf16.mxu0 0
        %5697 = vmatpush2.bf16.msra.mxu0 %v5610
        %5698 = vmatprep.mubr.bf16.mxu0 %v5347
        %5699 = vmatmul.mubr.bf16.gmra.mxu0 %v5346
        %v5700 = vpop.f32.mrf.mxu0
        %v5701 = vadd.f32 0.0, %v5700
        %v5702 = vpop.f32.mrf.mxu0
        %v5703 = vpop.f32.mrf.mxu0
        %v5704 = vadd.f32 0.0, %v5703
        %v5705 = vpop.f32.mrf.mxu0
        %5706 = vmatprep.mubr.bf16.mxu0 %v5351
        %5707 = vmatmul.mubr.bf16.gmra.mxu0 %v5350
        %v5708 = vpop.f32.mrf.mxu0
        %v5709 = vadd.f32 0.0, %v5708
        %v5710 = vpop.f32.mrf.mxu0
        %v5711 = vpop.f32.mrf.mxu0
        %v5712 = vadd.f32 0.0, %v5711
        %v5713 = vpop.f32.mrf.mxu0
        %5714 = vmatprep.mubr.bf16.mxu0 %v5355
        %5715 = vmatmul.mubr.bf16.gmra.mxu0 %v5354
        %v5716 = vpop.f32.mrf.mxu0
        %v5717 = vadd.f32 0.0, %v5716
        %v5718 = vpop.f32.mrf.mxu0
        %v5719 = vpop.f32.mrf.mxu0
        %v5720 = vadd.f32 0.0, %v5719
        %v5721 = vpop.f32.mrf.mxu0
        %5722 = vmatprep.mubr.bf16.mxu0 %v5359
        %5723 = vmatmul.mubr.bf16.gmra.mxu0 %v5358
        %v5724 = vpop.f32.mrf.mxu0
        %v5725 = vadd.f32 0.0, %v5724
        %v5726 = vpop.f32.mrf.mxu0
        %v5727 = vpop.f32.mrf.mxu0
        %v5728 = vadd.f32 0.0, %v5727
        %v5729 = vpop.f32.mrf.mxu0
        %5730 = vmatprep.mubr.bf16.mxu0 %v5363
        %5731 = vmatmul.mubr.bf16.gmra.mxu0 %v5362
        %v5732 = vpop.f32.mrf.mxu0
        %v5733 = vadd.f32 0.0, %v5732
        %v5734 = vpop.f32.mrf.mxu0
        %v5735 = vpop.f32.mrf.mxu0
        %v5736 = vadd.f32 0.0, %v5735
        %v5737 = vpop.f32.mrf.mxu0
        %5738 = vmatprep.mubr.bf16.mxu0 %v5367
        %5739 = vmatmul.mubr.bf16.gmra.mxu0 %v5366
        %v5740 = vpop.f32.mrf.mxu0
        %v5741 = vadd.f32 0.0, %v5740
        %v5742 = vpop.f32.mrf.mxu0
        %v5743 = vpop.f32.mrf.mxu0
        %v5744 = vadd.f32 0.0, %v5743
        %v5745 = vpop.f32.mrf.mxu0
        %5746 = vmatprep.mubr.bf16.mxu0 %v5371
        %5747 = vmatmul.mubr.bf16.gmra.mxu0 %v5370
        %v5748 = vpop.f32.mrf.mxu0
        %v5749 = vadd.f32 0.0, %v5748
        %v5750 = vpop.f32.mrf.mxu0
        %v5751 = vpop.f32.mrf.mxu0
        %v5752 = vadd.f32 0.0, %v5751
        %v5753 = vpop.f32.mrf.mxu0
        %5754 = vmatprep.mubr.bf16.mxu0 %v5375
        %5755 = vmatmul.mubr.bf16.gmra.mxu0 %v5374
        %v5756 = vpop.f32.mrf.mxu0
        %v5757 = vadd.f32 0.0, %v5756
        %v5758 = vpop.f32.mrf.mxu0
        %v5759 = vpop.f32.mrf.mxu0
        %v5760 = vadd.f32 0.0, %v5759
        %v5761 = vpop.f32.mrf.mxu0
        %5762 = vmatprep.mubr.bf16.mxu0 %v5379
        %5763 = vmatmul.mubr.bf16.gmra.mxu0 %v5378
        %v5764 = vpop.f32.mrf.mxu0
        %v5765 = vadd.f32 0.0, %v5764
        %v5766 = vpop.f32.mrf.mxu0
        %v5767 = vpop.f32.mrf.mxu0
        %v5768 = vadd.f32 0.0, %v5767
        %v5769 = vpop.f32.mrf.mxu0
        %5770 = vmatprep.mubr.bf16.mxu0 %v5383
        %5771 = vmatmul.mubr.bf16.gmra.mxu0 %v5382
        %v5772 = vpop.f32.mrf.mxu0
        %v5773 = vadd.f32 0.0, %v5772
        %v5774 = vpop.f32.mrf.mxu0
        %v5775 = vpop.f32.mrf.mxu0
        %v5776 = vadd.f32 0.0, %v5775
        %v5777 = vpop.f32.mrf.mxu0
        %5778 = vmatprep.mubr.bf16.mxu0 %v5387
        %5779 = vmatmul.mubr.bf16.gmra.mxu0 %v5386
        %v5780 = vpop.f32.mrf.mxu0
        %v5781 = vadd.f32 0.0, %v5780
        %v5782 = vpop.f32.mrf.mxu0
        %v5783 = vpop.f32.mrf.mxu0
        %v5784 = vadd.f32 0.0, %v5783
        %v5785 = vpop.f32.mrf.mxu0
        %5786 = vmatprep.mubr.bf16.mxu0 %v5391
        %5787 = vmatmul.mubr.bf16.gmra.mxu0 %v5390
        %v5788 = vpop.f32.mrf.mxu0
        %v5789 = vadd.f32 0.0, %v5788
        %v5790 = vpop.f32.mrf.mxu0
        %v5791 = vpop.f32.mrf.mxu0
        %v5792 = vadd.f32 0.0, %v5791
        %v5793 = vpop.f32.mrf.mxu0
        %5794 = vmatprep.mubr.bf16.mxu0 %v5395
        %5795 = vmatmul.mubr.bf16.gmra.mxu0 %v5394
        %v5796 = vpop.f32.mrf.mxu0
        %v5797 = vadd.f32 0.0, %v5796
        %v5798 = vpop.f32.mrf.mxu0
        %v5799 = vpop.f32.mrf.mxu0
        %v5800 = vadd.f32 0.0, %v5799
        %v5801 = vpop.f32.mrf.mxu0
        %5802 = vmatprep.mubr.bf16.mxu0 %v5399
        %5803 = vmatmul.mubr.bf16.gmra.mxu0 %v5398
        %v5804 = vpop.f32.mrf.mxu0
        %v5805 = vadd.f32 0.0, %v5804
        %v5806 = vpop.f32.mrf.mxu0
        %v5807 = vpop.f32.mrf.mxu0
        %v5808 = vadd.f32 0.0, %v5807
        %v5809 = vpop.f32.mrf.mxu0
        %5810 = vmatprep.mubr.bf16.mxu0 %v5403
        %5811 = vmatmul.mubr.bf16.gmra.mxu0 %v5402
        %v5812 = vpop.f32.mrf.mxu0
        %v5813 = vadd.f32 0.0, %v5812
        %v5814 = vpop.f32.mrf.mxu0
        %v5815 = vpop.f32.mrf.mxu0
        %v5816 = vadd.f32 0.0, %v5815
        %v5817 = vpop.f32.mrf.mxu0
        %5818 = vmatprep.mubr.bf16.mxu0 %v5407
        %5819 = vmatmul.mubr.bf16.gmra.mxu0 %v5406
        %v5820 = vpop.f32.mrf.mxu0
        %v5821 = vadd.f32 0.0, %v5820
        %v5822 = vpop.f32.mrf.mxu0
        %v5823 = vpop.f32.mrf.mxu0
        %v5824 = vadd.f32 0.0, %v5823
        %v5825 = vpop.f32.mrf.mxu0
        %5826 = vdwg.mxu0
        %5827 = vmatprep.subr.bf16.mxu0 0
        %5828 = vmatpush1.bf16.msra.mxu0 %v5625
        %5829 = vmatprep.subr.bf16.mxu0 0
        %5830 = vmatpush1.bf16.msra.mxu0 %v5624
        %5831 = vmatprep.subr.bf16.mxu0 0
        %5832 = vmatpush1.bf16.msra.mxu0 %v5623
        %5833 = vmatprep.subr.bf16.mxu0 0
        %5834 = vmatpush1.bf16.msra.mxu0 %v5622
        %5835 = vmatprep.subr.bf16.mxu0 0
        %5836 = vmatpush1.bf16.msra.mxu0 %v5621
        %5837 = vmatprep.subr.bf16.mxu0 0
        %5838 = vmatpush1.bf16.msra.mxu0 %v5620
        %5839 = vmatprep.subr.bf16.mxu0 0
        %5840 = vmatpush1.bf16.msra.mxu0 %v5619
        %5841 = vmatprep.subr.bf16.mxu0 0
        %5842 = vmatpush1.bf16.msra.mxu0 %v5618
        %5843 = vmatprep.subr.bf16.mxu0 0
        %5844 = vmatpush2.bf16.msra.mxu0 %v5633
        %5845 = vmatprep.subr.bf16.mxu0 0
        %5846 = vmatpush2.bf16.msra.mxu0 %v5632
        %5847 = vmatprep.subr.bf16.mxu0 0
        %5848 = vmatpush2.bf16.msra.mxu0 %v5631
        %5849 = vmatprep.subr.bf16.mxu0 0
        %5850 = vmatpush2.bf16.msra.mxu0 %v5630
        %5851 = vmatprep.subr.bf16.mxu0 0
        %5852 = vmatpush2.bf16.msra.mxu0 %v5629
        %5853 = vmatprep.subr.bf16.mxu0 0
        %5854 = vmatpush2.bf16.msra.mxu0 %v5628
        %5855 = vmatprep.subr.bf16.mxu0 0
        %5856 = vmatpush2.bf16.msra.mxu0 %v5627
        %5857 = vmatprep.subr.bf16.mxu0 0
        %5858 = vmatpush2.bf16.msra.mxu0 %v5626
        %5859 = vmatprep.mubr.bf16.mxu0 %v5349
        %5860 = vmatmul.mubr.bf16.gmra.mxu0 %v5348
        %v5861 = vpop.f32.mrf.mxu0
        %v5862 = vadd.f32 %v5701, %v5861
        %v5863 = vpop.f32.mrf.mxu0
        %v5864 = vpop.f32.mrf.mxu0
        %v5865 = vadd.f32 %v5704, %v5864
        %v5866 = vpop.f32.mrf.mxu0
        %5867 = vmatprep.mubr.bf16.mxu0 %v5353
        %5868 = vmatmul.mubr.bf16.gmra.mxu0 %v5352
        %v5869 = vpop.f32.mrf.mxu0
        %v5870 = vadd.f32 %v5709, %v5869
        %v5871 = vpop.f32.mrf.mxu0
        %v5872 = vpop.f32.mrf.mxu0
        %v5873 = vadd.f32 %v5712, %v5872
        %v5874 = vpop.f32.mrf.mxu0
        %5875 = vmatprep.mubr.bf16.mxu0 %v5357
        %5876 = vmatmul.mubr.bf16.gmra.mxu0 %v5356
        %v5877 = vpop.f32.mrf.mxu0
        %v5878 = vadd.f32 %v5717, %v5877
        %v5879 = vpop.f32.mrf.mxu0
        %v5880 = vpop.f32.mrf.mxu0
        %v5881 = vadd.f32 %v5720, %v5880
        %v5882 = vpop.f32.mrf.mxu0
        %5883 = vmatprep.mubr.bf16.mxu0 %v5361
        %5884 = vmatmul.mubr.bf16.gmra.mxu0 %v5360
        %v5885 = vpop.f32.mrf.mxu0
        %v5886 = vadd.f32 %v5725, %v5885
        %v5887 = vpop.f32.mrf.mxu0
        %v5888 = vpop.f32.mrf.mxu0
        %v5889 = vadd.f32 %v5728, %v5888
        %v5890 = vpop.f32.mrf.mxu0
        %5891 = vmatprep.mubr.bf16.mxu0 %v5365
        %5892 = vmatmul.mubr.bf16.gmra.mxu0 %v5364
        %v5893 = vpop.f32.mrf.mxu0
        %v5894 = vadd.f32 %v5733, %v5893
        %v5895 = vpop.f32.mrf.mxu0
        %v5896 = vpop.f32.mrf.mxu0
        %v5897 = vadd.f32 %v5736, %v5896
        %v5898 = vpop.f32.mrf.mxu0
        %5899 = vmatprep.mubr.bf16.mxu0 %v5369
        %5900 = vmatmul.mubr.bf16.gmra.mxu0 %v5368
        %v5901 = vpop.f32.mrf.mxu0
        %v5902 = vadd.f32 %v5741, %v5901
        %v5903 = vpop.f32.mrf.mxu0
        %v5904 = vpop.f32.mrf.mxu0
        %v5905 = vadd.f32 %v5744, %v5904
        %v5906 = vpop.f32.mrf.mxu0
        %5907 = vmatprep.mubr.bf16.mxu0 %v5373
        %5908 = vmatmul.mubr.bf16.gmra.mxu0 %v5372
        %v5909 = vpop.f32.mrf.mxu0
        %v5910 = vadd.f32 %v5749, %v5909
        %v5911 = vpop.f32.mrf.mxu0
        %v5912 = vpop.f32.mrf.mxu0
        %v5913 = vadd.f32 %v5752, %v5912
        %v5914 = vpop.f32.mrf.mxu0
        %5915 = vmatprep.mubr.bf16.mxu0 %v5377
        %5916 = vmatmul.mubr.bf16.gmra.mxu0 %v5376
        %v5917 = vpop.f32.mrf.mxu0
        %v5918 = vadd.f32 %v5757, %v5917
        %v5919 = vpop.f32.mrf.mxu0
        %v5920 = vpop.f32.mrf.mxu0
        %v5921 = vadd.f32 %v5760, %v5920
        %v5922 = vpop.f32.mrf.mxu0
        %5923 = vmatprep.mubr.bf16.mxu0 %v5381
        %5924 = vmatmul.mubr.bf16.gmra.mxu0 %v5380
        %v5925 = vpop.f32.mrf.mxu0
        %v5926 = vadd.f32 %v5765, %v5925
        %v5927 = vpop.f32.mrf.mxu0
        %v5928 = vpop.f32.mrf.mxu0
        %v5929 = vadd.f32 %v5768, %v5928
        %v5930 = vpop.f32.mrf.mxu0
        %5931 = vmatprep.mubr.bf16.mxu0 %v5385
        %5932 = vmatmul.mubr.bf16.gmra.mxu0 %v5384
        %v5933 = vpop.f32.mrf.mxu0
        %v5934 = vadd.f32 %v5773, %v5933
        %v5935 = vpop.f32.mrf.mxu0
        %v5936 = vpop.f32.mrf.mxu0
        %v5937 = vadd.f32 %v5776, %v5936
        %v5938 = vpop.f32.mrf.mxu0
        %5939 = vmatprep.mubr.bf16.mxu0 %v5389
        %5940 = vmatmul.mubr.bf16.gmra.mxu0 %v5388
        %v5941 = vpop.f32.mrf.mxu0
        %v5942 = vadd.f32 %v5781, %v5941
        %v5943 = vpop.f32.mrf.mxu0
        %v5944 = vpop.f32.mrf.mxu0
        %v5945 = vadd.f32 %v5784, %v5944
        %v5946 = vpop.f32.mrf.mxu0
        %5947 = vmatprep.mubr.bf16.mxu0 %v5393
        %5948 = vmatmul.mubr.bf16.gmra.mxu0 %v5392
        %v5949 = vpop.f32.mrf.mxu0
        %v5950 = vadd.f32 %v5789, %v5949
        %v5951 = vpop.f32.mrf.mxu0
        %v5952 = vpop.f32.mrf.mxu0
        %v5953 = vadd.f32 %v5792, %v5952
        %v5954 = vpop.f32.mrf.mxu0
        %5955 = vmatprep.mubr.bf16.mxu0 %v5397
        %5956 = vmatmul.mubr.bf16.gmra.mxu0 %v5396
        %v5957 = vpop.f32.mrf.mxu0
        %v5958 = vadd.f32 %v5797, %v5957
        %v5959 = vpop.f32.mrf.mxu0
        %v5960 = vpop.f32.mrf.mxu0
        %v5961 = vadd.f32 %v5800, %v5960
        %v5962 = vpop.f32.mrf.mxu0
        %5963 = vmatprep.mubr.bf16.mxu0 %v5401
        %5964 = vmatmul.mubr.bf16.gmra.mxu0 %v5400
        %v5965 = vpop.f32.mrf.mxu0
        %v5966 = vadd.f32 %v5805, %v5965
        %v5967 = vpop.f32.mrf.mxu0
        %v5968 = vpop.f32.mrf.mxu0
        %v5969 = vadd.f32 %v5808, %v5968
        %v5970 = vpop.f32.mrf.mxu0
        %5971 = vmatprep.mubr.bf16.mxu0 %v5405
        %5972 = vmatmul.mubr.bf16.gmra.mxu0 %v5404
        %v5973 = vpop.f32.mrf.mxu0
        %v5974 = vadd.f32 %v5813, %v5973
        %v5975 = vpop.f32.mrf.mxu0
        %v5976 = vpop.f32.mrf.mxu0
        %v5977 = vadd.f32 %v5816, %v5976
        %v5978 = vpop.f32.mrf.mxu0
        %5979 = vmatprep.mubr.bf16.mxu0 %v5409
        %5980 = vmatmul.mubr.bf16.gmra.mxu0 %v5408
        %v5981 = vpop.f32.mrf.mxu0
        %v5982 = vadd.f32 %v5821, %v5981
        %v5983 = vpop.f32.mrf.mxu0
        %v5984 = vpop.f32.mrf.mxu0
        %v5985 = vadd.f32 %v5824, %v5984
        %v5986 = vpop.f32.mrf.mxu0
        %5987 = vdwg.mxu0
        %v5988 = vld [vmem:[%s3 + $0x2] sm:$0x1]
        %v5989 = vld [vmem:[%s3 + $0x3] sm:$0x1]
        %5990 = vadd.xlane.f32.xlu0 %v5862
        %v5991 = vpop.xlane.xlu0 %5990
        %5992 = vadd.xlane.f32.xlu0 %v5865
        %v5993 = vpop.xlane.xlu0 %5992
        %5994 = vadd.xlane.f32.xlu0 %v5870
        %v5995 = vpop.xlane.xlu0 %5994
        %5996 = vadd.xlane.f32.xlu0 %v5873
        %v5997 = vpop.xlane.xlu0 %5996
        %5998 = vadd.xlane.f32.xlu0 %v5878
        %v5999 = vpop.xlane.xlu0 %5998
        %6000 = vadd.xlane.f32.xlu0 %v5881
        %v6001 = vpop.xlane.xlu0 %6000
        %6002 = vadd.xlane.f32.xlu0 %v5886
        %v6003 = vpop.xlane.xlu0 %6002
        %6004 = vadd.xlane.f32.xlu0 %v5889
        %v6005 = vpop.xlane.xlu0 %6004
        %6006 = vadd.xlane.f32.xlu0 %v5894
        %v6007 = vpop.xlane.xlu0 %6006
        %6008 = vadd.xlane.f32.xlu0 %v5897
        %v6009 = vpop.xlane.xlu0 %6008
        %6010 = vadd.xlane.f32.xlu0 %v5902
        %v6011 = vpop.xlane.xlu0 %6010
        %6012 = vadd.xlane.f32.xlu0 %v5905
        %v6013 = vpop.xlane.xlu0 %6012
        %6014 = vadd.xlane.f32.xlu0 %v5910
        %v6015 = vpop.xlane.xlu0 %6014
        %6016 = vadd.xlane.f32.xlu0 %v5913
        %v6017 = vpop.xlane.xlu0 %6016
        %6018 = vadd.xlane.f32.xlu0 %v5918
        %v6019 = vpop.xlane.xlu0 %6018
        %6020 = vadd.xlane.f32.xlu0 %v5921
        %v6021 = vpop.xlane.xlu0 %6020
        %6022 = vadd.xlane.f32.xlu0 %v5926
        %v6023 = vpop.xlane.xlu0 %6022
        %6024 = vadd.xlane.f32.xlu0 %v5929
        %v6025 = vpop.xlane.xlu0 %6024
        %6026 = vadd.xlane.f32.xlu0 %v5934
        %v6027 = vpop.xlane.xlu0 %6026
        %6028 = vadd.xlane.f32.xlu0 %v5937
        %v6029 = vpop.xlane.xlu0 %6028
        %6030 = vadd.xlane.f32.xlu0 %v5942
        %v6031 = vpop.xlane.xlu0 %6030
        %6032 = vadd.xlane.f32.xlu0 %v5945
        %v6033 = vpop.xlane.xlu0 %6032
        %6034 = vadd.xlane.f32.xlu0 %v5950
        %v6035 = vpop.xlane.xlu0 %6034
        %6036 = vadd.xlane.f32.xlu0 %v5953
        %v6037 = vpop.xlane.xlu0 %6036
        %6038 = vadd.xlane.f32.xlu0 %v5958
        %v6039 = vpop.xlane.xlu0 %6038
        %6040 = vadd.xlane.f32.xlu0 %v5961
        %v6041 = vpop.xlane.xlu0 %6040
        %6042 = vadd.xlane.f32.xlu0 %v5966
        %v6043 = vpop.xlane.xlu0 %6042
        %6044 = vadd.xlane.f32.xlu0 %v5969
        %v6045 = vpop.xlane.xlu0 %6044
        %6046 = vadd.xlane.f32.xlu0 %v5974
        %v6047 = vpop.xlane.xlu0 %6046
        %6048 = vadd.xlane.f32.xlu0 %v5977
        %v6049 = vpop.xlane.xlu0 %6048
        %6050 = vadd.xlane.f32.xlu0 %v5982
        %v6051 = vpop.xlane.xlu0 %6050
        %6052 = vadd.xlane.f32.xlu0 %v5985
        %v6053 = vpop.xlane.xlu0 %6052
        %v6054 = vmul.f32 %v5991, %v727
        %v6055 = vmul.f32 %v5993, %v727
        %v6056 = vmul.f32 %v5995, %v727
        %v6057 = vmul.f32 %v5997, %v727
        %v6058 = vmul.f32 %v5999, %v727
        %v6059 = vmul.f32 %v6001, %v727
        %v6060 = vmul.f32 %v6003, %v727
        %v6061 = vmul.f32 %v6005, %v727
        %v6062 = vmul.f32 %v6007, %v727
        %v6063 = vmul.f32 %v6009, %v727
        %v6064 = vmul.f32 %v6011, %v727
        %v6065 = vmul.f32 %v6013, %v727
        %v6066 = vmul.f32 %v6015, %v727
        %v6067 = vmul.f32 %v6017, %v727
        %v6068 = vmul.f32 %v6019, %v727
        %v6069 = vmul.f32 %v6021, %v727
        %v6070 = vmul.f32 %v6023, %v727
        %v6071 = vmul.f32 %v6025, %v727
        %v6072 = vmul.f32 %v6027, %v727
        %v6073 = vmul.f32 %v6029, %v727
        %v6074 = vmul.f32 %v6031, %v727
        %v6075 = vmul.f32 %v6033, %v727
        %v6076 = vmul.f32 %v6035, %v727
        %v6077 = vmul.f32 %v6037, %v727
        %v6078 = vmul.f32 %v6039, %v727
        %v6079 = vmul.f32 %v6041, %v727
        %v6080 = vmul.f32 %v6043, %v727
        %v6081 = vmul.f32 %v6045, %v727
        %v6082 = vmul.f32 %v6047, %v727
        %v6083 = vmul.f32 %v6049, %v727
        %v6084 = vmul.f32 %v6051, %v727
        %v6085 = vmul.f32 %v6053, %v727
        %v6086 = vsub.f32 %v5862, %v6054
        %v6087 = vsub.f32 %v5865, %v6055
        %v6088 = vsub.f32 %v5870, %v6056
        %v6089 = vsub.f32 %v5873, %v6057
        %v6090 = vsub.f32 %v5878, %v6058
        %v6091 = vsub.f32 %v5881, %v6059
        %v6092 = vsub.f32 %v5886, %v6060
        %v6093 = vsub.f32 %v5889, %v6061
        %v6094 = vsub.f32 %v5894, %v6062
        %v6095 = vsub.f32 %v5897, %v6063
        %v6096 = vsub.f32 %v5902, %v6064
        %v6097 = vsub.f32 %v5905, %v6065
        %v6098 = vsub.f32 %v5910, %v6066
        %v6099 = vsub.f32 %v5913, %v6067
        %v6100 = vsub.f32 %v5918, %v6068
        %v6101 = vsub.f32 %v5921, %v6069
        %v6102 = vsub.f32 %v5926, %v6070
        %v6103 = vsub.f32 %v5929, %v6071
        %v6104 = vsub.f32 %v5934, %v6072
        %v6105 = vsub.f32 %v5937, %v6073
        %v6106 = vsub.f32 %v5942, %v6074
        %v6107 = vsub.f32 %v5945, %v6075
        %v6108 = vsub.f32 %v5950, %v6076
        %v6109 = vsub.f32 %v5953, %v6077
        %v6110 = vsub.f32 %v5958, %v6078
        %v6111 = vsub.f32 %v5961, %v6079
        %v6112 = vsub.f32 %v5966, %v6080
        %v6113 = vsub.f32 %v5969, %v6081
        %v6114 = vsub.f32 %v5974, %v6082
        %v6115 = vsub.f32 %v5977, %v6083
        %v6116 = vsub.f32 %v5982, %v6084
        %v6117 = vsub.f32 %v5985, %v6085
        %v6118 = vmul.f32 %v6086, %v6086
        %v6119 = vmul.f32 %v6087, %v6087
        %v6120 = vmul.f32 %v6088, %v6088
        %v6121 = vmul.f32 %v6089, %v6089
        %v6122 = vmul.f32 %v6090, %v6090
        %v6123 = vmul.f32 %v6091, %v6091
        %v6124 = vmul.f32 %v6092, %v6092
        %v6125 = vmul.f32 %v6093, %v6093
        %v6126 = vmul.f32 %v6094, %v6094
        %v6127 = vmul.f32 %v6095, %v6095
        %v6128 = vmul.f32 %v6096, %v6096
        %v6129 = vmul.f32 %v6097, %v6097
        %v6130 = vmul.f32 %v6098, %v6098
        %v6131 = vmul.f32 %v6099, %v6099
        %v6132 = vmul.f32 %v6100, %v6100
        %v6133 = vmul.f32 %v6101, %v6101
        %v6134 = vmul.f32 %v6102, %v6102
        %v6135 = vmul.f32 %v6103, %v6103
        %v6136 = vmul.f32 %v6104, %v6104
        %v6137 = vmul.f32 %v6105, %v6105
        %v6138 = vmul.f32 %v6106, %v6106
        %v6139 = vmul.f32 %v6107, %v6107
        %v6140 = vmul.f32 %v6108, %v6108
        %v6141 = vmul.f32 %v6109, %v6109
        %v6142 = vmul.f32 %v6110, %v6110
        %v6143 = vmul.f32 %v6111, %v6111
        %v6144 = vmul.f32 %v6112, %v6112
        %v6145 = vmul.f32 %v6113, %v6113
        %v6146 = vmul.f32 %v6114, %v6114
        %v6147 = vmul.f32 %v6115, %v6115
        %v6148 = vmul.f32 %v6116, %v6116
        %v6149 = vmul.f32 %v6117, %v6117
        %6150 = vadd.xlane.f32.xlu0 %v6118
        %v6151 = vpop.xlane.xlu0 %6150
        %6152 = vadd.xlane.f32.xlu0 %v6119
        %v6153 = vpop.xlane.xlu0 %6152
        %6154 = vadd.xlane.f32.xlu0 %v6120
        %v6155 = vpop.xlane.xlu0 %6154
        %6156 = vadd.xlane.f32.xlu0 %v6121
        %v6157 = vpop.xlane.xlu0 %6156
        %6158 = vadd.xlane.f32.xlu0 %v6122
        %v6159 = vpop.xlane.xlu0 %6158
        %6160 = vadd.xlane.f32.xlu0 %v6123
        %v6161 = vpop.xlane.xlu0 %6160
        %6162 = vadd.xlane.f32.xlu0 %v6124
        %v6163 = vpop.xlane.xlu0 %6162
        %6164 = vadd.xlane.f32.xlu0 %v6125
        %v6165 = vpop.xlane.xlu0 %6164
        %6166 = vadd.xlane.f32.xlu0 %v6126
        %v6167 = vpop.xlane.xlu0 %6166
        %6168 = vadd.xlane.f32.xlu0 %v6127
        %v6169 = vpop.xlane.xlu0 %6168
        %6170 = vadd.xlane.f32.xlu0 %v6128
        %v6171 = vpop.xlane.xlu0 %6170
        %6172 = vadd.xlane.f32.xlu0 %v6129
        %v6173 = vpop.xlane.xlu0 %6172
        %6174 = vadd.xlane.f32.xlu0 %v6130
        %v6175 = vpop.xlane.xlu0 %6174
        %6176 = vadd.xlane.f32.xlu0 %v6131
        %v6177 = vpop.xlane.xlu0 %6176
        %6178 = vadd.xlane.f32.xlu0 %v6132
        %v6179 = vpop.xlane.xlu0 %6178
        %6180 = vadd.xlane.f32.xlu0 %v6133
        %v6181 = vpop.xlane.xlu0 %6180
        %6182 = vadd.xlane.f32.xlu0 %v6134
        %v6183 = vpop.xlane.xlu0 %6182
        %6184 = vadd.xlane.f32.xlu0 %v6135
        %v6185 = vpop.xlane.xlu0 %6184
        %6186 = vadd.xlane.f32.xlu0 %v6136
        %v6187 = vpop.xlane.xlu0 %6186
        %6188 = vadd.xlane.f32.xlu0 %v6137
        %v6189 = vpop.xlane.xlu0 %6188
        %6190 = vadd.xlane.f32.xlu0 %v6138
        %v6191 = vpop.xlane.xlu0 %6190
        %6192 = vadd.xlane.f32.xlu0 %v6139
        %v6193 = vpop.xlane.xlu0 %6192
        %6194 = vadd.xlane.f32.xlu0 %v6140
        %v6195 = vpop.xlane.xlu0 %6194
        %6196 = vadd.xlane.f32.xlu0 %v6141
        %v6197 = vpop.xlane.xlu0 %6196
        %6198 = vadd.xlane.f32.xlu0 %v6142
        %v6199 = vpop.xlane.xlu0 %6198
        %6200 = vadd.xlane.f32.xlu0 %v6143
        %v6201 = vpop.xlane.xlu0 %6200
        %6202 = vadd.xlane.f32.xlu0 %v6144
        %v6203 = vpop.xlane.xlu0 %6202
        %6204 = vadd.xlane.f32.xlu0 %v6145
        %v6205 = vpop.xlane.xlu0 %6204
        %6206 = vadd.xlane.f32.xlu0 %v6146
        %v6207 = vpop.xlane.xlu0 %6206
        %6208 = vadd.xlane.f32.xlu0 %v6147
        %v6209 = vpop.xlane.xlu0 %6208
        %6210 = vadd.xlane.f32.xlu0 %v6148
        %v6211 = vpop.xlane.xlu0 %6210
        %6212 = vadd.xlane.f32.xlu0 %v6149
        %v6213 = vpop.xlane.xlu0 %6212
        %v6214 = vmul.f32 %v6151, %v727
        %v6215 = vmul.f32 %v6153, %v727
        %v6216 = vmul.f32 %v6155, %v727
        %v6217 = vmul.f32 %v6157, %v727
        %v6218 = vmul.f32 %v6159, %v727
        %v6219 = vmul.f32 %v6161, %v727
        %v6220 = vmul.f32 %v6163, %v727
        %v6221 = vmul.f32 %v6165, %v727
        %v6222 = vmul.f32 %v6167, %v727
        %v6223 = vmul.f32 %v6169, %v727
        %v6224 = vmul.f32 %v6171, %v727
        %v6225 = vmul.f32 %v6173, %v727
        %v6226 = vmul.f32 %v6175, %v727
        %v6227 = vmul.f32 %v6177, %v727
        %v6228 = vmul.f32 %v6179, %v727
        %v6229 = vmul.f32 %v6181, %v727
        %v6230 = vmul.f32 %v6183, %v727
        %v6231 = vmul.f32 %v6185, %v727
        %v6232 = vmul.f32 %v6187, %v727
        %v6233 = vmul.f32 %v6189, %v727
        %v6234 = vmul.f32 %v6191, %v727
        %v6235 = vmul.f32 %v6193, %v727
        %v6236 = vmul.f32 %v6195, %v727
        %v6237 = vmul.f32 %v6197, %v727
        %v6238 = vmul.f32 %v6199, %v727
        %v6239 = vmul.f32 %v6201, %v727
        %v6240 = vmul.f32 %v6203, %v727
        %v6241 = vmul.f32 %v6205, %v727
        %v6242 = vmul.f32 %v6207, %v727
        %v6243 = vmul.f32 %v6209, %v727
        %v6244 = vmul.f32 %v6211, %v727
        %v6245 = vmul.f32 %v6213, %v727
        %v6246 = vadd.f32 %v6214, 1e-05
        %v6247 = vadd.f32 %v6215, 1e-05
        %v6248 = vadd.f32 %v6216, 1e-05
        %v6249 = vadd.f32 %v6217, 1e-05
        %v6250 = vadd.f32 %v6218, 1e-05
        %v6251 = vadd.f32 %v6219, 1e-05
        %v6252 = vadd.f32 %v6220, 1e-05
        %v6253 = vadd.f32 %v6221, 1e-05
        %v6254 = vadd.f32 %v6222, 1e-05
        %v6255 = vadd.f32 %v6223, 1e-05
        %v6256 = vadd.f32 %v6224, 1e-05
        %v6257 = vadd.f32 %v6225, 1e-05
        %v6258 = vadd.f32 %v6226, 1e-05
        %v6259 = vadd.f32 %v6227, 1e-05
        %v6260 = vadd.f32 %v6228, 1e-05
        %v6261 = vadd.f32 %v6229, 1e-05
        %v6262 = vadd.f32 %v6230, 1e-05
        %v6263 = vadd.f32 %v6231, 1e-05
        %v6264 = vadd.f32 %v6232, 1e-05
        %v6265 = vadd.f32 %v6233, 1e-05
        %v6266 = vadd.f32 %v6234, 1e-05
        %v6267 = vadd.f32 %v6235, 1e-05
        %v6268 = vadd.f32 %v6236, 1e-05
        %v6269 = vadd.f32 %v6237, 1e-05
        %v6270 = vadd.f32 %v6238, 1e-05
        %v6271 = vadd.f32 %v6239, 1e-05
        %v6272 = vadd.f32 %v6240, 1e-05
        %v6273 = vadd.f32 %v6241, 1e-05
        %v6274 = vadd.f32 %v6242, 1e-05
        %v6275 = vadd.f32 %v6243, 1e-05
        %v6276 = vadd.f32 %v6244, 1e-05
        %v6277 = vadd.f32 %v6245, 1e-05
        %v6278 = vrsqrt.pop %v6246
        %v6279 = vrsqrt.pop %v6247
        %v6280 = vrsqrt.pop %v6248
        %v6281 = vrsqrt.pop %v6249
        %v6282 = vrsqrt.pop %v6250
        %v6283 = vrsqrt.pop %v6251
        %v6284 = vrsqrt.pop %v6252
        %v6285 = vrsqrt.pop %v6253
        %v6286 = vrsqrt.pop %v6254
        %v6287 = vrsqrt.pop %v6255
        %v6288 = vrsqrt.pop %v6256
        %v6289 = vrsqrt.pop %v6257
        %v6290 = vrsqrt.pop %v6258
        %v6291 = vrsqrt.pop %v6259
        %v6292 = vrsqrt.pop %v6260
        %v6293 = vrsqrt.pop %v6261
        %v6294 = vrsqrt.pop %v6262
        %v6295 = vrsqrt.pop %v6263
        %v6296 = vrsqrt.pop %v6264
        %v6297 = vrsqrt.pop %v6265
        %v6298 = vrsqrt.pop %v6266
        %v6299 = vrsqrt.pop %v6267
        %v6300 = vrsqrt.pop %v6268
        %v6301 = vrsqrt.pop %v6269
        %v6302 = vrsqrt.pop %v6270
        %v6303 = vrsqrt.pop %v6271
        %v6304 = vrsqrt.pop %v6272
        %v6305 = vrsqrt.pop %v6273
        %v6306 = vrsqrt.pop %v6274
        %v6307 = vrsqrt.pop %v6275
        %v6308 = vrsqrt.pop %v6276
        %v6309 = vrsqrt.pop %v6277
        %v6310 = vmul.f32 %v6086, %v6278
        %v6311 = vmul.f32 %v6087, %v6279
        %v6312 = vmul.f32 %v6088, %v6280
        %v6313 = vmul.f32 %v6089, %v6281
        %v6314 = vmul.f32 %v6090, %v6282
        %v6315 = vmul.f32 %v6091, %v6283
        %v6316 = vmul.f32 %v6092, %v6284
        %v6317 = vmul.f32 %v6093, %v6285
        %v6318 = vmul.f32 %v6094, %v6286
        %v6319 = vmul.f32 %v6095, %v6287
        %v6320 = vmul.f32 %v6096, %v6288
        %v6321 = vmul.f32 %v6097, %v6289
        %v6322 = vmul.f32 %v6098, %v6290
        %v6323 = vmul.f32 %v6099, %v6291
        %v6324 = vmul.f32 %v6100, %v6292
        %v6325 = vmul.f32 %v6101, %v6293
        %v6326 = vmul.f32 %v6102, %v6294
        %v6327 = vmul.f32 %v6103, %v6295
        %v6328 = vmul.f32 %v6104, %v6296
        %v6329 = vmul.f32 %v6105, %v6297
        %v6330 = vmul.f32 %v6106, %v6298
        %v6331 = vmul.f32 %v6107, %v6299
        %v6332 = vmul.f32 %v6108, %v6300
        %v6333 = vmul.f32 %v6109, %v6301
        %v6334 = vmul.f32 %v6110, %v6302
        %v6335 = vmul.f32 %v6111, %v6303
        %v6336 = vmul.f32 %v6112, %v6304
        %v6337 = vmul.f32 %v6113, %v6305
        %v6338 = vmul.f32 %v6114, %v6306
        %v6339 = vmul.f32 %v6115, %v6307
        %v6340 = vmul.f32 %v6116, %v6308
        %v6341 = vmul.f32 %v6117, %v6309
        %v6342 = vlaneseq
        %v6343 = vshrl.u32 %v6342, 7
        %v6344 = vsub.s32 0, %v6343
        %v6345 = vrot.slane %v5988, %v6344
        %v6346 = vmul.f32 %v6310, %v6345
        %v6347 = vmul.f32 %v6311, %v6345
        %v6348 = vmul.f32 %v6312, %v6345
        %v6349 = vmul.f32 %v6313, %v6345
        %v6350 = vmul.f32 %v6314, %v6345
        %v6351 = vmul.f32 %v6315, %v6345
        %v6352 = vmul.f32 %v6316, %v6345
        %v6353 = vmul.f32 %v6317, %v6345
        %v6354 = vmul.f32 %v6318, %v6345
        %v6355 = vmul.f32 %v6319, %v6345
        %v6356 = vmul.f32 %v6320, %v6345
        %v6357 = vmul.f32 %v6321, %v6345
        %v6358 = vmul.f32 %v6322, %v6345
        %v6359 = vmul.f32 %v6323, %v6345
        %v6360 = vmul.f32 %v6324, %v6345
        %v6361 = vmul.f32 %v6325, %v6345
        %v6362 = vmul.f32 %v6326, %v6345
        %v6363 = vmul.f32 %v6327, %v6345
        %v6364 = vmul.f32 %v6328, %v6345
        %v6365 = vmul.f32 %v6329, %v6345
        %v6366 = vmul.f32 %v6330, %v6345
        %v6367 = vmul.f32 %v6331, %v6345
        %v6368 = vmul.f32 %v6332, %v6345
        %v6369 = vmul.f32 %v6333, %v6345
        %v6370 = vmul.f32 %v6334, %v6345
        %v6371 = vmul.f32 %v6335, %v6345
        %v6372 = vmul.f32 %v6336, %v6345
        %v6373 = vmul.f32 %v6337, %v6345
        %v6374 = vmul.f32 %v6338, %v6345
        %v6375 = vmul.f32 %v6339, %v6345
        %v6376 = vmul.f32 %v6340, %v6345
        %v6377 = vmul.f32 %v6341, %v6345
        %v6378 = vlaneseq
        %v6379 = vshrl.u32 %v6378, 7
        %v6380 = vsub.s32 0, %v6379
        %v6381 = vrot.slane %v5989, %v6380
        %v6382 = vadd.f32 %v6346, %v6381
        %v6383 = vadd.f32 %v6347, %v6381
        %v6384 = vadd.f32 %v6348, %v6381
        %v6385 = vadd.f32 %v6349, %v6381
        %v6386 = vadd.f32 %v6350, %v6381
        %v6387 = vadd.f32 %v6351, %v6381
        %v6388 = vadd.f32 %v6352, %v6381
        %v6389 = vadd.f32 %v6353, %v6381
        %v6390 = vadd.f32 %v6354, %v6381
        %v6391 = vadd.f32 %v6355, %v6381
        %v6392 = vadd.f32 %v6356, %v6381
        %v6393 = vadd.f32 %v6357, %v6381
        %v6394 = vadd.f32 %v6358, %v6381
        %v6395 = vadd.f32 %v6359, %v6381
        %v6396 = vadd.f32 %v6360, %v6381
        %v6397 = vadd.f32 %v6361, %v6381
        %v6398 = vadd.f32 %v6362, %v6381
        %v6399 = vadd.f32 %v6363, %v6381
        %v6400 = vadd.f32 %v6364, %v6381
        %v6401 = vadd.f32 %v6365, %v6381
        %v6402 = vadd.f32 %v6366, %v6381
        %v6403 = vadd.f32 %v6367, %v6381
        %v6404 = vadd.f32 %v6368, %v6381
        %v6405 = vadd.f32 %v6369, %v6381
        %v6406 = vadd.f32 %v6370, %v6381
        %v6407 = vadd.f32 %v6371, %v6381
        %v6408 = vadd.f32 %v6372, %v6381
        %v6409 = vadd.f32 %v6373, %v6381
        %v6410 = vadd.f32 %v6374, %v6381
        %v6411 = vadd.f32 %v6375, %v6381
        %v6412 = vadd.f32 %v6376, %v6381
        %v6413 = vadd.f32 %v6377, %v6381
        %v6414 = vadd.f32 %v276, %v6382
        %v6415 = vadd.f32 %v277, %v6383
        %v6416 = vadd.f32 %v278, %v6384
        %v6417 = vadd.f32 %v279, %v6385
        %v6418 = vadd.f32 %v280, %v6386
        %v6419 = vadd.f32 %v281, %v6387
        %v6420 = vadd.f32 %v282, %v6388
        %v6421 = vadd.f32 %v283, %v6389
        %v6422 = vadd.f32 %v284, %v6390
        %v6423 = vadd.f32 %v285, %v6391
        %v6424 = vadd.f32 %v286, %v6392
        %v6425 = vadd.f32 %v287, %v6393
        %v6426 = vadd.f32 %v288, %v6394
        %v6427 = vadd.f32 %v289, %v6395
        %v6428 = vadd.f32 %v290, %v6396
        %v6429 = vadd.f32 %v291, %v6397
        %v6430 = vadd.f32 %v292, %v6398
        %v6431 = vadd.f32 %v293, %v6399
        %v6432 = vadd.f32 %v294, %v6400
        %v6433 = vadd.f32 %v295, %v6401
        %v6434 = vadd.f32 %v296, %v6402
        %v6435 = vadd.f32 %v297, %v6403
        %v6436 = vadd.f32 %v298, %v6404
        %v6437 = vadd.f32 %v299, %v6405
        %v6438 = vadd.f32 %v300, %v6406
        %v6439 = vadd.f32 %v301, %v6407
        %v6440 = vadd.f32 %v302, %v6408
        %v6441 = vadd.f32 %v303, %v6409
        %v6442 = vadd.f32 %v304, %v6410
        %v6443 = vadd.f32 %v305, %v6411
        %v6444 = vadd.f32 %v306, %v6412
        %v6445 = vadd.f32 %v307, %v6413
        %6446 = vst [vmem:[%s261] sm:$0xff] %v6414
        %6447 = vst [vmem:[%s261 + $0x8] sm:$0xff] %v6415
        %6448 = vst [vmem:[%s261 + $0x10] sm:$0xff] %v6416
        %6449 = vst [vmem:[%s261 + $0x18] sm:$0xff] %v6417
        %6450 = vst [vmem:[%s261 + $0x20] sm:$0xff] %v6418
        %6451 = vst [vmem:[%s261 + $0x28] sm:$0xff] %v6419
        %6452 = vst [vmem:[%s261 + $0x30] sm:$0xff] %v6420
        %6453 = vst [vmem:[%s261 + $0x38] sm:$0xff] %v6421
        %6454 = vst [vmem:[%s261 + $0x40] sm:$0xff] %v6422
        %6455 = vst [vmem:[%s261 + $0x48] sm:$0xff] %v6423
        %6456 = vst [vmem:[%s261 + $0x50] sm:$0xff] %v6424
        %6457 = vst [vmem:[%s261 + $0x58] sm:$0xff] %v6425
        %6458 = vst [vmem:[%s261 + $0x60] sm:$0xff] %v6426
        %6459 = vst [vmem:[%s261 + $0x68] sm:$0xff] %v6427
        %6460 = vst [vmem:[%s261 + $0x70] sm:$0xff] %v6428
        %6461 = vst [vmem:[%s261 + $0x78] sm:$0xff] %v6429
        %6462 = vst [vmem:[%s261 + $0x80] sm:$0xff] %v6430
        %6463 = vst [vmem:[%s261 + $0x88] sm:$0xff] %v6431
        %6464 = vst [vmem:[%s261 + $0x90] sm:$0xff] %v6432
        %6465 = vst [vmem:[%s261 + $0x98] sm:$0xff] %v6433
        %6466 = vst [vmem:[%s261 + $0xa0] sm:$0xff] %v6434
        %6467 = vst [vmem:[%s261 + $0xa8] sm:$0xff] %v6435
        %6468 = vst [vmem:[%s261 + $0xb0] sm:$0xff] %v6436
        %6469 = vst [vmem:[%s261 + $0xb8] sm:$0xff] %v6437
        %6470 = vst [vmem:[%s261 + $0xc0] sm:$0xff] %v6438
        %6471 = vst [vmem:[%s261 + $0xc8] sm:$0xff] %v6439
        %6472 = vst [vmem:[%s261 + $0xd0] sm:$0xff] %v6440
        %6473 = vst [vmem:[%s261 + $0xd8] sm:$0xff] %v6441
        %6474 = vst [vmem:[%s261 + $0xe0] sm:$0xff] %v6442
        %6475 = vst [vmem:[%s261 + $0xe8] sm:$0xff] %v6443
        %6476 = vst [vmem:[%s261 + $0xf0] sm:$0xff] %v6444
        %6477 = vst [vmem:[%s261 + $0xf8] sm:$0xff] %v6445
        %s6478 = sand.u32 %s164, 1
        %s6479 = scalar_lea.sflag [#allocation3], %s6478
        %s6480 = sand.u32 %s164, 1
        %s6481 = smul.addr %s6480, 256
        %s6482 = scalar_lea.vmem [#allocation2], %s6481
        // Predicated region
        $region45: #{transformer_forward.3} parent=43 // pred_check
          %p6483 = pneg %p174
        $region46: #{transformer_forward.3} parent=43 // pred_check_branch
          %6485 = sbr.rel (%p6483) target = $region48
        $region47: #{transformer_forward.3} parent=43 // pred_region
          %s6486 = smul.u32 32, %s20
          %s6488 = ssub.s32 4096, 4096
          %6489 = vsyncadd %s6479, %s6488
          %s6490 = smul.addr %s6486, 128
          %s6491 = scalar_lea.hbm %s6, %s6490
          %s6492 = sshll.u32 %s6482, 4
          %s6493 = int_to_ptr.vmem [resolvable:$true] %s6492
          %6498 = dma.vmem_to_hbm [thread:$0]  %s6493, 4096, %s6491, %s6479, 128, 128, 8
        $region48: #{transformer_forward.3} parent=43 // pred_fallthru
          _
      $region44: #{transformer_forward.3} parent=5 // pred_fallthru
        _
      %p6499 = scmp.le.s32.totalorder 2, %s15
      // Predicated region
      $region49: #{transformer_forward.3} parent=5 // pred_check
        %p6500 = pneg %p6499
      $region50: #{transformer_forward.3} parent=5 // pred_check_branch
        %6502 = sbr.rel (%p6500) target = $region52
      $region51: #{transformer_forward.3} parent=5 // pred_region
        %s6503 = ssub.s32 %s15, 2
        // Predicated region
        $region53: #{transformer_forward.3} parent=51 // pred_check
          %p6504 = pneg %p180
        $region54: #{transformer_forward.3} parent=51 // pred_check_branch
          %6506 = sbr.rel (%p6504) target = $region56
        $region55: #{transformer_forward.3} parent=51 // pred_region
          %s6507 = sand.u32 %s165, 1
          %s6508 = scalar_lea.sflag [#allocation3], %s6507
          %s6509 = sand.u32 %s165, 1
          %s6510 = smul.addr %s6509, 256
          %s6511 = scalar_lea.vmem [#allocation2], %s6510
          %6512 = dma.done %s6508, 4096
        $region56: #{transformer_forward.3} parent=51 // pred_fallthru
          _
      $region52: #{transformer_forward.3} parent=5 // pred_fallthru
        _
    $region6: #{transformer_forward.3} parent=1 // loop_footer
      %s19 = sadd.s32 1, %s15
    $region7: #{transformer_forward.3} parent=1 // loop_footer_branch
      %14 = sbr.rel target = $region3
    $region8: #{transformer_forward.3} parent=1 // loop_exit
      _
    %6513 = vsyncpa [#allocation3], 1
    %s6514 = scalar_lea.sflag [#allocation3], 1
    %6515 = vsyncpa %s6514, 1

</llo_original>
